<compile_context>
chip_gen: v7x
topology: tpu7x:2x2x1
jax: 0.10.0
libtpu: 0.0.40
codegen_flags: <defaults>
</compile_context>

<pallas_src>
import functools

import jax
import jax.numpy as jnp
from jax.experimental import pallas as pl
from jax.experimental.pallas import tpu as pltpu

LANES = 128  # all channel / feature dims padded to a full vreg lane width


# ----------------------------------------------------------------------------
# Fused conv (valid, stride 1) + bias + tanh + 2x2/2 maxpool kernel
# ----------------------------------------------------------------------------
def _conv_tanh_pool_kernel(x_ref, w_ref, b_ref, o_ref, row_ref, *,
                           W, KH, KW, PH, PW, CHUNK):
    """Per-image fused conv+bias+tanh+pool.

    x_ref:   (1, H*W, Cin)      image, spatial flattened, channels minor.
    w_ref:   (KH*KW, Cin, 128)  weights (tap-major), Cout zero-padded to 128.
    b_ref:   (1, 128)           bias, zero-padded.
    o_ref:   (1, PH, PW, 128)   pooled output, lane dense.
    row_ref: (CHUNK, 128) f32   scratch holding the two conv rows of one pooled row.
    """
    bias = b_ref[...]                                    # (1, 128)
    taps = [(dh, dw) for dh in range(KH) for dw in range(KW)]

    def pooled_row(ph, carry):
        base = 2 * ph * W            # flat index of conv output row 2*ph
        # conv rows 2*ph (local rows [0, OW)) and 2*ph+1 (local rows [W, W+OW))
        acc = jnp.dot(x_ref[0, pl.ds(base, CHUNK), :], w_ref[0],
                      preferred_element_type=jnp.float32)
        for idx in range(1, len(taps)):
            dh, dw = taps[idx]
            off = dh * W + dw
            acc = acc + jnp.dot(x_ref[0, pl.ds(base + off, CHUNK), :], w_ref[idx],
                                preferred_element_type=jnp.float32)
        row_ref[...] = acc
        # 2x2 max pool: even/odd output columns via stride-2 reads of the two rows.
        p = jnp.maximum(
            jnp.maximum(row_ref[pl.ds(0, PW, 2), :], row_ref[pl.ds(1, PW, 2), :]),
            jnp.maximum(row_ref[pl.ds(W, PW, 2), :], row_ref[pl.ds(W + 1, PW, 2), :]))
        # bias-add and tanh commute with max -> apply on the pooled tile only.
        o_ref[0, ph] = jnp.tanh(p + bias).astype(o_ref.dtype)
        return carry

    jax.lax.fori_loop(0, PH, pooled_row, 0)


def conv_tanh_pool(x_flat, w, b, *, H, W, KH, KW):
    N, HW, Cin = x_flat.shape
    assert HW == H * W
    OH, OW = H - KH + 1, W - KW + 1
    PH, PW = OH // 2, OW // 2
    CHUNK = W + OW                    # span covering conv rows 2*ph and 2*ph+1
    kern = functools.partial(_conv_tanh_pool_kernel, W=W, KH=KH, KW=KW,
                             PH=PH, PW=PW, CHUNK=CHUNK)
    flops = 2 * N * PH * KH * KW * CHUNK * Cin * LANES
    return pl.pallas_call(
        kern,
        out_shape=jax.ShapeDtypeStruct((N, PH, PW, LANES), jnp.float32),
        grid=(N,),
        in_specs=[
            pl.BlockSpec((1, HW, Cin), lambda n: (n, 0, 0)),
            pl.BlockSpec((KH * KW, Cin, LANES), lambda n: (0, 0, 0)),
            pl.BlockSpec((1, LANES), lambda n: (0, 0)),
        ],
        out_specs=pl.BlockSpec((1, PH, PW, LANES), lambda n: (n, 0, 0, 0)),
        scratch_shapes=[pltpu.VMEM((CHUNK, LANES), jnp.float32)],
        compiler_params=pltpu.CompilerParams(dimension_semantics=("parallel",)),
        cost_estimate=pl.CostEstimate(
            flops=flops,
            transcendentals=N * PH * PW * LANES,
            bytes_accessed=4 * (N * HW * Cin + KH * KW * Cin * LANES
                                + N * PH * PW * LANES)),
    )(x_flat, w, b)


# ----------------------------------------------------------------------------
# Fused FC tail: (N,4608) -> tanh(fc1) -> tanh(fc2) -> fc3, one pallas_call
# ----------------------------------------------------------------------------
def _fc3_kernel(x_ref, w1_ref, b1_ref, w2_ref, b2_ref, w3_ref, b3_ref, o_ref):
    h = jnp.tanh(jnp.dot(x_ref[...], w1_ref[...],
                         preferred_element_type=jnp.float32) + b1_ref[...])
    h = jnp.tanh(jnp.dot(h, w2_ref[...],
                         preferred_element_type=jnp.float32) + b2_ref[...])
    o_ref[...] = (jnp.dot(h, w3_ref[...],
                          preferred_element_type=jnp.float32) + b3_ref[...]
                  ).astype(o_ref.dtype)


def fc_fused(x, w1, b1, w2, b2, w3, b3, *, tile_m=128):
    N, K = x.shape
    TM = N if N <= tile_m else tile_m          # TM is 8-divisible or == N
    full = lambda i: (0, 0)
    flops = 2 * N * (K * LANES + 2 * LANES * LANES)
    return pl.pallas_call(
        _fc3_kernel,
        out_shape=jax.ShapeDtypeStruct((N, LANES), jnp.float32),
        grid=(pl.cdiv(N, TM),),
        in_specs=[
            pl.BlockSpec((TM, K), lambda i: (i, 0)),
            pl.BlockSpec((K, LANES), full),
            pl.BlockSpec((1, LANES), full),
            pl.BlockSpec((LANES, LANES), full),
            pl.BlockSpec((1, LANES), full),
            pl.BlockSpec((LANES, LANES), full),
            pl.BlockSpec((1, LANES), full),
        ],
        out_specs=pl.BlockSpec((TM, LANES), lambda i: (i, 0)),
        compiler_params=pltpu.CompilerParams(dimension_semantics=("parallel",)),
        cost_estimate=pl.CostEstimate(
            flops=flops,
            transcendentals=2 * N * LANES,
            bytes_accessed=4 * (N * K + K * LANES + 2 * LANES * LANES + N * LANES)),
    )(x, w1, b1, w2, b2, w3, b3)


# ----------------------------------------------------------------------------
# Parameter init (PyTorch-default-style uniform) and one-time preprocessing
# ----------------------------------------------------------------------------
def _uniform(key, shape, bound):
    return jax.random.uniform(key, shape, jnp.float32, -bound, bound)


def init_params(seed=0):
    key = jax.random.PRNGKey(seed)
    ks = jax.random.split(key, 10)
    p = {}
    b = 1.0 / (3 * 5 * 5) ** 0.5
    p["conv1_w"] = _uniform(ks[0], (10, 3, 5, 5), b)
    p["conv1_b"] = _uniform(ks[1], (10,), b)
    b = 1.0 / (10 * 3 * 3) ** 0.5
    p["conv2_w"] = _uniform(ks[2], (20, 10, 3, 3), b)
    p["conv2_b"] = _uniform(ks[3], (20,), b)
    b = 1.0 / 720 ** 0.5
    p["fc1_w"] = _uniform(ks[4], (120, 720), b)
    p["fc1_b"] = _uniform(ks[5], (120,), b)
    b = 1.0 / 120 ** 0.5
    p["fc2_w"] = _uniform(ks[6], (84, 120), b)
    p["fc2_b"] = _uniform(ks[7], (84,), b)
    b = 1.0 / 84 ** 0.5
    p["fc3_w"] = _uniform(ks[8], (10, 84), b)
    p["fc3_b"] = _uniform(ks[9], (10,), b)
    return p


def prepare_params(p):
    """One-time repack: tap-major conv weights, lane-padded and pre-transposed
    FC weights with the PyTorch (c,h,w) flatten order folded into fc1."""
    prep = {}
    # conv1: (10,3,5,5) -> (25, 3, 128)
    w = jnp.transpose(p["conv1_w"], (2, 3, 1, 0)).reshape(25, 3, 10)
    prep["conv1_w"] = jnp.zeros((25, 3, LANES), jnp.float32).at[:, :, :10].set(w)
    prep["conv1_b"] = jnp.zeros((1, LANES), jnp.float32).at[0, :10].set(p["conv1_b"])
    # conv2: (20,10,3,3) -> (9, 128, 128)
    w = jnp.transpose(p["conv2_w"], (2, 3, 1, 0)).reshape(9, 10, 20)
    prep["conv2_w"] = jnp.zeros((9, LANES, LANES), jnp.float32).at[:, :10, :20].set(w)
    prep["conv2_b"] = jnp.zeros((1, LANES), jnp.float32).at[0, :20].set(p["conv2_b"])
    # fc1: (120, 720) -> (6*6*128, 128); our flat index is (h*6+w)*128 + c,
    # torch's is c*36 + h*6 + w -> permute the weight rows accordingly.
    w = p["fc1_w"].reshape(120, 20, 6, 6).transpose(2, 3, 1, 0)      # (6,6,20,120)
    w = jnp.zeros((6, 6, LANES, LANES), jnp.float32).at[:, :, :20, :120].set(w)
    prep["fc1_w"] = w.reshape(6 * 6 * LANES, LANES)
    prep["fc1_b"] = jnp.zeros((1, LANES), jnp.float32).at[0, :120].set(p["fc1_b"])
    # fc2: (84,120) -> (128,128) (K,N), zero padded
    prep["fc2_w"] = jnp.zeros((LANES, LANES), jnp.float32).at[:120, :84].set(p["fc2_w"].T)
    prep["fc2_b"] = jnp.zeros((1, LANES), jnp.float32).at[0, :84].set(p["fc2_b"])
    # fc3: (10,84) -> (128,128)
    prep["fc3_w"] = jnp.zeros((LANES, LANES), jnp.float32).at[:84, :10].set(p["fc3_w"].T)
    prep["fc3_b"] = jnp.zeros((1, LANES), jnp.float32).at[0, :10].set(p["fc3_b"])
    return prep


# ----------------------------------------------------------------------------
# Forward pass (mirrors CNN_net3.forward)
# ----------------------------------------------------------------------------
@jax.jit
def cnn_net3_forward(prep, x_nchw):
    N = x_nchw.shape[0]
    # single input-layout change: NCHW -> (N, H*W, C) channels-minor
    x = jnp.transpose(x_nchw, (0, 2, 3, 1)).reshape(N, 32 * 32, 3)
    h = conv_tanh_pool(x, prep["conv1_w"], prep["conv1_b"],
                       H=32, W=32, KH=5, KW=5)                   # (N,14,14,128)
    h = conv_tanh_pool(h.reshape(N, 14 * 14, LANES),
                       prep["conv2_w"], prep["conv2_b"],
                       H=14, W=14, KH=3, KW=3)                   # (N,6,6,128)
    out = fc_fused(h.reshape(N, 6 * 6 * LANES),
                   prep["fc1_w"], prep["fc1_b"],
                   prep["fc2_w"], prep["fc2_b"],
                   prep["fc3_w"], prep["fc3_b"])                 # (N,128)
    return out[:, :10]


# ----------------------------------------------------------------------------
# Pure-JAX reference (matches the PyTorch module) for a correctness check
# ----------------------------------------------------------------------------
def reference_forward(params, x):
    def conv(x, w, b):
        y = jax.lax.conv_general_dilated(
            x, w, window_strides=(1, 1), padding="VALID",
            dimension_numbers=("NCHW", "OIHW", "NCHW"))
        return y + b[None, :, None, None]

    def pool(x):
        return jax.lax.reduce_window(x, -jnp.inf, jax.lax.max,
                                     (1, 1, 2, 2), (1, 1, 2, 2), "VALID")

    h = pool(jnp.tanh(conv(x, params["conv1_w"], params["conv1_b"])))
    h = pool(jnp.tanh(conv(h, params["conv2_w"], params["conv2_b"])))
    h = h.reshape(h.shape[0], -1)                    # NCHW flatten == torch .view
    h = jnp.tanh(h @ params["fc1_w"].T + params["fc1_b"])
    h = jnp.tanh(h @ params["fc2_w"].T + params["fc2_b"])
    return h @ params["fc3_w"].T + params["fc3_b"]


if __name__ == "__main__":
    params = init_params(seed=0)
    prep = prepare_params(params)
    # Input shape implied by the module: (N, 3, 32, 32) so that 20*6*6 = 720.
    x = jax.random.normal(jax.random.PRNGKey(0), (2, 3, 32, 32), jnp.float32)
    out = jax.block_until_ready(cnn_net3_forward(prep, x))
    assert out.shape == (2, 10), out.shape
    ref = jax.block_until_ready(reference_forward(params, x))
    err = float(jnp.max(jnp.abs(out - ref)))
    assert err < 3e-2, f"mismatch vs reference, max abs err = {err}"
    print("KERNEL_OK")
</pallas_src>

<mosaic_0001>
module attributes {stable_mosaic.version = 11 : i64} {
  func.func @_conv_tanh_pool_kernel(%arg0: i32, %arg1: memref<1x1024x3xf32, #tpu.memory_space<vmem>>, %arg2: memref<25x3x128xf32, #tpu.memory_space<vmem>>, %arg3: memref<1x128xf32, #tpu.memory_space<vmem>>, %arg4: memref<1x14x14x128xf32, #tpu.memory_space<vmem>>, %arg5: memref<60x128xf32, #tpu.memory_space<vmem>>) attributes {dimension_semantics = [#tpu.dimension_semantics<parallel>], iteration_bounds = array<i64: 2>, scalar_prefetch = 0 : i64, scratch_operands = 1 : i64, tpu.core_type = #tpu.core_type<tc>, window_params = [{transform_indices = @transform_0, window_bounds = array<i64: 1, 1024, 3>}, {pipeline_mode = #tpu.pipeline_mode<synchronous>, transform_indices = @transform_1, window_bounds = array<i64: 25, 3, 128>}, {pipeline_mode = #tpu.pipeline_mode<synchronous>, transform_indices = @transform_2, window_bounds = array<i64: 1, 128>}, {transform_indices = @transform_3, window_bounds = array<i64: 1, 14, 14, 128>}]} {
    %c0 = arith.constant 0 : index
    %c0_0 = arith.constant 0 : index
    %0 = vector.load %arg3[%c0, %c0_0] : memref<1x128xf32, #tpu.memory_space<vmem>>, vector<1x128xf32>
    %c0_i32 = arith.constant 0 : i32
    %c14_i32 = arith.constant 14 : i32
    %1 = arith.addi %c0_i32, %c14_i32 : i32
    %c1_i32 = arith.constant 1 : i32
    scf.for %arg6 = %c0_i32 to %1 step %c1_i32  : i32 {
      %c2_i32 = arith.constant 2 : i32
      %2 = arith.muli %c2_i32, %arg6 : i32
      %c32_i32 = arith.constant 32 : i32
      %3 = arith.muli %2, %c32_i32 : i32
      %c0_2 = arith.constant 0 : index
      %4 = arith.index_cast %3 : i32 to index
      %c0_3 = arith.constant 0 : index
      %5 = vector.load %arg1[%c0_2, %4, %c0_3] : memref<1x1024x3xf32, #tpu.memory_space<vmem>>, vector<1x60x3xf32>
      %6 = vector.shape_cast %5 : vector<1x60x3xf32> to vector<60x3xf32>
      %c0_4 = arith.constant 0 : index
      %c0_5 = arith.constant 0 : index
      %c0_6 = arith.constant 0 : index
      %7 = vector.load %arg2[%c0_4, %c0_5, %c0_6] : memref<25x3x128xf32, #tpu.memory_space<vmem>>, vector<1x3x128xf32>
      %8 = vector.shape_cast %7 : vector<1x3x128xf32> to vector<3x128xf32>
      %cst = arith.constant dense<0.000000e+00> : vector<60x128xf32>
      %9 = tpu.matmul %6, %8, %cst {dimension_numbers = #tpu.dot_dimension_numbers<[1], [0], [0], [1], [0, 0, 1, 1], [], []>} : vector<60x3xf32>, vector<3x128xf32>, vector<60x128xf32> -> vector<60x128xf32>
      %c1_i32_7 = arith.constant 1 : i32
      %10 = arith.addi %3, %c1_i32_7 : i32
      %c0_8 = arith.constant 0 : index
      %11 = arith.index_cast %10 : i32 to index
      %c0_9 = arith.constant 0 : index
      %12 = vector.load %arg1[%c0_8, %11, %c0_9] : memref<1x1024x3xf32, #tpu.memory_space<vmem>>, vector<1x60x3xf32>
      %13 = vector.shape_cast %12 : vector<1x60x3xf32> to vector<60x3xf32>
      %c1 = arith.constant 1 : index
      %c0_10 = arith.constant 0 : index
      %c0_11 = arith.constant 0 : index
      %14 = vector.load %arg2[%c1, %c0_10, %c0_11] : memref<25x3x128xf32, #tpu.memory_space<vmem>>, vector<1x3x128xf32>
      %15 = vector.shape_cast %14 : vector<1x3x128xf32> to vector<3x128xf32>
      %cst_12 = arith.constant dense<0.000000e+00> : vector<60x128xf32>
      %16 = tpu.matmul %13, %15, %cst_12 {dimension_numbers = #tpu.dot_dimension_numbers<[1], [0], [0], [1], [0, 0, 1, 1], [], []>} : vector<60x3xf32>, vector<3x128xf32>, vector<60x128xf32> -> vector<60x128xf32>
      %17 = arith.addf %9, %16 : vector<60x128xf32>
      %c2_i32_13 = arith.constant 2 : i32
      %18 = arith.addi %3, %c2_i32_13 : i32
      %c0_14 = arith.constant 0 : index
      %19 = arith.index_cast %18 : i32 to index
      %c0_15 = arith.constant 0 : index
      %20 = vector.load %arg1[%c0_14, %19, %c0_15] : memref<1x1024x3xf32, #tpu.memory_space<vmem>>, vector<1x60x3xf32>
      %21 = vector.shape_cast %20 : vector<1x60x3xf32> to vector<60x3xf32>
      %c2 = arith.constant 2 : index
      %c0_16 = arith.constant 0 : index
      %c0_17 = arith.constant 0 : index
      %22 = vector.load %arg2[%c2, %c0_16, %c0_17] : memref<25x3x128xf32, #tpu.memory_space<vmem>>, vector<1x3x128xf32>
      %23 = vector.shape_cast %22 : vector<1x3x128xf32> to vector<3x128xf32>
      %cst_18 = arith.constant dense<0.000000e+00> : vector<60x128xf32>
      %24 = tpu.matmul %21, %23, %cst_18 {dimension_numbers = #tpu.dot_dimension_numbers<[1], [0], [0], [1], [0, 0, 1, 1], [], []>} : vector<60x3xf32>, vector<3x128xf32>, vector<60x128xf32> -> vector<60x128xf32>
      %25 = arith.addf %17, %24 : vector<60x128xf32>
      %c3_i32 = arith.constant 3 : i32
      %26 = arith.addi %3, %c3_i32 : i32
      %c0_19 = arith.constant 0 : index
      %27 = arith.index_cast %26 : i32 to index
      %c0_20 = arith.constant 0 : index
      %28 = vector.load %arg1[%c0_19, %27, %c0_20] : memref<1x1024x3xf32, #tpu.memory_space<vmem>>, vector<1x60x3xf32>
      %29 = vector.shape_cast %28 : vector<1x60x3xf32> to vector<60x3xf32>
      %c3 = arith.constant 3 : index
      %c0_21 = arith.constant 0 : index
      %c0_22 = arith.constant 0 : index
      %30 = vector.load %arg2[%c3, %c0_21, %c0_22] : memref<25x3x128xf32, #tpu.memory_space<vmem>>, vector<1x3x128xf32>
      %31 = vector.shape_cast %30 : vector<1x3x128xf32> to vector<3x128xf32>
      %cst_23 = arith.constant dense<0.000000e+00> : vector<60x128xf32>
      %32 = tpu.matmul %29, %31, %cst_23 {dimension_numbers = #tpu.dot_dimension_numbers<[1], [0], [0], [1], [0, 0, 1, 1], [], []>} : vector<60x3xf32>, vector<3x128xf32>, vector<60x128xf32> -> vector<60x128xf32>
      %33 = arith.addf %25, %32 : vector<60x128xf32>
      %c4_i32 = arith.constant 4 : i32
      %34 = arith.addi %3, %c4_i32 : i32
      %c0_24 = arith.constant 0 : index
      %35 = arith.index_cast %34 : i32 to index
      %c0_25 = arith.constant 0 : index
      %36 = vector.load %arg1[%c0_24, %35, %c0_25] : memref<1x1024x3xf32, #tpu.memory_space<vmem>>, vector<1x60x3xf32>
      %37 = vector.shape_cast %36 : vector<1x60x3xf32> to vector<60x3xf32>
      %c4 = arith.constant 4 : index
      %c0_26 = arith.constant 0 : index
      %c0_27 = arith.constant 0 : index
      %38 = vector.load %arg2[%c4, %c0_26, %c0_27] : memref<25x3x128xf32, #tpu.memory_space<vmem>>, vector<1x3x128xf32>
      %39 = vector.shape_cast %38 : vector<1x3x128xf32> to vector<3x128xf32>
      %cst_28 = arith.constant dense<0.000000e+00> : vector<60x128xf32>
      %40 = tpu.matmul %37, %39, %cst_28 {dimension_numbers = #tpu.dot_dimension_numbers<[1], [0], [0], [1], [0, 0, 1, 1], [], []>} : vector<60x3xf32>, vector<3x128xf32>, vector<60x128xf32> -> vector<60x128xf32>
      %41 = arith.addf %33, %40 : vector<60x128xf32>
      %c32_i32_29 = arith.constant 32 : i32
      %42 = arith.addi %3, %c32_i32_29 : i32
      %c0_30 = arith.constant 0 : index
      %43 = arith.index_cast %42 : i32 to index
      %c0_31 = arith.constant 0 : index
      %44 = vector.load %arg1[%c0_30, %43, %c0_31] : memref<1x1024x3xf32, #tpu.memory_space<vmem>>, vector<1x60x3xf32>
      %45 = vector.shape_cast %44 : vector<1x60x3xf32> to vector<60x3xf32>
      %c5 = arith.constant 5 : index
      %c0_32 = arith.constant 0 : index
      %c0_33 = arith.constant 0 : index
      %46 = vector.load %arg2[%c5, %c0_32, %c0_33] : memref<25x3x128xf32, #tpu.memory_space<vmem>>, vector<1x3x128xf32>
      %47 = vector.shape_cast %46 : vector<1x3x128xf32> to vector<3x128xf32>
      %cst_34 = arith.constant dense<0.000000e+00> : vector<60x128xf32>
      %48 = tpu.matmul %45, %47, %cst_34 {dimension_numbers = #tpu.dot_dimension_numbers<[1], [0], [0], [1], [0, 0, 1, 1], [], []>} : vector<60x3xf32>, vector<3x128xf32>, vector<60x128xf32> -> vector<60x128xf32>
      %49 = arith.addf %41, %48 : vector<60x128xf32>
      %c33_i32 = arith.constant 33 : i32
      %50 = arith.addi %3, %c33_i32 : i32
      %c0_35 = arith.constant 0 : index
      %51 = arith.index_cast %50 : i32 to index
      %c0_36 = arith.constant 0 : index
      %52 = vector.load %arg1[%c0_35, %51, %c0_36] : memref<1x1024x3xf32, #tpu.memory_space<vmem>>, vector<1x60x3xf32>
      %53 = vector.shape_cast %52 : vector<1x60x3xf32> to vector<60x3xf32>
      %c6 = arith.constant 6 : index
      %c0_37 = arith.constant 0 : index
      %c0_38 = arith.constant 0 : index
      %54 = vector.load %arg2[%c6, %c0_37, %c0_38] : memref<25x3x128xf32, #tpu.memory_space<vmem>>, vector<1x3x128xf32>
      %55 = vector.shape_cast %54 : vector<1x3x128xf32> to vector<3x128xf32>
      %cst_39 = arith.constant dense<0.000000e+00> : vector<60x128xf32>
      %56 = tpu.matmul %53, %55, %cst_39 {dimension_numbers = #tpu.dot_dimension_numbers<[1], [0], [0], [1], [0, 0, 1, 1], [], []>} : vector<60x3xf32>, vector<3x128xf32>, vector<60x128xf32> -> vector<60x128xf32>
      %57 = arith.addf %49, %56 : vector<60x128xf32>
      %c34_i32 = arith.constant 34 : i32
      %58 = arith.addi %3, %c34_i32 : i32
      %c0_40 = arith.constant 0 : index
      %59 = arith.index_cast %58 : i32 to index
      %c0_41 = arith.constant 0 : index
      %60 = vector.load %arg1[%c0_40, %59, %c0_41] : memref<1x1024x3xf32, #tpu.memory_space<vmem>>, vector<1x60x3xf32>
      %61 = vector.shape_cast %60 : vector<1x60x3xf32> to vector<60x3xf32>
      %c7 = arith.constant 7 : index
      %c0_42 = arith.constant 0 : index
      %c0_43 = arith.constant 0 : index
      %62 = vector.load %arg2[%c7, %c0_42, %c0_43] : memref<25x3x128xf32, #tpu.memory_space<vmem>>, vector<1x3x128xf32>
      %63 = vector.shape_cast %62 : vector<1x3x128xf32> to vector<3x128xf32>
      %cst_44 = arith.constant dense<0.000000e+00> : vector<60x128xf32>
      %64 = tpu.matmul %61, %63, %cst_44 {dimension_numbers = #tpu.dot_dimension_numbers<[1], [0], [0], [1], [0, 0, 1, 1], [], []>} : vector<60x3xf32>, vector<3x128xf32>, vector<60x128xf32> -> vector<60x128xf32>
      %65 = arith.addf %57, %64 : vector<60x128xf32>
      %c35_i32 = arith.constant 35 : i32
      %66 = arith.addi %3, %c35_i32 : i32
      %c0_45 = arith.constant 0 : index
      %67 = arith.index_cast %66 : i32 to index
      %c0_46 = arith.constant 0 : index
      %68 = vector.load %arg1[%c0_45, %67, %c0_46] : memref<1x1024x3xf32, #tpu.memory_space<vmem>>, vector<1x60x3xf32>
      %69 = vector.shape_cast %68 : vector<1x60x3xf32> to vector<60x3xf32>
      %c8 = arith.constant 8 : index
      %c0_47 = arith.constant 0 : index
      %c0_48 = arith.constant 0 : index
      %70 = vector.load %arg2[%c8, %c0_47, %c0_48] : memref<25x3x128xf32, #tpu.memory_space<vmem>>, vector<1x3x128xf32>
      %71 = vector.shape_cast %70 : vector<1x3x128xf32> to vector<3x128xf32>
      %cst_49 = arith.constant dense<0.000000e+00> : vector<60x128xf32>
      %72 = tpu.matmul %69, %71, %cst_49 {dimension_numbers = #tpu.dot_dimension_numbers<[1], [0], [0], [1], [0, 0, 1, 1], [], []>} : vector<60x3xf32>, vector<3x128xf32>, vector<60x128xf32> -> vector<60x128xf32>
      %73 = arith.addf %65, %72 : vector<60x128xf32>
      %c36_i32 = arith.constant 36 : i32
      %74 = arith.addi %3, %c36_i32 : i32
      %c0_50 = arith.constant 0 : index
      %75 = arith.index_cast %74 : i32 to index
      %c0_51 = arith.constant 0 : index
      %76 = vector.load %arg1[%c0_50, %75, %c0_51] : memref<1x1024x3xf32, #tpu.memory_space<vmem>>, vector<1x60x3xf32>
      %77 = vector.shape_cast %76 : vector<1x60x3xf32> to vector<60x3xf32>
      %c9 = arith.constant 9 : index
      %c0_52 = arith.constant 0 : index
      %c0_53 = arith.constant 0 : index
      %78 = vector.load %arg2[%c9, %c0_52, %c0_53] : memref<25x3x128xf32, #tpu.memory_space<vmem>>, vector<1x3x128xf32>
      %79 = vector.shape_cast %78 : vector<1x3x128xf32> to vector<3x128xf32>
      %cst_54 = arith.constant dense<0.000000e+00> : vector<60x128xf32>
      %80 = tpu.matmul %77, %79, %cst_54 {dimension_numbers = #tpu.dot_dimension_numbers<[1], [0], [0], [1], [0, 0, 1, 1], [], []>} : vector<60x3xf32>, vector<3x128xf32>, vector<60x128xf32> -> vector<60x128xf32>
      %81 = arith.addf %73, %80 : vector<60x128xf32>
      %c64_i32 = arith.constant 64 : i32
      %82 = arith.addi %3, %c64_i32 : i32
      %c0_55 = arith.constant 0 : index
      %83 = arith.index_cast %82 : i32 to index
      %c0_56 = arith.constant 0 : index
      %84 = vector.load %arg1[%c0_55, %83, %c0_56] : memref<1x1024x3xf32, #tpu.memory_space<vmem>>, vector<1x60x3xf32>
      %85 = vector.shape_cast %84 : vector<1x60x3xf32> to vector<60x3xf32>
      %c10 = arith.constant 10 : index
      %c0_57 = arith.constant 0 : index
      %c0_58 = arith.constant 0 : index
      %86 = vector.load %arg2[%c10, %c0_57, %c0_58] : memref<25x3x128xf32, #tpu.memory_space<vmem>>, vector<1x3x128xf32>
      %87 = vector.shape_cast %86 : vector<1x3x128xf32> to vector<3x128xf32>
      %cst_59 = arith.constant dense<0.000000e+00> : vector<60x128xf32>
      %88 = tpu.matmul %85, %87, %cst_59 {dimension_numbers = #tpu.dot_dimension_numbers<[1], [0], [0], [1], [0, 0, 1, 1], [], []>} : vector<60x3xf32>, vector<3x128xf32>, vector<60x128xf32> -> vector<60x128xf32>
      %89 = arith.addf %81, %88 : vector<60x128xf32>
      %c65_i32 = arith.constant 65 : i32
      %90 = arith.addi %3, %c65_i32 : i32
      %c0_60 = arith.constant 0 : index
      %91 = arith.index_cast %90 : i32 to index
      %c0_61 = arith.constant 0 : index
      %92 = vector.load %arg1[%c0_60, %91, %c0_61] : memref<1x1024x3xf32, #tpu.memory_space<vmem>>, vector<1x60x3xf32>
      %93 = vector.shape_cast %92 : vector<1x60x3xf32> to vector<60x3xf32>
      %c11 = arith.constant 11 : index
      %c0_62 = arith.constant 0 : index
      %c0_63 = arith.constant 0 : index
      %94 = vector.load %arg2[%c11, %c0_62, %c0_63] : memref<25x3x128xf32, #tpu.memory_space<vmem>>, vector<1x3x128xf32>
      %95 = vector.shape_cast %94 : vector<1x3x128xf32> to vector<3x128xf32>
      %cst_64 = arith.constant dense<0.000000e+00> : vector<60x128xf32>
      %96 = tpu.matmul %93, %95, %cst_64 {dimension_numbers = #tpu.dot_dimension_numbers<[1], [0], [0], [1], [0, 0, 1, 1], [], []>} : vector<60x3xf32>, vector<3x128xf32>, vector<60x128xf32> -> vector<60x128xf32>
      %97 = arith.addf %89, %96 : vector<60x128xf32>
      %c66_i32 = arith.constant 66 : i32
      %98 = arith.addi %3, %c66_i32 : i32
      %c0_65 = arith.constant 0 : index
      %99 = arith.index_cast %98 : i32 to index
      %c0_66 = arith.constant 0 : index
      %100 = vector.load %arg1[%c0_65, %99, %c0_66] : memref<1x1024x3xf32, #tpu.memory_space<vmem>>, vector<1x60x3xf32>
      %101 = vector.shape_cast %100 : vector<1x60x3xf32> to vector<60x3xf32>
      %c12 = arith.constant 12 : index
      %c0_67 = arith.constant 0 : index
      %c0_68 = arith.constant 0 : index
      %102 = vector.load %arg2[%c12, %c0_67, %c0_68] : memref<25x3x128xf32, #tpu.memory_space<vmem>>, vector<1x3x128xf32>
      %103 = vector.shape_cast %102 : vector<1x3x128xf32> to vector<3x128xf32>
      %cst_69 = arith.constant dense<0.000000e+00> : vector<60x128xf32>
      %104 = tpu.matmul %101, %103, %cst_69 {dimension_numbers = #tpu.dot_dimension_numbers<[1], [0], [0], [1], [0, 0, 1, 1], [], []>} : vector<60x3xf32>, vector<3x128xf32>, vector<60x128xf32> -> vector<60x128xf32>
      %105 = arith.addf %97, %104 : vector<60x128xf32>
      %c67_i32 = arith.constant 67 : i32
      %106 = arith.addi %3, %c67_i32 : i32
      %c0_70 = arith.constant 0 : index
      %107 = arith.index_cast %106 : i32 to index
      %c0_71 = arith.constant 0 : index
      %108 = vector.load %arg1[%c0_70, %107, %c0_71] : memref<1x1024x3xf32, #tpu.memory_space<vmem>>, vector<1x60x3xf32>
      %109 = vector.shape_cast %108 : vector<1x60x3xf32> to vector<60x3xf32>
      %c13 = arith.constant 13 : index
      %c0_72 = arith.constant 0 : index
      %c0_73 = arith.constant 0 : index
      %110 = vector.load %arg2[%c13, %c0_72, %c0_73] : memref<25x3x128xf32, #tpu.memory_space<vmem>>, vector<1x3x128xf32>
      %111 = vector.shape_cast %110 : vector<1x3x128xf32> to vector<3x128xf32>
      %cst_74 = arith.constant dense<0.000000e+00> : vector<60x128xf32>
      %112 = tpu.matmul %109, %111, %cst_74 {dimension_numbers = #tpu.dot_dimension_numbers<[1], [0], [0], [1], [0, 0, 1, 1], [], []>} : vector<60x3xf32>, vector<3x128xf32>, vector<60x128xf32> -> vector<60x128xf32>
      %113 = arith.addf %105, %112 : vector<60x128xf32>
      %c68_i32 = arith.constant 68 : i32
      %114 = arith.addi %3, %c68_i32 : i32
      %c0_75 = arith.constant 0 : index
      %115 = arith.index_cast %114 : i32 to index
      %c0_76 = arith.constant 0 : index
      %116 = vector.load %arg1[%c0_75, %115, %c0_76] : memref<1x1024x3xf32, #tpu.memory_space<vmem>>, vector<1x60x3xf32>
      %117 = vector.shape_cast %116 : vector<1x60x3xf32> to vector<60x3xf32>
      %c14 = arith.constant 14 : index
      %c0_77 = arith.constant 0 : index
      %c0_78 = arith.constant 0 : index
      %118 = vector.load %arg2[%c14, %c0_77, %c0_78] : memref<25x3x128xf32, #tpu.memory_space<vmem>>, vector<1x3x128xf32>
      %119 = vector.shape_cast %118 : vector<1x3x128xf32> to vector<3x128xf32>
      %cst_79 = arith.constant dense<0.000000e+00> : vector<60x128xf32>
      %120 = tpu.matmul %117, %119, %cst_79 {dimension_numbers = #tpu.dot_dimension_numbers<[1], [0], [0], [1], [0, 0, 1, 1], [], []>} : vector<60x3xf32>, vector<3x128xf32>, vector<60x128xf32> -> vector<60x128xf32>
      %121 = arith.addf %113, %120 : vector<60x128xf32>
      %c96_i32 = arith.constant 96 : i32
      %122 = arith.addi %3, %c96_i32 : i32
      %c0_80 = arith.constant 0 : index
      %123 = arith.index_cast %122 : i32 to index
      %c0_81 = arith.constant 0 : index
      %124 = vector.load %arg1[%c0_80, %123, %c0_81] : memref<1x1024x3xf32, #tpu.memory_space<vmem>>, vector<1x60x3xf32>
      %125 = vector.shape_cast %124 : vector<1x60x3xf32> to vector<60x3xf32>
      %c15 = arith.constant 15 : index
      %c0_82 = arith.constant 0 : index
      %c0_83 = arith.constant 0 : index
      %126 = vector.load %arg2[%c15, %c0_82, %c0_83] : memref<25x3x128xf32, #tpu.memory_space<vmem>>, vector<1x3x128xf32>
      %127 = vector.shape_cast %126 : vector<1x3x128xf32> to vector<3x128xf32>
      %cst_84 = arith.constant dense<0.000000e+00> : vector<60x128xf32>
      %128 = tpu.matmul %125, %127, %cst_84 {dimension_numbers = #tpu.dot_dimension_numbers<[1], [0], [0], [1], [0, 0, 1, 1], [], []>} : vector<60x3xf32>, vector<3x128xf32>, vector<60x128xf32> -> vector<60x128xf32>
      %129 = arith.addf %121, %128 : vector<60x128xf32>
      %c97_i32 = arith.constant 97 : i32
      %130 = arith.addi %3, %c97_i32 : i32
      %c0_85 = arith.constant 0 : index
      %131 = arith.index_cast %130 : i32 to index
      %c0_86 = arith.constant 0 : index
      %132 = vector.load %arg1[%c0_85, %131, %c0_86] : memref<1x1024x3xf32, #tpu.memory_space<vmem>>, vector<1x60x3xf32>
      %133 = vector.shape_cast %132 : vector<1x60x3xf32> to vector<60x3xf32>
      %c16 = arith.constant 16 : index
      %c0_87 = arith.constant 0 : index
      %c0_88 = arith.constant 0 : index
      %134 = vector.load %arg2[%c16, %c0_87, %c0_88] : memref<25x3x128xf32, #tpu.memory_space<vmem>>, vector<1x3x128xf32>
      %135 = vector.shape_cast %134 : vector<1x3x128xf32> to vector<3x128xf32>
      %cst_89 = arith.constant dense<0.000000e+00> : vector<60x128xf32>
      %136 = tpu.matmul %133, %135, %cst_89 {dimension_numbers = #tpu.dot_dimension_numbers<[1], [0], [0], [1], [0, 0, 1, 1], [], []>} : vector<60x3xf32>, vector<3x128xf32>, vector<60x128xf32> -> vector<60x128xf32>
      %137 = arith.addf %129, %136 : vector<60x128xf32>
      %c98_i32 = arith.constant 98 : i32
      %138 = arith.addi %3, %c98_i32 : i32
      %c0_90 = arith.constant 0 : index
      %139 = arith.index_cast %138 : i32 to index
      %c0_91 = arith.constant 0 : index
      %140 = vector.load %arg1[%c0_90, %139, %c0_91] : memref<1x1024x3xf32, #tpu.memory_space<vmem>>, vector<1x60x3xf32>
      %141 = vector.shape_cast %140 : vector<1x60x3xf32> to vector<60x3xf32>
      %c17 = arith.constant 17 : index
      %c0_92 = arith.constant 0 : index
      %c0_93 = arith.constant 0 : index
      %142 = vector.load %arg2[%c17, %c0_92, %c0_93] : memref<25x3x128xf32, #tpu.memory_space<vmem>>, vector<1x3x128xf32>
      %143 = vector.shape_cast %142 : vector<1x3x128xf32> to vector<3x128xf32>
      %cst_94 = arith.constant dense<0.000000e+00> : vector<60x128xf32>
      %144 = tpu.matmul %141, %143, %cst_94 {dimension_numbers = #tpu.dot_dimension_numbers<[1], [0], [0], [1], [0, 0, 1, 1], [], []>} : vector<60x3xf32>, vector<3x128xf32>, vector<60x128xf32> -> vector<60x128xf32>
      %145 = arith.addf %137, %144 : vector<60x128xf32>
      %c99_i32 = arith.constant 99 : i32
      %146 = arith.addi %3, %c99_i32 : i32
      %c0_95 = arith.constant 0 : index
      %147 = arith.index_cast %146 : i32 to index
      %c0_96 = arith.constant 0 : index
      %148 = vector.load %arg1[%c0_95, %147, %c0_96] : memref<1x1024x3xf32, #tpu.memory_space<vmem>>, vector<1x60x3xf32>
      %149 = vector.shape_cast %148 : vector<1x60x3xf32> to vector<60x3xf32>
      %c18 = arith.constant 18 : index
      %c0_97 = arith.constant 0 : index
      %c0_98 = arith.constant 0 : index
      %150 = vector.load %arg2[%c18, %c0_97, %c0_98] : memref<25x3x128xf32, #tpu.memory_space<vmem>>, vector<1x3x128xf32>
      %151 = vector.shape_cast %150 : vector<1x3x128xf32> to vector<3x128xf32>
      %cst_99 = arith.constant dense<0.000000e+00> : vector<60x128xf32>
      %152 = tpu.matmul %149, %151, %cst_99 {dimension_numbers = #tpu.dot_dimension_numbers<[1], [0], [0], [1], [0, 0, 1, 1], [], []>} : vector<60x3xf32>, vector<3x128xf32>, vector<60x128xf32> -> vector<60x128xf32>
      %153 = arith.addf %145, %152 : vector<60x128xf32>
      %c100_i32 = arith.constant 100 : i32
      %154 = arith.addi %3, %c100_i32 : i32
      %c0_100 = arith.constant 0 : index
      %155 = arith.index_cast %154 : i32 to index
      %c0_101 = arith.constant 0 : index
      %156 = vector.load %arg1[%c0_100, %155, %c0_101] : memref<1x1024x3xf32, #tpu.memory_space<vmem>>, vector<1x60x3xf32>
      %157 = vector.shape_cast %156 : vector<1x60x3xf32> to vector<60x3xf32>
      %c19 = arith.constant 19 : index
      %c0_102 = arith.constant 0 : index
      %c0_103 = arith.constant 0 : index
      %158 = vector.load %arg2[%c19, %c0_102, %c0_103] : memref<25x3x128xf32, #tpu.memory_space<vmem>>, vector<1x3x128xf32>
      %159 = vector.shape_cast %158 : vector<1x3x128xf32> to vector<3x128xf32>
      %cst_104 = arith.constant dense<0.000000e+00> : vector<60x128xf32>
      %160 = tpu.matmul %157, %159, %cst_104 {dimension_numbers = #tpu.dot_dimension_numbers<[1], [0], [0], [1], [0, 0, 1, 1], [], []>} : vector<60x3xf32>, vector<3x128xf32>, vector<60x128xf32> -> vector<60x128xf32>
      %161 = arith.addf %153, %160 : vector<60x128xf32>
      %c128_i32 = arith.constant 128 : i32
      %162 = arith.addi %3, %c128_i32 : i32
      %c0_105 = arith.constant 0 : index
      %163 = arith.index_cast %162 : i32 to index
      %c0_106 = arith.constant 0 : index
      %164 = vector.load %arg1[%c0_105, %163, %c0_106] : memref<1x1024x3xf32, #tpu.memory_space<vmem>>, vector<1x60x3xf32>
      %165 = vector.shape_cast %164 : vector<1x60x3xf32> to vector<60x3xf32>
      %c20 = arith.constant 20 : index
      %c0_107 = arith.constant 0 : index
      %c0_108 = arith.constant 0 : index
      %166 = vector.load %arg2[%c20, %c0_107, %c0_108] : memref<25x3x128xf32, #tpu.memory_space<vmem>>, vector<1x3x128xf32>
      %167 = vector.shape_cast %166 : vector<1x3x128xf32> to vector<3x128xf32>
      %cst_109 = arith.constant dense<0.000000e+00> : vector<60x128xf32>
      %168 = tpu.matmul %165, %167, %cst_109 {dimension_numbers = #tpu.dot_dimension_numbers<[1], [0], [0], [1], [0, 0, 1, 1], [], []>} : vector<60x3xf32>, vector<3x128xf32>, vector<60x128xf32> -> vector<60x128xf32>
      %169 = arith.addf %161, %168 : vector<60x128xf32>
      %c129_i32 = arith.constant 129 : i32
      %170 = arith.addi %3, %c129_i32 : i32
      %c0_110 = arith.constant 0 : index
      %171 = arith.index_cast %170 : i32 to index
      %c0_111 = arith.constant 0 : index
      %172 = vector.load %arg1[%c0_110, %171, %c0_111] : memref<1x1024x3xf32, #tpu.memory_space<vmem>>, vector<1x60x3xf32>
      %173 = vector.shape_cast %172 : vector<1x60x3xf32> to vector<60x3xf32>
      %c21 = arith.constant 21 : index
      %c0_112 = arith.constant 0 : index
      %c0_113 = arith.constant 0 : index
      %174 = vector.load %arg2[%c21, %c0_112, %c0_113] : memref<25x3x128xf32, #tpu.memory_space<vmem>>, vector<1x3x128xf32>
      %175 = vector.shape_cast %174 : vector<1x3x128xf32> to vector<3x128xf32>
      %cst_114 = arith.constant dense<0.000000e+00> : vector<60x128xf32>
      %176 = tpu.matmul %173, %175, %cst_114 {dimension_numbers = #tpu.dot_dimension_numbers<[1], [0], [0], [1], [0, 0, 1, 1], [], []>} : vector<60x3xf32>, vector<3x128xf32>, vector<60x128xf32> -> vector<60x128xf32>
      %177 = arith.addf %169, %176 : vector<60x128xf32>
      %c130_i32 = arith.constant 130 : i32
      %178 = arith.addi %3, %c130_i32 : i32
      %c0_115 = arith.constant 0 : index
      %179 = arith.index_cast %178 : i32 to index
      %c0_116 = arith.constant 0 : index
      %180 = vector.load %arg1[%c0_115, %179, %c0_116] : memref<1x1024x3xf32, #tpu.memory_space<vmem>>, vector<1x60x3xf32>
      %181 = vector.shape_cast %180 : vector<1x60x3xf32> to vector<60x3xf32>
      %c22 = arith.constant 22 : index
      %c0_117 = arith.constant 0 : index
      %c0_118 = arith.constant 0 : index
      %182 = vector.load %arg2[%c22, %c0_117, %c0_118] : memref<25x3x128xf32, #tpu.memory_space<vmem>>, vector<1x3x128xf32>
      %183 = vector.shape_cast %182 : vector<1x3x128xf32> to vector<3x128xf32>
      %cst_119 = arith.constant dense<0.000000e+00> : vector<60x128xf32>
      %184 = tpu.matmul %181, %183, %cst_119 {dimension_numbers = #tpu.dot_dimension_numbers<[1], [0], [0], [1], [0, 0, 1, 1], [], []>} : vector<60x3xf32>, vector<3x128xf32>, vector<60x128xf32> -> vector<60x128xf32>
      %185 = arith.addf %177, %184 : vector<60x128xf32>
      %c131_i32 = arith.constant 131 : i32
      %186 = arith.addi %3, %c131_i32 : i32
      %c0_120 = arith.constant 0 : index
      %187 = arith.index_cast %186 : i32 to index
      %c0_121 = arith.constant 0 : index
      %188 = vector.load %arg1[%c0_120, %187, %c0_121] : memref<1x1024x3xf32, #tpu.memory_space<vmem>>, vector<1x60x3xf32>
      %189 = vector.shape_cast %188 : vector<1x60x3xf32> to vector<60x3xf32>
      %c23 = arith.constant 23 : index
      %c0_122 = arith.constant 0 : index
      %c0_123 = arith.constant 0 : index
      %190 = vector.load %arg2[%c23, %c0_122, %c0_123] : memref<25x3x128xf32, #tpu.memory_space<vmem>>, vector<1x3x128xf32>
      %191 = vector.shape_cast %190 : vector<1x3x128xf32> to vector<3x128xf32>
      %cst_124 = arith.constant dense<0.000000e+00> : vector<60x128xf32>
      %192 = tpu.matmul %189, %191, %cst_124 {dimension_numbers = #tpu.dot_dimension_numbers<[1], [0], [0], [1], [0, 0, 1, 1], [], []>} : vector<60x3xf32>, vector<3x128xf32>, vector<60x128xf32> -> vector<60x128xf32>
      %193 = arith.addf %185, %192 : vector<60x128xf32>
      %c132_i32 = arith.constant 132 : i32
      %194 = arith.addi %3, %c132_i32 : i32
      %c0_125 = arith.constant 0 : index
      %195 = arith.index_cast %194 : i32 to index
      %c0_126 = arith.constant 0 : index
      %196 = vector.load %arg1[%c0_125, %195, %c0_126] : memref<1x1024x3xf32, #tpu.memory_space<vmem>>, vector<1x60x3xf32>
      %197 = vector.shape_cast %196 : vector<1x60x3xf32> to vector<60x3xf32>
      %c24 = arith.constant 24 : index
      %c0_127 = arith.constant 0 : index
      %c0_128 = arith.constant 0 : index
      %198 = vector.load %arg2[%c24, %c0_127, %c0_128] : memref<25x3x128xf32, #tpu.memory_space<vmem>>, vector<1x3x128xf32>
      %199 = vector.shape_cast %198 : vector<1x3x128xf32> to vector<3x128xf32>
      %cst_129 = arith.constant dense<0.000000e+00> : vector<60x128xf32>
      %200 = tpu.matmul %197, %199, %cst_129 {dimension_numbers = #tpu.dot_dimension_numbers<[1], [0], [0], [1], [0, 0, 1, 1], [], []>} : vector<60x3xf32>, vector<3x128xf32>, vector<60x128xf32> -> vector<60x128xf32>
      %201 = arith.addf %193, %200 : vector<60x128xf32>
      %c0_130 = arith.constant 0 : index
      %c0_131 = arith.constant 0 : index
      %202 = vector.load %arg5[%c0_130, %c0_131] : memref<60x128xf32, #tpu.memory_space<vmem>>, vector<60x128xf32>
      tpu.vector_store %arg5[%c0_130, %c0_131], %201 {strides = array<i32>} : memref<60x128xf32, #tpu.memory_space<vmem>>, vector<60x128xf32>,
      %c0_132 = arith.constant 0 : index
      %c0_133 = arith.constant 0 : index
      %203 = tpu.strided_load %arg5[%c0_132, %c0_133] {strides = array<i32: 2, 1>} : memref<60x128xf32, #tpu.memory_space<vmem>>, vector<14x128xf32>
      %c1_134 = arith.constant 1 : index
      %c0_135 = arith.constant 0 : index
      %204 = tpu.strided_load %arg5[%c1_134, %c0_135] {strides = array<i32: 2, 1>} : memref<60x128xf32, #tpu.memory_space<vmem>>, vector<14x128xf32>
      %205 = arith.maximumf %203, %204 : vector<14x128xf32>
      %c32 = arith.constant 32 : index
      %c0_136 = arith.constant 0 : index
      %206 = tpu.strided_load %arg5[%c32, %c0_136] {strides = array<i32: 2, 1>} : memref<60x128xf32, #tpu.memory_space<vmem>>, vector<14x128xf32>
      %c33 = arith.constant 33 : index
      %c0_137 = arith.constant 0 : index
      %207 = tpu.strided_load %arg5[%c33, %c0_137] {strides = array<i32: 2, 1>} : memref<60x128xf32, #tpu.memory_space<vmem>>, vector<14x128xf32>
      %208 = arith.maximumf %206, %207 : vector<14x128xf32>
      %209 = arith.maximumf %205, %208 : vector<14x128xf32>
      %210 = vector.broadcast %0 : vector<1x128xf32> to vector<14x128xf32>
      %211 = arith.addf %209, %210 : vector<14x128xf32>
      %212 = math.tanh %211 : vector<14x128xf32>
      %c0_138 = arith.constant 0 : index
      %213 = arith.index_cast %arg6 : i32 to index
      %c0_139 = arith.constant 0 : index
      %c0_140 = arith.constant 0 : index
      %214 = vector.load %arg4[%c0_138, %213, %c0_139, %c0_140] : memref<1x14x14x128xf32, #tpu.memory_space<vmem>>, vector<1x1x14x128xf32>
      %215 = vector.shape_cast %214 : vector<1x1x14x128xf32> to vector<14x128xf32>
      %216 = vector.shape_cast %212 : vector<14x128xf32> to vector<1x1x14x128xf32>
      tpu.vector_store %arg4[%c0_138, %213, %c0_139, %c0_140], %216 {strides = array<i32>} : memref<1x14x14x128xf32, #tpu.memory_space<vmem>>, vector<1x1x14x128xf32>,
    }
    %c14_i32_1 = arith.constant 14 : i32
    return
  }
  func.func @transform_0(%arg0: i32) -> (i32, i32, i32) {
    %c0_i32 = arith.constant 0 : i32
    %c0_i32_0 = arith.constant 0 : i32
    %c0_i32_1 = arith.constant 0 : i32
    return %arg0, %c0_i32, %c0_i32_0 : i32, i32, i32
  }
  func.func @transform_1(%arg0: i32) -> (i32, i32, i32) {
    %c0_i32 = arith.constant 0 : i32
    %c0_i32_0 = arith.constant 0 : i32
    %c0_i32_1 = arith.constant 0 : i32
    %c0_i32_2 = arith.constant 0 : i32
    return %c0_i32, %c0_i32_0, %c0_i32_1 : i32, i32, i32
  }
  func.func @transform_2(%arg0: i32) -> (i32, i32) {
    %c0_i32 = arith.constant 0 : i32
    %c0_i32_0 = arith.constant 0 : i32
    %c0_i32_1 = arith.constant 0 : i32
    return %c0_i32, %c0_i32_0 : i32, i32
  }
  func.func @transform_3(%arg0: i32) -> (i32, i32, i32, i32) {
    %c0_i32 = arith.constant 0 : i32
    %c0_i32_0 = arith.constant 0 : i32
    %c0_i32_1 = arith.constant 0 : i32
    %c0_i32_2 = arith.constant 0 : i32
    return %arg0, %c0_i32, %c0_i32_0, %c0_i32_1 : i32, i32, i32, i32
  }
}

module attributes {stable_mosaic.version = 11 : i64} {
  func.func @_conv_tanh_pool_kernel(%arg0: i32, %arg1: memref<1x196x128xf32, #tpu.memory_space<vmem>>, %arg2: memref<9x128x128xf32, #tpu.memory_space<vmem>>, %arg3: memref<1x128xf32, #tpu.memory_space<vmem>>, %arg4: memref<1x6x6x128xf32, #tpu.memory_space<vmem>>, %arg5: memref<26x128xf32, #tpu.memory_space<vmem>>) attributes {dimension_semantics = [#tpu.dimension_semantics<parallel>], iteration_bounds = array<i64: 2>, scalar_prefetch = 0 : i64, scratch_operands = 1 : i64, tpu.core_type = #tpu.core_type<tc>, window_params = [{transform_indices = @transform_0, window_bounds = array<i64: 1, 196, 128>}, {pipeline_mode = #tpu.pipeline_mode<synchronous>, transform_indices = @transform_1, window_bounds = array<i64: 9, 128, 128>}, {pipeline_mode = #tpu.pipeline_mode<synchronous>, transform_indices = @transform_2, window_bounds = array<i64: 1, 128>}, {transform_indices = @transform_3, window_bounds = array<i64: 1, 6, 6, 128>}]} {
    %c0 = arith.constant 0 : index
    %c0_0 = arith.constant 0 : index
    %0 = vector.load %arg3[%c0, %c0_0] : memref<1x128xf32, #tpu.memory_space<vmem>>, vector<1x128xf32>
    %c0_i32 = arith.constant 0 : i32
    %c6_i32 = arith.constant 6 : i32
    %1 = arith.addi %c0_i32, %c6_i32 : i32
    %c1_i32 = arith.constant 1 : i32
    scf.for %arg6 = %c0_i32 to %1 step %c1_i32  : i32 {
      %c2_i32 = arith.constant 2 : i32
      %2 = arith.muli %c2_i32, %arg6 : i32
      %c14_i32 = arith.constant 14 : i32
      %3 = arith.muli %2, %c14_i32 : i32
      %c0_2 = arith.constant 0 : index
      %4 = arith.index_cast %3 : i32 to index
      %c0_3 = arith.constant 0 : index
      %5 = vector.load %arg1[%c0_2, %4, %c0_3] : memref<1x196x128xf32, #tpu.memory_space<vmem>>, vector<1x26x128xf32>
      %6 = vector.shape_cast %5 : vector<1x26x128xf32> to vector<26x128xf32>
      %c0_4 = arith.constant 0 : index
      %c0_5 = arith.constant 0 : index
      %c0_6 = arith.constant 0 : index
      %7 = vector.load %arg2[%c0_4, %c0_5, %c0_6] : memref<9x128x128xf32, #tpu.memory_space<vmem>>, vector<1x128x128xf32>
      %8 = vector.shape_cast %7 : vector<1x128x128xf32> to vector<128x128xf32>
      %cst = arith.constant dense<0.000000e+00> : vector<26x128xf32>
      %9 = tpu.matmul %6, %8, %cst {dimension_numbers = #tpu.dot_dimension_numbers<[1], [0], [0], [1], [0, 0, 1, 1], [], []>} : vector<26x128xf32>, vector<128x128xf32>, vector<26x128xf32> -> vector<26x128xf32>
      %c1_i32_7 = arith.constant 1 : i32
      %10 = arith.addi %3, %c1_i32_7 : i32
      %c0_8 = arith.constant 0 : index
      %11 = arith.index_cast %10 : i32 to index
      %c0_9 = arith.constant 0 : index
      %12 = vector.load %arg1[%c0_8, %11, %c0_9] : memref<1x196x128xf32, #tpu.memory_space<vmem>>, vector<1x26x128xf32>
      %13 = vector.shape_cast %12 : vector<1x26x128xf32> to vector<26x128xf32>
      %c1 = arith.constant 1 : index
      %c0_10 = arith.constant 0 : index
      %c0_11 = arith.constant 0 : index
      %14 = vector.load %arg2[%c1, %c0_10, %c0_11] : memref<9x128x128xf32, #tpu.memory_space<vmem>>, vector<1x128x128xf32>
      %15 = vector.shape_cast %14 : vector<1x128x128xf32> to vector<128x128xf32>
      %cst_12 = arith.constant dense<0.000000e+00> : vector<26x128xf32>
      %16 = tpu.matmul %13, %15, %cst_12 {dimension_numbers = #tpu.dot_dimension_numbers<[1], [0], [0], [1], [0, 0, 1, 1], [], []>} : vector<26x128xf32>, vector<128x128xf32>, vector<26x128xf32> -> vector<26x128xf32>
      %17 = arith.addf %9, %16 : vector<26x128xf32>
      %c2_i32_13 = arith.constant 2 : i32
      %18 = arith.addi %3, %c2_i32_13 : i32
      %c0_14 = arith.constant 0 : index
      %19 = arith.index_cast %18 : i32 to index
      %c0_15 = arith.constant 0 : index
      %20 = vector.load %arg1[%c0_14, %19, %c0_15] : memref<1x196x128xf32, #tpu.memory_space<vmem>>, vector<1x26x128xf32>
      %21 = vector.shape_cast %20 : vector<1x26x128xf32> to vector<26x128xf32>
      %c2 = arith.constant 2 : index
      %c0_16 = arith.constant 0 : index
      %c0_17 = arith.constant 0 : index
      %22 = vector.load %arg2[%c2, %c0_16, %c0_17] : memref<9x128x128xf32, #tpu.memory_space<vmem>>, vector<1x128x128xf32>
      %23 = vector.shape_cast %22 : vector<1x128x128xf32> to vector<128x128xf32>
      %cst_18 = arith.constant dense<0.000000e+00> : vector<26x128xf32>
      %24 = tpu.matmul %21, %23, %cst_18 {dimension_numbers = #tpu.dot_dimension_numbers<[1], [0], [0], [1], [0, 0, 1, 1], [], []>} : vector<26x128xf32>, vector<128x128xf32>, vector<26x128xf32> -> vector<26x128xf32>
      %25 = arith.addf %17, %24 : vector<26x128xf32>
      %c14_i32_19 = arith.constant 14 : i32
      %26 = arith.addi %3, %c14_i32_19 : i32
      %c0_20 = arith.constant 0 : index
      %27 = arith.index_cast %26 : i32 to index
      %c0_21 = arith.constant 0 : index
      %28 = vector.load %arg1[%c0_20, %27, %c0_21] : memref<1x196x128xf32, #tpu.memory_space<vmem>>, vector<1x26x128xf32>
      %29 = vector.shape_cast %28 : vector<1x26x128xf32> to vector<26x128xf32>
      %c3 = arith.constant 3 : index
      %c0_22 = arith.constant 0 : index
      %c0_23 = arith.constant 0 : index
      %30 = vector.load %arg2[%c3, %c0_22, %c0_23] : memref<9x128x128xf32, #tpu.memory_space<vmem>>, vector<1x128x128xf32>
      %31 = vector.shape_cast %30 : vector<1x128x128xf32> to vector<128x128xf32>
      %cst_24 = arith.constant dense<0.000000e+00> : vector<26x128xf32>
      %32 = tpu.matmul %29, %31, %cst_24 {dimension_numbers = #tpu.dot_dimension_numbers<[1], [0], [0], [1], [0, 0, 1, 1], [], []>} : vector<26x128xf32>, vector<128x128xf32>, vector<26x128xf32> -> vector<26x128xf32>
      %33 = arith.addf %25, %32 : vector<26x128xf32>
      %c15_i32 = arith.constant 15 : i32
      %34 = arith.addi %3, %c15_i32 : i32
      %c0_25 = arith.constant 0 : index
      %35 = arith.index_cast %34 : i32 to index
      %c0_26 = arith.constant 0 : index
      %36 = vector.load %arg1[%c0_25, %35, %c0_26] : memref<1x196x128xf32, #tpu.memory_space<vmem>>, vector<1x26x128xf32>
      %37 = vector.shape_cast %36 : vector<1x26x128xf32> to vector<26x128xf32>
      %c4 = arith.constant 4 : index
      %c0_27 = arith.constant 0 : index
      %c0_28 = arith.constant 0 : index
      %38 = vector.load %arg2[%c4, %c0_27, %c0_28] : memref<9x128x128xf32, #tpu.memory_space<vmem>>, vector<1x128x128xf32>
      %39 = vector.shape_cast %38 : vector<1x128x128xf32> to vector<128x128xf32>
      %cst_29 = arith.constant dense<0.000000e+00> : vector<26x128xf32>
      %40 = tpu.matmul %37, %39, %cst_29 {dimension_numbers = #tpu.dot_dimension_numbers<[1], [0], [0], [1], [0, 0, 1, 1], [], []>} : vector<26x128xf32>, vector<128x128xf32>, vector<26x128xf32> -> vector<26x128xf32>
      %41 = arith.addf %33, %40 : vector<26x128xf32>
      %c16_i32 = arith.constant 16 : i32
      %42 = arith.addi %3, %c16_i32 : i32
      %c0_30 = arith.constant 0 : index
      %43 = arith.index_cast %42 : i32 to index
      %c0_31 = arith.constant 0 : index
      %44 = vector.load %arg1[%c0_30, %43, %c0_31] : memref<1x196x128xf32, #tpu.memory_space<vmem>>, vector<1x26x128xf32>
      %45 = vector.shape_cast %44 : vector<1x26x128xf32> to vector<26x128xf32>
      %c5 = arith.constant 5 : index
      %c0_32 = arith.constant 0 : index
      %c0_33 = arith.constant 0 : index
      %46 = vector.load %arg2[%c5, %c0_32, %c0_33] : memref<9x128x128xf32, #tpu.memory_space<vmem>>, vector<1x128x128xf32>
      %47 = vector.shape_cast %46 : vector<1x128x128xf32> to vector<128x128xf32>
      %cst_34 = arith.constant dense<0.000000e+00> : vector<26x128xf32>
      %48 = tpu.matmul %45, %47, %cst_34 {dimension_numbers = #tpu.dot_dimension_numbers<[1], [0], [0], [1], [0, 0, 1, 1], [], []>} : vector<26x128xf32>, vector<128x128xf32>, vector<26x128xf32> -> vector<26x128xf32>
      %49 = arith.addf %41, %48 : vector<26x128xf32>
      %c28_i32 = arith.constant 28 : i32
      %50 = arith.addi %3, %c28_i32 : i32
      %c0_35 = arith.constant 0 : index
      %51 = arith.index_cast %50 : i32 to index
      %c0_36 = arith.constant 0 : index
      %52 = vector.load %arg1[%c0_35, %51, %c0_36] : memref<1x196x128xf32, #tpu.memory_space<vmem>>, vector<1x26x128xf32>
      %53 = vector.shape_cast %52 : vector<1x26x128xf32> to vector<26x128xf32>
      %c6 = arith.constant 6 : index
      %c0_37 = arith.constant 0 : index
      %c0_38 = arith.constant 0 : index
      %54 = vector.load %arg2[%c6, %c0_37, %c0_38] : memref<9x128x128xf32, #tpu.memory_space<vmem>>, vector<1x128x128xf32>
      %55 = vector.shape_cast %54 : vector<1x128x128xf32> to vector<128x128xf32>
      %cst_39 = arith.constant dense<0.000000e+00> : vector<26x128xf32>
      %56 = tpu.matmul %53, %55, %cst_39 {dimension_numbers = #tpu.dot_dimension_numbers<[1], [0], [0], [1], [0, 0, 1, 1], [], []>} : vector<26x128xf32>, vector<128x128xf32>, vector<26x128xf32> -> vector<26x128xf32>
      %57 = arith.addf %49, %56 : vector<26x128xf32>
      %c29_i32 = arith.constant 29 : i32
      %58 = arith.addi %3, %c29_i32 : i32
      %c0_40 = arith.constant 0 : index
      %59 = arith.index_cast %58 : i32 to index
      %c0_41 = arith.constant 0 : index
      %60 = vector.load %arg1[%c0_40, %59, %c0_41] : memref<1x196x128xf32, #tpu.memory_space<vmem>>, vector<1x26x128xf32>
      %61 = vector.shape_cast %60 : vector<1x26x128xf32> to vector<26x128xf32>
      %c7 = arith.constant 7 : index
      %c0_42 = arith.constant 0 : index
      %c0_43 = arith.constant 0 : index
      %62 = vector.load %arg2[%c7, %c0_42, %c0_43] : memref<9x128x128xf32, #tpu.memory_space<vmem>>, vector<1x128x128xf32>
      %63 = vector.shape_cast %62 : vector<1x128x128xf32> to vector<128x128xf32>
      %cst_44 = arith.constant dense<0.000000e+00> : vector<26x128xf32>
      %64 = tpu.matmul %61, %63, %cst_44 {dimension_numbers = #tpu.dot_dimension_numbers<[1], [0], [0], [1], [0, 0, 1, 1], [], []>} : vector<26x128xf32>, vector<128x128xf32>, vector<26x128xf32> -> vector<26x128xf32>
      %65 = arith.addf %57, %64 : vector<26x128xf32>
      %c30_i32 = arith.constant 30 : i32
      %66 = arith.addi %3, %c30_i32 : i32
      %c0_45 = arith.constant 0 : index
      %67 = arith.index_cast %66 : i32 to index
      %c0_46 = arith.constant 0 : index
      %68 = vector.load %arg1[%c0_45, %67, %c0_46] : memref<1x196x128xf32, #tpu.memory_space<vmem>>, vector<1x26x128xf32>
      %69 = vector.shape_cast %68 : vector<1x26x128xf32> to vector<26x128xf32>
      %c8 = arith.constant 8 : index
      %c0_47 = arith.constant 0 : index
      %c0_48 = arith.constant 0 : index
      %70 = vector.load %arg2[%c8, %c0_47, %c0_48] : memref<9x128x128xf32, #tpu.memory_space<vmem>>, vector<1x128x128xf32>
      %71 = vector.shape_cast %70 : vector<1x128x128xf32> to vector<128x128xf32>
      %cst_49 = arith.constant dense<0.000000e+00> : vector<26x128xf32>
      %72 = tpu.matmul %69, %71, %cst_49 {dimension_numbers = #tpu.dot_dimension_numbers<[1], [0], [0], [1], [0, 0, 1, 1], [], []>} : vector<26x128xf32>, vector<128x128xf32>, vector<26x128xf32> -> vector<26x128xf32>
      %73 = arith.addf %65, %72 : vector<26x128xf32>
      %c0_50 = arith.constant 0 : index
      %c0_51 = arith.constant 0 : index
      %74 = vector.load %arg5[%c0_50, %c0_51] : memref<26x128xf32, #tpu.memory_space<vmem>>, vector<26x128xf32>
      tpu.vector_store %arg5[%c0_50, %c0_51], %73 {strides = array<i32>} : memref<26x128xf32, #tpu.memory_space<vmem>>, vector<26x128xf32>,
      %c0_52 = arith.constant 0 : index
      %c0_53 = arith.constant 0 : index
      %75 = tpu.strided_load %arg5[%c0_52, %c0_53] {strides = array<i32: 2, 1>} : memref<26x128xf32, #tpu.memory_space<vmem>>, vector<6x128xf32>
      %c1_54 = arith.constant 1 : index
      %c0_55 = arith.constant 0 : index
      %76 = tpu.strided_load %arg5[%c1_54, %c0_55] {strides = array<i32: 2, 1>} : memref<26x128xf32, #tpu.memory_space<vmem>>, vector<6x128xf32>
      %77 = arith.maximumf %75, %76 : vector<6x128xf32>
      %c14 = arith.constant 14 : index
      %c0_56 = arith.constant 0 : index
      %78 = tpu.strided_load %arg5[%c14, %c0_56] {strides = array<i32: 2, 1>} : memref<26x128xf32, #tpu.memory_space<vmem>>, vector<6x128xf32>
      %c15 = arith.constant 15 : index
      %c0_57 = arith.constant 0 : index
      %79 = tpu.strided_load %arg5[%c15, %c0_57] {strides = array<i32: 2, 1>} : memref<26x128xf32, #tpu.memory_space<vmem>>, vector<6x128xf32>
      %80 = arith.maximumf %78, %79 : vector<6x128xf32>
      %81 = arith.maximumf %77, %80 : vector<6x128xf32>
      %82 = vector.broadcast %0 : vector<1x128xf32> to vector<6x128xf32>
      %83 = arith.addf %81, %82 : vector<6x128xf32>
      %84 = math.tanh %83 : vector<6x128xf32>
      %c0_58 = arith.constant 0 : index
      %85 = arith.index_cast %arg6 : i32 to index
      %c0_59 = arith.constant 0 : index
      %c0_60 = arith.constant 0 : index
      %86 = vector.load %arg4[%c0_58, %85, %c0_59, %c0_60] : memref<1x6x6x128xf32, #tpu.memory_space<vmem>>, vector<1x1x6x128xf32>
      %87 = vector.shape_cast %86 : vector<1x1x6x128xf32> to vector<6x128xf32>
      %88 = vector.shape_cast %84 : vector<6x128xf32> to vector<1x1x6x128xf32>
      tpu.vector_store %arg4[%c0_58, %85, %c0_59, %c0_60], %88 {strides = array<i32>} : memref<1x6x6x128xf32, #tpu.memory_space<vmem>>, vector<1x1x6x128xf32>,
    }
    %c6_i32_1 = arith.constant 6 : i32
    return
  }
  func.func @transform_0(%arg0: i32) -> (i32, i32, i32) {
    %c0_i32 = arith.constant 0 : i32
    %c0_i32_0 = arith.constant 0 : i32
    %c0_i32_1 = arith.constant 0 : i32
    return %arg0, %c0_i32, %c0_i32_0 : i32, i32, i32
  }
  func.func @transform_1(%arg0: i32) -> (i32, i32, i32) {
    %c0_i32 = arith.constant 0 : i32
    %c0_i32_0 = arith.constant 0 : i32
    %c0_i32_1 = arith.constant 0 : i32
    %c0_i32_2 = arith.constant 0 : i32
    return %c0_i32, %c0_i32_0, %c0_i32_1 : i32, i32, i32
  }
  func.func @transform_2(%arg0: i32) -> (i32, i32) {
    %c0_i32 = arith.constant 0 : i32
    %c0_i32_0 = arith.constant 0 : i32
    %c0_i32_1 = arith.constant 0 : i32
    return %c0_i32, %c0_i32_0 : i32, i32
  }
  func.func @transform_3(%arg0: i32) -> (i32, i32, i32, i32) {
    %c0_i32 = arith.constant 0 : i32
    %c0_i32_0 = arith.constant 0 : i32
    %c0_i32_1 = arith.constant 0 : i32
    %c0_i32_2 = arith.constant 0 : i32
    return %arg0, %c0_i32, %c0_i32_0, %c0_i32_1 : i32, i32, i32, i32
  }
}

module attributes {stable_mosaic.version = 11 : i64} {
  func.func @_fc3_kernel(%arg0: i32, %arg1: memref<2x4608xf32, #tpu.memory_space<vmem>>, %arg2: memref<4608x128xf32, #tpu.memory_space<vmem>>, %arg3: memref<1x128xf32, #tpu.memory_space<vmem>>, %arg4: memref<128x128xf32, #tpu.memory_space<vmem>>, %arg5: memref<1x128xf32, #tpu.memory_space<vmem>>, %arg6: memref<128x128xf32, #tpu.memory_space<vmem>>, %arg7: memref<1x128xf32, #tpu.memory_space<vmem>>, %arg8: memref<2x128xf32, #tpu.memory_space<vmem>>) attributes {dimension_semantics = [#tpu.dimension_semantics<parallel>], iteration_bounds = array<i64: 1>, scalar_prefetch = 0 : i64, scratch_operands = 0 : i64, tpu.core_type = #tpu.core_type<tc>, window_params = [{transform_indices = @transform_0, window_bounds = array<i64: 2, 4608>}, {pipeline_mode = #tpu.pipeline_mode<synchronous>, transform_indices = @transform_1, window_bounds = array<i64: 4608, 128>}, {pipeline_mode = #tpu.pipeline_mode<synchronous>, transform_indices = @transform_2, window_bounds = array<i64: 1, 128>}, {pipeline_mode = #tpu.pipeline_mode<synchronous>, transform_indices = @transform_3, window_bounds = array<i64: 128, 128>}, {pipeline_mode = #tpu.pipeline_mode<synchronous>, transform_indices = @transform_4, window_bounds = array<i64: 1, 128>}, {pipeline_mode = #tpu.pipeline_mode<synchronous>, transform_indices = @transform_5, window_bounds = array<i64: 128, 128>}, {pipeline_mode = #tpu.pipeline_mode<synchronous>, transform_indices = @transform_6, window_bounds = array<i64: 1, 128>}, {transform_indices = @transform_7, window_bounds = array<i64: 2, 128>}]} {
    %c0 = arith.constant 0 : index
    %c0_0 = arith.constant 0 : index
    %0 = vector.load %arg1[%c0, %c0_0] : memref<2x4608xf32, #tpu.memory_space<vmem>>, vector<2x4608xf32>
    %c0_1 = arith.constant 0 : index
    %c0_2 = arith.constant 0 : index
    %1 = vector.load %arg2[%c0_1, %c0_2] : memref<4608x128xf32, #tpu.memory_space<vmem>>, vector<4608x128xf32>
    %cst = arith.constant dense<0.000000e+00> : vector<2x128xf32>
    %2 = tpu.matmul %0, %1, %cst {dimension_numbers = #tpu.dot_dimension_numbers<[1], [0], [0], [1], [0, 0, 1, 1], [], []>} : vector<2x4608xf32>, vector<4608x128xf32>, vector<2x128xf32> -> vector<2x128xf32>
    %c0_3 = arith.constant 0 : index
    %c0_4 = arith.constant 0 : index
    %3 = vector.load %arg3[%c0_3, %c0_4] : memref<1x128xf32, #tpu.memory_space<vmem>>, vector<1x128xf32>
    %4 = vector.broadcast %3 : vector<1x128xf32> to vector<2x128xf32>
    %5 = arith.addf %2, %4 : vector<2x128xf32>
    %6 = math.tanh %5 : vector<2x128xf32>
    %c0_5 = arith.constant 0 : index
    %c0_6 = arith.constant 0 : index
    %7 = vector.load %arg4[%c0_5, %c0_6] : memref<128x128xf32, #tpu.memory_space<vmem>>, vector<128x128xf32>
    %cst_7 = arith.constant dense<0.000000e+00> : vector<2x128xf32>
    %8 = tpu.matmul %6, %7, %cst_7 {dimension_numbers = #tpu.dot_dimension_numbers<[1], [0], [0], [1], [0, 0, 1, 1], [], []>} : vector<2x128xf32>, vector<128x128xf32>, vector<2x128xf32> -> vector<2x128xf32>
    %c0_8 = arith.constant 0 : index
    %c0_9 = arith.constant 0 : index
    %9 = vector.load %arg5[%c0_8, %c0_9] : memref<1x128xf32, #tpu.memory_space<vmem>>, vector<1x128xf32>
    %10 = vector.broadcast %9 : vector<1x128xf32> to vector<2x128xf32>
    %11 = arith.addf %8, %10 : vector<2x128xf32>
    %12 = math.tanh %11 : vector<2x128xf32>
    %c0_10 = arith.constant 0 : index
    %c0_11 = arith.constant 0 : index
    %13 = vector.load %arg6[%c0_10, %c0_11] : memref<128x128xf32, #tpu.memory_space<vmem>>, vector<128x128xf32>
    %cst_12 = arith.constant dense<0.000000e+00> : vector<2x128xf32>
    %14 = tpu.matmul %12, %13, %cst_12 {dimension_numbers = #tpu.dot_dimension_numbers<[1], [0], [0], [1], [0, 0, 1, 1], [], []>} : vector<2x128xf32>, vector<128x128xf32>, vector<2x128xf32> -> vector<2x128xf32>
    %c0_13 = arith.constant 0 : index
    %c0_14 = arith.constant 0 : index
    %15 = vector.load %arg7[%c0_13, %c0_14] : memref<1x128xf32, #tpu.memory_space<vmem>>, vector<1x128xf32>
    %16 = vector.broadcast %15 : vector<1x128xf32> to vector<2x128xf32>
    %17 = arith.addf %14, %16 : vector<2x128xf32>
    %c0_15 = arith.constant 0 : index
    %c0_16 = arith.constant 0 : index
    %18 = vector.load %arg8[%c0_15, %c0_16] : memref<2x128xf32, #tpu.memory_space<vmem>>, vector<2x128xf32>
    tpu.vector_store %arg8[%c0_15, %c0_16], %17 {strides = array<i32>} : memref<2x128xf32, #tpu.memory_space<vmem>>, vector<2x128xf32>,
    return
  }
  func.func @transform_0(%arg0: i32) -> (i32, i32) {
    %c0_i32 = arith.constant 0 : i32
    %c0_i32_0 = arith.constant 0 : i32
    return %arg0, %c0_i32 : i32, i32
  }
  func.func @transform_1(%arg0: i32) -> (i32, i32) {
    %c0_i32 = arith.constant 0 : i32
    %c0_i32_0 = arith.constant 0 : i32
    %c0_i32_1 = arith.constant 0 : i32
    return %c0_i32, %c0_i32_0 : i32, i32
  }
  func.func @transform_2(%arg0: i32) -> (i32, i32) {
    %c0_i32 = arith.constant 0 : i32
    %c0_i32_0 = arith.constant 0 : i32
    %c0_i32_1 = arith.constant 0 : i32
    return %c0_i32, %c0_i32_0 : i32, i32
  }
  func.func @transform_3(%arg0: i32) -> (i32, i32) {
    %c0_i32 = arith.constant 0 : i32
    %c0_i32_0 = arith.constant 0 : i32
    %c0_i32_1 = arith.constant 0 : i32
    return %c0_i32, %c0_i32_0 : i32, i32
  }
  func.func @transform_4(%arg0: i32) -> (i32, i32) {
    %c0_i32 = arith.constant 0 : i32
    %c0_i32_0 = arith.constant 0 : i32
    %c0_i32_1 = arith.constant 0 : i32
    return %c0_i32, %c0_i32_0 : i32, i32
  }
  func.func @transform_5(%arg0: i32) -> (i32, i32) {
    %c0_i32 = arith.constant 0 : i32
    %c0_i32_0 = arith.constant 0 : i32
    %c0_i32_1 = arith.constant 0 : i32
    return %c0_i32, %c0_i32_0 : i32, i32
  }
  func.func @transform_6(%arg0: i32) -> (i32, i32) {
    %c0_i32 = arith.constant 0 : i32
    %c0_i32_0 = arith.constant 0 : i32
    %c0_i32_1 = arith.constant 0 : i32
    return %c0_i32, %c0_i32_0 : i32, i32
  }
  func.func @transform_7(%arg0: i32) -> (i32, i32) {
    %c0_i32 = arith.constant 0 : i32
    %c0_i32_0 = arith.constant 0 : i32
    return %arg0, %c0_i32 : i32, i32
  }
}

</mosaic_0001>

<llo_original>
// kernel: cnn_net3_forward.4
$region0: #{cnn_net3_forward.4}
  #allocation0 [shape = 'u32[]', space=smem, size = 0x4, offset = 0x4, fixed_abs, tag = 'smem constant byte address 0x4 - core index']
  #allocation1 [shape = 'u32[144,128]{1,0:T(1,128)}', space=vmem, size = 0x12000, scoped, tag = 'internal scratch']
  #allocation2 [shape = 'f32[26,128]{1,0:T(8,128)}', space=vmem, size = 0x4000, scoped, tag = 'scratch operand']
  %s0 = inlined_call_operand.vmem [shape: f32[2,196,128], index: 0, kind: input, shape index: {}]
  %s1 = inlined_call_operand.vmem [shape: f32[9,128,128], index: 1, kind: input, shape index: {}]
  %s2 = inlined_call_operand.vmem [shape: f32[1,128], index: 2, kind: input, shape index: {}]
  %s3 = inlined_call_operand.vmem [shape: f32[2,6,6,128], index: 3, kind: output, shape index: {}]
  %s4 = sld [smem:[#allocation0]]
  $region52: #{cnn_net3_forward.4} parent=0
    _
  %s6 = ssub.s32 1, %s4
  %s7 = scalar_select 0, %s6, %s4
  loop: start=0, step=1, limit=4
  $region2: #{cnn_net3_forward.4} parent=0 // loop_pre_header
    _
  $region3: #{cnn_net3_forward.4} parent=0 // loop_header
    %s9 = sphi 0, %s13
    %p10 = scmp.ge.s32.totalorder %s9, 4
    %s19 = sphi 0, %s21
    %s22 = sphi 0, %s19
    %s23 = sphi 0, %s22
    %s39 = sphi 0, %s23
    %s43 = sphi 0, %s43
    %s45 = sphi 0, %s43
    %s46 = sphi 0, %s45
    %s60 = sphi 0, %s46
    %s64 = sphi 0, %s64
    %s66 = sphi 0, %s64
    %s67 = sphi 0, %s66
    %s81 = sphi 0, %s67
    %s87 = sphi 0, %s89
    %s90 = sphi 0, %s87
    %s91 = sphi 0, %s90
    %s107 = sphi 0, %s91
  $region4: #{cnn_net3_forward.4} parent=0 // loop_header_branch
    %12 = sbr.rel (%p10) target = $region8
  $region5: #{cnn_net3_forward.4} parent=0 // loop_body
    %s14 = ssub.s32 %s9, 1
    %s15 = ssub.s32 %s9, 2
    %s16 = sadd.s32 %s9, 1
    %s17 = ssub.s32 %s9, %s16
    %p18 = scmp.eq.s32.totalorder %s17, 0
    %s20 = sadd.s32 %s19, 1
    %s21 = scalar_select %p18, %s19, %s20
    %p24 = pneg %p18
    %p25 = scmp.eq.s32.totalorder %s9, 1
    %p26 = por %p24, %p25
    %p27 = scmp.ne.s32.totalorder %s19, %s22
    %p28 = scmp.eq.s32.totalorder %s9, 0
    %p29 = por %p27, %p28
    %p30 = scmp.ne.s32.totalorder %s19, %s22
    %p31 = scmp.eq.s32.totalorder %s14, 1
    %p32 = por %p30, %p31
    %p33 = scmp.ne.s32.totalorder %s22, %s23
    %p34 = scmp.eq.s32.totalorder %s14, 0
    %p35 = por %p33, %p34
    %p36 = scmp.ne.s32.totalorder %s22, %s23
    %p37 = scmp.eq.s32.totalorder %s15, 1
    %p38 = por %p36, %p37
    %p40 = scmp.ne.s32.totalorder %s23, %s39
    %p41 = scmp.eq.s32.totalorder %s15, 0
    %p42 = por %p40, %p41
    %s44 = sadd.s32 %s43, 1
    %p47 = scmp.eq.s32.totalorder %s9, 1
    %p48 = scmp.ne.s32.totalorder %s43, %s45
    %p49 = scmp.eq.s32.totalorder %s9, 0
    %p50 = por %p48, %p49
    %p51 = scmp.ne.s32.totalorder %s43, %s45
    %p52 = scmp.eq.s32.totalorder %s14, 1
    %p53 = por %p51, %p52
    %p54 = scmp.ne.s32.totalorder %s45, %s46
    %p55 = scmp.eq.s32.totalorder %s14, 0
    %p56 = por %p54, %p55
    %p57 = scmp.ne.s32.totalorder %s45, %s46
    %p58 = scmp.eq.s32.totalorder %s15, 1
    %p59 = por %p57, %p58
    %p61 = scmp.ne.s32.totalorder %s46, %s60
    %p62 = scmp.eq.s32.totalorder %s15, 0
    %p63 = por %p61, %p62
    %s65 = sadd.s32 %s64, 1
    %p68 = scmp.eq.s32.totalorder %s9, 1
    %p69 = scmp.ne.s32.totalorder %s64, %s66
    %p70 = scmp.eq.s32.totalorder %s9, 0
    %p71 = por %p69, %p70
    %p72 = scmp.ne.s32.totalorder %s64, %s66
    %p73 = scmp.eq.s32.totalorder %s14, 1
    %p74 = por %p72, %p73
    %p75 = scmp.ne.s32.totalorder %s66, %s67
    %p76 = scmp.eq.s32.totalorder %s14, 0
    %p77 = por %p75, %p76
    %p78 = scmp.ne.s32.totalorder %s66, %s67
    %p79 = scmp.eq.s32.totalorder %s15, 1
    %p80 = por %p78, %p79
    %p82 = scmp.ne.s32.totalorder %s67, %s81
    %p83 = scmp.eq.s32.totalorder %s15, 0
    %p84 = por %p82, %p83
    %s85 = ssub.s32 %s9, %s16
    %p86 = scmp.eq.s32.totalorder %s85, 0
    %s88 = sadd.s32 %s87, 1
    %s89 = scalar_select %p86, %s87, %s88
    %p92 = pneg %p86
    %p93 = scmp.eq.s32.totalorder %s9, 1
    %p94 = por %p92, %p93
    %p95 = scmp.ne.s32.totalorder %s87, %s90
    %p96 = scmp.eq.s32.totalorder %s9, 0
    %p97 = por %p95, %p96
    %p98 = scmp.ne.s32.totalorder %s87, %s90
    %p99 = scmp.eq.s32.totalorder %s14, 1
    %p100 = por %p98, %p99
    %p101 = scmp.ne.s32.totalorder %s90, %s91
    %p102 = scmp.eq.s32.totalorder %s14, 0
    %p103 = por %p101, %p102
    %p104 = scmp.ne.s32.totalorder %s90, %s91
    %p105 = scmp.eq.s32.totalorder %s15, 1
    %p106 = por %p104, %p105
    %p108 = scmp.ne.s32.totalorder %s91, %s107
    %p109 = scmp.eq.s32.totalorder %s15, 0
    %p110 = por %p108, %p109
    %p111 = scmp.le.s32.totalorder 1, %s9
    %p112 = scmp.lt.s32.totalorder %s9, 3
    %p113 = pnand %p111, %p112
    %p114 = pneg %p113
    // Predicated region
    $region9: #{cnn_net3_forward.4} parent=5 // pred_check
      _
    $region10: #{cnn_net3_forward.4} parent=5 // pred_check_branch
      %116 = sbr.rel (%p113) target = $region12
    $region11: #{cnn_net3_forward.4} parent=5 // pred_region
      %s117 = ssub.s32 %s9, 1
      // Predicated region
      $region13: #{cnn_net3_forward.4} parent=11 // pred_check
        %p118 = pneg %p56
      $region14: #{cnn_net3_forward.4} parent=11 // pred_check_branch
        %120 = sbr.rel (%p118) target = $region16
      $region15: #{cnn_net3_forward.4} parent=11 // pred_region
        _
      $region16: #{cnn_net3_forward.4} parent=11 // pred_fallthru
        _
      // Predicated region
      $region17: #{cnn_net3_forward.4} parent=11 // pred_check
        %p121 = pneg %p77
      $region18: #{cnn_net3_forward.4} parent=11 // pred_check_branch
        %123 = sbr.rel (%p121) target = $region20
      $region19: #{cnn_net3_forward.4} parent=11 // pred_region
        _
      $region20: #{cnn_net3_forward.4} parent=11 // pred_fallthru
        _
    $region12: #{cnn_net3_forward.4} parent=5 // pred_fallthru
      _
    %p124 = scmp.lt.s32.totalorder %s9, 2
    // Predicated region
    $region21: #{cnn_net3_forward.4} parent=5 // pred_check
      %p125 = pneg %p124
    $region22: #{cnn_net3_forward.4} parent=5 // pred_check_branch
      %127 = sbr.rel (%p125) target = $region24
    $region23: #{cnn_net3_forward.4} parent=5 // pred_region
      // Predicated region
      $region25: #{cnn_net3_forward.4} parent=23 // pred_check
        %p128 = pneg %p29
      $region26: #{cnn_net3_forward.4} parent=23 // pred_check_branch
        %130 = sbr.rel (%p128) target = $region28
      $region27: #{cnn_net3_forward.4} parent=23 // pred_region
        %p131 = scmp.lt.s32.totalorder %s9, 1
        %s132 = scalar_select %p131, %s9, 1
        %s133 = smul.addr %s132, 25
        %s134 = smul.addr %s133, 8
        %s135 = scalar_lea.vmem %s0, %s134
      $region28: #{cnn_net3_forward.4} parent=23 // pred_fallthru
        _
    $region24: #{cnn_net3_forward.4} parent=5 // pred_fallthru
      _
    %p136 = scmp.le.s32.totalorder 1, %s9
    %p137 = scmp.lt.s32.totalorder %s9, 3
    %p138 = pnand %p136, %p137
    %p139 = pneg %p138
    // Predicated region
    $region29: #{cnn_net3_forward.4} parent=5 // pred_check
      _
    $region30: #{cnn_net3_forward.4} parent=5 // pred_check_branch
      %141 = sbr.rel (%p138) target = $region32
    $region31: #{cnn_net3_forward.4} parent=5 // pred_region
      %s142 = ssub.s32 %s9, 1
      %p143 = scmp.lt.s32.totalorder %s14, 1
      %s144 = scalar_select %p143, %s14, 1
      %s145 = smul.addr %s144, 25
      %s146 = smul.addr %s145, 8
      %s147 = scalar_lea.vmem %s0, %s146
      %p148 = pneg %p35
      %p149 = pneg %p32
      %p150 = pneg %p56
      %p151 = pneg %p53
      %p152 = pneg %p77
      %p153 = pneg %p74
      %p154 = pneg %p103
      %p155 = pneg %p100
      %p156 = scmp.lt.s32.totalorder %s14, 1
      %s157 = scalar_select %p156, %s14, 1
      %s158 = smul.addr %s157, 6
      %s159 = smul.addr %s158, 8
      %s160 = scalar_lea.vmem %s3, %s159
      %p161 = scmp.lt.s32.totalorder %s14, 1
      %s162 = scalar_select %p161, %s14, 1
      %s163 = smul.addr %s162, 25
      %s164 = smul.addr %s163, 8
      %s165 = scalar_lea.vmem %s0, %s164
      %p166 = scmp.lt.s32.totalorder %s14, 1
      %s167 = scalar_select %p166, %s14, 1
      %s168 = smul.addr %s167, 6
      %s169 = smul.addr %s168, 8
      %s170 = scalar_lea.vmem %s3, %s169
      %v171 = vld [vmem:[%s2] sm:$0x1]
      loop: start=0, step=1, limit=6
      $region33: #{cnn_net3_forward.4} parent=31 // loop_pre_header
        _
      $region34: #{cnn_net3_forward.4} parent=31 // loop_header
        %s173 = sphi 0, %s177
        %p174 = scmp.ge.s32.totalorder %s173, 6
      $region35: #{cnn_net3_forward.4} parent=31 // loop_header_branch
        %176 = sbr.rel (%p174) target = $region39
      $region36: #{cnn_net3_forward.4} parent=31 // loop_body
        %s178 = smul.u32 %s173, 28
        %s179 = scalar_lea.vmem %s165, %s178
        %v180 = vld [vmem:[%s179] sm:$0xff]
        %v181 = vld [vmem:[%s179 + $0x8] sm:$0xff]
        %v182 = vld [vmem:[%s179 + $0x10] sm:$0xff]
        %v183 = vld [vmem:[%s179 + $0x18] sm:$0x3]
        %v184 = vld [vmem:[%s1] sm:$0xff]
        %v185 = vld [vmem:[%s1 + $0x8] sm:$0xff]
        %v186 = vld [vmem:[%s1 + $0x10] sm:$0xff]
        %v187 = vld [vmem:[%s1 + $0x18] sm:$0xff]
        %v188 = vld [vmem:[%s1 + $0x20] sm:$0xff]
        %v189 = vld [vmem:[%s1 + $0x28] sm:$0xff]
        %v190 = vld [vmem:[%s1 + $0x30] sm:$0xff]
        %v191 = vld [vmem:[%s1 + $0x38] sm:$0xff]
        %v192 = vld [vmem:[%s1 + $0x40] sm:$0xff]
        %v193 = vld [vmem:[%s1 + $0x48] sm:$0xff]
        %v194 = vld [vmem:[%s1 + $0x50] sm:$0xff]
        %v195 = vld [vmem:[%s1 + $0x58] sm:$0xff]
        %v196 = vld [vmem:[%s1 + $0x60] sm:$0xff]
        %v197 = vld [vmem:[%s1 + $0x68] sm:$0xff]
        %v198 = vld [vmem:[%s1 + $0x70] sm:$0xff]
        %v199 = vld [vmem:[%s1 + $0x78] sm:$0xff]
        %s200 = sadd.s32 %s178, 1
        %s201 = scalar_lea.vmem %s165, %s200
        %v202 = vld [vmem:[%s201] sm:$0xff]
        %v203 = vld [vmem:[%s201 + $0x8] sm:$0xff]
        %v204 = vld [vmem:[%s201 + $0x10] sm:$0xff]
        %v205 = vld [vmem:[%s201 + $0x18] sm:$0x3]
        %s206 = scalar_lea.vmem %s1, 128
        %v207 = vld [vmem:[%s206] sm:$0xff]
        %v208 = vld [vmem:[%s206 + $0x8] sm:$0xff]
        %v209 = vld [vmem:[%s206 + $0x10] sm:$0xff]
        %v210 = vld [vmem:[%s206 + $0x18] sm:$0xff]
        %v211 = vld [vmem:[%s206 + $0x20] sm:$0xff]
        %v212 = vld [vmem:[%s206 + $0x28] sm:$0xff]
        %v213 = vld [vmem:[%s206 + $0x30] sm:$0xff]
        %v214 = vld [vmem:[%s206 + $0x38] sm:$0xff]
        %v215 = vld [vmem:[%s206 + $0x40] sm:$0xff]
        %v216 = vld [vmem:[%s206 + $0x48] sm:$0xff]
        %v217 = vld [vmem:[%s206 + $0x50] sm:$0xff]
        %v218 = vld [vmem:[%s206 + $0x58] sm:$0xff]
        %v219 = vld [vmem:[%s206 + $0x60] sm:$0xff]
        %v220 = vld [vmem:[%s206 + $0x68] sm:$0xff]
        %v221 = vld [vmem:[%s206 + $0x70] sm:$0xff]
        %v222 = vld [vmem:[%s206 + $0x78] sm:$0xff]
        %223 = vmatprep.subr.mxu0 0.0
        %224 = vmatpush1.msra.mxu0 %v207
        %225 = vmatprep.subr.mxu0 0.0
        %226 = vmatpush1.msra.mxu0 %v208
        %227 = vmatprep.subr.mxu0 0.0
        %228 = vmatpush1.msra.mxu0 %v209
        %229 = vmatprep.subr.mxu0 0.0
        %230 = vmatpush1.msra.mxu0 %v210
        %231 = vmatprep.subr.mxu0 0.0
        %232 = vmatpush1.msra.mxu0 %v211
        %233 = vmatprep.subr.mxu0 0.0
        %234 = vmatpush1.msra.mxu0 %v212
        %235 = vmatprep.subr.mxu0 0.0
        %236 = vmatpush1.msra.mxu0 %v213
        %237 = vmatprep.subr.mxu0 0.0
        %238 = vmatpush1.msra.mxu0 %v214
        %239 = vmatprep.subr.mxu0 0.0
        %240 = vmatpush1.msra.mxu0 %v215
        %241 = vmatprep.subr.mxu0 0.0
        %242 = vmatpush1.msra.mxu0 %v216
        %243 = vmatprep.subr.mxu0 0.0
        %244 = vmatpush1.msra.mxu0 %v217
        %245 = vmatprep.subr.mxu0 0.0
        %246 = vmatpush1.msra.mxu0 %v218
        %247 = vmatprep.subr.mxu0 0.0
        %248 = vmatpush1.msra.mxu0 %v219
        %249 = vmatprep.subr.mxu0 0.0
        %250 = vmatpush1.msra.mxu0 %v220
        %251 = vmatprep.subr.mxu0 0.0
        %252 = vmatpush1.msra.mxu0 %v221
        %253 = vmatprep.subr.mxu0 0.0
        %254 = vmatpush1.msra.mxu0 %v222
        %255 = vmatprep.subr.mxu0 0.0
        %256 = vmatpush1.msra.mxu0 0.0
        %257 = vmatprep.subr.mxu0 0.0
        %258 = vmatpush1.msra.mxu0 0.0
        %259 = vmatprep.subr.mxu0 0.0
        %260 = vmatpush1.msra.mxu0 0.0
        %261 = vmatprep.subr.mxu0 0.0
        %262 = vmatpush1.msra.mxu0 0.0
        %263 = vmatprep.subr.mxu0 0.0
        %264 = vmatpush1.msra.mxu0 0.0
        %265 = vmatprep.subr.mxu0 0.0
        %266 = vmatpush1.msra.mxu0 0.0
        %267 = vmatprep.subr.mxu0 0.0
        %268 = vmatpush1.msra.mxu0 0.0
        %269 = vmatprep.subr.mxu0 0.0
        %270 = vmatpush1.msra.mxu0 0.0
        %271 = vmatprep.subr.mxu0 0.0
        %272 = vmatpush1.msra.mxu0 0.0
        %273 = vmatprep.subr.mxu0 0.0
        %274 = vmatpush1.msra.mxu0 0.0
        %275 = vmatprep.subr.mxu0 0.0
        %276 = vmatpush1.msra.mxu0 0.0
        %277 = vmatprep.subr.mxu0 0.0
        %278 = vmatpush1.msra.mxu0 0.0
        %279 = vmatprep.subr.mxu0 0.0
        %280 = vmatpush1.msra.mxu0 0.0
        %281 = vmatprep.subr.mxu0 0.0
        %282 = vmatpush1.msra.mxu0 0.0
        %283 = vmatprep.subr.mxu0 0.0
        %284 = vmatpush1.msra.mxu0 0.0
        %285 = vmatprep.subr.mxu0 0.0
        %286 = vmatpush1.msra.mxu0 0.0
        %287 = vmatprep.mubr.f32.mxu0 0.0
        %288 = vmatmul.mubr.f32.gmra.mrb[0].mxu0 %v202
        %v289 = vpop.f32.mrb[0].mxu0
        %v290 = vadd.f32 0.0, %v289
        %v291 = vpop.f32.mrb[0].mxu0
        %292 = vmatprep.mubr.f32.mxu0 0.0
        %293 = vmatmul.mubr.f32.gmra.mrb[0].mxu0 %v203
        %v294 = vpop.f32.mrb[0].mxu0
        %v295 = vadd.f32 0.0, %v294
        %v296 = vpop.f32.mrb[0].mxu0
        %297 = vmatprep.mubr.f32.mxu0 0.0
        %298 = vmatmul.mubr.f32.gmra.mrb[0].mxu0 %v204
        %v299 = vpop.f32.mrb[0].mxu0
        %v300 = vadd.f32 0.0, %v299
        %v301 = vpop.f32.mrb[0].mxu0
        %302 = vmatprep.mubr.f32.mxu0 0.0
        %303 = vmatmul.mubr.f32.gmra.mrb[0].mxu0 %v205
        %v304 = vpop.f32.mrb[0].mxu0
        %v305 = vadd.f32 0.0, %v304
        %v306 = vpop.f32.mrb[0].mxu0
        %307 = vdwg.mxu0
        %308 = vmatprep.subr.mxu0 0.0
        %309 = vmatpush1.msra.mxu0 %v184
        %310 = vmatprep.subr.mxu0 0.0
        %311 = vmatpush1.msra.mxu0 %v185
        %312 = vmatprep.subr.mxu0 0.0
        %313 = vmatpush1.msra.mxu0 %v186
        %314 = vmatprep.subr.mxu0 0.0
        %315 = vmatpush1.msra.mxu0 %v187
        %316 = vmatprep.subr.mxu0 0.0
        %317 = vmatpush1.msra.mxu0 %v188
        %318 = vmatprep.subr.mxu0 0.0
        %319 = vmatpush1.msra.mxu0 %v189
        %320 = vmatprep.subr.mxu0 0.0
        %321 = vmatpush1.msra.mxu0 %v190
        %322 = vmatprep.subr.mxu0 0.0
        %323 = vmatpush1.msra.mxu0 %v191
        %324 = vmatprep.subr.mxu0 0.0
        %325 = vmatpush1.msra.mxu0 %v192
        %326 = vmatprep.subr.mxu0 0.0
        %327 = vmatpush1.msra.mxu0 %v193
        %328 = vmatprep.subr.mxu0 0.0
        %329 = vmatpush1.msra.mxu0 %v194
        %330 = vmatprep.subr.mxu0 0.0
        %331 = vmatpush1.msra.mxu0 %v195
        %332 = vmatprep.subr.mxu0 0.0
        %333 = vmatpush1.msra.mxu0 %v196
        %334 = vmatprep.subr.mxu0 0.0
        %335 = vmatpush1.msra.mxu0 %v197
        %336 = vmatprep.subr.mxu0 0.0
        %337 = vmatpush1.msra.mxu0 %v198
        %338 = vmatprep.subr.mxu0 0.0
        %339 = vmatpush1.msra.mxu0 %v199
        %340 = vmatprep.subr.mxu0 0.0
        %341 = vmatpush1.msra.mxu0 0.0
        %342 = vmatprep.subr.mxu0 0.0
        %343 = vmatpush1.msra.mxu0 0.0
        %344 = vmatprep.subr.mxu0 0.0
        %345 = vmatpush1.msra.mxu0 0.0
        %346 = vmatprep.subr.mxu0 0.0
        %347 = vmatpush1.msra.mxu0 0.0
        %348 = vmatprep.subr.mxu0 0.0
        %349 = vmatpush1.msra.mxu0 0.0
        %350 = vmatprep.subr.mxu0 0.0
        %351 = vmatpush1.msra.mxu0 0.0
        %352 = vmatprep.subr.mxu0 0.0
        %353 = vmatpush1.msra.mxu0 0.0
        %354 = vmatprep.subr.mxu0 0.0
        %355 = vmatpush1.msra.mxu0 0.0
        %356 = vmatprep.subr.mxu0 0.0
        %357 = vmatpush1.msra.mxu0 0.0
        %358 = vmatprep.subr.mxu0 0.0
        %359 = vmatpush1.msra.mxu0 0.0
        %360 = vmatprep.subr.mxu0 0.0
        %361 = vmatpush1.msra.mxu0 0.0
        %362 = vmatprep.subr.mxu0 0.0
        %363 = vmatpush1.msra.mxu0 0.0
        %364 = vmatprep.subr.mxu0 0.0
        %365 = vmatpush1.msra.mxu0 0.0
        %366 = vmatprep.subr.mxu0 0.0
        %367 = vmatpush1.msra.mxu0 0.0
        %368 = vmatprep.subr.mxu0 0.0
        %369 = vmatpush1.msra.mxu0 0.0
        %370 = vmatprep.subr.mxu0 0.0
        %371 = vmatpush1.msra.mxu0 0.0
        %372 = vmatprep.mubr.f32.mxu0 0.0
        %373 = vmatmul.mubr.f32.gmra.mrb[0].mxu0 %v180
        %v374 = vpop.f32.mrb[0].mxu0
        %v375 = vadd.f32 %v290, %v374
        %v376 = vpop.f32.mrb[0].mxu0
        %377 = vmatprep.mubr.f32.mxu0 0.0
        %378 = vmatmul.mubr.f32.gmra.mrb[0].mxu0 %v181
        %v379 = vpop.f32.mrb[0].mxu0
        %v380 = vadd.f32 %v295, %v379
        %v381 = vpop.f32.mrb[0].mxu0
        %382 = vmatprep.mubr.f32.mxu0 0.0
        %383 = vmatmul.mubr.f32.gmra.mrb[0].mxu0 %v182
        %v384 = vpop.f32.mrb[0].mxu0
        %v385 = vadd.f32 %v300, %v384
        %v386 = vpop.f32.mrb[0].mxu0
        %387 = vmatprep.mubr.f32.mxu0 0.0
        %388 = vmatmul.mubr.f32.gmra.mrb[0].mxu0 %v183
        %v389 = vpop.f32.mrb[0].mxu0
        %v390 = vadd.f32 %v305, %v389
        %v391 = vpop.f32.mrb[0].mxu0
        %392 = vdwg.mxu0
        %s393 = sadd.s32 %s178, 2
        %s394 = scalar_lea.vmem %s165, %s393
        %v395 = vld [vmem:[%s394] sm:$0xff]
        %v396 = vld [vmem:[%s394 + $0x8] sm:$0xff]
        %v397 = vld [vmem:[%s394 + $0x10] sm:$0xff]
        %v398 = vld [vmem:[%s394 + $0x18] sm:$0x3]
        %s399 = scalar_lea.vmem %s1, 256
        %v400 = vld [vmem:[%s399] sm:$0xff]
        %v401 = vld [vmem:[%s399 + $0x8] sm:$0xff]
        %v402 = vld [vmem:[%s399 + $0x10] sm:$0xff]
        %v403 = vld [vmem:[%s399 + $0x18] sm:$0xff]
        %v404 = vld [vmem:[%s399 + $0x20] sm:$0xff]
        %v405 = vld [vmem:[%s399 + $0x28] sm:$0xff]
        %v406 = vld [vmem:[%s399 + $0x30] sm:$0xff]
        %v407 = vld [vmem:[%s399 + $0x38] sm:$0xff]
        %v408 = vld [vmem:[%s399 + $0x40] sm:$0xff]
        %v409 = vld [vmem:[%s399 + $0x48] sm:$0xff]
        %v410 = vld [vmem:[%s399 + $0x50] sm:$0xff]
        %v411 = vld [vmem:[%s399 + $0x58] sm:$0xff]
        %v412 = vld [vmem:[%s399 + $0x60] sm:$0xff]
        %v413 = vld [vmem:[%s399 + $0x68] sm:$0xff]
        %v414 = vld [vmem:[%s399 + $0x70] sm:$0xff]
        %v415 = vld [vmem:[%s399 + $0x78] sm:$0xff]
        %416 = vmatprep.subr.mxu0 0.0
        %417 = vmatpush1.msra.mxu0 %v400
        %418 = vmatprep.subr.mxu0 0.0
        %419 = vmatpush1.msra.mxu0 %v401
        %420 = vmatprep.subr.mxu0 0.0
        %421 = vmatpush1.msra.mxu0 %v402
        %422 = vmatprep.subr.mxu0 0.0
        %423 = vmatpush1.msra.mxu0 %v403
        %424 = vmatprep.subr.mxu0 0.0
        %425 = vmatpush1.msra.mxu0 %v404
        %426 = vmatprep.subr.mxu0 0.0
        %427 = vmatpush1.msra.mxu0 %v405
        %428 = vmatprep.subr.mxu0 0.0
        %429 = vmatpush1.msra.mxu0 %v406
        %430 = vmatprep.subr.mxu0 0.0
        %431 = vmatpush1.msra.mxu0 %v407
        %432 = vmatprep.subr.mxu0 0.0
        %433 = vmatpush1.msra.mxu0 %v408
        %434 = vmatprep.subr.mxu0 0.0
        %435 = vmatpush1.msra.mxu0 %v409
        %436 = vmatprep.subr.mxu0 0.0
        %437 = vmatpush1.msra.mxu0 %v410
        %438 = vmatprep.subr.mxu0 0.0
        %439 = vmatpush1.msra.mxu0 %v411
        %440 = vmatprep.subr.mxu0 0.0
        %441 = vmatpush1.msra.mxu0 %v412
        %442 = vmatprep.subr.mxu0 0.0
        %443 = vmatpush1.msra.mxu0 %v413
        %444 = vmatprep.subr.mxu0 0.0
        %445 = vmatpush1.msra.mxu0 %v414
        %446 = vmatprep.subr.mxu0 0.0
        %447 = vmatpush1.msra.mxu0 %v415
        %448 = vmatprep.subr.mxu0 0.0
        %449 = vmatpush1.msra.mxu0 0.0
        %450 = vmatprep.subr.mxu0 0.0
        %451 = vmatpush1.msra.mxu0 0.0
        %452 = vmatprep.subr.mxu0 0.0
        %453 = vmatpush1.msra.mxu0 0.0
        %454 = vmatprep.subr.mxu0 0.0
        %455 = vmatpush1.msra.mxu0 0.0
        %456 = vmatprep.subr.mxu0 0.0
        %457 = vmatpush1.msra.mxu0 0.0
        %458 = vmatprep.subr.mxu0 0.0
        %459 = vmatpush1.msra.mxu0 0.0
        %460 = vmatprep.subr.mxu0 0.0
        %461 = vmatpush1.msra.mxu0 0.0
        %462 = vmatprep.subr.mxu0 0.0
        %463 = vmatpush1.msra.mxu0 0.0
        %464 = vmatprep.subr.mxu0 0.0
        %465 = vmatpush1.msra.mxu0 0.0
        %466 = vmatprep.subr.mxu0 0.0
        %467 = vmatpush1.msra.mxu0 0.0
        %468 = vmatprep.subr.mxu0 0.0
        %469 = vmatpush1.msra.mxu0 0.0
        %470 = vmatprep.subr.mxu0 0.0
        %471 = vmatpush1.msra.mxu0 0.0
        %472 = vmatprep.subr.mxu0 0.0
        %473 = vmatpush1.msra.mxu0 0.0
        %474 = vmatprep.subr.mxu0 0.0
        %475 = vmatpush1.msra.mxu0 0.0
        %476 = vmatprep.subr.mxu0 0.0
        %477 = vmatpush1.msra.mxu0 0.0
        %478 = vmatprep.subr.mxu0 0.0
        %479 = vmatpush1.msra.mxu0 0.0
        %480 = vmatprep.mubr.f32.mxu0 0.0
        %481 = vmatmul.mubr.f32.gmra.mrb[0].mxu0 %v395
        %v482 = vpop.f32.mrb[0].mxu0
        %v483 = vadd.f32 0.0, %v482
        %v484 = vpop.f32.mrb[0].mxu0
        %485 = vmatprep.mubr.f32.mxu0 0.0
        %486 = vmatmul.mubr.f32.gmra.mrb[0].mxu0 %v396
        %v487 = vpop.f32.mrb[0].mxu0
        %v488 = vadd.f32 0.0, %v487
        %v489 = vpop.f32.mrb[0].mxu0
        %490 = vmatprep.mubr.f32.mxu0 0.0
        %491 = vmatmul.mubr.f32.gmra.mrb[0].mxu0 %v397
        %v492 = vpop.f32.mrb[0].mxu0
        %v493 = vadd.f32 0.0, %v492
        %v494 = vpop.f32.mrb[0].mxu0
        %495 = vmatprep.mubr.f32.mxu0 0.0
        %496 = vmatmul.mubr.f32.gmra.mrb[0].mxu0 %v398
        %v497 = vpop.f32.mrb[0].mxu0
        %v498 = vadd.f32 0.0, %v497
        %v499 = vpop.f32.mrb[0].mxu0
        %500 = vdwg.mxu0
        %v501 = vadd.f32 %v375, %v483
        %v502 = vadd.f32 %v380, %v488
        %v503 = vadd.f32 %v385, %v493
        %v504 = vadd.f32 %v390, %v498
        %s505 = sadd.s32 %s178, 14
        %s506 = scalar_lea.vmem %s165, %s505
        %v507 = vld [vmem:[%s506] sm:$0xff]
        %v508 = vld [vmem:[%s506 + $0x8] sm:$0xff]
        %v509 = vld [vmem:[%s506 + $0x10] sm:$0xff]
        %v510 = vld [vmem:[%s506 + $0x18] sm:$0x3]
        %s511 = scalar_lea.vmem %s1, 384
        %v512 = vld [vmem:[%s511] sm:$0xff]
        %v513 = vld [vmem:[%s511 + $0x8] sm:$0xff]
        %v514 = vld [vmem:[%s511 + $0x10] sm:$0xff]
        %v515 = vld [vmem:[%s511 + $0x18] sm:$0xff]
        %v516 = vld [vmem:[%s511 + $0x20] sm:$0xff]
        %v517 = vld [vmem:[%s511 + $0x28] sm:$0xff]
        %v518 = vld [vmem:[%s511 + $0x30] sm:$0xff]
        %v519 = vld [vmem:[%s511 + $0x38] sm:$0xff]
        %v520 = vld [vmem:[%s511 + $0x40] sm:$0xff]
        %v521 = vld [vmem:[%s511 + $0x48] sm:$0xff]
        %v522 = vld [vmem:[%s511 + $0x50] sm:$0xff]
        %v523 = vld [vmem:[%s511 + $0x58] sm:$0xff]
        %v524 = vld [vmem:[%s511 + $0x60] sm:$0xff]
        %v525 = vld [vmem:[%s511 + $0x68] sm:$0xff]
        %v526 = vld [vmem:[%s511 + $0x70] sm:$0xff]
        %v527 = vld [vmem:[%s511 + $0x78] sm:$0xff]
        %528 = vmatprep.subr.mxu0 0.0
        %529 = vmatpush1.msra.mxu0 %v512
        %530 = vmatprep.subr.mxu0 0.0
        %531 = vmatpush1.msra.mxu0 %v513
        %532 = vmatprep.subr.mxu0 0.0
        %533 = vmatpush1.msra.mxu0 %v514
        %534 = vmatprep.subr.mxu0 0.0
        %535 = vmatpush1.msra.mxu0 %v515
        %536 = vmatprep.subr.mxu0 0.0
        %537 = vmatpush1.msra.mxu0 %v516
        %538 = vmatprep.subr.mxu0 0.0
        %539 = vmatpush1.msra.mxu0 %v517
        %540 = vmatprep.subr.mxu0 0.0
        %541 = vmatpush1.msra.mxu0 %v518
        %542 = vmatprep.subr.mxu0 0.0
        %543 = vmatpush1.msra.mxu0 %v519
        %544 = vmatprep.subr.mxu0 0.0
        %545 = vmatpush1.msra.mxu0 %v520
        %546 = vmatprep.subr.mxu0 0.0
        %547 = vmatpush1.msra.mxu0 %v521
        %548 = vmatprep.subr.mxu0 0.0
        %549 = vmatpush1.msra.mxu0 %v522
        %550 = vmatprep.subr.mxu0 0.0
        %551 = vmatpush1.msra.mxu0 %v523
        %552 = vmatprep.subr.mxu0 0.0
        %553 = vmatpush1.msra.mxu0 %v524
        %554 = vmatprep.subr.mxu0 0.0
        %555 = vmatpush1.msra.mxu0 %v525
        %556 = vmatprep.subr.mxu0 0.0
        %557 = vmatpush1.msra.mxu0 %v526
        %558 = vmatprep.subr.mxu0 0.0
        %559 = vmatpush1.msra.mxu0 %v527
        %560 = vmatprep.subr.mxu0 0.0
        %561 = vmatpush1.msra.mxu0 0.0
        %562 = vmatprep.subr.mxu0 0.0
        %563 = vmatpush1.msra.mxu0 0.0
        %564 = vmatprep.subr.mxu0 0.0
        %565 = vmatpush1.msra.mxu0 0.0
        %566 = vmatprep.subr.mxu0 0.0
        %567 = vmatpush1.msra.mxu0 0.0
        %568 = vmatprep.subr.mxu0 0.0
        %569 = vmatpush1.msra.mxu0 0.0
        %570 = vmatprep.subr.mxu0 0.0
        %571 = vmatpush1.msra.mxu0 0.0
        %572 = vmatprep.subr.mxu0 0.0
        %573 = vmatpush1.msra.mxu0 0.0
        %574 = vmatprep.subr.mxu0 0.0
        %575 = vmatpush1.msra.mxu0 0.0
        %576 = vmatprep.subr.mxu0 0.0
        %577 = vmatpush1.msra.mxu0 0.0
        %578 = vmatprep.subr.mxu0 0.0
        %579 = vmatpush1.msra.mxu0 0.0
        %580 = vmatprep.subr.mxu0 0.0
        %581 = vmatpush1.msra.mxu0 0.0
        %582 = vmatprep.subr.mxu0 0.0
        %583 = vmatpush1.msra.mxu0 0.0
        %584 = vmatprep.subr.mxu0 0.0
        %585 = vmatpush1.msra.mxu0 0.0
        %586 = vmatprep.subr.mxu0 0.0
        %587 = vmatpush1.msra.mxu0 0.0
        %588 = vmatprep.subr.mxu0 0.0
        %589 = vmatpush1.msra.mxu0 0.0
        %590 = vmatprep.subr.mxu0 0.0
        %591 = vmatpush1.msra.mxu0 0.0
        %592 = vmatprep.mubr.f32.mxu0 0.0
        %593 = vmatmul.mubr.f32.gmra.mrb[0].mxu0 %v507
        %v594 = vpop.f32.mrb[0].mxu0
        %v595 = vadd.f32 0.0, %v594
        %v596 = vpop.f32.mrb[0].mxu0
        %597 = vmatprep.mubr.f32.mxu0 0.0
        %598 = vmatmul.mubr.f32.gmra.mrb[0].mxu0 %v508
        %v599 = vpop.f32.mrb[0].mxu0
        %v600 = vadd.f32 0.0, %v599
        %v601 = vpop.f32.mrb[0].mxu0
        %602 = vmatprep.mubr.f32.mxu0 0.0
        %603 = vmatmul.mubr.f32.gmra.mrb[0].mxu0 %v509
        %v604 = vpop.f32.mrb[0].mxu0
        %v605 = vadd.f32 0.0, %v604
        %v606 = vpop.f32.mrb[0].mxu0
        %607 = vmatprep.mubr.f32.mxu0 0.0
        %608 = vmatmul.mubr.f32.gmra.mrb[0].mxu0 %v510
        %v609 = vpop.f32.mrb[0].mxu0
        %v610 = vadd.f32 0.0, %v609
        %v611 = vpop.f32.mrb[0].mxu0
        %612 = vdwg.mxu0
        %v613 = vadd.f32 %v501, %v595
        %v614 = vadd.f32 %v502, %v600
        %v615 = vadd.f32 %v503, %v605
        %v616 = vadd.f32 %v504, %v610
        %s617 = sadd.s32 %s178, 15
        %s618 = scalar_lea.vmem %s165, %s617
        %v619 = vld [vmem:[%s618] sm:$0xff]
        %v620 = vld [vmem:[%s618 + $0x8] sm:$0xff]
        %v621 = vld [vmem:[%s618 + $0x10] sm:$0xff]
        %v622 = vld [vmem:[%s618 + $0x18] sm:$0x3]
        %s623 = scalar_lea.vmem %s1, 512
        %v624 = vld [vmem:[%s623] sm:$0xff]
        %v625 = vld [vmem:[%s623 + $0x8] sm:$0xff]
        %v626 = vld [vmem:[%s623 + $0x10] sm:$0xff]
        %v627 = vld [vmem:[%s623 + $0x18] sm:$0xff]
        %v628 = vld [vmem:[%s623 + $0x20] sm:$0xff]
        %v629 = vld [vmem:[%s623 + $0x28] sm:$0xff]
        %v630 = vld [vmem:[%s623 + $0x30] sm:$0xff]
        %v631 = vld [vmem:[%s623 + $0x38] sm:$0xff]
        %v632 = vld [vmem:[%s623 + $0x40] sm:$0xff]
        %v633 = vld [vmem:[%s623 + $0x48] sm:$0xff]
        %v634 = vld [vmem:[%s623 + $0x50] sm:$0xff]
        %v635 = vld [vmem:[%s623 + $0x58] sm:$0xff]
        %v636 = vld [vmem:[%s623 + $0x60] sm:$0xff]
        %v637 = vld [vmem:[%s623 + $0x68] sm:$0xff]
        %v638 = vld [vmem:[%s623 + $0x70] sm:$0xff]
        %v639 = vld [vmem:[%s623 + $0x78] sm:$0xff]
        %640 = vmatprep.subr.mxu0 0.0
        %641 = vmatpush1.msra.mxu0 %v624
        %642 = vmatprep.subr.mxu0 0.0
        %643 = vmatpush1.msra.mxu0 %v625
        %644 = vmatprep.subr.mxu0 0.0
        %645 = vmatpush1.msra.mxu0 %v626
        %646 = vmatprep.subr.mxu0 0.0
        %647 = vmatpush1.msra.mxu0 %v627
        %648 = vmatprep.subr.mxu0 0.0
        %649 = vmatpush1.msra.mxu0 %v628
        %650 = vmatprep.subr.mxu0 0.0
        %651 = vmatpush1.msra.mxu0 %v629
        %652 = vmatprep.subr.mxu0 0.0
        %653 = vmatpush1.msra.mxu0 %v630
        %654 = vmatprep.subr.mxu0 0.0
        %655 = vmatpush1.msra.mxu0 %v631
        %656 = vmatprep.subr.mxu0 0.0
        %657 = vmatpush1.msra.mxu0 %v632
        %658 = vmatprep.subr.mxu0 0.0
        %659 = vmatpush1.msra.mxu0 %v633
        %660 = vmatprep.subr.mxu0 0.0
        %661 = vmatpush1.msra.mxu0 %v634
        %662 = vmatprep.subr.mxu0 0.0
        %663 = vmatpush1.msra.mxu0 %v635
        %664 = vmatprep.subr.mxu0 0.0
        %665 = vmatpush1.msra.mxu0 %v636
        %666 = vmatprep.subr.mxu0 0.0
        %667 = vmatpush1.msra.mxu0 %v637
        %668 = vmatprep.subr.mxu0 0.0
        %669 = vmatpush1.msra.mxu0 %v638
        %670 = vmatprep.subr.mxu0 0.0
        %671 = vmatpush1.msra.mxu0 %v639
        %672 = vmatprep.subr.mxu0 0.0
        %673 = vmatpush1.msra.mxu0 0.0
        %674 = vmatprep.subr.mxu0 0.0
        %675 = vmatpush1.msra.mxu0 0.0
        %676 = vmatprep.subr.mxu0 0.0
        %677 = vmatpush1.msra.mxu0 0.0
        %678 = vmatprep.subr.mxu0 0.0
        %679 = vmatpush1.msra.mxu0 0.0
        %680 = vmatprep.subr.mxu0 0.0
        %681 = vmatpush1.msra.mxu0 0.0
        %682 = vmatprep.subr.mxu0 0.0
        %683 = vmatpush1.msra.mxu0 0.0
        %684 = vmatprep.subr.mxu0 0.0
        %685 = vmatpush1.msra.mxu0 0.0
        %686 = vmatprep.subr.mxu0 0.0
        %687 = vmatpush1.msra.mxu0 0.0
        %688 = vmatprep.subr.mxu0 0.0
        %689 = vmatpush1.msra.mxu0 0.0
        %690 = vmatprep.subr.mxu0 0.0
        %691 = vmatpush1.msra.mxu0 0.0
        %692 = vmatprep.subr.mxu0 0.0
        %693 = vmatpush1.msra.mxu0 0.0
        %694 = vmatprep.subr.mxu0 0.0
        %695 = vmatpush1.msra.mxu0 0.0
        %696 = vmatprep.subr.mxu0 0.0
        %697 = vmatpush1.msra.mxu0 0.0
        %698 = vmatprep.subr.mxu0 0.0
        %699 = vmatpush1.msra.mxu0 0.0
        %700 = vmatprep.subr.mxu0 0.0
        %701 = vmatpush1.msra.mxu0 0.0
        %702 = vmatprep.subr.mxu0 0.0
        %703 = vmatpush1.msra.mxu0 0.0
        %704 = vmatprep.mubr.f32.mxu0 0.0
        %705 = vmatmul.mubr.f32.gmra.mrb[0].mxu0 %v619
        %v706 = vpop.f32.mrb[0].mxu0
        %v707 = vadd.f32 0.0, %v706
        %v708 = vpop.f32.mrb[0].mxu0
        %709 = vmatprep.mubr.f32.mxu0 0.0
        %710 = vmatmul.mubr.f32.gmra.mrb[0].mxu0 %v620
        %v711 = vpop.f32.mrb[0].mxu0
        %v712 = vadd.f32 0.0, %v711
        %v713 = vpop.f32.mrb[0].mxu0
        %714 = vmatprep.mubr.f32.mxu0 0.0
        %715 = vmatmul.mubr.f32.gmra.mrb[0].mxu0 %v621
        %v716 = vpop.f32.mrb[0].mxu0
        %v717 = vadd.f32 0.0, %v716
        %v718 = vpop.f32.mrb[0].mxu0
        %719 = vmatprep.mubr.f32.mxu0 0.0
        %720 = vmatmul.mubr.f32.gmra.mrb[0].mxu0 %v622
        %v721 = vpop.f32.mrb[0].mxu0
        %v722 = vadd.f32 0.0, %v721
        %v723 = vpop.f32.mrb[0].mxu0
        %724 = vdwg.mxu0
        %v725 = vadd.f32 %v613, %v707
        %v726 = vadd.f32 %v614, %v712
        %v727 = vadd.f32 %v615, %v717
        %v728 = vadd.f32 %v616, %v722
        %s729 = sadd.s32 %s178, 16
        %s730 = scalar_lea.vmem %s165, %s729
        %v731 = vld [vmem:[%s730] sm:$0xff]
        %v732 = vld [vmem:[%s730 + $0x8] sm:$0xff]
        %v733 = vld [vmem:[%s730 + $0x10] sm:$0xff]
        %v734 = vld [vmem:[%s730 + $0x18] sm:$0x3]
        %s735 = scalar_lea.vmem %s1, 640
        %v736 = vld [vmem:[%s735] sm:$0xff]
        %v737 = vld [vmem:[%s735 + $0x8] sm:$0xff]
        %v738 = vld [vmem:[%s735 + $0x10] sm:$0xff]
        %v739 = vld [vmem:[%s735 + $0x18] sm:$0xff]
        %v740 = vld [vmem:[%s735 + $0x20] sm:$0xff]
        %v741 = vld [vmem:[%s735 + $0x28] sm:$0xff]
        %v742 = vld [vmem:[%s735 + $0x30] sm:$0xff]
        %v743 = vld [vmem:[%s735 + $0x38] sm:$0xff]
        %v744 = vld [vmem:[%s735 + $0x40] sm:$0xff]
        %v745 = vld [vmem:[%s735 + $0x48] sm:$0xff]
        %v746 = vld [vmem:[%s735 + $0x50] sm:$0xff]
        %v747 = vld [vmem:[%s735 + $0x58] sm:$0xff]
        %v748 = vld [vmem:[%s735 + $0x60] sm:$0xff]
        %v749 = vld [vmem:[%s735 + $0x68] sm:$0xff]
        %v750 = vld [vmem:[%s735 + $0x70] sm:$0xff]
        %v751 = vld [vmem:[%s735 + $0x78] sm:$0xff]
        %752 = vmatprep.subr.mxu0 0.0
        %753 = vmatpush1.msra.mxu0 %v736
        %754 = vmatprep.subr.mxu0 0.0
        %755 = vmatpush1.msra.mxu0 %v737
        %756 = vmatprep.subr.mxu0 0.0
        %757 = vmatpush1.msra.mxu0 %v738
        %758 = vmatprep.subr.mxu0 0.0
        %759 = vmatpush1.msra.mxu0 %v739
        %760 = vmatprep.subr.mxu0 0.0
        %761 = vmatpush1.msra.mxu0 %v740
        %762 = vmatprep.subr.mxu0 0.0
        %763 = vmatpush1.msra.mxu0 %v741
        %764 = vmatprep.subr.mxu0 0.0
        %765 = vmatpush1.msra.mxu0 %v742
        %766 = vmatprep.subr.mxu0 0.0
        %767 = vmatpush1.msra.mxu0 %v743
        %768 = vmatprep.subr.mxu0 0.0
        %769 = vmatpush1.msra.mxu0 %v744
        %770 = vmatprep.subr.mxu0 0.0
        %771 = vmatpush1.msra.mxu0 %v745
        %772 = vmatprep.subr.mxu0 0.0
        %773 = vmatpush1.msra.mxu0 %v746
        %774 = vmatprep.subr.mxu0 0.0
        %775 = vmatpush1.msra.mxu0 %v747
        %776 = vmatprep.subr.mxu0 0.0
        %777 = vmatpush1.msra.mxu0 %v748
        %778 = vmatprep.subr.mxu0 0.0
        %779 = vmatpush1.msra.mxu0 %v749
        %780 = vmatprep.subr.mxu0 0.0
        %781 = vmatpush1.msra.mxu0 %v750
        %782 = vmatprep.subr.mxu0 0.0
        %783 = vmatpush1.msra.mxu0 %v751
        %784 = vmatprep.subr.mxu0 0.0
        %785 = vmatpush1.msra.mxu0 0.0
        %786 = vmatprep.subr.mxu0 0.0
        %787 = vmatpush1.msra.mxu0 0.0
        %788 = vmatprep.subr.mxu0 0.0
        %789 = vmatpush1.msra.mxu0 0.0
        %790 = vmatprep.subr.mxu0 0.0
        %791 = vmatpush1.msra.mxu0 0.0
        %792 = vmatprep.subr.mxu0 0.0
        %793 = vmatpush1.msra.mxu0 0.0
        %794 = vmatprep.subr.mxu0 0.0
        %795 = vmatpush1.msra.mxu0 0.0
        %796 = vmatprep.subr.mxu0 0.0
        %797 = vmatpush1.msra.mxu0 0.0
        %798 = vmatprep.subr.mxu0 0.0
        %799 = vmatpush1.msra.mxu0 0.0
        %800 = vmatprep.subr.mxu0 0.0
        %801 = vmatpush1.msra.mxu0 0.0
        %802 = vmatprep.subr.mxu0 0.0
        %803 = vmatpush1.msra.mxu0 0.0
        %804 = vmatprep.subr.mxu0 0.0
        %805 = vmatpush1.msra.mxu0 0.0
        %806 = vmatprep.subr.mxu0 0.0
        %807 = vmatpush1.msra.mxu0 0.0
        %808 = vmatprep.subr.mxu0 0.0
        %809 = vmatpush1.msra.mxu0 0.0
        %810 = vmatprep.subr.mxu0 0.0
        %811 = vmatpush1.msra.mxu0 0.0
        %812 = vmatprep.subr.mxu0 0.0
        %813 = vmatpush1.msra.mxu0 0.0
        %814 = vmatprep.subr.mxu0 0.0
        %815 = vmatpush1.msra.mxu0 0.0
        %816 = vmatprep.mubr.f32.mxu0 0.0
        %817 = vmatmul.mubr.f32.gmra.mrb[0].mxu0 %v731
        %v818 = vpop.f32.mrb[0].mxu0
        %v819 = vadd.f32 0.0, %v818
        %v820 = vpop.f32.mrb[0].mxu0
        %821 = vmatprep.mubr.f32.mxu0 0.0
        %822 = vmatmul.mubr.f32.gmra.mrb[0].mxu0 %v732
        %v823 = vpop.f32.mrb[0].mxu0
        %v824 = vadd.f32 0.0, %v823
        %v825 = vpop.f32.mrb[0].mxu0
        %826 = vmatprep.mubr.f32.mxu0 0.0
        %827 = vmatmul.mubr.f32.gmra.mrb[0].mxu0 %v733
        %v828 = vpop.f32.mrb[0].mxu0
        %v829 = vadd.f32 0.0, %v828
        %v830 = vpop.f32.mrb[0].mxu0
        %831 = vmatprep.mubr.f32.mxu0 0.0
        %832 = vmatmul.mubr.f32.gmra.mrb[0].mxu0 %v734
        %v833 = vpop.f32.mrb[0].mxu0
        %v834 = vadd.f32 0.0, %v833
        %v835 = vpop.f32.mrb[0].mxu0
        %836 = vdwg.mxu0
        %v837 = vadd.f32 %v725, %v819
        %v838 = vadd.f32 %v726, %v824
        %v839 = vadd.f32 %v727, %v829
        %v840 = vadd.f32 %v728, %v834
        %s841 = sadd.s32 %s178, 28
        %s842 = scalar_lea.vmem %s165, %s841
        %v843 = vld [vmem:[%s842] sm:$0xff]
        %v844 = vld [vmem:[%s842 + $0x8] sm:$0xff]
        %v845 = vld [vmem:[%s842 + $0x10] sm:$0xff]
        %v846 = vld [vmem:[%s842 + $0x18] sm:$0x3]
        %s847 = scalar_lea.vmem %s1, 768
        %v848 = vld [vmem:[%s847] sm:$0xff]
        %v849 = vld [vmem:[%s847 + $0x8] sm:$0xff]
        %v850 = vld [vmem:[%s847 + $0x10] sm:$0xff]
        %v851 = vld [vmem:[%s847 + $0x18] sm:$0xff]
        %v852 = vld [vmem:[%s847 + $0x20] sm:$0xff]
        %v853 = vld [vmem:[%s847 + $0x28] sm:$0xff]
        %v854 = vld [vmem:[%s847 + $0x30] sm:$0xff]
        %v855 = vld [vmem:[%s847 + $0x38] sm:$0xff]
        %v856 = vld [vmem:[%s847 + $0x40] sm:$0xff]
        %v857 = vld [vmem:[%s847 + $0x48] sm:$0xff]
        %v858 = vld [vmem:[%s847 + $0x50] sm:$0xff]
        %v859 = vld [vmem:[%s847 + $0x58] sm:$0xff]
        %v860 = vld [vmem:[%s847 + $0x60] sm:$0xff]
        %v861 = vld [vmem:[%s847 + $0x68] sm:$0xff]
        %v862 = vld [vmem:[%s847 + $0x70] sm:$0xff]
        %v863 = vld [vmem:[%s847 + $0x78] sm:$0xff]
        %864 = vmatprep.subr.mxu0 0.0
        %865 = vmatpush1.msra.mxu0 %v848
        %866 = vmatprep.subr.mxu0 0.0
        %867 = vmatpush1.msra.mxu0 %v849
        %868 = vmatprep.subr.mxu0 0.0
        %869 = vmatpush1.msra.mxu0 %v850
        %870 = vmatprep.subr.mxu0 0.0
        %871 = vmatpush1.msra.mxu0 %v851
        %872 = vmatprep.subr.mxu0 0.0
        %873 = vmatpush1.msra.mxu0 %v852
        %874 = vmatprep.subr.mxu0 0.0
        %875 = vmatpush1.msra.mxu0 %v853
        %876 = vmatprep.subr.mxu0 0.0
        %877 = vmatpush1.msra.mxu0 %v854
        %878 = vmatprep.subr.mxu0 0.0
        %879 = vmatpush1.msra.mxu0 %v855
        %880 = vmatprep.subr.mxu0 0.0
        %881 = vmatpush1.msra.mxu0 %v856
        %882 = vmatprep.subr.mxu0 0.0
        %883 = vmatpush1.msra.mxu0 %v857
        %884 = vmatprep.subr.mxu0 0.0
        %885 = vmatpush1.msra.mxu0 %v858
        %886 = vmatprep.subr.mxu0 0.0
        %887 = vmatpush1.msra.mxu0 %v859
        %888 = vmatprep.subr.mxu0 0.0
        %889 = vmatpush1.msra.mxu0 %v860
        %890 = vmatprep.subr.mxu0 0.0
        %891 = vmatpush1.msra.mxu0 %v861
        %892 = vmatprep.subr.mxu0 0.0
        %893 = vmatpush1.msra.mxu0 %v862
        %894 = vmatprep.subr.mxu0 0.0
        %895 = vmatpush1.msra.mxu0 %v863
        %896 = vmatprep.subr.mxu0 0.0
        %897 = vmatpush1.msra.mxu0 0.0
        %898 = vmatprep.subr.mxu0 0.0
        %899 = vmatpush1.msra.mxu0 0.0
        %900 = vmatprep.subr.mxu0 0.0
        %901 = vmatpush1.msra.mxu0 0.0
        %902 = vmatprep.subr.mxu0 0.0
        %903 = vmatpush1.msra.mxu0 0.0
        %904 = vmatprep.subr.mxu0 0.0
        %905 = vmatpush1.msra.mxu0 0.0
        %906 = vmatprep.subr.mxu0 0.0
        %907 = vmatpush1.msra.mxu0 0.0
        %908 = vmatprep.subr.mxu0 0.0
        %909 = vmatpush1.msra.mxu0 0.0
        %910 = vmatprep.subr.mxu0 0.0
        %911 = vmatpush1.msra.mxu0 0.0
        %912 = vmatprep.subr.mxu0 0.0
        %913 = vmatpush1.msra.mxu0 0.0
        %914 = vmatprep.subr.mxu0 0.0
        %915 = vmatpush1.msra.mxu0 0.0
        %916 = vmatprep.subr.mxu0 0.0
        %917 = vmatpush1.msra.mxu0 0.0
        %918 = vmatprep.subr.mxu0 0.0
        %919 = vmatpush1.msra.mxu0 0.0
        %920 = vmatprep.subr.mxu0 0.0
        %921 = vmatpush1.msra.mxu0 0.0
        %922 = vmatprep.subr.mxu0 0.0
        %923 = vmatpush1.msra.mxu0 0.0
        %924 = vmatprep.subr.mxu0 0.0
        %925 = vmatpush1.msra.mxu0 0.0
        %926 = vmatprep.subr.mxu0 0.0
        %927 = vmatpush1.msra.mxu0 0.0
        %928 = vmatprep.mubr.f32.mxu0 0.0
        %929 = vmatmul.mubr.f32.gmra.mrb[0].mxu0 %v843
        %v930 = vpop.f32.mrb[0].mxu0
        %v931 = vadd.f32 0.0, %v930
        %v932 = vpop.f32.mrb[0].mxu0
        %933 = vmatprep.mubr.f32.mxu0 0.0
        %934 = vmatmul.mubr.f32.gmra.mrb[0].mxu0 %v844
        %v935 = vpop.f32.mrb[0].mxu0
        %v936 = vadd.f32 0.0, %v935
        %v937 = vpop.f32.mrb[0].mxu0
        %938 = vmatprep.mubr.f32.mxu0 0.0
        %939 = vmatmul.mubr.f32.gmra.mrb[0].mxu0 %v845
        %v940 = vpop.f32.mrb[0].mxu0
        %v941 = vadd.f32 0.0, %v940
        %v942 = vpop.f32.mrb[0].mxu0
        %943 = vmatprep.mubr.f32.mxu0 0.0
        %944 = vmatmul.mubr.f32.gmra.mrb[0].mxu0 %v846
        %v945 = vpop.f32.mrb[0].mxu0
        %v946 = vadd.f32 0.0, %v945
        %v947 = vpop.f32.mrb[0].mxu0
        %948 = vdwg.mxu0
        %v949 = vadd.f32 %v837, %v931
        %v950 = vadd.f32 %v838, %v936
        %v951 = vadd.f32 %v839, %v941
        %v952 = vadd.f32 %v840, %v946
        %s953 = sadd.s32 %s178, 29
        %s954 = scalar_lea.vmem %s165, %s953
        %v955 = vld [vmem:[%s954] sm:$0xff]
        %v956 = vld [vmem:[%s954 + $0x8] sm:$0xff]
        %v957 = vld [vmem:[%s954 + $0x10] sm:$0xff]
        %v958 = vld [vmem:[%s954 + $0x18] sm:$0x3]
        %s959 = scalar_lea.vmem %s1, 896
        %v960 = vld [vmem:[%s959] sm:$0xff]
        %v961 = vld [vmem:[%s959 + $0x8] sm:$0xff]
        %v962 = vld [vmem:[%s959 + $0x10] sm:$0xff]
        %v963 = vld [vmem:[%s959 + $0x18] sm:$0xff]
        %v964 = vld [vmem:[%s959 + $0x20] sm:$0xff]
        %v965 = vld [vmem:[%s959 + $0x28] sm:$0xff]
        %v966 = vld [vmem:[%s959 + $0x30] sm:$0xff]
        %v967 = vld [vmem:[%s959 + $0x38] sm:$0xff]
        %v968 = vld [vmem:[%s959 + $0x40] sm:$0xff]
        %v969 = vld [vmem:[%s959 + $0x48] sm:$0xff]
        %v970 = vld [vmem:[%s959 + $0x50] sm:$0xff]
        %v971 = vld [vmem:[%s959 + $0x58] sm:$0xff]
        %v972 = vld [vmem:[%s959 + $0x60] sm:$0xff]
        %v973 = vld [vmem:[%s959 + $0x68] sm:$0xff]
        %v974 = vld [vmem:[%s959 + $0x70] sm:$0xff]
        %v975 = vld [vmem:[%s959 + $0x78] sm:$0xff]
        %976 = vmatprep.subr.mxu0 0.0
        %977 = vmatpush1.msra.mxu0 %v960
        %978 = vmatprep.subr.mxu0 0.0
        %979 = vmatpush1.msra.mxu0 %v961
        %980 = vmatprep.subr.mxu0 0.0
        %981 = vmatpush1.msra.mxu0 %v962
        %982 = vmatprep.subr.mxu0 0.0
        %983 = vmatpush1.msra.mxu0 %v963
        %984 = vmatprep.subr.mxu0 0.0
        %985 = vmatpush1.msra.mxu0 %v964
        %986 = vmatprep.subr.mxu0 0.0
        %987 = vmatpush1.msra.mxu0 %v965
        %988 = vmatprep.subr.mxu0 0.0
        %989 = vmatpush1.msra.mxu0 %v966
        %990 = vmatprep.subr.mxu0 0.0
        %991 = vmatpush1.msra.mxu0 %v967
        %992 = vmatprep.subr.mxu0 0.0
        %993 = vmatpush1.msra.mxu0 %v968
        %994 = vmatprep.subr.mxu0 0.0
        %995 = vmatpush1.msra.mxu0 %v969
        %996 = vmatprep.subr.mxu0 0.0
        %997 = vmatpush1.msra.mxu0 %v970
        %998 = vmatprep.subr.mxu0 0.0
        %999 = vmatpush1.msra.mxu0 %v971
        %1000 = vmatprep.subr.mxu0 0.0
        %1001 = vmatpush1.msra.mxu0 %v972
        %1002 = vmatprep.subr.mxu0 0.0
        %1003 = vmatpush1.msra.mxu0 %v973
        %1004 = vmatprep.subr.mxu0 0.0
        %1005 = vmatpush1.msra.mxu0 %v974
        %1006 = vmatprep.subr.mxu0 0.0
        %1007 = vmatpush1.msra.mxu0 %v975
        %1008 = vmatprep.subr.mxu0 0.0
        %1009 = vmatpush1.msra.mxu0 0.0
        %1010 = vmatprep.subr.mxu0 0.0
        %1011 = vmatpush1.msra.mxu0 0.0
        %1012 = vmatprep.subr.mxu0 0.0
        %1013 = vmatpush1.msra.mxu0 0.0
        %1014 = vmatprep.subr.mxu0 0.0
        %1015 = vmatpush1.msra.mxu0 0.0
        %1016 = vmatprep.subr.mxu0 0.0
        %1017 = vmatpush1.msra.mxu0 0.0
        %1018 = vmatprep.subr.mxu0 0.0
        %1019 = vmatpush1.msra.mxu0 0.0
        %1020 = vmatprep.subr.mxu0 0.0
        %1021 = vmatpush1.msra.mxu0 0.0
        %1022 = vmatprep.subr.mxu0 0.0
        %1023 = vmatpush1.msra.mxu0 0.0
        %1024 = vmatprep.subr.mxu0 0.0
        %1025 = vmatpush1.msra.mxu0 0.0
        %1026 = vmatprep.subr.mxu0 0.0
        %1027 = vmatpush1.msra.mxu0 0.0
        %1028 = vmatprep.subr.mxu0 0.0
        %1029 = vmatpush1.msra.mxu0 0.0
        %1030 = vmatprep.subr.mxu0 0.0
        %1031 = vmatpush1.msra.mxu0 0.0
        %1032 = vmatprep.subr.mxu0 0.0
        %1033 = vmatpush1.msra.mxu0 0.0
        %1034 = vmatprep.subr.mxu0 0.0
        %1035 = vmatpush1.msra.mxu0 0.0
        %1036 = vmatprep.subr.mxu0 0.0
        %1037 = vmatpush1.msra.mxu0 0.0
        %1038 = vmatprep.subr.mxu0 0.0
        %1039 = vmatpush1.msra.mxu0 0.0
        %1040 = vmatprep.mubr.f32.mxu0 0.0
        %1041 = vmatmul.mubr.f32.gmra.mrb[0].mxu0 %v955
        %v1042 = vpop.f32.mrb[0].mxu0
        %v1043 = vadd.f32 0.0, %v1042
        %v1044 = vpop.f32.mrb[0].mxu0
        %1045 = vmatprep.mubr.f32.mxu0 0.0
        %1046 = vmatmul.mubr.f32.gmra.mrb[0].mxu0 %v956
        %v1047 = vpop.f32.mrb[0].mxu0
        %v1048 = vadd.f32 0.0, %v1047
        %v1049 = vpop.f32.mrb[0].mxu0
        %1050 = vmatprep.mubr.f32.mxu0 0.0
        %1051 = vmatmul.mubr.f32.gmra.mrb[0].mxu0 %v957
        %v1052 = vpop.f32.mrb[0].mxu0
        %v1053 = vadd.f32 0.0, %v1052
        %v1054 = vpop.f32.mrb[0].mxu0
        %1055 = vmatprep.mubr.f32.mxu0 0.0
        %1056 = vmatmul.mubr.f32.gmra.mrb[0].mxu0 %v958
        %v1057 = vpop.f32.mrb[0].mxu0
        %v1058 = vadd.f32 0.0, %v1057
        %v1059 = vpop.f32.mrb[0].mxu0
        %1060 = vdwg.mxu0
        %v1061 = vadd.f32 %v949, %v1043
        %v1062 = vadd.f32 %v950, %v1048
        %v1063 = vadd.f32 %v951, %v1053
        %v1064 = vadd.f32 %v952, %v1058
        %s1065 = sadd.s32 %s178, 30
        %s1066 = scalar_lea.vmem %s165, %s1065
        %v1067 = vld [vmem:[%s1066] sm:$0xff]
        %v1068 = vld [vmem:[%s1066 + $0x8] sm:$0xff]
        %v1069 = vld [vmem:[%s1066 + $0x10] sm:$0xff]
        %v1070 = vld [vmem:[%s1066 + $0x18] sm:$0x3]
        %s1071 = scalar_lea.vmem %s1, 1024
        %v1072 = vld [vmem:[%s1071] sm:$0xff]
        %v1073 = vld [vmem:[%s1071 + $0x8] sm:$0xff]
        %v1074 = vld [vmem:[%s1071 + $0x10] sm:$0xff]
        %v1075 = vld [vmem:[%s1071 + $0x18] sm:$0xff]
        %v1076 = vld [vmem:[%s1071 + $0x20] sm:$0xff]
        %v1077 = vld [vmem:[%s1071 + $0x28] sm:$0xff]
        %v1078 = vld [vmem:[%s1071 + $0x30] sm:$0xff]
        %v1079 = vld [vmem:[%s1071 + $0x38] sm:$0xff]
        %v1080 = vld [vmem:[%s1071 + $0x40] sm:$0xff]
        %v1081 = vld [vmem:[%s1071 + $0x48] sm:$0xff]
        %v1082 = vld [vmem:[%s1071 + $0x50] sm:$0xff]
        %v1083 = vld [vmem:[%s1071 + $0x58] sm:$0xff]
        %v1084 = vld [vmem:[%s1071 + $0x60] sm:$0xff]
        %v1085 = vld [vmem:[%s1071 + $0x68] sm:$0xff]
        %v1086 = vld [vmem:[%s1071 + $0x70] sm:$0xff]
        %v1087 = vld [vmem:[%s1071 + $0x78] sm:$0xff]
        %1088 = vmatprep.subr.mxu0 0.0
        %1089 = vmatpush1.msra.mxu0 %v1072
        %1090 = vmatprep.subr.mxu0 0.0
        %1091 = vmatpush1.msra.mxu0 %v1073
        %1092 = vmatprep.subr.mxu0 0.0
        %1093 = vmatpush1.msra.mxu0 %v1074
        %1094 = vmatprep.subr.mxu0 0.0
        %1095 = vmatpush1.msra.mxu0 %v1075
        %1096 = vmatprep.subr.mxu0 0.0
        %1097 = vmatpush1.msra.mxu0 %v1076
        %1098 = vmatprep.subr.mxu0 0.0
        %1099 = vmatpush1.msra.mxu0 %v1077
        %1100 = vmatprep.subr.mxu0 0.0
        %1101 = vmatpush1.msra.mxu0 %v1078
        %1102 = vmatprep.subr.mxu0 0.0
        %1103 = vmatpush1.msra.mxu0 %v1079
        %1104 = vmatprep.subr.mxu0 0.0
        %1105 = vmatpush1.msra.mxu0 %v1080
        %1106 = vmatprep.subr.mxu0 0.0
        %1107 = vmatpush1.msra.mxu0 %v1081
        %1108 = vmatprep.subr.mxu0 0.0
        %1109 = vmatpush1.msra.mxu0 %v1082
        %1110 = vmatprep.subr.mxu0 0.0
        %1111 = vmatpush1.msra.mxu0 %v1083
        %1112 = vmatprep.subr.mxu0 0.0
        %1113 = vmatpush1.msra.mxu0 %v1084
        %1114 = vmatprep.subr.mxu0 0.0
        %1115 = vmatpush1.msra.mxu0 %v1085
        %1116 = vmatprep.subr.mxu0 0.0
        %1117 = vmatpush1.msra.mxu0 %v1086
        %1118 = vmatprep.subr.mxu0 0.0
        %1119 = vmatpush1.msra.mxu0 %v1087
        %1120 = vmatprep.subr.mxu0 0.0
        %1121 = vmatpush1.msra.mxu0 0.0
        %1122 = vmatprep.subr.mxu0 0.0
        %1123 = vmatpush1.msra.mxu0 0.0
        %1124 = vmatprep.subr.mxu0 0.0
        %1125 = vmatpush1.msra.mxu0 0.0
        %1126 = vmatprep.subr.mxu0 0.0
        %1127 = vmatpush1.msra.mxu0 0.0
        %1128 = vmatprep.subr.mxu0 0.0
        %1129 = vmatpush1.msra.mxu0 0.0
        %1130 = vmatprep.subr.mxu0 0.0
        %1131 = vmatpush1.msra.mxu0 0.0
        %1132 = vmatprep.subr.mxu0 0.0
        %1133 = vmatpush1.msra.mxu0 0.0
        %1134 = vmatprep.subr.mxu0 0.0
        %1135 = vmatpush1.msra.mxu0 0.0
        %1136 = vmatprep.subr.mxu0 0.0
        %1137 = vmatpush1.msra.mxu0 0.0
        %1138 = vmatprep.subr.mxu0 0.0
        %1139 = vmatpush1.msra.mxu0 0.0
        %1140 = vmatprep.subr.mxu0 0.0
        %1141 = vmatpush1.msra.mxu0 0.0
        %1142 = vmatprep.subr.mxu0 0.0
        %1143 = vmatpush1.msra.mxu0 0.0
        %1144 = vmatprep.subr.mxu0 0.0
        %1145 = vmatpush1.msra.mxu0 0.0
        %1146 = vmatprep.subr.mxu0 0.0
        %1147 = vmatpush1.msra.mxu0 0.0
        %1148 = vmatprep.subr.mxu0 0.0
        %1149 = vmatpush1.msra.mxu0 0.0
        %1150 = vmatprep.subr.mxu0 0.0
        %1151 = vmatpush1.msra.mxu0 0.0
        %1152 = vmatprep.mubr.f32.mxu0 0.0
        %1153 = vmatmul.mubr.f32.gmra.mrb[0].mxu0 %v1067
        %v1154 = vpop.f32.mrb[0].mxu0
        %v1155 = vadd.f32 0.0, %v1154
        %v1156 = vpop.f32.mrb[0].mxu0
        %1157 = vmatprep.mubr.f32.mxu0 0.0
        %1158 = vmatmul.mubr.f32.gmra.mrb[0].mxu0 %v1068
        %v1159 = vpop.f32.mrb[0].mxu0
        %v1160 = vadd.f32 0.0, %v1159
        %v1161 = vpop.f32.mrb[0].mxu0
        %1162 = vmatprep.mubr.f32.mxu0 0.0
        %1163 = vmatmul.mubr.f32.gmra.mrb[0].mxu0 %v1069
        %v1164 = vpop.f32.mrb[0].mxu0
        %v1165 = vadd.f32 0.0, %v1164
        %v1166 = vpop.f32.mrb[0].mxu0
        %1167 = vmatprep.mubr.f32.mxu0 0.0
        %1168 = vmatmul.mubr.f32.gmra.mrb[0].mxu0 %v1070
        %v1169 = vpop.f32.mrb[0].mxu0
        %v1170 = vadd.f32 0.0, %v1169
        %v1171 = vpop.f32.mrb[0].mxu0
        %1172 = vdwg.mxu0
        %v1173 = vadd.f32 %v1061, %v1155
        %v1174 = vadd.f32 %v1062, %v1160
        %v1175 = vadd.f32 %v1063, %v1165
        %v1176 = vadd.f32 %v1064, %v1170
        %1177 = vst [vmem:[#allocation2] sm:$0xff] %v1173
        %1178 = vst [vmem:[#allocation2 + $0x8] sm:$0xff] %v1174
        %1179 = vst [vmem:[#allocation2 + $0x10] sm:$0xff] %v1175
        %1180 = vst [vmem:[#allocation2 + $0x18] sm:$0x3] %v1176
        %v1181 = vld [vmem:[#allocation2] ss:$2 sm:$0x3f]
        %s1182 = scalar_lea.vmem [#allocation2], 1
        %v1183 = vld [vmem:[%s1182] ss:$2 sm:$0x3f]
        %v1184 = vmax.f32 %v1181, %v1183
        %s1185 = scalar_lea.vmem [#allocation2], 14
        %v1186 = vld [vmem:[%s1185] ss:$2 sm:$0x3f]
        %s1187 = scalar_lea.vmem [#allocation2], 15
        %v1188 = vld [vmem:[%s1187] ss:$2 sm:$0x3f]
        %v1189 = vmax.f32 %v1186, %v1188
        %v1190 = vmax.f32 %v1184, %v1189
        %v1192 = vlaneseq
        %v1193 = vshrl.u32 %v1192, 7
        %v1194 = vsub.s32 0, %v1193
        %v1195 = vrot.slane %v171, %v1194
        %v1197 = vadd.f32 %v1190, %v1195
        %v1198 = vtanh.pop %v1197
        %s1199 = smul.u32 %s173, 8
        %s1200 = scalar_lea.vmem %s170, %s1199
        %1201 = vst [vmem:[%s1200] sm:$0x3f] %v1198
      $region37: #{cnn_net3_forward.4} parent=31 // loop_footer
        %s177 = sadd.s32 1, %s173
      $region38: #{cnn_net3_forward.4} parent=31 // loop_footer_branch
        %172 = sbr.rel target = $region34
      $region39: #{cnn_net3_forward.4} parent=31 // loop_exit
        _
      %p1202 = scmp.lt.s32.totalorder %s14, 1
      %s1203 = scalar_select %p1202, %s14, 1
      %s1204 = smul.addr %s1203, 6
      %s1205 = smul.addr %s1204, 8
      %s1206 = scalar_lea.vmem %s3, %s1205
      // Predicated region
      $region40: #{cnn_net3_forward.4} parent=31 // pred_check
        %p1207 = pneg %p100
      $region41: #{cnn_net3_forward.4} parent=31 // pred_check_branch
        %1209 = sbr.rel (%p1207) target = $region43
      $region42: #{cnn_net3_forward.4} parent=31 // pred_region
        _
      $region43: #{cnn_net3_forward.4} parent=31 // pred_fallthru
        _
    $region32: #{cnn_net3_forward.4} parent=5 // pred_fallthru
      _
    %p1210 = scmp.le.s32.totalorder 2, %s9
    // Predicated region
    $region44: #{cnn_net3_forward.4} parent=5 // pred_check
      %p1211 = pneg %p1210
    $region45: #{cnn_net3_forward.4} parent=5 // pred_check_branch
      %1213 = sbr.rel (%p1211) target = $region47
    $region46: #{cnn_net3_forward.4} parent=5 // pred_region
      %s1214 = ssub.s32 %s9, 2
      // Predicated region
      $region48: #{cnn_net3_forward.4} parent=46 // pred_check
        %p1215 = pneg %p106
      $region49: #{cnn_net3_forward.4} parent=46 // pred_check_branch
        %1217 = sbr.rel (%p1215) target = $region51
      $region50: #{cnn_net3_forward.4} parent=46 // pred_region
        %p1218 = scmp.lt.s32.totalorder %s15, 1
        %s1219 = scalar_select %p1218, %s15, 1
        %s1220 = smul.addr %s1219, 6
        %s1221 = smul.addr %s1220, 8
        %s1222 = scalar_lea.vmem %s3, %s1221
      $region51: #{cnn_net3_forward.4} parent=46 // pred_fallthru
        _
    $region47: #{cnn_net3_forward.4} parent=5 // pred_fallthru
      _
  $region6: #{cnn_net3_forward.4} parent=0 // loop_footer
    %s13 = sadd.s32 1, %s9
  $region7: #{cnn_net3_forward.4} parent=0 // loop_footer_branch
    %8 = sbr.rel target = $region3
  $region8: #{cnn_net3_forward.4} parent=0 // loop_exit
    _

// kernel: cnn_net3_forward.3
$region0: #{cnn_net3_forward.3}
  #allocation0 [shape = 'u32[]', space=smem, size = 0x4, offset = 0x4, fixed_abs, tag = 'smem constant byte address 0x4 - core index']
  #allocation1 [shape = 'u32[144,128]{1,0:T(1,128)}', space=vmem, size = 0x12000, scoped, tag = 'internal scratch']
  #allocation2 [shape = 'f32[60,128]{1,0:T(8,128)}', space=vmem, size = 0x8000, scoped, tag = 'scratch operand']
  %s0 = inlined_call_operand.vmem [shape: f32[2,1024,3], index: 0, kind: input, shape index: {}]
  %s1 = inlined_call_operand.vmem [shape: f32[25,3,128], index: 1, kind: input, shape index: {}]
  %s2 = inlined_call_operand.hbm [shape: f32[1,128], index: 2, kind: input, shape index: {}]
  %s3 = inlined_call_operand.vmem [shape: f32[2,14,14,128], index: 3, kind: output, shape index: {}]
  %s4 = sld [smem:[#allocation0]]
  $region56: #{cnn_net3_forward.3} parent=0
    _
  %s6 = ssub.s32 1, %s4
  %s7 = scalar_select 0, %s6, %s4
  $region1: #{cnn_net3_forward.3} parent=0
    #allocation3 [shape = 'u8[512]{0}', space=vmem, size = 0x400, scoped, tag = 'input window, operand 2, single buffered']
    #allocation4 [shape = 's32[2]{0}', space=sflag, size = 0x8, scoped, tag = 'scoped memory for cnn_net3_forward.3']
    %8 = vsyncpa [#allocation4], 0
    loop: start=0, step=1, limit=4
    $region2: #{cnn_net3_forward.3} parent=1 // loop_pre_header
      _
    $region3: #{cnn_net3_forward.3} parent=1 // loop_header
      %s10 = sphi 0, %s14
      %p11 = scmp.ge.s32.totalorder %s10, 4
      %s20 = sphi 0, %s22
      %s23 = sphi 0, %s20
      %s24 = sphi 0, %s23
      %s40 = sphi 0, %s24
      %s44 = sphi 0, %s44
      %s46 = sphi 0, %s44
      %s47 = sphi 0, %s46
      %s61 = sphi 0, %s47
      %s65 = sphi 0, %s65
      %s67 = sphi 0, %s65
      %s68 = sphi 0, %s67
      %s82 = sphi 0, %s68
      %s88 = sphi 0, %s90
      %s91 = sphi 0, %s88
      %s92 = sphi 0, %s91
      %s108 = sphi 0, %s92
    $region4: #{cnn_net3_forward.3} parent=1 // loop_header_branch
      %13 = sbr.rel (%p11) target = $region8
    $region5: #{cnn_net3_forward.3} parent=1 // loop_body
      %s15 = ssub.s32 %s10, 1
      %s16 = ssub.s32 %s10, 2
      %s17 = sadd.s32 %s10, 1
      %s18 = ssub.s32 %s10, %s17
      %p19 = scmp.eq.s32.totalorder %s18, 0
      %s21 = sadd.s32 %s20, 1
      %s22 = scalar_select %p19, %s20, %s21
      %p25 = pneg %p19
      %p26 = scmp.eq.s32.totalorder %s10, 1
      %p27 = por %p25, %p26
      %p28 = scmp.ne.s32.totalorder %s20, %s23
      %p29 = scmp.eq.s32.totalorder %s10, 0
      %p30 = por %p28, %p29
      %p31 = scmp.ne.s32.totalorder %s20, %s23
      %p32 = scmp.eq.s32.totalorder %s15, 1
      %p33 = por %p31, %p32
      %p34 = scmp.ne.s32.totalorder %s23, %s24
      %p35 = scmp.eq.s32.totalorder %s15, 0
      %p36 = por %p34, %p35
      %p37 = scmp.ne.s32.totalorder %s23, %s24
      %p38 = scmp.eq.s32.totalorder %s16, 1
      %p39 = por %p37, %p38
      %p41 = scmp.ne.s32.totalorder %s24, %s40
      %p42 = scmp.eq.s32.totalorder %s16, 0
      %p43 = por %p41, %p42
      %s45 = sadd.s32 %s44, 1
      %p48 = scmp.eq.s32.totalorder %s10, 1
      %p49 = scmp.ne.s32.totalorder %s44, %s46
      %p50 = scmp.eq.s32.totalorder %s10, 0
      %p51 = por %p49, %p50
      %p52 = scmp.ne.s32.totalorder %s44, %s46
      %p53 = scmp.eq.s32.totalorder %s15, 1
      %p54 = por %p52, %p53
      %p55 = scmp.ne.s32.totalorder %s46, %s47
      %p56 = scmp.eq.s32.totalorder %s15, 0
      %p57 = por %p55, %p56
      %p58 = scmp.ne.s32.totalorder %s46, %s47
      %p59 = scmp.eq.s32.totalorder %s16, 1
      %p60 = por %p58, %p59
      %p62 = scmp.ne.s32.totalorder %s47, %s61
      %p63 = scmp.eq.s32.totalorder %s16, 0
      %p64 = por %p62, %p63
      %s66 = sadd.s32 %s65, 1
      %p69 = scmp.eq.s32.totalorder %s10, 1
      %p70 = scmp.ne.s32.totalorder %s65, %s67
      %p71 = scmp.eq.s32.totalorder %s10, 0
      %p72 = por %p70, %p71
      %p73 = scmp.ne.s32.totalorder %s65, %s67
      %p74 = scmp.eq.s32.totalorder %s15, 1
      %p75 = por %p73, %p74
      %p76 = scmp.ne.s32.totalorder %s67, %s68
      %p77 = scmp.eq.s32.totalorder %s15, 0
      %p78 = por %p76, %p77
      %p79 = scmp.ne.s32.totalorder %s67, %s68
      %p80 = scmp.eq.s32.totalorder %s16, 1
      %p81 = por %p79, %p80
      %p83 = scmp.ne.s32.totalorder %s68, %s82
      %p84 = scmp.eq.s32.totalorder %s16, 0
      %p85 = por %p83, %p84
      %s86 = ssub.s32 %s10, %s17
      %p87 = scmp.eq.s32.totalorder %s86, 0
      %s89 = sadd.s32 %s88, 1
      %s90 = scalar_select %p87, %s88, %s89
      %p93 = pneg %p87
      %p94 = scmp.eq.s32.totalorder %s10, 1
      %p95 = por %p93, %p94
      %p96 = scmp.ne.s32.totalorder %s88, %s91
      %p97 = scmp.eq.s32.totalorder %s10, 0
      %p98 = por %p96, %p97
      %p99 = scmp.ne.s32.totalorder %s88, %s91
      %p100 = scmp.eq.s32.totalorder %s15, 1
      %p101 = por %p99, %p100
      %p102 = scmp.ne.s32.totalorder %s91, %s92
      %p103 = scmp.eq.s32.totalorder %s15, 0
      %p104 = por %p102, %p103
      %p105 = scmp.ne.s32.totalorder %s91, %s92
      %p106 = scmp.eq.s32.totalorder %s16, 1
      %p107 = por %p105, %p106
      %p109 = scmp.ne.s32.totalorder %s92, %s108
      %p110 = scmp.eq.s32.totalorder %s16, 0
      %p111 = por %p109, %p110
      %p112 = scmp.le.s32.totalorder 1, %s10
      %p113 = scmp.lt.s32.totalorder %s10, 3
      %p114 = pnand %p112, %p113
      %p115 = pneg %p114
      // Predicated region
      $region9: #{cnn_net3_forward.3} parent=5 // pred_check
        _
      $region10: #{cnn_net3_forward.3} parent=5 // pred_check_branch
        %117 = sbr.rel (%p114) target = $region12
      $region11: #{cnn_net3_forward.3} parent=5 // pred_region
        %s118 = ssub.s32 %s10, 1
        // Predicated region
        $region13: #{cnn_net3_forward.3} parent=11 // pred_check
          %p119 = pneg %p57
        $region14: #{cnn_net3_forward.3} parent=11 // pred_check_branch
          %121 = sbr.rel (%p119) target = $region16
        $region15: #{cnn_net3_forward.3} parent=11 // pred_region
          _
        $region16: #{cnn_net3_forward.3} parent=11 // pred_fallthru
          _
        // Predicated region
        $region17: #{cnn_net3_forward.3} parent=11 // pred_check
          %p122 = pneg %p78
        $region18: #{cnn_net3_forward.3} parent=11 // pred_check_branch
          %124 = sbr.rel (%p122) target = $region20
        $region19: #{cnn_net3_forward.3} parent=11 // pred_region
          %s126 = ssub.s32 16, 16
          %127 = vsyncadd [#allocation4], %s126
          %s129 = sshll.u32 [#allocation3], 4
          %s130 = int_to_ptr.vmem [resolvable:$true] %s129
          %132 = dma.hbm_to_vmem [thread:$0]  %s2, 16, %s130, [#allocation4]
        $region20: #{cnn_net3_forward.3} parent=11 // pred_fallthru
          _
      $region12: #{cnn_net3_forward.3} parent=5 // pred_fallthru
        _
      %p133 = scmp.lt.s32.totalorder %s10, 2
      // Predicated region
      $region21: #{cnn_net3_forward.3} parent=5 // pred_check
        %p134 = pneg %p133
      $region22: #{cnn_net3_forward.3} parent=5 // pred_check_branch
        %136 = sbr.rel (%p134) target = $region24
      $region23: #{cnn_net3_forward.3} parent=5 // pred_region
        // Predicated region
        $region25: #{cnn_net3_forward.3} parent=23 // pred_check
          %p137 = pneg %p30
        $region26: #{cnn_net3_forward.3} parent=23 // pred_check_branch
          %139 = sbr.rel (%p137) target = $region28
        $region27: #{cnn_net3_forward.3} parent=23 // pred_region
          %p140 = scmp.lt.s32.totalorder %s10, 1
          %s141 = scalar_select %p140, %s10, 1
          %s142 = smul.addr %s141, 128
          %s143 = smul.addr %s142, 8
          %s144 = scalar_lea.vmem %s0, %s143
        $region28: #{cnn_net3_forward.3} parent=23 // pred_fallthru
          _
      $region24: #{cnn_net3_forward.3} parent=5 // pred_fallthru
        _
      %p145 = scmp.le.s32.totalorder 1, %s10
      %p146 = scmp.lt.s32.totalorder %s10, 3
      %p147 = pnand %p145, %p146
      %p148 = pneg %p147
      // Predicated region
      $region29: #{cnn_net3_forward.3} parent=5 // pred_check
        _
      $region30: #{cnn_net3_forward.3} parent=5 // pred_check_branch
        %150 = sbr.rel (%p147) target = $region32
      $region31: #{cnn_net3_forward.3} parent=5 // pred_region
        %s151 = ssub.s32 %s10, 1
        // Predicated region
        $region33: #{cnn_net3_forward.3} parent=31 // pred_check
          %p152 = pneg %p78
        $region34: #{cnn_net3_forward.3} parent=31 // pred_check_branch
          %154 = sbr.rel (%p152) target = $region36
        $region35: #{cnn_net3_forward.3} parent=31 // pred_region
          %155 = dma.done [#allocation4], 16
        $region36: #{cnn_net3_forward.3} parent=31 // pred_fallthru
          _
        %p156 = scmp.lt.s32.totalorder %s15, 1
        %s157 = scalar_select %p156, %s15, 1
        %s158 = smul.addr %s157, 128
        %s159 = smul.addr %s158, 8
        %s160 = scalar_lea.vmem %s0, %s159
        %p161 = pneg %p36
        %p162 = pneg %p33
        %p163 = pneg %p57
        %p164 = pneg %p54
        %p165 = pneg %p78
        %p166 = pneg %p75
        %p167 = pneg %p104
        %p168 = pneg %p101
        %p169 = scmp.lt.s32.totalorder %s15, 1
        %s170 = scalar_select %p169, %s15, 1
        %s171 = smul.addr %s170, 28
        %s172 = smul.addr %s171, 8
        %s173 = scalar_lea.vmem %s3, %s172
        %p174 = scmp.lt.s32.totalorder %s15, 1
        %s175 = scalar_select %p174, %s15, 1
        %s176 = smul.addr %s175, 128
        %s177 = smul.addr %s176, 8
        %s178 = scalar_lea.vmem %s0, %s177
        %p179 = scmp.lt.s32.totalorder %s15, 1
        %s180 = scalar_select %p179, %s15, 1
        %s181 = smul.addr %s180, 28
        %s182 = smul.addr %s181, 8
        %s183 = scalar_lea.vmem %s3, %s182
        %v184 = vld [vmem:[#allocation3] sm:$0x1]
        loop: start=0, step=1, limit=14
        $region37: #{cnn_net3_forward.3} parent=31 // loop_pre_header
          _
        $region38: #{cnn_net3_forward.3} parent=31 // loop_header
          %s186 = sphi 0, %s190
          %p187 = scmp.ge.s32.totalorder %s186, 14
        $region39: #{cnn_net3_forward.3} parent=31 // loop_header_branch
          %189 = sbr.rel (%p187) target = $region43
        $region40: #{cnn_net3_forward.3} parent=31 // loop_body
          %s191 = smul.u32 %s186, 64
          %s192 = scalar_lea.vmem %s178, %s191
          %v193 = vld [vmem:[%s192] sm:$0xff]
          %v194 = vld [vmem:[%s192 + $0x8] sm:$0xff]
          %v195 = vld [vmem:[%s192 + $0x10] sm:$0xff]
          %v196 = vld [vmem:[%s192 + $0x18] sm:$0xff]
          %v197 = vld [vmem:[%s192 + $0x20] sm:$0xff]
          %v198 = vld [vmem:[%s192 + $0x28] sm:$0xff]
          %v199 = vld [vmem:[%s192 + $0x30] sm:$0xff]
          %v200 = vld [vmem:[%s192 + $0x38] sm:$0xf]
          %v201 = vld [vmem:[%s1] sm:$0x7]
          %s202 = sadd.s32 %s191, 1
          %s203 = scalar_lea.vmem %s178, %s202
          %v204 = vld [vmem:[%s203] sm:$0xff]
          %v205 = vld [vmem:[%s203 + $0x8] sm:$0xff]
          %v206 = vld [vmem:[%s203 + $0x10] sm:$0xff]
          %v207 = vld [vmem:[%s203 + $0x18] sm:$0xff]
          %v208 = vld [vmem:[%s203 + $0x20] sm:$0xff]
          %v209 = vld [vmem:[%s203 + $0x28] sm:$0xff]
          %v210 = vld [vmem:[%s203 + $0x30] sm:$0xff]
          %v211 = vld [vmem:[%s203 + $0x38] sm:$0xf]
          %s212 = scalar_lea.vmem %s1, 4
          %v213 = vld [vmem:[%s212] sm:$0x7]
          %vm214 = vcmask 23552
          %v216 = vsel %vm214, %v204, 0
          %v219 = vsel %vm214, %v205, 0
          %v222 = vsel %vm214, %v206, 0
          %v225 = vsel %vm214, %v207, 0
          %v228 = vsel %vm214, %v208, 0
          %v231 = vsel %vm214, %v209, 0
          %v234 = vsel %vm214, %v210, 0
          %v237 = vsel %vm214, %v211, 0
          %vm239 = vcmask 1042432
          %v241 = vsel %vm239, %v213, 0
          %243 = vmatprep.subr.mxu0 0.0
          %244 = vmatpush1.msra.mxu0 %v241
          %245 = vmatprep.subr.mxu0 0.0
          %246 = vmatpush1.msra.mxu0 0.0
          %247 = vmatprep.subr.mxu0 0.0
          %248 = vmatpush1.msra.mxu0 0.0
          %249 = vmatprep.subr.mxu0 0.0
          %250 = vmatpush1.msra.mxu0 0.0
          %251 = vmatprep.subr.mxu0 0.0
          %252 = vmatpush1.msra.mxu0 0.0
          %253 = vmatprep.subr.mxu0 0.0
          %254 = vmatpush1.msra.mxu0 0.0
          %255 = vmatprep.subr.mxu0 0.0
          %256 = vmatpush1.msra.mxu0 0.0
          %257 = vmatprep.subr.mxu0 0.0
          %258 = vmatpush1.msra.mxu0 0.0
          %259 = vmatprep.subr.mxu0 0.0
          %260 = vmatpush1.msra.mxu0 0.0
          %261 = vmatprep.subr.mxu0 0.0
          %262 = vmatpush1.msra.mxu0 0.0
          %263 = vmatprep.subr.mxu0 0.0
          %264 = vmatpush1.msra.mxu0 0.0
          %265 = vmatprep.subr.mxu0 0.0
          %266 = vmatpush1.msra.mxu0 0.0
          %267 = vmatprep.subr.mxu0 0.0
          %268 = vmatpush1.msra.mxu0 0.0
          %269 = vmatprep.subr.mxu0 0.0
          %270 = vmatpush1.msra.mxu0 0.0
          %271 = vmatprep.subr.mxu0 0.0
          %272 = vmatpush1.msra.mxu0 0.0
          %273 = vmatprep.subr.mxu0 0.0
          %274 = vmatpush1.msra.mxu0 0.0
          %275 = vmatprep.subr.mxu0 0.0
          %276 = vmatpush1.msra.mxu0 0.0
          %277 = vmatprep.subr.mxu0 0.0
          %278 = vmatpush1.msra.mxu0 0.0
          %279 = vmatprep.subr.mxu0 0.0
          %280 = vmatpush1.msra.mxu0 0.0
          %281 = vmatprep.subr.mxu0 0.0
          %282 = vmatpush1.msra.mxu0 0.0
          %283 = vmatprep.subr.mxu0 0.0
          %284 = vmatpush1.msra.mxu0 0.0
          %285 = vmatprep.subr.mxu0 0.0
          %286 = vmatpush1.msra.mxu0 0.0
          %287 = vmatprep.subr.mxu0 0.0
          %288 = vmatpush1.msra.mxu0 0.0
          %289 = vmatprep.subr.mxu0 0.0
          %290 = vmatpush1.msra.mxu0 0.0
          %291 = vmatprep.subr.mxu0 0.0
          %292 = vmatpush1.msra.mxu0 0.0
          %293 = vmatprep.subr.mxu0 0.0
          %294 = vmatpush1.msra.mxu0 0.0
          %295 = vmatprep.subr.mxu0 0.0
          %296 = vmatpush1.msra.mxu0 0.0
          %297 = vmatprep.subr.mxu0 0.0
          %298 = vmatpush1.msra.mxu0 0.0
          %299 = vmatprep.subr.mxu0 0.0
          %300 = vmatpush1.msra.mxu0 0.0
          %301 = vmatprep.subr.mxu0 0.0
          %302 = vmatpush1.msra.mxu0 0.0
          %303 = vmatprep.subr.mxu0 0.0
          %304 = vmatpush1.msra.mxu0 0.0
          %305 = vmatprep.subr.mxu0 0.0
          %306 = vmatpush1.msra.mxu0 0.0
          %307 = vmatprep.mubr.f32.mxu0 0.0
          %308 = vmatmul.mubr.f32.gmra.mrb[0].mxu0 %v216
          %v309 = vpop.f32.mrb[0].mxu0
          %v310 = vadd.f32 0.0, %v309
          %v311 = vpop.f32.mrb[0].mxu0
          %312 = vmatprep.mubr.f32.mxu0 0.0
          %313 = vmatmul.mubr.f32.gmra.mrb[0].mxu0 %v219
          %v314 = vpop.f32.mrb[0].mxu0
          %v315 = vadd.f32 0.0, %v314
          %v316 = vpop.f32.mrb[0].mxu0
          %317 = vmatprep.mubr.f32.mxu0 0.0
          %318 = vmatmul.mubr.f32.gmra.mrb[0].mxu0 %v222
          %v319 = vpop.f32.mrb[0].mxu0
          %v320 = vadd.f32 0.0, %v319
          %v321 = vpop.f32.mrb[0].mxu0
          %322 = vmatprep.mubr.f32.mxu0 0.0
          %323 = vmatmul.mubr.f32.gmra.mrb[0].mxu0 %v225
          %v324 = vpop.f32.mrb[0].mxu0
          %v325 = vadd.f32 0.0, %v324
          %v326 = vpop.f32.mrb[0].mxu0
          %327 = vmatprep.mubr.f32.mxu0 0.0
          %328 = vmatmul.mubr.f32.gmra.mrb[0].mxu0 %v228
          %v329 = vpop.f32.mrb[0].mxu0
          %v330 = vadd.f32 0.0, %v329
          %v331 = vpop.f32.mrb[0].mxu0
          %332 = vmatprep.mubr.f32.mxu0 0.0
          %333 = vmatmul.mubr.f32.gmra.mrb[0].mxu0 %v231
          %v334 = vpop.f32.mrb[0].mxu0
          %v335 = vadd.f32 0.0, %v334
          %v336 = vpop.f32.mrb[0].mxu0
          %337 = vmatprep.mubr.f32.mxu0 0.0
          %338 = vmatmul.mubr.f32.gmra.mrb[0].mxu0 %v234
          %v339 = vpop.f32.mrb[0].mxu0
          %v340 = vadd.f32 0.0, %v339
          %v341 = vpop.f32.mrb[0].mxu0
          %342 = vmatprep.mubr.f32.mxu0 0.0
          %343 = vmatmul.mubr.f32.gmra.mrb[0].mxu0 %v237
          %v344 = vpop.f32.mrb[0].mxu0
          %v345 = vadd.f32 0.0, %v344
          %v346 = vpop.f32.mrb[0].mxu0
          %347 = vdwg.mxu0
          %v349 = vsel %vm214, %v193, 0
          %v352 = vsel %vm214, %v194, 0
          %v355 = vsel %vm214, %v195, 0
          %v358 = vsel %vm214, %v196, 0
          %v361 = vsel %vm214, %v197, 0
          %v364 = vsel %vm214, %v198, 0
          %v367 = vsel %vm214, %v199, 0
          %v370 = vsel %vm214, %v200, 0
          %v373 = vsel %vm239, %v201, 0
          %375 = vmatprep.subr.mxu0 0.0
          %376 = vmatpush1.msra.mxu0 %v373
          %377 = vmatprep.subr.mxu0 0.0
          %378 = vmatpush1.msra.mxu0 0.0
          %379 = vmatprep.subr.mxu0 0.0
          %380 = vmatpush1.msra.mxu0 0.0
          %381 = vmatprep.subr.mxu0 0.0
          %382 = vmatpush1.msra.mxu0 0.0
          %383 = vmatprep.subr.mxu0 0.0
          %384 = vmatpush1.msra.mxu0 0.0
          %385 = vmatprep.subr.mxu0 0.0
          %386 = vmatpush1.msra.mxu0 0.0
          %387 = vmatprep.subr.mxu0 0.0
          %388 = vmatpush1.msra.mxu0 0.0
          %389 = vmatprep.subr.mxu0 0.0
          %390 = vmatpush1.msra.mxu0 0.0
          %391 = vmatprep.subr.mxu0 0.0
          %392 = vmatpush1.msra.mxu0 0.0
          %393 = vmatprep.subr.mxu0 0.0
          %394 = vmatpush1.msra.mxu0 0.0
          %395 = vmatprep.subr.mxu0 0.0
          %396 = vmatpush1.msra.mxu0 0.0
          %397 = vmatprep.subr.mxu0 0.0
          %398 = vmatpush1.msra.mxu0 0.0
          %399 = vmatprep.subr.mxu0 0.0
          %400 = vmatpush1.msra.mxu0 0.0
          %401 = vmatprep.subr.mxu0 0.0
          %402 = vmatpush1.msra.mxu0 0.0
          %403 = vmatprep.subr.mxu0 0.0
          %404 = vmatpush1.msra.mxu0 0.0
          %405 = vmatprep.subr.mxu0 0.0
          %406 = vmatpush1.msra.mxu0 0.0
          %407 = vmatprep.subr.mxu0 0.0
          %408 = vmatpush1.msra.mxu0 0.0
          %409 = vmatprep.subr.mxu0 0.0
          %410 = vmatpush1.msra.mxu0 0.0
          %411 = vmatprep.subr.mxu0 0.0
          %412 = vmatpush1.msra.mxu0 0.0
          %413 = vmatprep.subr.mxu0 0.0
          %414 = vmatpush1.msra.mxu0 0.0
          %415 = vmatprep.subr.mxu0 0.0
          %416 = vmatpush1.msra.mxu0 0.0
          %417 = vmatprep.subr.mxu0 0.0
          %418 = vmatpush1.msra.mxu0 0.0
          %419 = vmatprep.subr.mxu0 0.0
          %420 = vmatpush1.msra.mxu0 0.0
          %421 = vmatprep.subr.mxu0 0.0
          %422 = vmatpush1.msra.mxu0 0.0
          %423 = vmatprep.subr.mxu0 0.0
          %424 = vmatpush1.msra.mxu0 0.0
          %425 = vmatprep.subr.mxu0 0.0
          %426 = vmatpush1.msra.mxu0 0.0
          %427 = vmatprep.subr.mxu0 0.0
          %428 = vmatpush1.msra.mxu0 0.0
          %429 = vmatprep.subr.mxu0 0.0
          %430 = vmatpush1.msra.mxu0 0.0
          %431 = vmatprep.subr.mxu0 0.0
          %432 = vmatpush1.msra.mxu0 0.0
          %433 = vmatprep.subr.mxu0 0.0
          %434 = vmatpush1.msra.mxu0 0.0
          %435 = vmatprep.subr.mxu0 0.0
          %436 = vmatpush1.msra.mxu0 0.0
          %437 = vmatprep.subr.mxu0 0.0
          %438 = vmatpush1.msra.mxu0 0.0
          %439 = vmatprep.mubr.f32.mxu0 0.0
          %440 = vmatmul.mubr.f32.gmra.mrb[0].mxu0 %v349
          %v441 = vpop.f32.mrb[0].mxu0
          %v442 = vadd.f32 %v310, %v441
          %v443 = vpop.f32.mrb[0].mxu0
          %444 = vmatprep.mubr.f32.mxu0 0.0
          %445 = vmatmul.mubr.f32.gmra.mrb[0].mxu0 %v352
          %v446 = vpop.f32.mrb[0].mxu0
          %v447 = vadd.f32 %v315, %v446
          %v448 = vpop.f32.mrb[0].mxu0
          %449 = vmatprep.mubr.f32.mxu0 0.0
          %450 = vmatmul.mubr.f32.gmra.mrb[0].mxu0 %v355
          %v451 = vpop.f32.mrb[0].mxu0
          %v452 = vadd.f32 %v320, %v451
          %v453 = vpop.f32.mrb[0].mxu0
          %454 = vmatprep.mubr.f32.mxu0 0.0
          %455 = vmatmul.mubr.f32.gmra.mrb[0].mxu0 %v358
          %v456 = vpop.f32.mrb[0].mxu0
          %v457 = vadd.f32 %v325, %v456
          %v458 = vpop.f32.mrb[0].mxu0
          %459 = vmatprep.mubr.f32.mxu0 0.0
          %460 = vmatmul.mubr.f32.gmra.mrb[0].mxu0 %v361
          %v461 = vpop.f32.mrb[0].mxu0
          %v462 = vadd.f32 %v330, %v461
          %v463 = vpop.f32.mrb[0].mxu0
          %464 = vmatprep.mubr.f32.mxu0 0.0
          %465 = vmatmul.mubr.f32.gmra.mrb[0].mxu0 %v364
          %v466 = vpop.f32.mrb[0].mxu0
          %v467 = vadd.f32 %v335, %v466
          %v468 = vpop.f32.mrb[0].mxu0
          %469 = vmatprep.mubr.f32.mxu0 0.0
          %470 = vmatmul.mubr.f32.gmra.mrb[0].mxu0 %v367
          %v471 = vpop.f32.mrb[0].mxu0
          %v472 = vadd.f32 %v340, %v471
          %v473 = vpop.f32.mrb[0].mxu0
          %474 = vmatprep.mubr.f32.mxu0 0.0
          %475 = vmatmul.mubr.f32.gmra.mrb[0].mxu0 %v370
          %v476 = vpop.f32.mrb[0].mxu0
          %v477 = vadd.f32 %v345, %v476
          %v478 = vpop.f32.mrb[0].mxu0
          %479 = vdwg.mxu0
          %s480 = sadd.s32 %s191, 2
          %s481 = scalar_lea.vmem %s178, %s480
          %v482 = vld [vmem:[%s481] sm:$0xff]
          %v483 = vld [vmem:[%s481 + $0x8] sm:$0xff]
          %v484 = vld [vmem:[%s481 + $0x10] sm:$0xff]
          %v485 = vld [vmem:[%s481 + $0x18] sm:$0xff]
          %v486 = vld [vmem:[%s481 + $0x20] sm:$0xff]
          %v487 = vld [vmem:[%s481 + $0x28] sm:$0xff]
          %v488 = vld [vmem:[%s481 + $0x30] sm:$0xff]
          %v489 = vld [vmem:[%s481 + $0x38] sm:$0xf]
          %s490 = scalar_lea.vmem %s1, 8
          %v491 = vld [vmem:[%s490] sm:$0x7]
          %v493 = vsel %vm214, %v482, 0
          %v496 = vsel %vm214, %v483, 0
          %v499 = vsel %vm214, %v484, 0
          %v502 = vsel %vm214, %v485, 0
          %v505 = vsel %vm214, %v486, 0
          %v508 = vsel %vm214, %v487, 0
          %v511 = vsel %vm214, %v488, 0
          %v514 = vsel %vm214, %v489, 0
          %v517 = vsel %vm239, %v491, 0
          %519 = vmatprep.subr.mxu0 0.0
          %520 = vmatpush1.msra.mxu0 %v517
          %521 = vmatprep.subr.mxu0 0.0
          %522 = vmatpush1.msra.mxu0 0.0
          %523 = vmatprep.subr.mxu0 0.0
          %524 = vmatpush1.msra.mxu0 0.0
          %525 = vmatprep.subr.mxu0 0.0
          %526 = vmatpush1.msra.mxu0 0.0
          %527 = vmatprep.subr.mxu0 0.0
          %528 = vmatpush1.msra.mxu0 0.0
          %529 = vmatprep.subr.mxu0 0.0
          %530 = vmatpush1.msra.mxu0 0.0
          %531 = vmatprep.subr.mxu0 0.0
          %532 = vmatpush1.msra.mxu0 0.0
          %533 = vmatprep.subr.mxu0 0.0
          %534 = vmatpush1.msra.mxu0 0.0
          %535 = vmatprep.subr.mxu0 0.0
          %536 = vmatpush1.msra.mxu0 0.0
          %537 = vmatprep.subr.mxu0 0.0
          %538 = vmatpush1.msra.mxu0 0.0
          %539 = vmatprep.subr.mxu0 0.0
          %540 = vmatpush1.msra.mxu0 0.0
          %541 = vmatprep.subr.mxu0 0.0
          %542 = vmatpush1.msra.mxu0 0.0
          %543 = vmatprep.subr.mxu0 0.0
          %544 = vmatpush1.msra.mxu0 0.0
          %545 = vmatprep.subr.mxu0 0.0
          %546 = vmatpush1.msra.mxu0 0.0
          %547 = vmatprep.subr.mxu0 0.0
          %548 = vmatpush1.msra.mxu0 0.0
          %549 = vmatprep.subr.mxu0 0.0
          %550 = vmatpush1.msra.mxu0 0.0
          %551 = vmatprep.subr.mxu0 0.0
          %552 = vmatpush1.msra.mxu0 0.0
          %553 = vmatprep.subr.mxu0 0.0
          %554 = vmatpush1.msra.mxu0 0.0
          %555 = vmatprep.subr.mxu0 0.0
          %556 = vmatpush1.msra.mxu0 0.0
          %557 = vmatprep.subr.mxu0 0.0
          %558 = vmatpush1.msra.mxu0 0.0
          %559 = vmatprep.subr.mxu0 0.0
          %560 = vmatpush1.msra.mxu0 0.0
          %561 = vmatprep.subr.mxu0 0.0
          %562 = vmatpush1.msra.mxu0 0.0
          %563 = vmatprep.subr.mxu0 0.0
          %564 = vmatpush1.msra.mxu0 0.0
          %565 = vmatprep.subr.mxu0 0.0
          %566 = vmatpush1.msra.mxu0 0.0
          %567 = vmatprep.subr.mxu0 0.0
          %568 = vmatpush1.msra.mxu0 0.0
          %569 = vmatprep.subr.mxu0 0.0
          %570 = vmatpush1.msra.mxu0 0.0
          %571 = vmatprep.subr.mxu0 0.0
          %572 = vmatpush1.msra.mxu0 0.0
          %573 = vmatprep.subr.mxu0 0.0
          %574 = vmatpush1.msra.mxu0 0.0
          %575 = vmatprep.subr.mxu0 0.0
          %576 = vmatpush1.msra.mxu0 0.0
          %577 = vmatprep.subr.mxu0 0.0
          %578 = vmatpush1.msra.mxu0 0.0
          %579 = vmatprep.subr.mxu0 0.0
          %580 = vmatpush1.msra.mxu0 0.0
          %581 = vmatprep.subr.mxu0 0.0
          %582 = vmatpush1.msra.mxu0 0.0
          %583 = vmatprep.mubr.f32.mxu0 0.0
          %584 = vmatmul.mubr.f32.gmra.mrb[0].mxu0 %v493
          %v585 = vpop.f32.mrb[0].mxu0
          %v586 = vadd.f32 0.0, %v585
          %v587 = vpop.f32.mrb[0].mxu0
          %588 = vmatprep.mubr.f32.mxu0 0.0
          %589 = vmatmul.mubr.f32.gmra.mrb[0].mxu0 %v496
          %v590 = vpop.f32.mrb[0].mxu0
          %v591 = vadd.f32 0.0, %v590
          %v592 = vpop.f32.mrb[0].mxu0
          %593 = vmatprep.mubr.f32.mxu0 0.0
          %594 = vmatmul.mubr.f32.gmra.mrb[0].mxu0 %v499
          %v595 = vpop.f32.mrb[0].mxu0
          %v596 = vadd.f32 0.0, %v595
          %v597 = vpop.f32.mrb[0].mxu0
          %598 = vmatprep.mubr.f32.mxu0 0.0
          %599 = vmatmul.mubr.f32.gmra.mrb[0].mxu0 %v502
          %v600 = vpop.f32.mrb[0].mxu0
          %v601 = vadd.f32 0.0, %v600
          %v602 = vpop.f32.mrb[0].mxu0
          %603 = vmatprep.mubr.f32.mxu0 0.0
          %604 = vmatmul.mubr.f32.gmra.mrb[0].mxu0 %v505
          %v605 = vpop.f32.mrb[0].mxu0
          %v606 = vadd.f32 0.0, %v605
          %v607 = vpop.f32.mrb[0].mxu0
          %608 = vmatprep.mubr.f32.mxu0 0.0
          %609 = vmatmul.mubr.f32.gmra.mrb[0].mxu0 %v508
          %v610 = vpop.f32.mrb[0].mxu0
          %v611 = vadd.f32 0.0, %v610
          %v612 = vpop.f32.mrb[0].mxu0
          %613 = vmatprep.mubr.f32.mxu0 0.0
          %614 = vmatmul.mubr.f32.gmra.mrb[0].mxu0 %v511
          %v615 = vpop.f32.mrb[0].mxu0
          %v616 = vadd.f32 0.0, %v615
          %v617 = vpop.f32.mrb[0].mxu0
          %618 = vmatprep.mubr.f32.mxu0 0.0
          %619 = vmatmul.mubr.f32.gmra.mrb[0].mxu0 %v514
          %v620 = vpop.f32.mrb[0].mxu0
          %v621 = vadd.f32 0.0, %v620
          %v622 = vpop.f32.mrb[0].mxu0
          %623 = vdwg.mxu0
          %v624 = vadd.f32 %v442, %v586
          %v625 = vadd.f32 %v447, %v591
          %v626 = vadd.f32 %v452, %v596
          %v627 = vadd.f32 %v457, %v601
          %v628 = vadd.f32 %v462, %v606
          %v629 = vadd.f32 %v467, %v611
          %v630 = vadd.f32 %v472, %v616
          %v631 = vadd.f32 %v477, %v621
          %s632 = sadd.s32 %s191, 3
          %s633 = scalar_lea.vmem %s178, %s632
          %v634 = vld [vmem:[%s633] sm:$0xff]
          %v635 = vld [vmem:[%s633 + $0x8] sm:$0xff]
          %v636 = vld [vmem:[%s633 + $0x10] sm:$0xff]
          %v637 = vld [vmem:[%s633 + $0x18] sm:$0xff]
          %v638 = vld [vmem:[%s633 + $0x20] sm:$0xff]
          %v639 = vld [vmem:[%s633 + $0x28] sm:$0xff]
          %v640 = vld [vmem:[%s633 + $0x30] sm:$0xff]
          %v641 = vld [vmem:[%s633 + $0x38] sm:$0xf]
          %s642 = scalar_lea.vmem %s1, 12
          %v643 = vld [vmem:[%s642] sm:$0x7]
          %v645 = vsel %vm214, %v634, 0
          %v648 = vsel %vm214, %v635, 0
          %v651 = vsel %vm214, %v636, 0
          %v654 = vsel %vm214, %v637, 0
          %v657 = vsel %vm214, %v638, 0
          %v660 = vsel %vm214, %v639, 0
          %v663 = vsel %vm214, %v640, 0
          %v666 = vsel %vm214, %v641, 0
          %v669 = vsel %vm239, %v643, 0
          %671 = vmatprep.subr.mxu0 0.0
          %672 = vmatpush1.msra.mxu0 %v669
          %673 = vmatprep.subr.mxu0 0.0
          %674 = vmatpush1.msra.mxu0 0.0
          %675 = vmatprep.subr.mxu0 0.0
          %676 = vmatpush1.msra.mxu0 0.0
          %677 = vmatprep.subr.mxu0 0.0
          %678 = vmatpush1.msra.mxu0 0.0
          %679 = vmatprep.subr.mxu0 0.0
          %680 = vmatpush1.msra.mxu0 0.0
          %681 = vmatprep.subr.mxu0 0.0
          %682 = vmatpush1.msra.mxu0 0.0
          %683 = vmatprep.subr.mxu0 0.0
          %684 = vmatpush1.msra.mxu0 0.0
          %685 = vmatprep.subr.mxu0 0.0
          %686 = vmatpush1.msra.mxu0 0.0
          %687 = vmatprep.subr.mxu0 0.0
          %688 = vmatpush1.msra.mxu0 0.0
          %689 = vmatprep.subr.mxu0 0.0
          %690 = vmatpush1.msra.mxu0 0.0
          %691 = vmatprep.subr.mxu0 0.0
          %692 = vmatpush1.msra.mxu0 0.0
          %693 = vmatprep.subr.mxu0 0.0
          %694 = vmatpush1.msra.mxu0 0.0
          %695 = vmatprep.subr.mxu0 0.0
          %696 = vmatpush1.msra.mxu0 0.0
          %697 = vmatprep.subr.mxu0 0.0
          %698 = vmatpush1.msra.mxu0 0.0
          %699 = vmatprep.subr.mxu0 0.0
          %700 = vmatpush1.msra.mxu0 0.0
          %701 = vmatprep.subr.mxu0 0.0
          %702 = vmatpush1.msra.mxu0 0.0
          %703 = vmatprep.subr.mxu0 0.0
          %704 = vmatpush1.msra.mxu0 0.0
          %705 = vmatprep.subr.mxu0 0.0
          %706 = vmatpush1.msra.mxu0 0.0
          %707 = vmatprep.subr.mxu0 0.0
          %708 = vmatpush1.msra.mxu0 0.0
          %709 = vmatprep.subr.mxu0 0.0
          %710 = vmatpush1.msra.mxu0 0.0
          %711 = vmatprep.subr.mxu0 0.0
          %712 = vmatpush1.msra.mxu0 0.0
          %713 = vmatprep.subr.mxu0 0.0
          %714 = vmatpush1.msra.mxu0 0.0
          %715 = vmatprep.subr.mxu0 0.0
          %716 = vmatpush1.msra.mxu0 0.0
          %717 = vmatprep.subr.mxu0 0.0
          %718 = vmatpush1.msra.mxu0 0.0
          %719 = vmatprep.subr.mxu0 0.0
          %720 = vmatpush1.msra.mxu0 0.0
          %721 = vmatprep.subr.mxu0 0.0
          %722 = vmatpush1.msra.mxu0 0.0
          %723 = vmatprep.subr.mxu0 0.0
          %724 = vmatpush1.msra.mxu0 0.0
          %725 = vmatprep.subr.mxu0 0.0
          %726 = vmatpush1.msra.mxu0 0.0
          %727 = vmatprep.subr.mxu0 0.0
          %728 = vmatpush1.msra.mxu0 0.0
          %729 = vmatprep.subr.mxu0 0.0
          %730 = vmatpush1.msra.mxu0 0.0
          %731 = vmatprep.subr.mxu0 0.0
          %732 = vmatpush1.msra.mxu0 0.0
          %733 = vmatprep.subr.mxu0 0.0
          %734 = vmatpush1.msra.mxu0 0.0
          %735 = vmatprep.mubr.f32.mxu0 0.0
          %736 = vmatmul.mubr.f32.gmra.mrb[0].mxu0 %v645
          %v737 = vpop.f32.mrb[0].mxu0
          %v738 = vadd.f32 0.0, %v737
          %v739 = vpop.f32.mrb[0].mxu0
          %740 = vmatprep.mubr.f32.mxu0 0.0
          %741 = vmatmul.mubr.f32.gmra.mrb[0].mxu0 %v648
          %v742 = vpop.f32.mrb[0].mxu0
          %v743 = vadd.f32 0.0, %v742
          %v744 = vpop.f32.mrb[0].mxu0
          %745 = vmatprep.mubr.f32.mxu0 0.0
          %746 = vmatmul.mubr.f32.gmra.mrb[0].mxu0 %v651
          %v747 = vpop.f32.mrb[0].mxu0
          %v748 = vadd.f32 0.0, %v747
          %v749 = vpop.f32.mrb[0].mxu0
          %750 = vmatprep.mubr.f32.mxu0 0.0
          %751 = vmatmul.mubr.f32.gmra.mrb[0].mxu0 %v654
          %v752 = vpop.f32.mrb[0].mxu0
          %v753 = vadd.f32 0.0, %v752
          %v754 = vpop.f32.mrb[0].mxu0
          %755 = vmatprep.mubr.f32.mxu0 0.0
          %756 = vmatmul.mubr.f32.gmra.mrb[0].mxu0 %v657
          %v757 = vpop.f32.mrb[0].mxu0
          %v758 = vadd.f32 0.0, %v757
          %v759 = vpop.f32.mrb[0].mxu0
          %760 = vmatprep.mubr.f32.mxu0 0.0
          %761 = vmatmul.mubr.f32.gmra.mrb[0].mxu0 %v660
          %v762 = vpop.f32.mrb[0].mxu0
          %v763 = vadd.f32 0.0, %v762
          %v764 = vpop.f32.mrb[0].mxu0
          %765 = vmatprep.mubr.f32.mxu0 0.0
          %766 = vmatmul.mubr.f32.gmra.mrb[0].mxu0 %v663
          %v767 = vpop.f32.mrb[0].mxu0
          %v768 = vadd.f32 0.0, %v767
          %v769 = vpop.f32.mrb[0].mxu0
          %770 = vmatprep.mubr.f32.mxu0 0.0
          %771 = vmatmul.mubr.f32.gmra.mrb[0].mxu0 %v666
          %v772 = vpop.f32.mrb[0].mxu0
          %v773 = vadd.f32 0.0, %v772
          %v774 = vpop.f32.mrb[0].mxu0
          %775 = vdwg.mxu0
          %v776 = vadd.f32 %v624, %v738
          %v777 = vadd.f32 %v625, %v743
          %v778 = vadd.f32 %v626, %v748
          %v779 = vadd.f32 %v627, %v753
          %v780 = vadd.f32 %v628, %v758
          %v781 = vadd.f32 %v629, %v763
          %v782 = vadd.f32 %v630, %v768
          %v783 = vadd.f32 %v631, %v773
          %s784 = sadd.s32 %s191, 4
          %s785 = scalar_lea.vmem %s178, %s784
          %v786 = vld [vmem:[%s785] sm:$0xff]
          %v787 = vld [vmem:[%s785 + $0x8] sm:$0xff]
          %v788 = vld [vmem:[%s785 + $0x10] sm:$0xff]
          %v789 = vld [vmem:[%s785 + $0x18] sm:$0xff]
          %v790 = vld [vmem:[%s785 + $0x20] sm:$0xff]
          %v791 = vld [vmem:[%s785 + $0x28] sm:$0xff]
          %v792 = vld [vmem:[%s785 + $0x30] sm:$0xff]
          %v793 = vld [vmem:[%s785 + $0x38] sm:$0xf]
          %s794 = scalar_lea.vmem %s1, 16
          %v795 = vld [vmem:[%s794] sm:$0x7]
          %v797 = vsel %vm214, %v786, 0
          %v800 = vsel %vm214, %v787, 0
          %v803 = vsel %vm214, %v788, 0
          %v806 = vsel %vm214, %v789, 0
          %v809 = vsel %vm214, %v790, 0
          %v812 = vsel %vm214, %v791, 0
          %v815 = vsel %vm214, %v792, 0
          %v818 = vsel %vm214, %v793, 0
          %v821 = vsel %vm239, %v795, 0
          %823 = vmatprep.subr.mxu0 0.0
          %824 = vmatpush1.msra.mxu0 %v821
          %825 = vmatprep.subr.mxu0 0.0
          %826 = vmatpush1.msra.mxu0 0.0
          %827 = vmatprep.subr.mxu0 0.0
          %828 = vmatpush1.msra.mxu0 0.0
          %829 = vmatprep.subr.mxu0 0.0
          %830 = vmatpush1.msra.mxu0 0.0
          %831 = vmatprep.subr.mxu0 0.0
          %832 = vmatpush1.msra.mxu0 0.0
          %833 = vmatprep.subr.mxu0 0.0
          %834 = vmatpush1.msra.mxu0 0.0
          %835 = vmatprep.subr.mxu0 0.0
          %836 = vmatpush1.msra.mxu0 0.0
          %837 = vmatprep.subr.mxu0 0.0
          %838 = vmatpush1.msra.mxu0 0.0
          %839 = vmatprep.subr.mxu0 0.0
          %840 = vmatpush1.msra.mxu0 0.0
          %841 = vmatprep.subr.mxu0 0.0
          %842 = vmatpush1.msra.mxu0 0.0
          %843 = vmatprep.subr.mxu0 0.0
          %844 = vmatpush1.msra.mxu0 0.0
          %845 = vmatprep.subr.mxu0 0.0
          %846 = vmatpush1.msra.mxu0 0.0
          %847 = vmatprep.subr.mxu0 0.0
          %848 = vmatpush1.msra.mxu0 0.0
          %849 = vmatprep.subr.mxu0 0.0
          %850 = vmatpush1.msra.mxu0 0.0
          %851 = vmatprep.subr.mxu0 0.0
          %852 = vmatpush1.msra.mxu0 0.0
          %853 = vmatprep.subr.mxu0 0.0
          %854 = vmatpush1.msra.mxu0 0.0
          %855 = vmatprep.subr.mxu0 0.0
          %856 = vmatpush1.msra.mxu0 0.0
          %857 = vmatprep.subr.mxu0 0.0
          %858 = vmatpush1.msra.mxu0 0.0
          %859 = vmatprep.subr.mxu0 0.0
          %860 = vmatpush1.msra.mxu0 0.0
          %861 = vmatprep.subr.mxu0 0.0
          %862 = vmatpush1.msra.mxu0 0.0
          %863 = vmatprep.subr.mxu0 0.0
          %864 = vmatpush1.msra.mxu0 0.0
          %865 = vmatprep.subr.mxu0 0.0
          %866 = vmatpush1.msra.mxu0 0.0
          %867 = vmatprep.subr.mxu0 0.0
          %868 = vmatpush1.msra.mxu0 0.0
          %869 = vmatprep.subr.mxu0 0.0
          %870 = vmatpush1.msra.mxu0 0.0
          %871 = vmatprep.subr.mxu0 0.0
          %872 = vmatpush1.msra.mxu0 0.0
          %873 = vmatprep.subr.mxu0 0.0
          %874 = vmatpush1.msra.mxu0 0.0
          %875 = vmatprep.subr.mxu0 0.0
          %876 = vmatpush1.msra.mxu0 0.0
          %877 = vmatprep.subr.mxu0 0.0
          %878 = vmatpush1.msra.mxu0 0.0
          %879 = vmatprep.subr.mxu0 0.0
          %880 = vmatpush1.msra.mxu0 0.0
          %881 = vmatprep.subr.mxu0 0.0
          %882 = vmatpush1.msra.mxu0 0.0
          %883 = vmatprep.subr.mxu0 0.0
          %884 = vmatpush1.msra.mxu0 0.0
          %885 = vmatprep.subr.mxu0 0.0
          %886 = vmatpush1.msra.mxu0 0.0
          %887 = vmatprep.mubr.f32.mxu0 0.0
          %888 = vmatmul.mubr.f32.gmra.mrb[0].mxu0 %v797
          %v889 = vpop.f32.mrb[0].mxu0
          %v890 = vadd.f32 0.0, %v889
          %v891 = vpop.f32.mrb[0].mxu0
          %892 = vmatprep.mubr.f32.mxu0 0.0
          %893 = vmatmul.mubr.f32.gmra.mrb[0].mxu0 %v800
          %v894 = vpop.f32.mrb[0].mxu0
          %v895 = vadd.f32 0.0, %v894
          %v896 = vpop.f32.mrb[0].mxu0
          %897 = vmatprep.mubr.f32.mxu0 0.0
          %898 = vmatmul.mubr.f32.gmra.mrb[0].mxu0 %v803
          %v899 = vpop.f32.mrb[0].mxu0
          %v900 = vadd.f32 0.0, %v899
          %v901 = vpop.f32.mrb[0].mxu0
          %902 = vmatprep.mubr.f32.mxu0 0.0
          %903 = vmatmul.mubr.f32.gmra.mrb[0].mxu0 %v806
          %v904 = vpop.f32.mrb[0].mxu0
          %v905 = vadd.f32 0.0, %v904
          %v906 = vpop.f32.mrb[0].mxu0
          %907 = vmatprep.mubr.f32.mxu0 0.0
          %908 = vmatmul.mubr.f32.gmra.mrb[0].mxu0 %v809
          %v909 = vpop.f32.mrb[0].mxu0
          %v910 = vadd.f32 0.0, %v909
          %v911 = vpop.f32.mrb[0].mxu0
          %912 = vmatprep.mubr.f32.mxu0 0.0
          %913 = vmatmul.mubr.f32.gmra.mrb[0].mxu0 %v812
          %v914 = vpop.f32.mrb[0].mxu0
          %v915 = vadd.f32 0.0, %v914
          %v916 = vpop.f32.mrb[0].mxu0
          %917 = vmatprep.mubr.f32.mxu0 0.0
          %918 = vmatmul.mubr.f32.gmra.mrb[0].mxu0 %v815
          %v919 = vpop.f32.mrb[0].mxu0
          %v920 = vadd.f32 0.0, %v919
          %v921 = vpop.f32.mrb[0].mxu0
          %922 = vmatprep.mubr.f32.mxu0 0.0
          %923 = vmatmul.mubr.f32.gmra.mrb[0].mxu0 %v818
          %v924 = vpop.f32.mrb[0].mxu0
          %v925 = vadd.f32 0.0, %v924
          %v926 = vpop.f32.mrb[0].mxu0
          %927 = vdwg.mxu0
          %v928 = vadd.f32 %v776, %v890
          %v929 = vadd.f32 %v777, %v895
          %v930 = vadd.f32 %v778, %v900
          %v931 = vadd.f32 %v779, %v905
          %v932 = vadd.f32 %v780, %v910
          %v933 = vadd.f32 %v781, %v915
          %v934 = vadd.f32 %v782, %v920
          %v935 = vadd.f32 %v783, %v925
          %s936 = sadd.s32 %s191, 32
          %s937 = scalar_lea.vmem %s178, %s936
          %v938 = vld [vmem:[%s937] sm:$0xff]
          %v939 = vld [vmem:[%s937 + $0x8] sm:$0xff]
          %v940 = vld [vmem:[%s937 + $0x10] sm:$0xff]
          %v941 = vld [vmem:[%s937 + $0x18] sm:$0xff]
          %v942 = vld [vmem:[%s937 + $0x20] sm:$0xff]
          %v943 = vld [vmem:[%s937 + $0x28] sm:$0xff]
          %v944 = vld [vmem:[%s937 + $0x30] sm:$0xff]
          %v945 = vld [vmem:[%s937 + $0x38] sm:$0xf]
          %s946 = scalar_lea.vmem %s1, 20
          %v947 = vld [vmem:[%s946] sm:$0x7]
          %v949 = vsel %vm214, %v938, 0
          %v952 = vsel %vm214, %v939, 0
          %v955 = vsel %vm214, %v940, 0
          %v958 = vsel %vm214, %v941, 0
          %v961 = vsel %vm214, %v942, 0
          %v964 = vsel %vm214, %v943, 0
          %v967 = vsel %vm214, %v944, 0
          %v970 = vsel %vm214, %v945, 0
          %v973 = vsel %vm239, %v947, 0
          %975 = vmatprep.subr.mxu0 0.0
          %976 = vmatpush1.msra.mxu0 %v973
          %977 = vmatprep.subr.mxu0 0.0
          %978 = vmatpush1.msra.mxu0 0.0
          %979 = vmatprep.subr.mxu0 0.0
          %980 = vmatpush1.msra.mxu0 0.0
          %981 = vmatprep.subr.mxu0 0.0
          %982 = vmatpush1.msra.mxu0 0.0
          %983 = vmatprep.subr.mxu0 0.0
          %984 = vmatpush1.msra.mxu0 0.0
          %985 = vmatprep.subr.mxu0 0.0
          %986 = vmatpush1.msra.mxu0 0.0
          %987 = vmatprep.subr.mxu0 0.0
          %988 = vmatpush1.msra.mxu0 0.0
          %989 = vmatprep.subr.mxu0 0.0
          %990 = vmatpush1.msra.mxu0 0.0
          %991 = vmatprep.subr.mxu0 0.0
          %992 = vmatpush1.msra.mxu0 0.0
          %993 = vmatprep.subr.mxu0 0.0
          %994 = vmatpush1.msra.mxu0 0.0
          %995 = vmatprep.subr.mxu0 0.0
          %996 = vmatpush1.msra.mxu0 0.0
          %997 = vmatprep.subr.mxu0 0.0
          %998 = vmatpush1.msra.mxu0 0.0
          %999 = vmatprep.subr.mxu0 0.0
          %1000 = vmatpush1.msra.mxu0 0.0
          %1001 = vmatprep.subr.mxu0 0.0
          %1002 = vmatpush1.msra.mxu0 0.0
          %1003 = vmatprep.subr.mxu0 0.0
          %1004 = vmatpush1.msra.mxu0 0.0
          %1005 = vmatprep.subr.mxu0 0.0
          %1006 = vmatpush1.msra.mxu0 0.0
          %1007 = vmatprep.subr.mxu0 0.0
          %1008 = vmatpush1.msra.mxu0 0.0
          %1009 = vmatprep.subr.mxu0 0.0
          %1010 = vmatpush1.msra.mxu0 0.0
          %1011 = vmatprep.subr.mxu0 0.0
          %1012 = vmatpush1.msra.mxu0 0.0
          %1013 = vmatprep.subr.mxu0 0.0
          %1014 = vmatpush1.msra.mxu0 0.0
          %1015 = vmatprep.subr.mxu0 0.0
          %1016 = vmatpush1.msra.mxu0 0.0
          %1017 = vmatprep.subr.mxu0 0.0
          %1018 = vmatpush1.msra.mxu0 0.0
          %1019 = vmatprep.subr.mxu0 0.0
          %1020 = vmatpush1.msra.mxu0 0.0
          %1021 = vmatprep.subr.mxu0 0.0
          %1022 = vmatpush1.msra.mxu0 0.0
          %1023 = vmatprep.subr.mxu0 0.0
          %1024 = vmatpush1.msra.mxu0 0.0
          %1025 = vmatprep.subr.mxu0 0.0
          %1026 = vmatpush1.msra.mxu0 0.0
          %1027 = vmatprep.subr.mxu0 0.0
          %1028 = vmatpush1.msra.mxu0 0.0
          %1029 = vmatprep.subr.mxu0 0.0
          %1030 = vmatpush1.msra.mxu0 0.0
          %1031 = vmatprep.subr.mxu0 0.0
          %1032 = vmatpush1.msra.mxu0 0.0
          %1033 = vmatprep.subr.mxu0 0.0
          %1034 = vmatpush1.msra.mxu0 0.0
          %1035 = vmatprep.subr.mxu0 0.0
          %1036 = vmatpush1.msra.mxu0 0.0
          %1037 = vmatprep.subr.mxu0 0.0
          %1038 = vmatpush1.msra.mxu0 0.0
          %1039 = vmatprep.mubr.f32.mxu0 0.0
          %1040 = vmatmul.mubr.f32.gmra.mrb[0].mxu0 %v949
          %v1041 = vpop.f32.mrb[0].mxu0
          %v1042 = vadd.f32 0.0, %v1041
          %v1043 = vpop.f32.mrb[0].mxu0
          %1044 = vmatprep.mubr.f32.mxu0 0.0
          %1045 = vmatmul.mubr.f32.gmra.mrb[0].mxu0 %v952
          %v1046 = vpop.f32.mrb[0].mxu0
          %v1047 = vadd.f32 0.0, %v1046
          %v1048 = vpop.f32.mrb[0].mxu0
          %1049 = vmatprep.mubr.f32.mxu0 0.0
          %1050 = vmatmul.mubr.f32.gmra.mrb[0].mxu0 %v955
          %v1051 = vpop.f32.mrb[0].mxu0
          %v1052 = vadd.f32 0.0, %v1051
          %v1053 = vpop.f32.mrb[0].mxu0
          %1054 = vmatprep.mubr.f32.mxu0 0.0
          %1055 = vmatmul.mubr.f32.gmra.mrb[0].mxu0 %v958
          %v1056 = vpop.f32.mrb[0].mxu0
          %v1057 = vadd.f32 0.0, %v1056
          %v1058 = vpop.f32.mrb[0].mxu0
          %1059 = vmatprep.mubr.f32.mxu0 0.0
          %1060 = vmatmul.mubr.f32.gmra.mrb[0].mxu0 %v961
          %v1061 = vpop.f32.mrb[0].mxu0
          %v1062 = vadd.f32 0.0, %v1061
          %v1063 = vpop.f32.mrb[0].mxu0
          %1064 = vmatprep.mubr.f32.mxu0 0.0
          %1065 = vmatmul.mubr.f32.gmra.mrb[0].mxu0 %v964
          %v1066 = vpop.f32.mrb[0].mxu0
          %v1067 = vadd.f32 0.0, %v1066
          %v1068 = vpop.f32.mrb[0].mxu0
          %1069 = vmatprep.mubr.f32.mxu0 0.0
          %1070 = vmatmul.mubr.f32.gmra.mrb[0].mxu0 %v967
          %v1071 = vpop.f32.mrb[0].mxu0
          %v1072 = vadd.f32 0.0, %v1071
          %v1073 = vpop.f32.mrb[0].mxu0
          %1074 = vmatprep.mubr.f32.mxu0 0.0
          %1075 = vmatmul.mubr.f32.gmra.mrb[0].mxu0 %v970
          %v1076 = vpop.f32.mrb[0].mxu0
          %v1077 = vadd.f32 0.0, %v1076
          %v1078 = vpop.f32.mrb[0].mxu0
          %1079 = vdwg.mxu0
          %v1080 = vadd.f32 %v928, %v1042
          %v1081 = vadd.f32 %v929, %v1047
          %v1082 = vadd.f32 %v930, %v1052
          %v1083 = vadd.f32 %v931, %v1057
          %v1084 = vadd.f32 %v932, %v1062
          %v1085 = vadd.f32 %v933, %v1067
          %v1086 = vadd.f32 %v934, %v1072
          %v1087 = vadd.f32 %v935, %v1077
          %s1088 = sadd.s32 %s191, 33
          %s1089 = scalar_lea.vmem %s178, %s1088
          %v1090 = vld [vmem:[%s1089] sm:$0xff]
          %v1091 = vld [vmem:[%s1089 + $0x8] sm:$0xff]
          %v1092 = vld [vmem:[%s1089 + $0x10] sm:$0xff]
          %v1093 = vld [vmem:[%s1089 + $0x18] sm:$0xff]
          %v1094 = vld [vmem:[%s1089 + $0x20] sm:$0xff]
          %v1095 = vld [vmem:[%s1089 + $0x28] sm:$0xff]
          %v1096 = vld [vmem:[%s1089 + $0x30] sm:$0xff]
          %v1097 = vld [vmem:[%s1089 + $0x38] sm:$0xf]
          %s1098 = scalar_lea.vmem %s1, 24
          %v1099 = vld [vmem:[%s1098] sm:$0x7]
          %v1101 = vsel %vm214, %v1090, 0
          %v1104 = vsel %vm214, %v1091, 0
          %v1107 = vsel %vm214, %v1092, 0
          %v1110 = vsel %vm214, %v1093, 0
          %v1113 = vsel %vm214, %v1094, 0
          %v1116 = vsel %vm214, %v1095, 0
          %v1119 = vsel %vm214, %v1096, 0
          %v1122 = vsel %vm214, %v1097, 0
          %v1125 = vsel %vm239, %v1099, 0
          %1127 = vmatprep.subr.mxu0 0.0
          %1128 = vmatpush1.msra.mxu0 %v1125
          %1129 = vmatprep.subr.mxu0 0.0
          %1130 = vmatpush1.msra.mxu0 0.0
          %1131 = vmatprep.subr.mxu0 0.0
          %1132 = vmatpush1.msra.mxu0 0.0
          %1133 = vmatprep.subr.mxu0 0.0
          %1134 = vmatpush1.msra.mxu0 0.0
          %1135 = vmatprep.subr.mxu0 0.0
          %1136 = vmatpush1.msra.mxu0 0.0
          %1137 = vmatprep.subr.mxu0 0.0
          %1138 = vmatpush1.msra.mxu0 0.0
          %1139 = vmatprep.subr.mxu0 0.0
          %1140 = vmatpush1.msra.mxu0 0.0
          %1141 = vmatprep.subr.mxu0 0.0
          %1142 = vmatpush1.msra.mxu0 0.0
          %1143 = vmatprep.subr.mxu0 0.0
          %1144 = vmatpush1.msra.mxu0 0.0
          %1145 = vmatprep.subr.mxu0 0.0
          %1146 = vmatpush1.msra.mxu0 0.0
          %1147 = vmatprep.subr.mxu0 0.0
          %1148 = vmatpush1.msra.mxu0 0.0
          %1149 = vmatprep.subr.mxu0 0.0
          %1150 = vmatpush1.msra.mxu0 0.0
          %1151 = vmatprep.subr.mxu0 0.0
          %1152 = vmatpush1.msra.mxu0 0.0
          %1153 = vmatprep.subr.mxu0 0.0
          %1154 = vmatpush1.msra.mxu0 0.0
          %1155 = vmatprep.subr.mxu0 0.0
          %1156 = vmatpush1.msra.mxu0 0.0
          %1157 = vmatprep.subr.mxu0 0.0
          %1158 = vmatpush1.msra.mxu0 0.0
          %1159 = vmatprep.subr.mxu0 0.0
          %1160 = vmatpush1.msra.mxu0 0.0
          %1161 = vmatprep.subr.mxu0 0.0
          %1162 = vmatpush1.msra.mxu0 0.0
          %1163 = vmatprep.subr.mxu0 0.0
          %1164 = vmatpush1.msra.mxu0 0.0
          %1165 = vmatprep.subr.mxu0 0.0
          %1166 = vmatpush1.msra.mxu0 0.0
          %1167 = vmatprep.subr.mxu0 0.0
          %1168 = vmatpush1.msra.mxu0 0.0
          %1169 = vmatprep.subr.mxu0 0.0
          %1170 = vmatpush1.msra.mxu0 0.0
          %1171 = vmatprep.subr.mxu0 0.0
          %1172 = vmatpush1.msra.mxu0 0.0
          %1173 = vmatprep.subr.mxu0 0.0
          %1174 = vmatpush1.msra.mxu0 0.0
          %1175 = vmatprep.subr.mxu0 0.0
          %1176 = vmatpush1.msra.mxu0 0.0
          %1177 = vmatprep.subr.mxu0 0.0
          %1178 = vmatpush1.msra.mxu0 0.0
          %1179 = vmatprep.subr.mxu0 0.0
          %1180 = vmatpush1.msra.mxu0 0.0
          %1181 = vmatprep.subr.mxu0 0.0
          %1182 = vmatpush1.msra.mxu0 0.0
          %1183 = vmatprep.subr.mxu0 0.0
          %1184 = vmatpush1.msra.mxu0 0.0
          %1185 = vmatprep.subr.mxu0 0.0
          %1186 = vmatpush1.msra.mxu0 0.0
          %1187 = vmatprep.subr.mxu0 0.0
          %1188 = vmatpush1.msra.mxu0 0.0
          %1189 = vmatprep.subr.mxu0 0.0
          %1190 = vmatpush1.msra.mxu0 0.0
          %1191 = vmatprep.mubr.f32.mxu0 0.0
          %1192 = vmatmul.mubr.f32.gmra.mrb[0].mxu0 %v1101
          %v1193 = vpop.f32.mrb[0].mxu0
          %v1194 = vadd.f32 0.0, %v1193
          %v1195 = vpop.f32.mrb[0].mxu0
          %1196 = vmatprep.mubr.f32.mxu0 0.0
          %1197 = vmatmul.mubr.f32.gmra.mrb[0].mxu0 %v1104
          %v1198 = vpop.f32.mrb[0].mxu0
          %v1199 = vadd.f32 0.0, %v1198
          %v1200 = vpop.f32.mrb[0].mxu0
          %1201 = vmatprep.mubr.f32.mxu0 0.0
          %1202 = vmatmul.mubr.f32.gmra.mrb[0].mxu0 %v1107
          %v1203 = vpop.f32.mrb[0].mxu0
          %v1204 = vadd.f32 0.0, %v1203
          %v1205 = vpop.f32.mrb[0].mxu0
          %1206 = vmatprep.mubr.f32.mxu0 0.0
          %1207 = vmatmul.mubr.f32.gmra.mrb[0].mxu0 %v1110
          %v1208 = vpop.f32.mrb[0].mxu0
          %v1209 = vadd.f32 0.0, %v1208
          %v1210 = vpop.f32.mrb[0].mxu0
          %1211 = vmatprep.mubr.f32.mxu0 0.0
          %1212 = vmatmul.mubr.f32.gmra.mrb[0].mxu0 %v1113
          %v1213 = vpop.f32.mrb[0].mxu0
          %v1214 = vadd.f32 0.0, %v1213
          %v1215 = vpop.f32.mrb[0].mxu0
          %1216 = vmatprep.mubr.f32.mxu0 0.0
          %1217 = vmatmul.mubr.f32.gmra.mrb[0].mxu0 %v1116
          %v1218 = vpop.f32.mrb[0].mxu0
          %v1219 = vadd.f32 0.0, %v1218
          %v1220 = vpop.f32.mrb[0].mxu0
          %1221 = vmatprep.mubr.f32.mxu0 0.0
          %1222 = vmatmul.mubr.f32.gmra.mrb[0].mxu0 %v1119
          %v1223 = vpop.f32.mrb[0].mxu0
          %v1224 = vadd.f32 0.0, %v1223
          %v1225 = vpop.f32.mrb[0].mxu0
          %1226 = vmatprep.mubr.f32.mxu0 0.0
          %1227 = vmatmul.mubr.f32.gmra.mrb[0].mxu0 %v1122
          %v1228 = vpop.f32.mrb[0].mxu0
          %v1229 = vadd.f32 0.0, %v1228
          %v1230 = vpop.f32.mrb[0].mxu0
          %1231 = vdwg.mxu0
          %v1232 = vadd.f32 %v1080, %v1194
          %v1233 = vadd.f32 %v1081, %v1199
          %v1234 = vadd.f32 %v1082, %v1204
          %v1235 = vadd.f32 %v1083, %v1209
          %v1236 = vadd.f32 %v1084, %v1214
          %v1237 = vadd.f32 %v1085, %v1219
          %v1238 = vadd.f32 %v1086, %v1224
          %v1239 = vadd.f32 %v1087, %v1229
          %s1240 = sadd.s32 %s191, 34
          %s1241 = scalar_lea.vmem %s178, %s1240
          %v1242 = vld [vmem:[%s1241] sm:$0xff]
          %v1243 = vld [vmem:[%s1241 + $0x8] sm:$0xff]
          %v1244 = vld [vmem:[%s1241 + $0x10] sm:$0xff]
          %v1245 = vld [vmem:[%s1241 + $0x18] sm:$0xff]
          %v1246 = vld [vmem:[%s1241 + $0x20] sm:$0xff]
          %v1247 = vld [vmem:[%s1241 + $0x28] sm:$0xff]
          %v1248 = vld [vmem:[%s1241 + $0x30] sm:$0xff]
          %v1249 = vld [vmem:[%s1241 + $0x38] sm:$0xf]
          %s1250 = scalar_lea.vmem %s1, 28
          %v1251 = vld [vmem:[%s1250] sm:$0x7]
          %v1253 = vsel %vm214, %v1242, 0
          %v1256 = vsel %vm214, %v1243, 0
          %v1259 = vsel %vm214, %v1244, 0
          %v1262 = vsel %vm214, %v1245, 0
          %v1265 = vsel %vm214, %v1246, 0
          %v1268 = vsel %vm214, %v1247, 0
          %v1271 = vsel %vm214, %v1248, 0
          %v1274 = vsel %vm214, %v1249, 0
          %v1277 = vsel %vm239, %v1251, 0
          %1279 = vmatprep.subr.mxu0 0.0
          %1280 = vmatpush1.msra.mxu0 %v1277
          %1281 = vmatprep.subr.mxu0 0.0
          %1282 = vmatpush1.msra.mxu0 0.0
          %1283 = vmatprep.subr.mxu0 0.0
          %1284 = vmatpush1.msra.mxu0 0.0
          %1285 = vmatprep.subr.mxu0 0.0
          %1286 = vmatpush1.msra.mxu0 0.0
          %1287 = vmatprep.subr.mxu0 0.0
          %1288 = vmatpush1.msra.mxu0 0.0
          %1289 = vmatprep.subr.mxu0 0.0
          %1290 = vmatpush1.msra.mxu0 0.0
          %1291 = vmatprep.subr.mxu0 0.0
          %1292 = vmatpush1.msra.mxu0 0.0
          %1293 = vmatprep.subr.mxu0 0.0
          %1294 = vmatpush1.msra.mxu0 0.0
          %1295 = vmatprep.subr.mxu0 0.0
          %1296 = vmatpush1.msra.mxu0 0.0
          %1297 = vmatprep.subr.mxu0 0.0
          %1298 = vmatpush1.msra.mxu0 0.0
          %1299 = vmatprep.subr.mxu0 0.0
          %1300 = vmatpush1.msra.mxu0 0.0
          %1301 = vmatprep.subr.mxu0 0.0
          %1302 = vmatpush1.msra.mxu0 0.0
          %1303 = vmatprep.subr.mxu0 0.0
          %1304 = vmatpush1.msra.mxu0 0.0
          %1305 = vmatprep.subr.mxu0 0.0
          %1306 = vmatpush1.msra.mxu0 0.0
          %1307 = vmatprep.subr.mxu0 0.0
          %1308 = vmatpush1.msra.mxu0 0.0
          %1309 = vmatprep.subr.mxu0 0.0
          %1310 = vmatpush1.msra.mxu0 0.0
          %1311 = vmatprep.subr.mxu0 0.0
          %1312 = vmatpush1.msra.mxu0 0.0
          %1313 = vmatprep.subr.mxu0 0.0
          %1314 = vmatpush1.msra.mxu0 0.0
          %1315 = vmatprep.subr.mxu0 0.0
          %1316 = vmatpush1.msra.mxu0 0.0
          %1317 = vmatprep.subr.mxu0 0.0
          %1318 = vmatpush1.msra.mxu0 0.0
          %1319 = vmatprep.subr.mxu0 0.0
          %1320 = vmatpush1.msra.mxu0 0.0
          %1321 = vmatprep.subr.mxu0 0.0
          %1322 = vmatpush1.msra.mxu0 0.0
          %1323 = vmatprep.subr.mxu0 0.0
          %1324 = vmatpush1.msra.mxu0 0.0
          %1325 = vmatprep.subr.mxu0 0.0
          %1326 = vmatpush1.msra.mxu0 0.0
          %1327 = vmatprep.subr.mxu0 0.0
          %1328 = vmatpush1.msra.mxu0 0.0
          %1329 = vmatprep.subr.mxu0 0.0
          %1330 = vmatpush1.msra.mxu0 0.0
          %1331 = vmatprep.subr.mxu0 0.0
          %1332 = vmatpush1.msra.mxu0 0.0
          %1333 = vmatprep.subr.mxu0 0.0
          %1334 = vmatpush1.msra.mxu0 0.0
          %1335 = vmatprep.subr.mxu0 0.0
          %1336 = vmatpush1.msra.mxu0 0.0
          %1337 = vmatprep.subr.mxu0 0.0
          %1338 = vmatpush1.msra.mxu0 0.0
          %1339 = vmatprep.subr.mxu0 0.0
          %1340 = vmatpush1.msra.mxu0 0.0
          %1341 = vmatprep.subr.mxu0 0.0
          %1342 = vmatpush1.msra.mxu0 0.0
          %1343 = vmatprep.mubr.f32.mxu0 0.0
          %1344 = vmatmul.mubr.f32.gmra.mrb[0].mxu0 %v1253
          %v1345 = vpop.f32.mrb[0].mxu0
          %v1346 = vadd.f32 0.0, %v1345
          %v1347 = vpop.f32.mrb[0].mxu0
          %1348 = vmatprep.mubr.f32.mxu0 0.0
          %1349 = vmatmul.mubr.f32.gmra.mrb[0].mxu0 %v1256
          %v1350 = vpop.f32.mrb[0].mxu0
          %v1351 = vadd.f32 0.0, %v1350
          %v1352 = vpop.f32.mrb[0].mxu0
          %1353 = vmatprep.mubr.f32.mxu0 0.0
          %1354 = vmatmul.mubr.f32.gmra.mrb[0].mxu0 %v1259
          %v1355 = vpop.f32.mrb[0].mxu0
          %v1356 = vadd.f32 0.0, %v1355
          %v1357 = vpop.f32.mrb[0].mxu0
          %1358 = vmatprep.mubr.f32.mxu0 0.0
          %1359 = vmatmul.mubr.f32.gmra.mrb[0].mxu0 %v1262
          %v1360 = vpop.f32.mrb[0].mxu0
          %v1361 = vadd.f32 0.0, %v1360
          %v1362 = vpop.f32.mrb[0].mxu0
          %1363 = vmatprep.mubr.f32.mxu0 0.0
          %1364 = vmatmul.mubr.f32.gmra.mrb[0].mxu0 %v1265
          %v1365 = vpop.f32.mrb[0].mxu0
          %v1366 = vadd.f32 0.0, %v1365
          %v1367 = vpop.f32.mrb[0].mxu0
          %1368 = vmatprep.mubr.f32.mxu0 0.0
          %1369 = vmatmul.mubr.f32.gmra.mrb[0].mxu0 %v1268
          %v1370 = vpop.f32.mrb[0].mxu0
          %v1371 = vadd.f32 0.0, %v1370
          %v1372 = vpop.f32.mrb[0].mxu0
          %1373 = vmatprep.mubr.f32.mxu0 0.0
          %1374 = vmatmul.mubr.f32.gmra.mrb[0].mxu0 %v1271
          %v1375 = vpop.f32.mrb[0].mxu0
          %v1376 = vadd.f32 0.0, %v1375
          %v1377 = vpop.f32.mrb[0].mxu0
          %1378 = vmatprep.mubr.f32.mxu0 0.0
          %1379 = vmatmul.mubr.f32.gmra.mrb[0].mxu0 %v1274
          %v1380 = vpop.f32.mrb[0].mxu0
          %v1381 = vadd.f32 0.0, %v1380
          %v1382 = vpop.f32.mrb[0].mxu0
          %1383 = vdwg.mxu0
          %v1384 = vadd.f32 %v1232, %v1346
          %v1385 = vadd.f32 %v1233, %v1351
          %v1386 = vadd.f32 %v1234, %v1356
          %v1387 = vadd.f32 %v1235, %v1361
          %v1388 = vadd.f32 %v1236, %v1366
          %v1389 = vadd.f32 %v1237, %v1371
          %v1390 = vadd.f32 %v1238, %v1376
          %v1391 = vadd.f32 %v1239, %v1381
          %s1392 = sadd.s32 %s191, 35
          %s1393 = scalar_lea.vmem %s178, %s1392
          %v1394 = vld [vmem:[%s1393] sm:$0xff]
          %v1395 = vld [vmem:[%s1393 + $0x8] sm:$0xff]
          %v1396 = vld [vmem:[%s1393 + $0x10] sm:$0xff]
          %v1397 = vld [vmem:[%s1393 + $0x18] sm:$0xff]
          %v1398 = vld [vmem:[%s1393 + $0x20] sm:$0xff]
          %v1399 = vld [vmem:[%s1393 + $0x28] sm:$0xff]
          %v1400 = vld [vmem:[%s1393 + $0x30] sm:$0xff]
          %v1401 = vld [vmem:[%s1393 + $0x38] sm:$0xf]
          %s1402 = scalar_lea.vmem %s1, 32
          %v1403 = vld [vmem:[%s1402] sm:$0x7]
          %v1405 = vsel %vm214, %v1394, 0
          %v1408 = vsel %vm214, %v1395, 0
          %v1411 = vsel %vm214, %v1396, 0
          %v1414 = vsel %vm214, %v1397, 0
          %v1417 = vsel %vm214, %v1398, 0
          %v1420 = vsel %vm214, %v1399, 0
          %v1423 = vsel %vm214, %v1400, 0
          %v1426 = vsel %vm214, %v1401, 0
          %v1429 = vsel %vm239, %v1403, 0
          %1431 = vmatprep.subr.mxu0 0.0
          %1432 = vmatpush1.msra.mxu0 %v1429
          %1433 = vmatprep.subr.mxu0 0.0
          %1434 = vmatpush1.msra.mxu0 0.0
          %1435 = vmatprep.subr.mxu0 0.0
          %1436 = vmatpush1.msra.mxu0 0.0
          %1437 = vmatprep.subr.mxu0 0.0
          %1438 = vmatpush1.msra.mxu0 0.0
          %1439 = vmatprep.subr.mxu0 0.0
          %1440 = vmatpush1.msra.mxu0 0.0
          %1441 = vmatprep.subr.mxu0 0.0
          %1442 = vmatpush1.msra.mxu0 0.0
          %1443 = vmatprep.subr.mxu0 0.0
          %1444 = vmatpush1.msra.mxu0 0.0
          %1445 = vmatprep.subr.mxu0 0.0
          %1446 = vmatpush1.msra.mxu0 0.0
          %1447 = vmatprep.subr.mxu0 0.0
          %1448 = vmatpush1.msra.mxu0 0.0
          %1449 = vmatprep.subr.mxu0 0.0
          %1450 = vmatpush1.msra.mxu0 0.0
          %1451 = vmatprep.subr.mxu0 0.0
          %1452 = vmatpush1.msra.mxu0 0.0
          %1453 = vmatprep.subr.mxu0 0.0
          %1454 = vmatpush1.msra.mxu0 0.0
          %1455 = vmatprep.subr.mxu0 0.0
          %1456 = vmatpush1.msra.mxu0 0.0
          %1457 = vmatprep.subr.mxu0 0.0
          %1458 = vmatpush1.msra.mxu0 0.0
          %1459 = vmatprep.subr.mxu0 0.0
          %1460 = vmatpush1.msra.mxu0 0.0
          %1461 = vmatprep.subr.mxu0 0.0
          %1462 = vmatpush1.msra.mxu0 0.0
          %1463 = vmatprep.subr.mxu0 0.0
          %1464 = vmatpush1.msra.mxu0 0.0
          %1465 = vmatprep.subr.mxu0 0.0
          %1466 = vmatpush1.msra.mxu0 0.0
          %1467 = vmatprep.subr.mxu0 0.0
          %1468 = vmatpush1.msra.mxu0 0.0
          %1469 = vmatprep.subr.mxu0 0.0
          %1470 = vmatpush1.msra.mxu0 0.0
          %1471 = vmatprep.subr.mxu0 0.0
          %1472 = vmatpush1.msra.mxu0 0.0
          %1473 = vmatprep.subr.mxu0 0.0
          %1474 = vmatpush1.msra.mxu0 0.0
          %1475 = vmatprep.subr.mxu0 0.0
          %1476 = vmatpush1.msra.mxu0 0.0
          %1477 = vmatprep.subr.mxu0 0.0
          %1478 = vmatpush1.msra.mxu0 0.0
          %1479 = vmatprep.subr.mxu0 0.0
          %1480 = vmatpush1.msra.mxu0 0.0
          %1481 = vmatprep.subr.mxu0 0.0
          %1482 = vmatpush1.msra.mxu0 0.0
          %1483 = vmatprep.subr.mxu0 0.0
          %1484 = vmatpush1.msra.mxu0 0.0
          %1485 = vmatprep.subr.mxu0 0.0
          %1486 = vmatpush1.msra.mxu0 0.0
          %1487 = vmatprep.subr.mxu0 0.0
          %1488 = vmatpush1.msra.mxu0 0.0
          %1489 = vmatprep.subr.mxu0 0.0
          %1490 = vmatpush1.msra.mxu0 0.0
          %1491 = vmatprep.subr.mxu0 0.0
          %1492 = vmatpush1.msra.mxu0 0.0
          %1493 = vmatprep.subr.mxu0 0.0
          %1494 = vmatpush1.msra.mxu0 0.0
          %1495 = vmatprep.mubr.f32.mxu0 0.0
          %1496 = vmatmul.mubr.f32.gmra.mrb[0].mxu0 %v1405
          %v1497 = vpop.f32.mrb[0].mxu0
          %v1498 = vadd.f32 0.0, %v1497
          %v1499 = vpop.f32.mrb[0].mxu0
          %1500 = vmatprep.mubr.f32.mxu0 0.0
          %1501 = vmatmul.mubr.f32.gmra.mrb[0].mxu0 %v1408
          %v1502 = vpop.f32.mrb[0].mxu0
          %v1503 = vadd.f32 0.0, %v1502
          %v1504 = vpop.f32.mrb[0].mxu0
          %1505 = vmatprep.mubr.f32.mxu0 0.0
          %1506 = vmatmul.mubr.f32.gmra.mrb[0].mxu0 %v1411
          %v1507 = vpop.f32.mrb[0].mxu0
          %v1508 = vadd.f32 0.0, %v1507
          %v1509 = vpop.f32.mrb[0].mxu0
          %1510 = vmatprep.mubr.f32.mxu0 0.0
          %1511 = vmatmul.mubr.f32.gmra.mrb[0].mxu0 %v1414
          %v1512 = vpop.f32.mrb[0].mxu0
          %v1513 = vadd.f32 0.0, %v1512
          %v1514 = vpop.f32.mrb[0].mxu0
          %1515 = vmatprep.mubr.f32.mxu0 0.0
          %1516 = vmatmul.mubr.f32.gmra.mrb[0].mxu0 %v1417
          %v1517 = vpop.f32.mrb[0].mxu0
          %v1518 = vadd.f32 0.0, %v1517
          %v1519 = vpop.f32.mrb[0].mxu0
          %1520 = vmatprep.mubr.f32.mxu0 0.0
          %1521 = vmatmul.mubr.f32.gmra.mrb[0].mxu0 %v1420
          %v1522 = vpop.f32.mrb[0].mxu0
          %v1523 = vadd.f32 0.0, %v1522
          %v1524 = vpop.f32.mrb[0].mxu0
          %1525 = vmatprep.mubr.f32.mxu0 0.0
          %1526 = vmatmul.mubr.f32.gmra.mrb[0].mxu0 %v1423
          %v1527 = vpop.f32.mrb[0].mxu0
          %v1528 = vadd.f32 0.0, %v1527
          %v1529 = vpop.f32.mrb[0].mxu0
          %1530 = vmatprep.mubr.f32.mxu0 0.0
          %1531 = vmatmul.mubr.f32.gmra.mrb[0].mxu0 %v1426
          %v1532 = vpop.f32.mrb[0].mxu0
          %v1533 = vadd.f32 0.0, %v1532
          %v1534 = vpop.f32.mrb[0].mxu0
          %1535 = vdwg.mxu0
          %v1536 = vadd.f32 %v1384, %v1498
          %v1537 = vadd.f32 %v1385, %v1503
          %v1538 = vadd.f32 %v1386, %v1508
          %v1539 = vadd.f32 %v1387, %v1513
          %v1540 = vadd.f32 %v1388, %v1518
          %v1541 = vadd.f32 %v1389, %v1523
          %v1542 = vadd.f32 %v1390, %v1528
          %v1543 = vadd.f32 %v1391, %v1533
          %s1544 = sadd.s32 %s191, 36
          %s1545 = scalar_lea.vmem %s178, %s1544
          %v1546 = vld [vmem:[%s1545] sm:$0xff]
          %v1547 = vld [vmem:[%s1545 + $0x8] sm:$0xff]
          %v1548 = vld [vmem:[%s1545 + $0x10] sm:$0xff]
          %v1549 = vld [vmem:[%s1545 + $0x18] sm:$0xff]
          %v1550 = vld [vmem:[%s1545 + $0x20] sm:$0xff]
          %v1551 = vld [vmem:[%s1545 + $0x28] sm:$0xff]
          %v1552 = vld [vmem:[%s1545 + $0x30] sm:$0xff]
          %v1553 = vld [vmem:[%s1545 + $0x38] sm:$0xf]
          %s1554 = scalar_lea.vmem %s1, 36
          %v1555 = vld [vmem:[%s1554] sm:$0x7]
          %v1557 = vsel %vm214, %v1546, 0
          %v1560 = vsel %vm214, %v1547, 0
          %v1563 = vsel %vm214, %v1548, 0
          %v1566 = vsel %vm214, %v1549, 0
          %v1569 = vsel %vm214, %v1550, 0
          %v1572 = vsel %vm214, %v1551, 0
          %v1575 = vsel %vm214, %v1552, 0
          %v1578 = vsel %vm214, %v1553, 0
          %v1581 = vsel %vm239, %v1555, 0
          %1583 = vmatprep.subr.mxu0 0.0
          %1584 = vmatpush1.msra.mxu0 %v1581
          %1585 = vmatprep.subr.mxu0 0.0
          %1586 = vmatpush1.msra.mxu0 0.0
          %1587 = vmatprep.subr.mxu0 0.0
          %1588 = vmatpush1.msra.mxu0 0.0
          %1589 = vmatprep.subr.mxu0 0.0
          %1590 = vmatpush1.msra.mxu0 0.0
          %1591 = vmatprep.subr.mxu0 0.0
          %1592 = vmatpush1.msra.mxu0 0.0
          %1593 = vmatprep.subr.mxu0 0.0
          %1594 = vmatpush1.msra.mxu0 0.0
          %1595 = vmatprep.subr.mxu0 0.0
          %1596 = vmatpush1.msra.mxu0 0.0
          %1597 = vmatprep.subr.mxu0 0.0
          %1598 = vmatpush1.msra.mxu0 0.0
          %1599 = vmatprep.subr.mxu0 0.0
          %1600 = vmatpush1.msra.mxu0 0.0
          %1601 = vmatprep.subr.mxu0 0.0
          %1602 = vmatpush1.msra.mxu0 0.0
          %1603 = vmatprep.subr.mxu0 0.0
          %1604 = vmatpush1.msra.mxu0 0.0
          %1605 = vmatprep.subr.mxu0 0.0
          %1606 = vmatpush1.msra.mxu0 0.0
          %1607 = vmatprep.subr.mxu0 0.0
          %1608 = vmatpush1.msra.mxu0 0.0
          %1609 = vmatprep.subr.mxu0 0.0
          %1610 = vmatpush1.msra.mxu0 0.0
          %1611 = vmatprep.subr.mxu0 0.0
          %1612 = vmatpush1.msra.mxu0 0.0
          %1613 = vmatprep.subr.mxu0 0.0
          %1614 = vmatpush1.msra.mxu0 0.0
          %1615 = vmatprep.subr.mxu0 0.0
          %1616 = vmatpush1.msra.mxu0 0.0
          %1617 = vmatprep.subr.mxu0 0.0
          %1618 = vmatpush1.msra.mxu0 0.0
          %1619 = vmatprep.subr.mxu0 0.0
          %1620 = vmatpush1.msra.mxu0 0.0
          %1621 = vmatprep.subr.mxu0 0.0
          %1622 = vmatpush1.msra.mxu0 0.0
          %1623 = vmatprep.subr.mxu0 0.0
          %1624 = vmatpush1.msra.mxu0 0.0
          %1625 = vmatprep.subr.mxu0 0.0
          %1626 = vmatpush1.msra.mxu0 0.0
          %1627 = vmatprep.subr.mxu0 0.0
          %1628 = vmatpush1.msra.mxu0 0.0
          %1629 = vmatprep.subr.mxu0 0.0
          %1630 = vmatpush1.msra.mxu0 0.0
          %1631 = vmatprep.subr.mxu0 0.0
          %1632 = vmatpush1.msra.mxu0 0.0
          %1633 = vmatprep.subr.mxu0 0.0
          %1634 = vmatpush1.msra.mxu0 0.0
          %1635 = vmatprep.subr.mxu0 0.0
          %1636 = vmatpush1.msra.mxu0 0.0
          %1637 = vmatprep.subr.mxu0 0.0
          %1638 = vmatpush1.msra.mxu0 0.0
          %1639 = vmatprep.subr.mxu0 0.0
          %1640 = vmatpush1.msra.mxu0 0.0
          %1641 = vmatprep.subr.mxu0 0.0
          %1642 = vmatpush1.msra.mxu0 0.0
          %1643 = vmatprep.subr.mxu0 0.0
          %1644 = vmatpush1.msra.mxu0 0.0
          %1645 = vmatprep.subr.mxu0 0.0
          %1646 = vmatpush1.msra.mxu0 0.0
          %1647 = vmatprep.mubr.f32.mxu0 0.0
          %1648 = vmatmul.mubr.f32.gmra.mrb[0].mxu0 %v1557
          %v1649 = vpop.f32.mrb[0].mxu0
          %v1650 = vadd.f32 0.0, %v1649
          %v1651 = vpop.f32.mrb[0].mxu0
          %1652 = vmatprep.mubr.f32.mxu0 0.0
          %1653 = vmatmul.mubr.f32.gmra.mrb[0].mxu0 %v1560
          %v1654 = vpop.f32.mrb[0].mxu0
          %v1655 = vadd.f32 0.0, %v1654
          %v1656 = vpop.f32.mrb[0].mxu0
          %1657 = vmatprep.mubr.f32.mxu0 0.0
          %1658 = vmatmul.mubr.f32.gmra.mrb[0].mxu0 %v1563
          %v1659 = vpop.f32.mrb[0].mxu0
          %v1660 = vadd.f32 0.0, %v1659
          %v1661 = vpop.f32.mrb[0].mxu0
          %1662 = vmatprep.mubr.f32.mxu0 0.0
          %1663 = vmatmul.mubr.f32.gmra.mrb[0].mxu0 %v1566
          %v1664 = vpop.f32.mrb[0].mxu0
          %v1665 = vadd.f32 0.0, %v1664
          %v1666 = vpop.f32.mrb[0].mxu0
          %1667 = vmatprep.mubr.f32.mxu0 0.0
          %1668 = vmatmul.mubr.f32.gmra.mrb[0].mxu0 %v1569
          %v1669 = vpop.f32.mrb[0].mxu0
          %v1670 = vadd.f32 0.0, %v1669
          %v1671 = vpop.f32.mrb[0].mxu0
          %1672 = vmatprep.mubr.f32.mxu0 0.0
          %1673 = vmatmul.mubr.f32.gmra.mrb[0].mxu0 %v1572
          %v1674 = vpop.f32.mrb[0].mxu0
          %v1675 = vadd.f32 0.0, %v1674
          %v1676 = vpop.f32.mrb[0].mxu0
          %1677 = vmatprep.mubr.f32.mxu0 0.0
          %1678 = vmatmul.mubr.f32.gmra.mrb[0].mxu0 %v1575
          %v1679 = vpop.f32.mrb[0].mxu0
          %v1680 = vadd.f32 0.0, %v1679
          %v1681 = vpop.f32.mrb[0].mxu0
          %1682 = vmatprep.mubr.f32.mxu0 0.0
          %1683 = vmatmul.mubr.f32.gmra.mrb[0].mxu0 %v1578
          %v1684 = vpop.f32.mrb[0].mxu0
          %v1685 = vadd.f32 0.0, %v1684
          %v1686 = vpop.f32.mrb[0].mxu0
          %1687 = vdwg.mxu0
          %v1688 = vadd.f32 %v1536, %v1650
          %v1689 = vadd.f32 %v1537, %v1655
          %v1690 = vadd.f32 %v1538, %v1660
          %v1691 = vadd.f32 %v1539, %v1665
          %v1692 = vadd.f32 %v1540, %v1670
          %v1693 = vadd.f32 %v1541, %v1675
          %v1694 = vadd.f32 %v1542, %v1680
          %v1695 = vadd.f32 %v1543, %v1685
          %s1696 = sadd.s32 %s191, 64
          %s1697 = scalar_lea.vmem %s178, %s1696
          %v1698 = vld [vmem:[%s1697] sm:$0xff]
          %v1699 = vld [vmem:[%s1697 + $0x8] sm:$0xff]
          %v1700 = vld [vmem:[%s1697 + $0x10] sm:$0xff]
          %v1701 = vld [vmem:[%s1697 + $0x18] sm:$0xff]
          %v1702 = vld [vmem:[%s1697 + $0x20] sm:$0xff]
          %v1703 = vld [vmem:[%s1697 + $0x28] sm:$0xff]
          %v1704 = vld [vmem:[%s1697 + $0x30] sm:$0xff]
          %v1705 = vld [vmem:[%s1697 + $0x38] sm:$0xf]
          %s1706 = scalar_lea.vmem %s1, 40
          %v1707 = vld [vmem:[%s1706] sm:$0x7]
          %v1709 = vsel %vm214, %v1698, 0
          %v1712 = vsel %vm214, %v1699, 0
          %v1715 = vsel %vm214, %v1700, 0
          %v1718 = vsel %vm214, %v1701, 0
          %v1721 = vsel %vm214, %v1702, 0
          %v1724 = vsel %vm214, %v1703, 0
          %v1727 = vsel %vm214, %v1704, 0
          %v1730 = vsel %vm214, %v1705, 0
          %v1733 = vsel %vm239, %v1707, 0
          %1735 = vmatprep.subr.mxu0 0.0
          %1736 = vmatpush1.msra.mxu0 %v1733
          %1737 = vmatprep.subr.mxu0 0.0
          %1738 = vmatpush1.msra.mxu0 0.0
          %1739 = vmatprep.subr.mxu0 0.0
          %1740 = vmatpush1.msra.mxu0 0.0
          %1741 = vmatprep.subr.mxu0 0.0
          %1742 = vmatpush1.msra.mxu0 0.0
          %1743 = vmatprep.subr.mxu0 0.0
          %1744 = vmatpush1.msra.mxu0 0.0
          %1745 = vmatprep.subr.mxu0 0.0
          %1746 = vmatpush1.msra.mxu0 0.0
          %1747 = vmatprep.subr.mxu0 0.0
          %1748 = vmatpush1.msra.mxu0 0.0
          %1749 = vmatprep.subr.mxu0 0.0
          %1750 = vmatpush1.msra.mxu0 0.0
          %1751 = vmatprep.subr.mxu0 0.0
          %1752 = vmatpush1.msra.mxu0 0.0
          %1753 = vmatprep.subr.mxu0 0.0
          %1754 = vmatpush1.msra.mxu0 0.0
          %1755 = vmatprep.subr.mxu0 0.0
          %1756 = vmatpush1.msra.mxu0 0.0
          %1757 = vmatprep.subr.mxu0 0.0
          %1758 = vmatpush1.msra.mxu0 0.0
          %1759 = vmatprep.subr.mxu0 0.0
          %1760 = vmatpush1.msra.mxu0 0.0
          %1761 = vmatprep.subr.mxu0 0.0
          %1762 = vmatpush1.msra.mxu0 0.0
          %1763 = vmatprep.subr.mxu0 0.0
          %1764 = vmatpush1.msra.mxu0 0.0
          %1765 = vmatprep.subr.mxu0 0.0
          %1766 = vmatpush1.msra.mxu0 0.0
          %1767 = vmatprep.subr.mxu0 0.0
          %1768 = vmatpush1.msra.mxu0 0.0
          %1769 = vmatprep.subr.mxu0 0.0
          %1770 = vmatpush1.msra.mxu0 0.0
          %1771 = vmatprep.subr.mxu0 0.0
          %1772 = vmatpush1.msra.mxu0 0.0
          %1773 = vmatprep.subr.mxu0 0.0
          %1774 = vmatpush1.msra.mxu0 0.0
          %1775 = vmatprep.subr.mxu0 0.0
          %1776 = vmatpush1.msra.mxu0 0.0
          %1777 = vmatprep.subr.mxu0 0.0
          %1778 = vmatpush1.msra.mxu0 0.0
          %1779 = vmatprep.subr.mxu0 0.0
          %1780 = vmatpush1.msra.mxu0 0.0
          %1781 = vmatprep.subr.mxu0 0.0
          %1782 = vmatpush1.msra.mxu0 0.0
          %1783 = vmatprep.subr.mxu0 0.0
          %1784 = vmatpush1.msra.mxu0 0.0
          %1785 = vmatprep.subr.mxu0 0.0
          %1786 = vmatpush1.msra.mxu0 0.0
          %1787 = vmatprep.subr.mxu0 0.0
          %1788 = vmatpush1.msra.mxu0 0.0
          %1789 = vmatprep.subr.mxu0 0.0
          %1790 = vmatpush1.msra.mxu0 0.0
          %1791 = vmatprep.subr.mxu0 0.0
          %1792 = vmatpush1.msra.mxu0 0.0
          %1793 = vmatprep.subr.mxu0 0.0
          %1794 = vmatpush1.msra.mxu0 0.0
          %1795 = vmatprep.subr.mxu0 0.0
          %1796 = vmatpush1.msra.mxu0 0.0
          %1797 = vmatprep.subr.mxu0 0.0
          %1798 = vmatpush1.msra.mxu0 0.0
          %1799 = vmatprep.mubr.f32.mxu0 0.0
          %1800 = vmatmul.mubr.f32.gmra.mrb[0].mxu0 %v1709
          %v1801 = vpop.f32.mrb[0].mxu0
          %v1802 = vadd.f32 0.0, %v1801
          %v1803 = vpop.f32.mrb[0].mxu0
          %1804 = vmatprep.mubr.f32.mxu0 0.0
          %1805 = vmatmul.mubr.f32.gmra.mrb[0].mxu0 %v1712
          %v1806 = vpop.f32.mrb[0].mxu0
          %v1807 = vadd.f32 0.0, %v1806
          %v1808 = vpop.f32.mrb[0].mxu0
          %1809 = vmatprep.mubr.f32.mxu0 0.0
          %1810 = vmatmul.mubr.f32.gmra.mrb[0].mxu0 %v1715
          %v1811 = vpop.f32.mrb[0].mxu0
          %v1812 = vadd.f32 0.0, %v1811
          %v1813 = vpop.f32.mrb[0].mxu0
          %1814 = vmatprep.mubr.f32.mxu0 0.0
          %1815 = vmatmul.mubr.f32.gmra.mrb[0].mxu0 %v1718
          %v1816 = vpop.f32.mrb[0].mxu0
          %v1817 = vadd.f32 0.0, %v1816
          %v1818 = vpop.f32.mrb[0].mxu0
          %1819 = vmatprep.mubr.f32.mxu0 0.0
          %1820 = vmatmul.mubr.f32.gmra.mrb[0].mxu0 %v1721
          %v1821 = vpop.f32.mrb[0].mxu0
          %v1822 = vadd.f32 0.0, %v1821
          %v1823 = vpop.f32.mrb[0].mxu0
          %1824 = vmatprep.mubr.f32.mxu0 0.0
          %1825 = vmatmul.mubr.f32.gmra.mrb[0].mxu0 %v1724
          %v1826 = vpop.f32.mrb[0].mxu0
          %v1827 = vadd.f32 0.0, %v1826
          %v1828 = vpop.f32.mrb[0].mxu0
          %1829 = vmatprep.mubr.f32.mxu0 0.0
          %1830 = vmatmul.mubr.f32.gmra.mrb[0].mxu0 %v1727
          %v1831 = vpop.f32.mrb[0].mxu0
          %v1832 = vadd.f32 0.0, %v1831
          %v1833 = vpop.f32.mrb[0].mxu0
          %1834 = vmatprep.mubr.f32.mxu0 0.0
          %1835 = vmatmul.mubr.f32.gmra.mrb[0].mxu0 %v1730
          %v1836 = vpop.f32.mrb[0].mxu0
          %v1837 = vadd.f32 0.0, %v1836
          %v1838 = vpop.f32.mrb[0].mxu0
          %1839 = vdwg.mxu0
          %v1840 = vadd.f32 %v1688, %v1802
          %v1841 = vadd.f32 %v1689, %v1807
          %v1842 = vadd.f32 %v1690, %v1812
          %v1843 = vadd.f32 %v1691, %v1817
          %v1844 = vadd.f32 %v1692, %v1822
          %v1845 = vadd.f32 %v1693, %v1827
          %v1846 = vadd.f32 %v1694, %v1832
          %v1847 = vadd.f32 %v1695, %v1837
          %s1848 = sadd.s32 %s191, 65
          %s1849 = scalar_lea.vmem %s178, %s1848
          %v1850 = vld [vmem:[%s1849] sm:$0xff]
          %v1851 = vld [vmem:[%s1849 + $0x8] sm:$0xff]
          %v1852 = vld [vmem:[%s1849 + $0x10] sm:$0xff]
          %v1853 = vld [vmem:[%s1849 + $0x18] sm:$0xff]
          %v1854 = vld [vmem:[%s1849 + $0x20] sm:$0xff]
          %v1855 = vld [vmem:[%s1849 + $0x28] sm:$0xff]
          %v1856 = vld [vmem:[%s1849 + $0x30] sm:$0xff]
          %v1857 = vld [vmem:[%s1849 + $0x38] sm:$0xf]
          %s1858 = scalar_lea.vmem %s1, 44
          %v1859 = vld [vmem:[%s1858] sm:$0x7]
          %v1861 = vsel %vm214, %v1850, 0
          %v1864 = vsel %vm214, %v1851, 0
          %v1867 = vsel %vm214, %v1852, 0
          %v1870 = vsel %vm214, %v1853, 0
          %v1873 = vsel %vm214, %v1854, 0
          %v1876 = vsel %vm214, %v1855, 0
          %v1879 = vsel %vm214, %v1856, 0
          %v1882 = vsel %vm214, %v1857, 0
          %v1885 = vsel %vm239, %v1859, 0
          %1887 = vmatprep.subr.mxu0 0.0
          %1888 = vmatpush1.msra.mxu0 %v1885
          %1889 = vmatprep.subr.mxu0 0.0
          %1890 = vmatpush1.msra.mxu0 0.0
          %1891 = vmatprep.subr.mxu0 0.0
          %1892 = vmatpush1.msra.mxu0 0.0
          %1893 = vmatprep.subr.mxu0 0.0
          %1894 = vmatpush1.msra.mxu0 0.0
          %1895 = vmatprep.subr.mxu0 0.0
          %1896 = vmatpush1.msra.mxu0 0.0
          %1897 = vmatprep.subr.mxu0 0.0
          %1898 = vmatpush1.msra.mxu0 0.0
          %1899 = vmatprep.subr.mxu0 0.0
          %1900 = vmatpush1.msra.mxu0 0.0
          %1901 = vmatprep.subr.mxu0 0.0
          %1902 = vmatpush1.msra.mxu0 0.0
          %1903 = vmatprep.subr.mxu0 0.0
          %1904 = vmatpush1.msra.mxu0 0.0
          %1905 = vmatprep.subr.mxu0 0.0
          %1906 = vmatpush1.msra.mxu0 0.0
          %1907 = vmatprep.subr.mxu0 0.0
          %1908 = vmatpush1.msra.mxu0 0.0
          %1909 = vmatprep.subr.mxu0 0.0
          %1910 = vmatpush1.msra.mxu0 0.0
          %1911 = vmatprep.subr.mxu0 0.0
          %1912 = vmatpush1.msra.mxu0 0.0
          %1913 = vmatprep.subr.mxu0 0.0
          %1914 = vmatpush1.msra.mxu0 0.0
          %1915 = vmatprep.subr.mxu0 0.0
          %1916 = vmatpush1.msra.mxu0 0.0
          %1917 = vmatprep.subr.mxu0 0.0
          %1918 = vmatpush1.msra.mxu0 0.0
          %1919 = vmatprep.subr.mxu0 0.0
          %1920 = vmatpush1.msra.mxu0 0.0
          %1921 = vmatprep.subr.mxu0 0.0
          %1922 = vmatpush1.msra.mxu0 0.0
          %1923 = vmatprep.subr.mxu0 0.0
          %1924 = vmatpush1.msra.mxu0 0.0
          %1925 = vmatprep.subr.mxu0 0.0
          %1926 = vmatpush1.msra.mxu0 0.0
          %1927 = vmatprep.subr.mxu0 0.0
          %1928 = vmatpush1.msra.mxu0 0.0
          %1929 = vmatprep.subr.mxu0 0.0
          %1930 = vmatpush1.msra.mxu0 0.0
          %1931 = vmatprep.subr.mxu0 0.0
          %1932 = vmatpush1.msra.mxu0 0.0
          %1933 = vmatprep.subr.mxu0 0.0
          %1934 = vmatpush1.msra.mxu0 0.0
          %1935 = vmatprep.subr.mxu0 0.0
          %1936 = vmatpush1.msra.mxu0 0.0
          %1937 = vmatprep.subr.mxu0 0.0
          %1938 = vmatpush1.msra.mxu0 0.0
          %1939 = vmatprep.subr.mxu0 0.0
          %1940 = vmatpush1.msra.mxu0 0.0
          %1941 = vmatprep.subr.mxu0 0.0
          %1942 = vmatpush1.msra.mxu0 0.0
          %1943 = vmatprep.subr.mxu0 0.0
          %1944 = vmatpush1.msra.mxu0 0.0
          %1945 = vmatprep.subr.mxu0 0.0
          %1946 = vmatpush1.msra.mxu0 0.0
          %1947 = vmatprep.subr.mxu0 0.0
          %1948 = vmatpush1.msra.mxu0 0.0
          %1949 = vmatprep.subr.mxu0 0.0
          %1950 = vmatpush1.msra.mxu0 0.0
          %1951 = vmatprep.mubr.f32.mxu0 0.0
          %1952 = vmatmul.mubr.f32.gmra.mrb[0].mxu0 %v1861
          %v1953 = vpop.f32.mrb[0].mxu0
          %v1954 = vadd.f32 0.0, %v1953
          %v1955 = vpop.f32.mrb[0].mxu0
          %1956 = vmatprep.mubr.f32.mxu0 0.0
          %1957 = vmatmul.mubr.f32.gmra.mrb[0].mxu0 %v1864
          %v1958 = vpop.f32.mrb[0].mxu0
          %v1959 = vadd.f32 0.0, %v1958
          %v1960 = vpop.f32.mrb[0].mxu0
          %1961 = vmatprep.mubr.f32.mxu0 0.0
          %1962 = vmatmul.mubr.f32.gmra.mrb[0].mxu0 %v1867
          %v1963 = vpop.f32.mrb[0].mxu0
          %v1964 = vadd.f32 0.0, %v1963
          %v1965 = vpop.f32.mrb[0].mxu0
          %1966 = vmatprep.mubr.f32.mxu0 0.0
          %1967 = vmatmul.mubr.f32.gmra.mrb[0].mxu0 %v1870
          %v1968 = vpop.f32.mrb[0].mxu0
          %v1969 = vadd.f32 0.0, %v1968
          %v1970 = vpop.f32.mrb[0].mxu0
          %1971 = vmatprep.mubr.f32.mxu0 0.0
          %1972 = vmatmul.mubr.f32.gmra.mrb[0].mxu0 %v1873
          %v1973 = vpop.f32.mrb[0].mxu0
          %v1974 = vadd.f32 0.0, %v1973
          %v1975 = vpop.f32.mrb[0].mxu0
          %1976 = vmatprep.mubr.f32.mxu0 0.0
          %1977 = vmatmul.mubr.f32.gmra.mrb[0].mxu0 %v1876
          %v1978 = vpop.f32.mrb[0].mxu0
          %v1979 = vadd.f32 0.0, %v1978
          %v1980 = vpop.f32.mrb[0].mxu0
          %1981 = vmatprep.mubr.f32.mxu0 0.0
          %1982 = vmatmul.mubr.f32.gmra.mrb[0].mxu0 %v1879
          %v1983 = vpop.f32.mrb[0].mxu0
          %v1984 = vadd.f32 0.0, %v1983
          %v1985 = vpop.f32.mrb[0].mxu0
          %1986 = vmatprep.mubr.f32.mxu0 0.0
          %1987 = vmatmul.mubr.f32.gmra.mrb[0].mxu0 %v1882
          %v1988 = vpop.f32.mrb[0].mxu0
          %v1989 = vadd.f32 0.0, %v1988
          %v1990 = vpop.f32.mrb[0].mxu0
          %1991 = vdwg.mxu0
          %v1992 = vadd.f32 %v1840, %v1954
          %v1993 = vadd.f32 %v1841, %v1959
          %v1994 = vadd.f32 %v1842, %v1964
          %v1995 = vadd.f32 %v1843, %v1969
          %v1996 = vadd.f32 %v1844, %v1974
          %v1997 = vadd.f32 %v1845, %v1979
          %v1998 = vadd.f32 %v1846, %v1984
          %v1999 = vadd.f32 %v1847, %v1989
          %s2000 = sadd.s32 %s191, 66
          %s2001 = scalar_lea.vmem %s178, %s2000
          %v2002 = vld [vmem:[%s2001] sm:$0xff]
          %v2003 = vld [vmem:[%s2001 + $0x8] sm:$0xff]
          %v2004 = vld [vmem:[%s2001 + $0x10] sm:$0xff]
          %v2005 = vld [vmem:[%s2001 + $0x18] sm:$0xff]
          %v2006 = vld [vmem:[%s2001 + $0x20] sm:$0xff]
          %v2007 = vld [vmem:[%s2001 + $0x28] sm:$0xff]
          %v2008 = vld [vmem:[%s2001 + $0x30] sm:$0xff]
          %v2009 = vld [vmem:[%s2001 + $0x38] sm:$0xf]
          %s2010 = scalar_lea.vmem %s1, 48
          %v2011 = vld [vmem:[%s2010] sm:$0x7]
          %v2013 = vsel %vm214, %v2002, 0
          %v2016 = vsel %vm214, %v2003, 0
          %v2019 = vsel %vm214, %v2004, 0
          %v2022 = vsel %vm214, %v2005, 0
          %v2025 = vsel %vm214, %v2006, 0
          %v2028 = vsel %vm214, %v2007, 0
          %v2031 = vsel %vm214, %v2008, 0
          %v2034 = vsel %vm214, %v2009, 0
          %v2037 = vsel %vm239, %v2011, 0
          %2039 = vmatprep.subr.mxu0 0.0
          %2040 = vmatpush1.msra.mxu0 %v2037
          %2041 = vmatprep.subr.mxu0 0.0
          %2042 = vmatpush1.msra.mxu0 0.0
          %2043 = vmatprep.subr.mxu0 0.0
          %2044 = vmatpush1.msra.mxu0 0.0
          %2045 = vmatprep.subr.mxu0 0.0
          %2046 = vmatpush1.msra.mxu0 0.0
          %2047 = vmatprep.subr.mxu0 0.0
          %2048 = vmatpush1.msra.mxu0 0.0
          %2049 = vmatprep.subr.mxu0 0.0
          %2050 = vmatpush1.msra.mxu0 0.0
          %2051 = vmatprep.subr.mxu0 0.0
          %2052 = vmatpush1.msra.mxu0 0.0
          %2053 = vmatprep.subr.mxu0 0.0
          %2054 = vmatpush1.msra.mxu0 0.0
          %2055 = vmatprep.subr.mxu0 0.0
          %2056 = vmatpush1.msra.mxu0 0.0
          %2057 = vmatprep.subr.mxu0 0.0
          %2058 = vmatpush1.msra.mxu0 0.0
          %2059 = vmatprep.subr.mxu0 0.0
          %2060 = vmatpush1.msra.mxu0 0.0
          %2061 = vmatprep.subr.mxu0 0.0
          %2062 = vmatpush1.msra.mxu0 0.0
          %2063 = vmatprep.subr.mxu0 0.0
          %2064 = vmatpush1.msra.mxu0 0.0
          %2065 = vmatprep.subr.mxu0 0.0
          %2066 = vmatpush1.msra.mxu0 0.0
          %2067 = vmatprep.subr.mxu0 0.0
          %2068 = vmatpush1.msra.mxu0 0.0
          %2069 = vmatprep.subr.mxu0 0.0
          %2070 = vmatpush1.msra.mxu0 0.0
          %2071 = vmatprep.subr.mxu0 0.0
          %2072 = vmatpush1.msra.mxu0 0.0
          %2073 = vmatprep.subr.mxu0 0.0
          %2074 = vmatpush1.msra.mxu0 0.0
          %2075 = vmatprep.subr.mxu0 0.0
          %2076 = vmatpush1.msra.mxu0 0.0
          %2077 = vmatprep.subr.mxu0 0.0
          %2078 = vmatpush1.msra.mxu0 0.0
          %2079 = vmatprep.subr.mxu0 0.0
          %2080 = vmatpush1.msra.mxu0 0.0
          %2081 = vmatprep.subr.mxu0 0.0
          %2082 = vmatpush1.msra.mxu0 0.0
          %2083 = vmatprep.subr.mxu0 0.0
          %2084 = vmatpush1.msra.mxu0 0.0
          %2085 = vmatprep.subr.mxu0 0.0
          %2086 = vmatpush1.msra.mxu0 0.0
          %2087 = vmatprep.subr.mxu0 0.0
          %2088 = vmatpush1.msra.mxu0 0.0
          %2089 = vmatprep.subr.mxu0 0.0
          %2090 = vmatpush1.msra.mxu0 0.0
          %2091 = vmatprep.subr.mxu0 0.0
          %2092 = vmatpush1.msra.mxu0 0.0
          %2093 = vmatprep.subr.mxu0 0.0
          %2094 = vmatpush1.msra.mxu0 0.0
          %2095 = vmatprep.subr.mxu0 0.0
          %2096 = vmatpush1.msra.mxu0 0.0
          %2097 = vmatprep.subr.mxu0 0.0
          %2098 = vmatpush1.msra.mxu0 0.0
          %2099 = vmatprep.subr.mxu0 0.0
          %2100 = vmatpush1.msra.mxu0 0.0
          %2101 = vmatprep.subr.mxu0 0.0
          %2102 = vmatpush1.msra.mxu0 0.0
          %2103 = vmatprep.mubr.f32.mxu0 0.0
          %2104 = vmatmul.mubr.f32.gmra.mrb[0].mxu0 %v2013
          %v2105 = vpop.f32.mrb[0].mxu0
          %v2106 = vadd.f32 0.0, %v2105
          %v2107 = vpop.f32.mrb[0].mxu0
          %2108 = vmatprep.mubr.f32.mxu0 0.0
          %2109 = vmatmul.mubr.f32.gmra.mrb[0].mxu0 %v2016
          %v2110 = vpop.f32.mrb[0].mxu0
          %v2111 = vadd.f32 0.0, %v2110
          %v2112 = vpop.f32.mrb[0].mxu0
          %2113 = vmatprep.mubr.f32.mxu0 0.0
          %2114 = vmatmul.mubr.f32.gmra.mrb[0].mxu0 %v2019
          %v2115 = vpop.f32.mrb[0].mxu0
          %v2116 = vadd.f32 0.0, %v2115
          %v2117 = vpop.f32.mrb[0].mxu0
          %2118 = vmatprep.mubr.f32.mxu0 0.0
          %2119 = vmatmul.mubr.f32.gmra.mrb[0].mxu0 %v2022
          %v2120 = vpop.f32.mrb[0].mxu0
          %v2121 = vadd.f32 0.0, %v2120
          %v2122 = vpop.f32.mrb[0].mxu0
          %2123 = vmatprep.mubr.f32.mxu0 0.0
          %2124 = vmatmul.mubr.f32.gmra.mrb[0].mxu0 %v2025
          %v2125 = vpop.f32.mrb[0].mxu0
          %v2126 = vadd.f32 0.0, %v2125
          %v2127 = vpop.f32.mrb[0].mxu0
          %2128 = vmatprep.mubr.f32.mxu0 0.0
          %2129 = vmatmul.mubr.f32.gmra.mrb[0].mxu0 %v2028
          %v2130 = vpop.f32.mrb[0].mxu0
          %v2131 = vadd.f32 0.0, %v2130
          %v2132 = vpop.f32.mrb[0].mxu0
          %2133 = vmatprep.mubr.f32.mxu0 0.0
          %2134 = vmatmul.mubr.f32.gmra.mrb[0].mxu0 %v2031
          %v2135 = vpop.f32.mrb[0].mxu0
          %v2136 = vadd.f32 0.0, %v2135
          %v2137 = vpop.f32.mrb[0].mxu0
          %2138 = vmatprep.mubr.f32.mxu0 0.0
          %2139 = vmatmul.mubr.f32.gmra.mrb[0].mxu0 %v2034
          %v2140 = vpop.f32.mrb[0].mxu0
          %v2141 = vadd.f32 0.0, %v2140
          %v2142 = vpop.f32.mrb[0].mxu0
          %2143 = vdwg.mxu0
          %v2144 = vadd.f32 %v1992, %v2106
          %v2145 = vadd.f32 %v1993, %v2111
          %v2146 = vadd.f32 %v1994, %v2116
          %v2147 = vadd.f32 %v1995, %v2121
          %v2148 = vadd.f32 %v1996, %v2126
          %v2149 = vadd.f32 %v1997, %v2131
          %v2150 = vadd.f32 %v1998, %v2136
          %v2151 = vadd.f32 %v1999, %v2141
          %s2152 = sadd.s32 %s191, 67
          %s2153 = scalar_lea.vmem %s178, %s2152
          %v2154 = vld [vmem:[%s2153] sm:$0xff]
          %v2155 = vld [vmem:[%s2153 + $0x8] sm:$0xff]
          %v2156 = vld [vmem:[%s2153 + $0x10] sm:$0xff]
          %v2157 = vld [vmem:[%s2153 + $0x18] sm:$0xff]
          %v2158 = vld [vmem:[%s2153 + $0x20] sm:$0xff]
          %v2159 = vld [vmem:[%s2153 + $0x28] sm:$0xff]
          %v2160 = vld [vmem:[%s2153 + $0x30] sm:$0xff]
          %v2161 = vld [vmem:[%s2153 + $0x38] sm:$0xf]
          %s2162 = scalar_lea.vmem %s1, 52
          %v2163 = vld [vmem:[%s2162] sm:$0x7]
          %v2165 = vsel %vm214, %v2154, 0
          %v2168 = vsel %vm214, %v2155, 0
          %v2171 = vsel %vm214, %v2156, 0
          %v2174 = vsel %vm214, %v2157, 0
          %v2177 = vsel %vm214, %v2158, 0
          %v2180 = vsel %vm214, %v2159, 0
          %v2183 = vsel %vm214, %v2160, 0
          %v2186 = vsel %vm214, %v2161, 0
          %v2189 = vsel %vm239, %v2163, 0
          %2191 = vmatprep.subr.mxu0 0.0
          %2192 = vmatpush1.msra.mxu0 %v2189
          %2193 = vmatprep.subr.mxu0 0.0
          %2194 = vmatpush1.msra.mxu0 0.0
          %2195 = vmatprep.subr.mxu0 0.0
          %2196 = vmatpush1.msra.mxu0 0.0
          %2197 = vmatprep.subr.mxu0 0.0
          %2198 = vmatpush1.msra.mxu0 0.0
          %2199 = vmatprep.subr.mxu0 0.0
          %2200 = vmatpush1.msra.mxu0 0.0
          %2201 = vmatprep.subr.mxu0 0.0
          %2202 = vmatpush1.msra.mxu0 0.0
          %2203 = vmatprep.subr.mxu0 0.0
          %2204 = vmatpush1.msra.mxu0 0.0
          %2205 = vmatprep.subr.mxu0 0.0
          %2206 = vmatpush1.msra.mxu0 0.0
          %2207 = vmatprep.subr.mxu0 0.0
          %2208 = vmatpush1.msra.mxu0 0.0
          %2209 = vmatprep.subr.mxu0 0.0
          %2210 = vmatpush1.msra.mxu0 0.0
          %2211 = vmatprep.subr.mxu0 0.0
          %2212 = vmatpush1.msra.mxu0 0.0
          %2213 = vmatprep.subr.mxu0 0.0
          %2214 = vmatpush1.msra.mxu0 0.0
          %2215 = vmatprep.subr.mxu0 0.0
          %2216 = vmatpush1.msra.mxu0 0.0
          %2217 = vmatprep.subr.mxu0 0.0
          %2218 = vmatpush1.msra.mxu0 0.0
          %2219 = vmatprep.subr.mxu0 0.0
          %2220 = vmatpush1.msra.mxu0 0.0
          %2221 = vmatprep.subr.mxu0 0.0
          %2222 = vmatpush1.msra.mxu0 0.0
          %2223 = vmatprep.subr.mxu0 0.0
          %2224 = vmatpush1.msra.mxu0 0.0
          %2225 = vmatprep.subr.mxu0 0.0
          %2226 = vmatpush1.msra.mxu0 0.0
          %2227 = vmatprep.subr.mxu0 0.0
          %2228 = vmatpush1.msra.mxu0 0.0
          %2229 = vmatprep.subr.mxu0 0.0
          %2230 = vmatpush1.msra.mxu0 0.0
          %2231 = vmatprep.subr.mxu0 0.0
          %2232 = vmatpush1.msra.mxu0 0.0
          %2233 = vmatprep.subr.mxu0 0.0
          %2234 = vmatpush1.msra.mxu0 0.0
          %2235 = vmatprep.subr.mxu0 0.0
          %2236 = vmatpush1.msra.mxu0 0.0
          %2237 = vmatprep.subr.mxu0 0.0
          %2238 = vmatpush1.msra.mxu0 0.0
          %2239 = vmatprep.subr.mxu0 0.0
          %2240 = vmatpush1.msra.mxu0 0.0
          %2241 = vmatprep.subr.mxu0 0.0
          %2242 = vmatpush1.msra.mxu0 0.0
          %2243 = vmatprep.subr.mxu0 0.0
          %2244 = vmatpush1.msra.mxu0 0.0
          %2245 = vmatprep.subr.mxu0 0.0
          %2246 = vmatpush1.msra.mxu0 0.0
          %2247 = vmatprep.subr.mxu0 0.0
          %2248 = vmatpush1.msra.mxu0 0.0
          %2249 = vmatprep.subr.mxu0 0.0
          %2250 = vmatpush1.msra.mxu0 0.0
          %2251 = vmatprep.subr.mxu0 0.0
          %2252 = vmatpush1.msra.mxu0 0.0
          %2253 = vmatprep.subr.mxu0 0.0
          %2254 = vmatpush1.msra.mxu0 0.0
          %2255 = vmatprep.mubr.f32.mxu0 0.0
          %2256 = vmatmul.mubr.f32.gmra.mrb[0].mxu0 %v2165
          %v2257 = vpop.f32.mrb[0].mxu0
          %v2258 = vadd.f32 0.0, %v2257
          %v2259 = vpop.f32.mrb[0].mxu0
          %2260 = vmatprep.mubr.f32.mxu0 0.0
          %2261 = vmatmul.mubr.f32.gmra.mrb[0].mxu0 %v2168
          %v2262 = vpop.f32.mrb[0].mxu0
          %v2263 = vadd.f32 0.0, %v2262
          %v2264 = vpop.f32.mrb[0].mxu0
          %2265 = vmatprep.mubr.f32.mxu0 0.0
          %2266 = vmatmul.mubr.f32.gmra.mrb[0].mxu0 %v2171
          %v2267 = vpop.f32.mrb[0].mxu0
          %v2268 = vadd.f32 0.0, %v2267
          %v2269 = vpop.f32.mrb[0].mxu0
          %2270 = vmatprep.mubr.f32.mxu0 0.0
          %2271 = vmatmul.mubr.f32.gmra.mrb[0].mxu0 %v2174
          %v2272 = vpop.f32.mrb[0].mxu0
          %v2273 = vadd.f32 0.0, %v2272
          %v2274 = vpop.f32.mrb[0].mxu0
          %2275 = vmatprep.mubr.f32.mxu0 0.0
          %2276 = vmatmul.mubr.f32.gmra.mrb[0].mxu0 %v2177
          %v2277 = vpop.f32.mrb[0].mxu0
          %v2278 = vadd.f32 0.0, %v2277
          %v2279 = vpop.f32.mrb[0].mxu0
          %2280 = vmatprep.mubr.f32.mxu0 0.0
          %2281 = vmatmul.mubr.f32.gmra.mrb[0].mxu0 %v2180
          %v2282 = vpop.f32.mrb[0].mxu0
          %v2283 = vadd.f32 0.0, %v2282
          %v2284 = vpop.f32.mrb[0].mxu0
          %2285 = vmatprep.mubr.f32.mxu0 0.0
          %2286 = vmatmul.mubr.f32.gmra.mrb[0].mxu0 %v2183
          %v2287 = vpop.f32.mrb[0].mxu0
          %v2288 = vadd.f32 0.0, %v2287
          %v2289 = vpop.f32.mrb[0].mxu0
          %2290 = vmatprep.mubr.f32.mxu0 0.0
          %2291 = vmatmul.mubr.f32.gmra.mrb[0].mxu0 %v2186
          %v2292 = vpop.f32.mrb[0].mxu0
          %v2293 = vadd.f32 0.0, %v2292
          %v2294 = vpop.f32.mrb[0].mxu0
          %2295 = vdwg.mxu0
          %v2296 = vadd.f32 %v2144, %v2258
          %v2297 = vadd.f32 %v2145, %v2263
          %v2298 = vadd.f32 %v2146, %v2268
          %v2299 = vadd.f32 %v2147, %v2273
          %v2300 = vadd.f32 %v2148, %v2278
          %v2301 = vadd.f32 %v2149, %v2283
          %v2302 = vadd.f32 %v2150, %v2288
          %v2303 = vadd.f32 %v2151, %v2293
          %s2304 = sadd.s32 %s191, 68
          %s2305 = scalar_lea.vmem %s178, %s2304
          %v2306 = vld [vmem:[%s2305] sm:$0xff]
          %v2307 = vld [vmem:[%s2305 + $0x8] sm:$0xff]
          %v2308 = vld [vmem:[%s2305 + $0x10] sm:$0xff]
          %v2309 = vld [vmem:[%s2305 + $0x18] sm:$0xff]
          %v2310 = vld [vmem:[%s2305 + $0x20] sm:$0xff]
          %v2311 = vld [vmem:[%s2305 + $0x28] sm:$0xff]
          %v2312 = vld [vmem:[%s2305 + $0x30] sm:$0xff]
          %v2313 = vld [vmem:[%s2305 + $0x38] sm:$0xf]
          %s2314 = scalar_lea.vmem %s1, 56
          %v2315 = vld [vmem:[%s2314] sm:$0x7]
          %v2317 = vsel %vm214, %v2306, 0
          %v2320 = vsel %vm214, %v2307, 0
          %v2323 = vsel %vm214, %v2308, 0
          %v2326 = vsel %vm214, %v2309, 0
          %v2329 = vsel %vm214, %v2310, 0
          %v2332 = vsel %vm214, %v2311, 0
          %v2335 = vsel %vm214, %v2312, 0
          %v2338 = vsel %vm214, %v2313, 0
          %v2341 = vsel %vm239, %v2315, 0
          %2343 = vmatprep.subr.mxu0 0.0
          %2344 = vmatpush1.msra.mxu0 %v2341
          %2345 = vmatprep.subr.mxu0 0.0
          %2346 = vmatpush1.msra.mxu0 0.0
          %2347 = vmatprep.subr.mxu0 0.0
          %2348 = vmatpush1.msra.mxu0 0.0
          %2349 = vmatprep.subr.mxu0 0.0
          %2350 = vmatpush1.msra.mxu0 0.0
          %2351 = vmatprep.subr.mxu0 0.0
          %2352 = vmatpush1.msra.mxu0 0.0
          %2353 = vmatprep.subr.mxu0 0.0
          %2354 = vmatpush1.msra.mxu0 0.0
          %2355 = vmatprep.subr.mxu0 0.0
          %2356 = vmatpush1.msra.mxu0 0.0
          %2357 = vmatprep.subr.mxu0 0.0
          %2358 = vmatpush1.msra.mxu0 0.0
          %2359 = vmatprep.subr.mxu0 0.0
          %2360 = vmatpush1.msra.mxu0 0.0
          %2361 = vmatprep.subr.mxu0 0.0
          %2362 = vmatpush1.msra.mxu0 0.0
          %2363 = vmatprep.subr.mxu0 0.0
          %2364 = vmatpush1.msra.mxu0 0.0
          %2365 = vmatprep.subr.mxu0 0.0
          %2366 = vmatpush1.msra.mxu0 0.0
          %2367 = vmatprep.subr.mxu0 0.0
          %2368 = vmatpush1.msra.mxu0 0.0
          %2369 = vmatprep.subr.mxu0 0.0
          %2370 = vmatpush1.msra.mxu0 0.0
          %2371 = vmatprep.subr.mxu0 0.0
          %2372 = vmatpush1.msra.mxu0 0.0
          %2373 = vmatprep.subr.mxu0 0.0
          %2374 = vmatpush1.msra.mxu0 0.0
          %2375 = vmatprep.subr.mxu0 0.0
          %2376 = vmatpush1.msra.mxu0 0.0
          %2377 = vmatprep.subr.mxu0 0.0
          %2378 = vmatpush1.msra.mxu0 0.0
          %2379 = vmatprep.subr.mxu0 0.0
          %2380 = vmatpush1.msra.mxu0 0.0
          %2381 = vmatprep.subr.mxu0 0.0
          %2382 = vmatpush1.msra.mxu0 0.0
          %2383 = vmatprep.subr.mxu0 0.0
          %2384 = vmatpush1.msra.mxu0 0.0
          %2385 = vmatprep.subr.mxu0 0.0
          %2386 = vmatpush1.msra.mxu0 0.0
          %2387 = vmatprep.subr.mxu0 0.0
          %2388 = vmatpush1.msra.mxu0 0.0
          %2389 = vmatprep.subr.mxu0 0.0
          %2390 = vmatpush1.msra.mxu0 0.0
          %2391 = vmatprep.subr.mxu0 0.0
          %2392 = vmatpush1.msra.mxu0 0.0
          %2393 = vmatprep.subr.mxu0 0.0
          %2394 = vmatpush1.msra.mxu0 0.0
          %2395 = vmatprep.subr.mxu0 0.0
          %2396 = vmatpush1.msra.mxu0 0.0
          %2397 = vmatprep.subr.mxu0 0.0
          %2398 = vmatpush1.msra.mxu0 0.0
          %2399 = vmatprep.subr.mxu0 0.0
          %2400 = vmatpush1.msra.mxu0 0.0
          %2401 = vmatprep.subr.mxu0 0.0
          %2402 = vmatpush1.msra.mxu0 0.0
          %2403 = vmatprep.subr.mxu0 0.0
          %2404 = vmatpush1.msra.mxu0 0.0
          %2405 = vmatprep.subr.mxu0 0.0
          %2406 = vmatpush1.msra.mxu0 0.0
          %2407 = vmatprep.mubr.f32.mxu0 0.0
          %2408 = vmatmul.mubr.f32.gmra.mrb[0].mxu0 %v2317
          %v2409 = vpop.f32.mrb[0].mxu0
          %v2410 = vadd.f32 0.0, %v2409
          %v2411 = vpop.f32.mrb[0].mxu0
          %2412 = vmatprep.mubr.f32.mxu0 0.0
          %2413 = vmatmul.mubr.f32.gmra.mrb[0].mxu0 %v2320
          %v2414 = vpop.f32.mrb[0].mxu0
          %v2415 = vadd.f32 0.0, %v2414
          %v2416 = vpop.f32.mrb[0].mxu0
          %2417 = vmatprep.mubr.f32.mxu0 0.0
          %2418 = vmatmul.mubr.f32.gmra.mrb[0].mxu0 %v2323
          %v2419 = vpop.f32.mrb[0].mxu0
          %v2420 = vadd.f32 0.0, %v2419
          %v2421 = vpop.f32.mrb[0].mxu0
          %2422 = vmatprep.mubr.f32.mxu0 0.0
          %2423 = vmatmul.mubr.f32.gmra.mrb[0].mxu0 %v2326
          %v2424 = vpop.f32.mrb[0].mxu0
          %v2425 = vadd.f32 0.0, %v2424
          %v2426 = vpop.f32.mrb[0].mxu0
          %2427 = vmatprep.mubr.f32.mxu0 0.0
          %2428 = vmatmul.mubr.f32.gmra.mrb[0].mxu0 %v2329
          %v2429 = vpop.f32.mrb[0].mxu0
          %v2430 = vadd.f32 0.0, %v2429
          %v2431 = vpop.f32.mrb[0].mxu0
          %2432 = vmatprep.mubr.f32.mxu0 0.0
          %2433 = vmatmul.mubr.f32.gmra.mrb[0].mxu0 %v2332
          %v2434 = vpop.f32.mrb[0].mxu0
          %v2435 = vadd.f32 0.0, %v2434
          %v2436 = vpop.f32.mrb[0].mxu0
          %2437 = vmatprep.mubr.f32.mxu0 0.0
          %2438 = vmatmul.mubr.f32.gmra.mrb[0].mxu0 %v2335
          %v2439 = vpop.f32.mrb[0].mxu0
          %v2440 = vadd.f32 0.0, %v2439
          %v2441 = vpop.f32.mrb[0].mxu0
          %2442 = vmatprep.mubr.f32.mxu0 0.0
          %2443 = vmatmul.mubr.f32.gmra.mrb[0].mxu0 %v2338
          %v2444 = vpop.f32.mrb[0].mxu0
          %v2445 = vadd.f32 0.0, %v2444
          %v2446 = vpop.f32.mrb[0].mxu0
          %2447 = vdwg.mxu0
          %v2448 = vadd.f32 %v2296, %v2410
          %v2449 = vadd.f32 %v2297, %v2415
          %v2450 = vadd.f32 %v2298, %v2420
          %v2451 = vadd.f32 %v2299, %v2425
          %v2452 = vadd.f32 %v2300, %v2430
          %v2453 = vadd.f32 %v2301, %v2435
          %v2454 = vadd.f32 %v2302, %v2440
          %v2455 = vadd.f32 %v2303, %v2445
          %s2456 = sadd.s32 %s191, 96
          %s2457 = scalar_lea.vmem %s178, %s2456
          %v2458 = vld [vmem:[%s2457] sm:$0xff]
          %v2459 = vld [vmem:[%s2457 + $0x8] sm:$0xff]
          %v2460 = vld [vmem:[%s2457 + $0x10] sm:$0xff]
          %v2461 = vld [vmem:[%s2457 + $0x18] sm:$0xff]
          %v2462 = vld [vmem:[%s2457 + $0x20] sm:$0xff]
          %v2463 = vld [vmem:[%s2457 + $0x28] sm:$0xff]
          %v2464 = vld [vmem:[%s2457 + $0x30] sm:$0xff]
          %v2465 = vld [vmem:[%s2457 + $0x38] sm:$0xf]
          %s2466 = scalar_lea.vmem %s1, 60
          %v2467 = vld [vmem:[%s2466] sm:$0x7]
          %v2469 = vsel %vm214, %v2458, 0
          %v2472 = vsel %vm214, %v2459, 0
          %v2475 = vsel %vm214, %v2460, 0
          %v2478 = vsel %vm214, %v2461, 0
          %v2481 = vsel %vm214, %v2462, 0
          %v2484 = vsel %vm214, %v2463, 0
          %v2487 = vsel %vm214, %v2464, 0
          %v2490 = vsel %vm214, %v2465, 0
          %v2493 = vsel %vm239, %v2467, 0
          %2495 = vmatprep.subr.mxu0 0.0
          %2496 = vmatpush1.msra.mxu0 %v2493
          %2497 = vmatprep.subr.mxu0 0.0
          %2498 = vmatpush1.msra.mxu0 0.0
          %2499 = vmatprep.subr.mxu0 0.0
          %2500 = vmatpush1.msra.mxu0 0.0
          %2501 = vmatprep.subr.mxu0 0.0
          %2502 = vmatpush1.msra.mxu0 0.0
          %2503 = vmatprep.subr.mxu0 0.0
          %2504 = vmatpush1.msra.mxu0 0.0
          %2505 = vmatprep.subr.mxu0 0.0
          %2506 = vmatpush1.msra.mxu0 0.0
          %2507 = vmatprep.subr.mxu0 0.0
          %2508 = vmatpush1.msra.mxu0 0.0
          %2509 = vmatprep.subr.mxu0 0.0
          %2510 = vmatpush1.msra.mxu0 0.0
          %2511 = vmatprep.subr.mxu0 0.0
          %2512 = vmatpush1.msra.mxu0 0.0
          %2513 = vmatprep.subr.mxu0 0.0
          %2514 = vmatpush1.msra.mxu0 0.0
          %2515 = vmatprep.subr.mxu0 0.0
          %2516 = vmatpush1.msra.mxu0 0.0
          %2517 = vmatprep.subr.mxu0 0.0
          %2518 = vmatpush1.msra.mxu0 0.0
          %2519 = vmatprep.subr.mxu0 0.0
          %2520 = vmatpush1.msra.mxu0 0.0
          %2521 = vmatprep.subr.mxu0 0.0
          %2522 = vmatpush1.msra.mxu0 0.0
          %2523 = vmatprep.subr.mxu0 0.0
          %2524 = vmatpush1.msra.mxu0 0.0
          %2525 = vmatprep.subr.mxu0 0.0
          %2526 = vmatpush1.msra.mxu0 0.0
          %2527 = vmatprep.subr.mxu0 0.0
          %2528 = vmatpush1.msra.mxu0 0.0
          %2529 = vmatprep.subr.mxu0 0.0
          %2530 = vmatpush1.msra.mxu0 0.0
          %2531 = vmatprep.subr.mxu0 0.0
          %2532 = vmatpush1.msra.mxu0 0.0
          %2533 = vmatprep.subr.mxu0 0.0
          %2534 = vmatpush1.msra.mxu0 0.0
          %2535 = vmatprep.subr.mxu0 0.0
          %2536 = vmatpush1.msra.mxu0 0.0
          %2537 = vmatprep.subr.mxu0 0.0
          %2538 = vmatpush1.msra.mxu0 0.0
          %2539 = vmatprep.subr.mxu0 0.0
          %2540 = vmatpush1.msra.mxu0 0.0
          %2541 = vmatprep.subr.mxu0 0.0
          %2542 = vmatpush1.msra.mxu0 0.0
          %2543 = vmatprep.subr.mxu0 0.0
          %2544 = vmatpush1.msra.mxu0 0.0
          %2545 = vmatprep.subr.mxu0 0.0
          %2546 = vmatpush1.msra.mxu0 0.0
          %2547 = vmatprep.subr.mxu0 0.0
          %2548 = vmatpush1.msra.mxu0 0.0
          %2549 = vmatprep.subr.mxu0 0.0
          %2550 = vmatpush1.msra.mxu0 0.0
          %2551 = vmatprep.subr.mxu0 0.0
          %2552 = vmatpush1.msra.mxu0 0.0
          %2553 = vmatprep.subr.mxu0 0.0
          %2554 = vmatpush1.msra.mxu0 0.0
          %2555 = vmatprep.subr.mxu0 0.0
          %2556 = vmatpush1.msra.mxu0 0.0
          %2557 = vmatprep.subr.mxu0 0.0
          %2558 = vmatpush1.msra.mxu0 0.0
          %2559 = vmatprep.mubr.f32.mxu0 0.0
          %2560 = vmatmul.mubr.f32.gmra.mrb[0].mxu0 %v2469
          %v2561 = vpop.f32.mrb[0].mxu0
          %v2562 = vadd.f32 0.0, %v2561
          %v2563 = vpop.f32.mrb[0].mxu0
          %2564 = vmatprep.mubr.f32.mxu0 0.0
          %2565 = vmatmul.mubr.f32.gmra.mrb[0].mxu0 %v2472
          %v2566 = vpop.f32.mrb[0].mxu0
          %v2567 = vadd.f32 0.0, %v2566
          %v2568 = vpop.f32.mrb[0].mxu0
          %2569 = vmatprep.mubr.f32.mxu0 0.0
          %2570 = vmatmul.mubr.f32.gmra.mrb[0].mxu0 %v2475
          %v2571 = vpop.f32.mrb[0].mxu0
          %v2572 = vadd.f32 0.0, %v2571
          %v2573 = vpop.f32.mrb[0].mxu0
          %2574 = vmatprep.mubr.f32.mxu0 0.0
          %2575 = vmatmul.mubr.f32.gmra.mrb[0].mxu0 %v2478
          %v2576 = vpop.f32.mrb[0].mxu0
          %v2577 = vadd.f32 0.0, %v2576
          %v2578 = vpop.f32.mrb[0].mxu0
          %2579 = vmatprep.mubr.f32.mxu0 0.0
          %2580 = vmatmul.mubr.f32.gmra.mrb[0].mxu0 %v2481
          %v2581 = vpop.f32.mrb[0].mxu0
          %v2582 = vadd.f32 0.0, %v2581
          %v2583 = vpop.f32.mrb[0].mxu0
          %2584 = vmatprep.mubr.f32.mxu0 0.0
          %2585 = vmatmul.mubr.f32.gmra.mrb[0].mxu0 %v2484
          %v2586 = vpop.f32.mrb[0].mxu0
          %v2587 = vadd.f32 0.0, %v2586
          %v2588 = vpop.f32.mrb[0].mxu0
          %2589 = vmatprep.mubr.f32.mxu0 0.0
          %2590 = vmatmul.mubr.f32.gmra.mrb[0].mxu0 %v2487
          %v2591 = vpop.f32.mrb[0].mxu0
          %v2592 = vadd.f32 0.0, %v2591
          %v2593 = vpop.f32.mrb[0].mxu0
          %2594 = vmatprep.mubr.f32.mxu0 0.0
          %2595 = vmatmul.mubr.f32.gmra.mrb[0].mxu0 %v2490
          %v2596 = vpop.f32.mrb[0].mxu0
          %v2597 = vadd.f32 0.0, %v2596
          %v2598 = vpop.f32.mrb[0].mxu0
          %2599 = vdwg.mxu0
          %v2600 = vadd.f32 %v2448, %v2562
          %v2601 = vadd.f32 %v2449, %v2567
          %v2602 = vadd.f32 %v2450, %v2572
          %v2603 = vadd.f32 %v2451, %v2577
          %v2604 = vadd.f32 %v2452, %v2582
          %v2605 = vadd.f32 %v2453, %v2587
          %v2606 = vadd.f32 %v2454, %v2592
          %v2607 = vadd.f32 %v2455, %v2597
          %s2608 = sadd.s32 %s191, 97
          %s2609 = scalar_lea.vmem %s178, %s2608
          %v2610 = vld [vmem:[%s2609] sm:$0xff]
          %v2611 = vld [vmem:[%s2609 + $0x8] sm:$0xff]
          %v2612 = vld [vmem:[%s2609 + $0x10] sm:$0xff]
          %v2613 = vld [vmem:[%s2609 + $0x18] sm:$0xff]
          %v2614 = vld [vmem:[%s2609 + $0x20] sm:$0xff]
          %v2615 = vld [vmem:[%s2609 + $0x28] sm:$0xff]
          %v2616 = vld [vmem:[%s2609 + $0x30] sm:$0xff]
          %v2617 = vld [vmem:[%s2609 + $0x38] sm:$0xf]
          %s2618 = scalar_lea.vmem %s1, 64
          %v2619 = vld [vmem:[%s2618] sm:$0x7]
          %v2621 = vsel %vm214, %v2610, 0
          %v2624 = vsel %vm214, %v2611, 0
          %v2627 = vsel %vm214, %v2612, 0
          %v2630 = vsel %vm214, %v2613, 0
          %v2633 = vsel %vm214, %v2614, 0
          %v2636 = vsel %vm214, %v2615, 0
          %v2639 = vsel %vm214, %v2616, 0
          %v2642 = vsel %vm214, %v2617, 0
          %v2645 = vsel %vm239, %v2619, 0
          %2647 = vmatprep.subr.mxu0 0.0
          %2648 = vmatpush1.msra.mxu0 %v2645
          %2649 = vmatprep.subr.mxu0 0.0
          %2650 = vmatpush1.msra.mxu0 0.0
          %2651 = vmatprep.subr.mxu0 0.0
          %2652 = vmatpush1.msra.mxu0 0.0
          %2653 = vmatprep.subr.mxu0 0.0
          %2654 = vmatpush1.msra.mxu0 0.0
          %2655 = vmatprep.subr.mxu0 0.0
          %2656 = vmatpush1.msra.mxu0 0.0
          %2657 = vmatprep.subr.mxu0 0.0
          %2658 = vmatpush1.msra.mxu0 0.0
          %2659 = vmatprep.subr.mxu0 0.0
          %2660 = vmatpush1.msra.mxu0 0.0
          %2661 = vmatprep.subr.mxu0 0.0
          %2662 = vmatpush1.msra.mxu0 0.0
          %2663 = vmatprep.subr.mxu0 0.0
          %2664 = vmatpush1.msra.mxu0 0.0
          %2665 = vmatprep.subr.mxu0 0.0
          %2666 = vmatpush1.msra.mxu0 0.0
          %2667 = vmatprep.subr.mxu0 0.0
          %2668 = vmatpush1.msra.mxu0 0.0
          %2669 = vmatprep.subr.mxu0 0.0
          %2670 = vmatpush1.msra.mxu0 0.0
          %2671 = vmatprep.subr.mxu0 0.0
          %2672 = vmatpush1.msra.mxu0 0.0
          %2673 = vmatprep.subr.mxu0 0.0
          %2674 = vmatpush1.msra.mxu0 0.0
          %2675 = vmatprep.subr.mxu0 0.0
          %2676 = vmatpush1.msra.mxu0 0.0
          %2677 = vmatprep.subr.mxu0 0.0
          %2678 = vmatpush1.msra.mxu0 0.0
          %2679 = vmatprep.subr.mxu0 0.0
          %2680 = vmatpush1.msra.mxu0 0.0
          %2681 = vmatprep.subr.mxu0 0.0
          %2682 = vmatpush1.msra.mxu0 0.0
          %2683 = vmatprep.subr.mxu0 0.0
          %2684 = vmatpush1.msra.mxu0 0.0
          %2685 = vmatprep.subr.mxu0 0.0
          %2686 = vmatpush1.msra.mxu0 0.0
          %2687 = vmatprep.subr.mxu0 0.0
          %2688 = vmatpush1.msra.mxu0 0.0
          %2689 = vmatprep.subr.mxu0 0.0
          %2690 = vmatpush1.msra.mxu0 0.0
          %2691 = vmatprep.subr.mxu0 0.0
          %2692 = vmatpush1.msra.mxu0 0.0
          %2693 = vmatprep.subr.mxu0 0.0
          %2694 = vmatpush1.msra.mxu0 0.0
          %2695 = vmatprep.subr.mxu0 0.0
          %2696 = vmatpush1.msra.mxu0 0.0
          %2697 = vmatprep.subr.mxu0 0.0
          %2698 = vmatpush1.msra.mxu0 0.0
          %2699 = vmatprep.subr.mxu0 0.0
          %2700 = vmatpush1.msra.mxu0 0.0
          %2701 = vmatprep.subr.mxu0 0.0
          %2702 = vmatpush1.msra.mxu0 0.0
          %2703 = vmatprep.subr.mxu0 0.0
          %2704 = vmatpush1.msra.mxu0 0.0
          %2705 = vmatprep.subr.mxu0 0.0
          %2706 = vmatpush1.msra.mxu0 0.0
          %2707 = vmatprep.subr.mxu0 0.0
          %2708 = vmatpush1.msra.mxu0 0.0
          %2709 = vmatprep.subr.mxu0 0.0
          %2710 = vmatpush1.msra.mxu0 0.0
          %2711 = vmatprep.mubr.f32.mxu0 0.0
          %2712 = vmatmul.mubr.f32.gmra.mrb[0].mxu0 %v2621
          %v2713 = vpop.f32.mrb[0].mxu0
          %v2714 = vadd.f32 0.0, %v2713
          %v2715 = vpop.f32.mrb[0].mxu0
          %2716 = vmatprep.mubr.f32.mxu0 0.0
          %2717 = vmatmul.mubr.f32.gmra.mrb[0].mxu0 %v2624
          %v2718 = vpop.f32.mrb[0].mxu0
          %v2719 = vadd.f32 0.0, %v2718
          %v2720 = vpop.f32.mrb[0].mxu0
          %2721 = vmatprep.mubr.f32.mxu0 0.0
          %2722 = vmatmul.mubr.f32.gmra.mrb[0].mxu0 %v2627
          %v2723 = vpop.f32.mrb[0].mxu0
          %v2724 = vadd.f32 0.0, %v2723
          %v2725 = vpop.f32.mrb[0].mxu0
          %2726 = vmatprep.mubr.f32.mxu0 0.0
          %2727 = vmatmul.mubr.f32.gmra.mrb[0].mxu0 %v2630
          %v2728 = vpop.f32.mrb[0].mxu0
          %v2729 = vadd.f32 0.0, %v2728
          %v2730 = vpop.f32.mrb[0].mxu0
          %2731 = vmatprep.mubr.f32.mxu0 0.0
          %2732 = vmatmul.mubr.f32.gmra.mrb[0].mxu0 %v2633
          %v2733 = vpop.f32.mrb[0].mxu0
          %v2734 = vadd.f32 0.0, %v2733
          %v2735 = vpop.f32.mrb[0].mxu0
          %2736 = vmatprep.mubr.f32.mxu0 0.0
          %2737 = vmatmul.mubr.f32.gmra.mrb[0].mxu0 %v2636
          %v2738 = vpop.f32.mrb[0].mxu0
          %v2739 = vadd.f32 0.0, %v2738
          %v2740 = vpop.f32.mrb[0].mxu0
          %2741 = vmatprep.mubr.f32.mxu0 0.0
          %2742 = vmatmul.mubr.f32.gmra.mrb[0].mxu0 %v2639
          %v2743 = vpop.f32.mrb[0].mxu0
          %v2744 = vadd.f32 0.0, %v2743
          %v2745 = vpop.f32.mrb[0].mxu0
          %2746 = vmatprep.mubr.f32.mxu0 0.0
          %2747 = vmatmul.mubr.f32.gmra.mrb[0].mxu0 %v2642
          %v2748 = vpop.f32.mrb[0].mxu0
          %v2749 = vadd.f32 0.0, %v2748
          %v2750 = vpop.f32.mrb[0].mxu0
          %2751 = vdwg.mxu0
          %v2752 = vadd.f32 %v2600, %v2714
          %v2753 = vadd.f32 %v2601, %v2719
          %v2754 = vadd.f32 %v2602, %v2724
          %v2755 = vadd.f32 %v2603, %v2729
          %v2756 = vadd.f32 %v2604, %v2734
          %v2757 = vadd.f32 %v2605, %v2739
          %v2758 = vadd.f32 %v2606, %v2744
          %v2759 = vadd.f32 %v2607, %v2749
          %s2760 = sadd.s32 %s191, 98
          %s2761 = scalar_lea.vmem %s178, %s2760
          %v2762 = vld [vmem:[%s2761] sm:$0xff]
          %v2763 = vld [vmem:[%s2761 + $0x8] sm:$0xff]
          %v2764 = vld [vmem:[%s2761 + $0x10] sm:$0xff]
          %v2765 = vld [vmem:[%s2761 + $0x18] sm:$0xff]
          %v2766 = vld [vmem:[%s2761 + $0x20] sm:$0xff]
          %v2767 = vld [vmem:[%s2761 + $0x28] sm:$0xff]
          %v2768 = vld [vmem:[%s2761 + $0x30] sm:$0xff]
          %v2769 = vld [vmem:[%s2761 + $0x38] sm:$0xf]
          %s2770 = scalar_lea.vmem %s1, 68
          %v2771 = vld [vmem:[%s2770] sm:$0x7]
          %v2773 = vsel %vm214, %v2762, 0
          %v2776 = vsel %vm214, %v2763, 0
          %v2779 = vsel %vm214, %v2764, 0
          %v2782 = vsel %vm214, %v2765, 0
          %v2785 = vsel %vm214, %v2766, 0
          %v2788 = vsel %vm214, %v2767, 0
          %v2791 = vsel %vm214, %v2768, 0
          %v2794 = vsel %vm214, %v2769, 0
          %v2797 = vsel %vm239, %v2771, 0
          %2799 = vmatprep.subr.mxu0 0.0
          %2800 = vmatpush1.msra.mxu0 %v2797
          %2801 = vmatprep.subr.mxu0 0.0
          %2802 = vmatpush1.msra.mxu0 0.0
          %2803 = vmatprep.subr.mxu0 0.0
          %2804 = vmatpush1.msra.mxu0 0.0
          %2805 = vmatprep.subr.mxu0 0.0
          %2806 = vmatpush1.msra.mxu0 0.0
          %2807 = vmatprep.subr.mxu0 0.0
          %2808 = vmatpush1.msra.mxu0 0.0
          %2809 = vmatprep.subr.mxu0 0.0
          %2810 = vmatpush1.msra.mxu0 0.0
          %2811 = vmatprep.subr.mxu0 0.0
          %2812 = vmatpush1.msra.mxu0 0.0
          %2813 = vmatprep.subr.mxu0 0.0
          %2814 = vmatpush1.msra.mxu0 0.0
          %2815 = vmatprep.subr.mxu0 0.0
          %2816 = vmatpush1.msra.mxu0 0.0
          %2817 = vmatprep.subr.mxu0 0.0
          %2818 = vmatpush1.msra.mxu0 0.0
          %2819 = vmatprep.subr.mxu0 0.0
          %2820 = vmatpush1.msra.mxu0 0.0
          %2821 = vmatprep.subr.mxu0 0.0
          %2822 = vmatpush1.msra.mxu0 0.0
          %2823 = vmatprep.subr.mxu0 0.0
          %2824 = vmatpush1.msra.mxu0 0.0
          %2825 = vmatprep.subr.mxu0 0.0
          %2826 = vmatpush1.msra.mxu0 0.0
          %2827 = vmatprep.subr.mxu0 0.0
          %2828 = vmatpush1.msra.mxu0 0.0
          %2829 = vmatprep.subr.mxu0 0.0
          %2830 = vmatpush1.msra.mxu0 0.0
          %2831 = vmatprep.subr.mxu0 0.0
          %2832 = vmatpush1.msra.mxu0 0.0
          %2833 = vmatprep.subr.mxu0 0.0
          %2834 = vmatpush1.msra.mxu0 0.0
          %2835 = vmatprep.subr.mxu0 0.0
          %2836 = vmatpush1.msra.mxu0 0.0
          %2837 = vmatprep.subr.mxu0 0.0
          %2838 = vmatpush1.msra.mxu0 0.0
          %2839 = vmatprep.subr.mxu0 0.0
          %2840 = vmatpush1.msra.mxu0 0.0
          %2841 = vmatprep.subr.mxu0 0.0
          %2842 = vmatpush1.msra.mxu0 0.0
          %2843 = vmatprep.subr.mxu0 0.0
          %2844 = vmatpush1.msra.mxu0 0.0
          %2845 = vmatprep.subr.mxu0 0.0
          %2846 = vmatpush1.msra.mxu0 0.0
          %2847 = vmatprep.subr.mxu0 0.0
          %2848 = vmatpush1.msra.mxu0 0.0
          %2849 = vmatprep.subr.mxu0 0.0
          %2850 = vmatpush1.msra.mxu0 0.0
          %2851 = vmatprep.subr.mxu0 0.0
          %2852 = vmatpush1.msra.mxu0 0.0
          %2853 = vmatprep.subr.mxu0 0.0
          %2854 = vmatpush1.msra.mxu0 0.0
          %2855 = vmatprep.subr.mxu0 0.0
          %2856 = vmatpush1.msra.mxu0 0.0
          %2857 = vmatprep.subr.mxu0 0.0
          %2858 = vmatpush1.msra.mxu0 0.0
          %2859 = vmatprep.subr.mxu0 0.0
          %2860 = vmatpush1.msra.mxu0 0.0
          %2861 = vmatprep.subr.mxu0 0.0
          %2862 = vmatpush1.msra.mxu0 0.0
          %2863 = vmatprep.mubr.f32.mxu0 0.0
          %2864 = vmatmul.mubr.f32.gmra.mrb[0].mxu0 %v2773
          %v2865 = vpop.f32.mrb[0].mxu0
          %v2866 = vadd.f32 0.0, %v2865
          %v2867 = vpop.f32.mrb[0].mxu0
          %2868 = vmatprep.mubr.f32.mxu0 0.0
          %2869 = vmatmul.mubr.f32.gmra.mrb[0].mxu0 %v2776
          %v2870 = vpop.f32.mrb[0].mxu0
          %v2871 = vadd.f32 0.0, %v2870
          %v2872 = vpop.f32.mrb[0].mxu0
          %2873 = vmatprep.mubr.f32.mxu0 0.0
          %2874 = vmatmul.mubr.f32.gmra.mrb[0].mxu0 %v2779
          %v2875 = vpop.f32.mrb[0].mxu0
          %v2876 = vadd.f32 0.0, %v2875
          %v2877 = vpop.f32.mrb[0].mxu0
          %2878 = vmatprep.mubr.f32.mxu0 0.0
          %2879 = vmatmul.mubr.f32.gmra.mrb[0].mxu0 %v2782
          %v2880 = vpop.f32.mrb[0].mxu0
          %v2881 = vadd.f32 0.0, %v2880
          %v2882 = vpop.f32.mrb[0].mxu0
          %2883 = vmatprep.mubr.f32.mxu0 0.0
          %2884 = vmatmul.mubr.f32.gmra.mrb[0].mxu0 %v2785
          %v2885 = vpop.f32.mrb[0].mxu0
          %v2886 = vadd.f32 0.0, %v2885
          %v2887 = vpop.f32.mrb[0].mxu0
          %2888 = vmatprep.mubr.f32.mxu0 0.0
          %2889 = vmatmul.mubr.f32.gmra.mrb[0].mxu0 %v2788
          %v2890 = vpop.f32.mrb[0].mxu0
          %v2891 = vadd.f32 0.0, %v2890
          %v2892 = vpop.f32.mrb[0].mxu0
          %2893 = vmatprep.mubr.f32.mxu0 0.0
          %2894 = vmatmul.mubr.f32.gmra.mrb[0].mxu0 %v2791
          %v2895 = vpop.f32.mrb[0].mxu0
          %v2896 = vadd.f32 0.0, %v2895
          %v2897 = vpop.f32.mrb[0].mxu0
          %2898 = vmatprep.mubr.f32.mxu0 0.0
          %2899 = vmatmul.mubr.f32.gmra.mrb[0].mxu0 %v2794
          %v2900 = vpop.f32.mrb[0].mxu0
          %v2901 = vadd.f32 0.0, %v2900
          %v2902 = vpop.f32.mrb[0].mxu0
          %2903 = vdwg.mxu0
          %v2904 = vadd.f32 %v2752, %v2866
          %v2905 = vadd.f32 %v2753, %v2871
          %v2906 = vadd.f32 %v2754, %v2876
          %v2907 = vadd.f32 %v2755, %v2881
          %v2908 = vadd.f32 %v2756, %v2886
          %v2909 = vadd.f32 %v2757, %v2891
          %v2910 = vadd.f32 %v2758, %v2896
          %v2911 = vadd.f32 %v2759, %v2901
          %s2912 = sadd.s32 %s191, 99
          %s2913 = scalar_lea.vmem %s178, %s2912
          %v2914 = vld [vmem:[%s2913] sm:$0xff]
          %v2915 = vld [vmem:[%s2913 + $0x8] sm:$0xff]
          %v2916 = vld [vmem:[%s2913 + $0x10] sm:$0xff]
          %v2917 = vld [vmem:[%s2913 + $0x18] sm:$0xff]
          %v2918 = vld [vmem:[%s2913 + $0x20] sm:$0xff]
          %v2919 = vld [vmem:[%s2913 + $0x28] sm:$0xff]
          %v2920 = vld [vmem:[%s2913 + $0x30] sm:$0xff]
          %v2921 = vld [vmem:[%s2913 + $0x38] sm:$0xf]
          %s2922 = scalar_lea.vmem %s1, 72
          %v2923 = vld [vmem:[%s2922] sm:$0x7]
          %v2925 = vsel %vm214, %v2914, 0
          %v2928 = vsel %vm214, %v2915, 0
          %v2931 = vsel %vm214, %v2916, 0
          %v2934 = vsel %vm214, %v2917, 0
          %v2937 = vsel %vm214, %v2918, 0
          %v2940 = vsel %vm214, %v2919, 0
          %v2943 = vsel %vm214, %v2920, 0
          %v2946 = vsel %vm214, %v2921, 0
          %v2949 = vsel %vm239, %v2923, 0
          %2951 = vmatprep.subr.mxu0 0.0
          %2952 = vmatpush1.msra.mxu0 %v2949
          %2953 = vmatprep.subr.mxu0 0.0
          %2954 = vmatpush1.msra.mxu0 0.0
          %2955 = vmatprep.subr.mxu0 0.0
          %2956 = vmatpush1.msra.mxu0 0.0
          %2957 = vmatprep.subr.mxu0 0.0
          %2958 = vmatpush1.msra.mxu0 0.0
          %2959 = vmatprep.subr.mxu0 0.0
          %2960 = vmatpush1.msra.mxu0 0.0
          %2961 = vmatprep.subr.mxu0 0.0
          %2962 = vmatpush1.msra.mxu0 0.0
          %2963 = vmatprep.subr.mxu0 0.0
          %2964 = vmatpush1.msra.mxu0 0.0
          %2965 = vmatprep.subr.mxu0 0.0
          %2966 = vmatpush1.msra.mxu0 0.0
          %2967 = vmatprep.subr.mxu0 0.0
          %2968 = vmatpush1.msra.mxu0 0.0
          %2969 = vmatprep.subr.mxu0 0.0
          %2970 = vmatpush1.msra.mxu0 0.0
          %2971 = vmatprep.subr.mxu0 0.0
          %2972 = vmatpush1.msra.mxu0 0.0
          %2973 = vmatprep.subr.mxu0 0.0
          %2974 = vmatpush1.msra.mxu0 0.0
          %2975 = vmatprep.subr.mxu0 0.0
          %2976 = vmatpush1.msra.mxu0 0.0
          %2977 = vmatprep.subr.mxu0 0.0
          %2978 = vmatpush1.msra.mxu0 0.0
          %2979 = vmatprep.subr.mxu0 0.0
          %2980 = vmatpush1.msra.mxu0 0.0
          %2981 = vmatprep.subr.mxu0 0.0
          %2982 = vmatpush1.msra.mxu0 0.0
          %2983 = vmatprep.subr.mxu0 0.0
          %2984 = vmatpush1.msra.mxu0 0.0
          %2985 = vmatprep.subr.mxu0 0.0
          %2986 = vmatpush1.msra.mxu0 0.0
          %2987 = vmatprep.subr.mxu0 0.0
          %2988 = vmatpush1.msra.mxu0 0.0
          %2989 = vmatprep.subr.mxu0 0.0
          %2990 = vmatpush1.msra.mxu0 0.0
          %2991 = vmatprep.subr.mxu0 0.0
          %2992 = vmatpush1.msra.mxu0 0.0
          %2993 = vmatprep.subr.mxu0 0.0
          %2994 = vmatpush1.msra.mxu0 0.0
          %2995 = vmatprep.subr.mxu0 0.0
          %2996 = vmatpush1.msra.mxu0 0.0
          %2997 = vmatprep.subr.mxu0 0.0
          %2998 = vmatpush1.msra.mxu0 0.0
          %2999 = vmatprep.subr.mxu0 0.0
          %3000 = vmatpush1.msra.mxu0 0.0
          %3001 = vmatprep.subr.mxu0 0.0
          %3002 = vmatpush1.msra.mxu0 0.0
          %3003 = vmatprep.subr.mxu0 0.0
          %3004 = vmatpush1.msra.mxu0 0.0
          %3005 = vmatprep.subr.mxu0 0.0
          %3006 = vmatpush1.msra.mxu0 0.0
          %3007 = vmatprep.subr.mxu0 0.0
          %3008 = vmatpush1.msra.mxu0 0.0
          %3009 = vmatprep.subr.mxu0 0.0
          %3010 = vmatpush1.msra.mxu0 0.0
          %3011 = vmatprep.subr.mxu0 0.0
          %3012 = vmatpush1.msra.mxu0 0.0
          %3013 = vmatprep.subr.mxu0 0.0
          %3014 = vmatpush1.msra.mxu0 0.0
          %3015 = vmatprep.mubr.f32.mxu0 0.0
          %3016 = vmatmul.mubr.f32.gmra.mrb[0].mxu0 %v2925
          %v3017 = vpop.f32.mrb[0].mxu0
          %v3018 = vadd.f32 0.0, %v3017
          %v3019 = vpop.f32.mrb[0].mxu0
          %3020 = vmatprep.mubr.f32.mxu0 0.0
          %3021 = vmatmul.mubr.f32.gmra.mrb[0].mxu0 %v2928
          %v3022 = vpop.f32.mrb[0].mxu0
          %v3023 = vadd.f32 0.0, %v3022
          %v3024 = vpop.f32.mrb[0].mxu0
          %3025 = vmatprep.mubr.f32.mxu0 0.0
          %3026 = vmatmul.mubr.f32.gmra.mrb[0].mxu0 %v2931
          %v3027 = vpop.f32.mrb[0].mxu0
          %v3028 = vadd.f32 0.0, %v3027
          %v3029 = vpop.f32.mrb[0].mxu0
          %3030 = vmatprep.mubr.f32.mxu0 0.0
          %3031 = vmatmul.mubr.f32.gmra.mrb[0].mxu0 %v2934
          %v3032 = vpop.f32.mrb[0].mxu0
          %v3033 = vadd.f32 0.0, %v3032
          %v3034 = vpop.f32.mrb[0].mxu0
          %3035 = vmatprep.mubr.f32.mxu0 0.0
          %3036 = vmatmul.mubr.f32.gmra.mrb[0].mxu0 %v2937
          %v3037 = vpop.f32.mrb[0].mxu0
          %v3038 = vadd.f32 0.0, %v3037
          %v3039 = vpop.f32.mrb[0].mxu0
          %3040 = vmatprep.mubr.f32.mxu0 0.0
          %3041 = vmatmul.mubr.f32.gmra.mrb[0].mxu0 %v2940
          %v3042 = vpop.f32.mrb[0].mxu0
          %v3043 = vadd.f32 0.0, %v3042
          %v3044 = vpop.f32.mrb[0].mxu0
          %3045 = vmatprep.mubr.f32.mxu0 0.0
          %3046 = vmatmul.mubr.f32.gmra.mrb[0].mxu0 %v2943
          %v3047 = vpop.f32.mrb[0].mxu0
          %v3048 = vadd.f32 0.0, %v3047
          %v3049 = vpop.f32.mrb[0].mxu0
          %3050 = vmatprep.mubr.f32.mxu0 0.0
          %3051 = vmatmul.mubr.f32.gmra.mrb[0].mxu0 %v2946
          %v3052 = vpop.f32.mrb[0].mxu0
          %v3053 = vadd.f32 0.0, %v3052
          %v3054 = vpop.f32.mrb[0].mxu0
          %3055 = vdwg.mxu0
          %v3056 = vadd.f32 %v2904, %v3018
          %v3057 = vadd.f32 %v2905, %v3023
          %v3058 = vadd.f32 %v2906, %v3028
          %v3059 = vadd.f32 %v2907, %v3033
          %v3060 = vadd.f32 %v2908, %v3038
          %v3061 = vadd.f32 %v2909, %v3043
          %v3062 = vadd.f32 %v2910, %v3048
          %v3063 = vadd.f32 %v2911, %v3053
          %s3064 = sadd.s32 %s191, 100
          %s3065 = scalar_lea.vmem %s178, %s3064
          %v3066 = vld [vmem:[%s3065] sm:$0xff]
          %v3067 = vld [vmem:[%s3065 + $0x8] sm:$0xff]
          %v3068 = vld [vmem:[%s3065 + $0x10] sm:$0xff]
          %v3069 = vld [vmem:[%s3065 + $0x18] sm:$0xff]
          %v3070 = vld [vmem:[%s3065 + $0x20] sm:$0xff]
          %v3071 = vld [vmem:[%s3065 + $0x28] sm:$0xff]
          %v3072 = vld [vmem:[%s3065 + $0x30] sm:$0xff]
          %v3073 = vld [vmem:[%s3065 + $0x38] sm:$0xf]
          %s3074 = scalar_lea.vmem %s1, 76
          %v3075 = vld [vmem:[%s3074] sm:$0x7]
          %v3077 = vsel %vm214, %v3066, 0
          %v3080 = vsel %vm214, %v3067, 0
          %v3083 = vsel %vm214, %v3068, 0
          %v3086 = vsel %vm214, %v3069, 0
          %v3089 = vsel %vm214, %v3070, 0
          %v3092 = vsel %vm214, %v3071, 0
          %v3095 = vsel %vm214, %v3072, 0
          %v3098 = vsel %vm214, %v3073, 0
          %v3101 = vsel %vm239, %v3075, 0
          %3103 = vmatprep.subr.mxu0 0.0
          %3104 = vmatpush1.msra.mxu0 %v3101
          %3105 = vmatprep.subr.mxu0 0.0
          %3106 = vmatpush1.msra.mxu0 0.0
          %3107 = vmatprep.subr.mxu0 0.0
          %3108 = vmatpush1.msra.mxu0 0.0
          %3109 = vmatprep.subr.mxu0 0.0
          %3110 = vmatpush1.msra.mxu0 0.0
          %3111 = vmatprep.subr.mxu0 0.0
          %3112 = vmatpush1.msra.mxu0 0.0
          %3113 = vmatprep.subr.mxu0 0.0
          %3114 = vmatpush1.msra.mxu0 0.0
          %3115 = vmatprep.subr.mxu0 0.0
          %3116 = vmatpush1.msra.mxu0 0.0
          %3117 = vmatprep.subr.mxu0 0.0
          %3118 = vmatpush1.msra.mxu0 0.0
          %3119 = vmatprep.subr.mxu0 0.0
          %3120 = vmatpush1.msra.mxu0 0.0
          %3121 = vmatprep.subr.mxu0 0.0
          %3122 = vmatpush1.msra.mxu0 0.0
          %3123 = vmatprep.subr.mxu0 0.0
          %3124 = vmatpush1.msra.mxu0 0.0
          %3125 = vmatprep.subr.mxu0 0.0
          %3126 = vmatpush1.msra.mxu0 0.0
          %3127 = vmatprep.subr.mxu0 0.0
          %3128 = vmatpush1.msra.mxu0 0.0
          %3129 = vmatprep.subr.mxu0 0.0
          %3130 = vmatpush1.msra.mxu0 0.0
          %3131 = vmatprep.subr.mxu0 0.0
          %3132 = vmatpush1.msra.mxu0 0.0
          %3133 = vmatprep.subr.mxu0 0.0
          %3134 = vmatpush1.msra.mxu0 0.0
          %3135 = vmatprep.subr.mxu0 0.0
          %3136 = vmatpush1.msra.mxu0 0.0
          %3137 = vmatprep.subr.mxu0 0.0
          %3138 = vmatpush1.msra.mxu0 0.0
          %3139 = vmatprep.subr.mxu0 0.0
          %3140 = vmatpush1.msra.mxu0 0.0
          %3141 = vmatprep.subr.mxu0 0.0
          %3142 = vmatpush1.msra.mxu0 0.0
          %3143 = vmatprep.subr.mxu0 0.0
          %3144 = vmatpush1.msra.mxu0 0.0
          %3145 = vmatprep.subr.mxu0 0.0
          %3146 = vmatpush1.msra.mxu0 0.0
          %3147 = vmatprep.subr.mxu0 0.0
          %3148 = vmatpush1.msra.mxu0 0.0
          %3149 = vmatprep.subr.mxu0 0.0
          %3150 = vmatpush1.msra.mxu0 0.0
          %3151 = vmatprep.subr.mxu0 0.0
          %3152 = vmatpush1.msra.mxu0 0.0
          %3153 = vmatprep.subr.mxu0 0.0
          %3154 = vmatpush1.msra.mxu0 0.0
          %3155 = vmatprep.subr.mxu0 0.0
          %3156 = vmatpush1.msra.mxu0 0.0
          %3157 = vmatprep.subr.mxu0 0.0
          %3158 = vmatpush1.msra.mxu0 0.0
          %3159 = vmatprep.subr.mxu0 0.0
          %3160 = vmatpush1.msra.mxu0 0.0
          %3161 = vmatprep.subr.mxu0 0.0
          %3162 = vmatpush1.msra.mxu0 0.0
          %3163 = vmatprep.subr.mxu0 0.0
          %3164 = vmatpush1.msra.mxu0 0.0
          %3165 = vmatprep.subr.mxu0 0.0
          %3166 = vmatpush1.msra.mxu0 0.0
          %3167 = vmatprep.mubr.f32.mxu0 0.0
          %3168 = vmatmul.mubr.f32.gmra.mrb[0].mxu0 %v3077
          %v3169 = vpop.f32.mrb[0].mxu0
          %v3170 = vadd.f32 0.0, %v3169
          %v3171 = vpop.f32.mrb[0].mxu0
          %3172 = vmatprep.mubr.f32.mxu0 0.0
          %3173 = vmatmul.mubr.f32.gmra.mrb[0].mxu0 %v3080
          %v3174 = vpop.f32.mrb[0].mxu0
          %v3175 = vadd.f32 0.0, %v3174
          %v3176 = vpop.f32.mrb[0].mxu0
          %3177 = vmatprep.mubr.f32.mxu0 0.0
          %3178 = vmatmul.mubr.f32.gmra.mrb[0].mxu0 %v3083
          %v3179 = vpop.f32.mrb[0].mxu0
          %v3180 = vadd.f32 0.0, %v3179
          %v3181 = vpop.f32.mrb[0].mxu0
          %3182 = vmatprep.mubr.f32.mxu0 0.0
          %3183 = vmatmul.mubr.f32.gmra.mrb[0].mxu0 %v3086
          %v3184 = vpop.f32.mrb[0].mxu0
          %v3185 = vadd.f32 0.0, %v3184
          %v3186 = vpop.f32.mrb[0].mxu0
          %3187 = vmatprep.mubr.f32.mxu0 0.0
          %3188 = vmatmul.mubr.f32.gmra.mrb[0].mxu0 %v3089
          %v3189 = vpop.f32.mrb[0].mxu0
          %v3190 = vadd.f32 0.0, %v3189
          %v3191 = vpop.f32.mrb[0].mxu0
          %3192 = vmatprep.mubr.f32.mxu0 0.0
          %3193 = vmatmul.mubr.f32.gmra.mrb[0].mxu0 %v3092
          %v3194 = vpop.f32.mrb[0].mxu0
          %v3195 = vadd.f32 0.0, %v3194
          %v3196 = vpop.f32.mrb[0].mxu0
          %3197 = vmatprep.mubr.f32.mxu0 0.0
          %3198 = vmatmul.mubr.f32.gmra.mrb[0].mxu0 %v3095
          %v3199 = vpop.f32.mrb[0].mxu0
          %v3200 = vadd.f32 0.0, %v3199
          %v3201 = vpop.f32.mrb[0].mxu0
          %3202 = vmatprep.mubr.f32.mxu0 0.0
          %3203 = vmatmul.mubr.f32.gmra.mrb[0].mxu0 %v3098
          %v3204 = vpop.f32.mrb[0].mxu0
          %v3205 = vadd.f32 0.0, %v3204
          %v3206 = vpop.f32.mrb[0].mxu0
          %3207 = vdwg.mxu0
          %v3208 = vadd.f32 %v3056, %v3170
          %v3209 = vadd.f32 %v3057, %v3175
          %v3210 = vadd.f32 %v3058, %v3180
          %v3211 = vadd.f32 %v3059, %v3185
          %v3212 = vadd.f32 %v3060, %v3190
          %v3213 = vadd.f32 %v3061, %v3195
          %v3214 = vadd.f32 %v3062, %v3200
          %v3215 = vadd.f32 %v3063, %v3205
          %s3216 = sadd.s32 %s191, 128
          %s3217 = scalar_lea.vmem %s178, %s3216
          %v3218 = vld [vmem:[%s3217] sm:$0xff]
          %v3219 = vld [vmem:[%s3217 + $0x8] sm:$0xff]
          %v3220 = vld [vmem:[%s3217 + $0x10] sm:$0xff]
          %v3221 = vld [vmem:[%s3217 + $0x18] sm:$0xff]
          %v3222 = vld [vmem:[%s3217 + $0x20] sm:$0xff]
          %v3223 = vld [vmem:[%s3217 + $0x28] sm:$0xff]
          %v3224 = vld [vmem:[%s3217 + $0x30] sm:$0xff]
          %v3225 = vld [vmem:[%s3217 + $0x38] sm:$0xf]
          %s3226 = scalar_lea.vmem %s1, 80
          %v3227 = vld [vmem:[%s3226] sm:$0x7]
          %v3229 = vsel %vm214, %v3218, 0
          %v3232 = vsel %vm214, %v3219, 0
          %v3235 = vsel %vm214, %v3220, 0
          %v3238 = vsel %vm214, %v3221, 0
          %v3241 = vsel %vm214, %v3222, 0
          %v3244 = vsel %vm214, %v3223, 0
          %v3247 = vsel %vm214, %v3224, 0
          %v3250 = vsel %vm214, %v3225, 0
          %v3253 = vsel %vm239, %v3227, 0
          %3255 = vmatprep.subr.mxu0 0.0
          %3256 = vmatpush1.msra.mxu0 %v3253
          %3257 = vmatprep.subr.mxu0 0.0
          %3258 = vmatpush1.msra.mxu0 0.0
          %3259 = vmatprep.subr.mxu0 0.0
          %3260 = vmatpush1.msra.mxu0 0.0
          %3261 = vmatprep.subr.mxu0 0.0
          %3262 = vmatpush1.msra.mxu0 0.0
          %3263 = vmatprep.subr.mxu0 0.0
          %3264 = vmatpush1.msra.mxu0 0.0
          %3265 = vmatprep.subr.mxu0 0.0
          %3266 = vmatpush1.msra.mxu0 0.0
          %3267 = vmatprep.subr.mxu0 0.0
          %3268 = vmatpush1.msra.mxu0 0.0
          %3269 = vmatprep.subr.mxu0 0.0
          %3270 = vmatpush1.msra.mxu0 0.0
          %3271 = vmatprep.subr.mxu0 0.0
          %3272 = vmatpush1.msra.mxu0 0.0
          %3273 = vmatprep.subr.mxu0 0.0
          %3274 = vmatpush1.msra.mxu0 0.0
          %3275 = vmatprep.subr.mxu0 0.0
          %3276 = vmatpush1.msra.mxu0 0.0
          %3277 = vmatprep.subr.mxu0 0.0
          %3278 = vmatpush1.msra.mxu0 0.0
          %3279 = vmatprep.subr.mxu0 0.0
          %3280 = vmatpush1.msra.mxu0 0.0
          %3281 = vmatprep.subr.mxu0 0.0
          %3282 = vmatpush1.msra.mxu0 0.0
          %3283 = vmatprep.subr.mxu0 0.0
          %3284 = vmatpush1.msra.mxu0 0.0
          %3285 = vmatprep.subr.mxu0 0.0
          %3286 = vmatpush1.msra.mxu0 0.0
          %3287 = vmatprep.subr.mxu0 0.0
          %3288 = vmatpush1.msra.mxu0 0.0
          %3289 = vmatprep.subr.mxu0 0.0
          %3290 = vmatpush1.msra.mxu0 0.0
          %3291 = vmatprep.subr.mxu0 0.0
          %3292 = vmatpush1.msra.mxu0 0.0
          %3293 = vmatprep.subr.mxu0 0.0
          %3294 = vmatpush1.msra.mxu0 0.0
          %3295 = vmatprep.subr.mxu0 0.0
          %3296 = vmatpush1.msra.mxu0 0.0
          %3297 = vmatprep.subr.mxu0 0.0
          %3298 = vmatpush1.msra.mxu0 0.0
          %3299 = vmatprep.subr.mxu0 0.0
          %3300 = vmatpush1.msra.mxu0 0.0
          %3301 = vmatprep.subr.mxu0 0.0
          %3302 = vmatpush1.msra.mxu0 0.0
          %3303 = vmatprep.subr.mxu0 0.0
          %3304 = vmatpush1.msra.mxu0 0.0
          %3305 = vmatprep.subr.mxu0 0.0
          %3306 = vmatpush1.msra.mxu0 0.0
          %3307 = vmatprep.subr.mxu0 0.0
          %3308 = vmatpush1.msra.mxu0 0.0
          %3309 = vmatprep.subr.mxu0 0.0
          %3310 = vmatpush1.msra.mxu0 0.0
          %3311 = vmatprep.subr.mxu0 0.0
          %3312 = vmatpush1.msra.mxu0 0.0
          %3313 = vmatprep.subr.mxu0 0.0
          %3314 = vmatpush1.msra.mxu0 0.0
          %3315 = vmatprep.subr.mxu0 0.0
          %3316 = vmatpush1.msra.mxu0 0.0
          %3317 = vmatprep.subr.mxu0 0.0
          %3318 = vmatpush1.msra.mxu0 0.0
          %3319 = vmatprep.mubr.f32.mxu0 0.0
          %3320 = vmatmul.mubr.f32.gmra.mrb[0].mxu0 %v3229
          %v3321 = vpop.f32.mrb[0].mxu0
          %v3322 = vadd.f32 0.0, %v3321
          %v3323 = vpop.f32.mrb[0].mxu0
          %3324 = vmatprep.mubr.f32.mxu0 0.0
          %3325 = vmatmul.mubr.f32.gmra.mrb[0].mxu0 %v3232
          %v3326 = vpop.f32.mrb[0].mxu0
          %v3327 = vadd.f32 0.0, %v3326
          %v3328 = vpop.f32.mrb[0].mxu0
          %3329 = vmatprep.mubr.f32.mxu0 0.0
          %3330 = vmatmul.mubr.f32.gmra.mrb[0].mxu0 %v3235
          %v3331 = vpop.f32.mrb[0].mxu0
          %v3332 = vadd.f32 0.0, %v3331
          %v3333 = vpop.f32.mrb[0].mxu0
          %3334 = vmatprep.mubr.f32.mxu0 0.0
          %3335 = vmatmul.mubr.f32.gmra.mrb[0].mxu0 %v3238
          %v3336 = vpop.f32.mrb[0].mxu0
          %v3337 = vadd.f32 0.0, %v3336
          %v3338 = vpop.f32.mrb[0].mxu0
          %3339 = vmatprep.mubr.f32.mxu0 0.0
          %3340 = vmatmul.mubr.f32.gmra.mrb[0].mxu0 %v3241
          %v3341 = vpop.f32.mrb[0].mxu0
          %v3342 = vadd.f32 0.0, %v3341
          %v3343 = vpop.f32.mrb[0].mxu0
          %3344 = vmatprep.mubr.f32.mxu0 0.0
          %3345 = vmatmul.mubr.f32.gmra.mrb[0].mxu0 %v3244
          %v3346 = vpop.f32.mrb[0].mxu0
          %v3347 = vadd.f32 0.0, %v3346
          %v3348 = vpop.f32.mrb[0].mxu0
          %3349 = vmatprep.mubr.f32.mxu0 0.0
          %3350 = vmatmul.mubr.f32.gmra.mrb[0].mxu0 %v3247
          %v3351 = vpop.f32.mrb[0].mxu0
          %v3352 = vadd.f32 0.0, %v3351
          %v3353 = vpop.f32.mrb[0].mxu0
          %3354 = vmatprep.mubr.f32.mxu0 0.0
          %3355 = vmatmul.mubr.f32.gmra.mrb[0].mxu0 %v3250
          %v3356 = vpop.f32.mrb[0].mxu0
          %v3357 = vadd.f32 0.0, %v3356
          %v3358 = vpop.f32.mrb[0].mxu0
          %3359 = vdwg.mxu0
          %v3360 = vadd.f32 %v3208, %v3322
          %v3361 = vadd.f32 %v3209, %v3327
          %v3362 = vadd.f32 %v3210, %v3332
          %v3363 = vadd.f32 %v3211, %v3337
          %v3364 = vadd.f32 %v3212, %v3342
          %v3365 = vadd.f32 %v3213, %v3347
          %v3366 = vadd.f32 %v3214, %v3352
          %v3367 = vadd.f32 %v3215, %v3357
          %s3368 = sadd.s32 %s191, 129
          %s3369 = scalar_lea.vmem %s178, %s3368
          %v3370 = vld [vmem:[%s3369] sm:$0xff]
          %v3371 = vld [vmem:[%s3369 + $0x8] sm:$0xff]
          %v3372 = vld [vmem:[%s3369 + $0x10] sm:$0xff]
          %v3373 = vld [vmem:[%s3369 + $0x18] sm:$0xff]
          %v3374 = vld [vmem:[%s3369 + $0x20] sm:$0xff]
          %v3375 = vld [vmem:[%s3369 + $0x28] sm:$0xff]
          %v3376 = vld [vmem:[%s3369 + $0x30] sm:$0xff]
          %v3377 = vld [vmem:[%s3369 + $0x38] sm:$0xf]
          %s3378 = scalar_lea.vmem %s1, 84
          %v3379 = vld [vmem:[%s3378] sm:$0x7]
          %v3381 = vsel %vm214, %v3370, 0
          %v3384 = vsel %vm214, %v3371, 0
          %v3387 = vsel %vm214, %v3372, 0
          %v3390 = vsel %vm214, %v3373, 0
          %v3393 = vsel %vm214, %v3374, 0
          %v3396 = vsel %vm214, %v3375, 0
          %v3399 = vsel %vm214, %v3376, 0
          %v3402 = vsel %vm214, %v3377, 0
          %v3405 = vsel %vm239, %v3379, 0
          %3407 = vmatprep.subr.mxu0 0.0
          %3408 = vmatpush1.msra.mxu0 %v3405
          %3409 = vmatprep.subr.mxu0 0.0
          %3410 = vmatpush1.msra.mxu0 0.0
          %3411 = vmatprep.subr.mxu0 0.0
          %3412 = vmatpush1.msra.mxu0 0.0
          %3413 = vmatprep.subr.mxu0 0.0
          %3414 = vmatpush1.msra.mxu0 0.0
          %3415 = vmatprep.subr.mxu0 0.0
          %3416 = vmatpush1.msra.mxu0 0.0
          %3417 = vmatprep.subr.mxu0 0.0
          %3418 = vmatpush1.msra.mxu0 0.0
          %3419 = vmatprep.subr.mxu0 0.0
          %3420 = vmatpush1.msra.mxu0 0.0
          %3421 = vmatprep.subr.mxu0 0.0
          %3422 = vmatpush1.msra.mxu0 0.0
          %3423 = vmatprep.subr.mxu0 0.0
          %3424 = vmatpush1.msra.mxu0 0.0
          %3425 = vmatprep.subr.mxu0 0.0
          %3426 = vmatpush1.msra.mxu0 0.0
          %3427 = vmatprep.subr.mxu0 0.0
          %3428 = vmatpush1.msra.mxu0 0.0
          %3429 = vmatprep.subr.mxu0 0.0
          %3430 = vmatpush1.msra.mxu0 0.0
          %3431 = vmatprep.subr.mxu0 0.0
          %3432 = vmatpush1.msra.mxu0 0.0
          %3433 = vmatprep.subr.mxu0 0.0
          %3434 = vmatpush1.msra.mxu0 0.0
          %3435 = vmatprep.subr.mxu0 0.0
          %3436 = vmatpush1.msra.mxu0 0.0
          %3437 = vmatprep.subr.mxu0 0.0
          %3438 = vmatpush1.msra.mxu0 0.0
          %3439 = vmatprep.subr.mxu0 0.0
          %3440 = vmatpush1.msra.mxu0 0.0
          %3441 = vmatprep.subr.mxu0 0.0
          %3442 = vmatpush1.msra.mxu0 0.0
          %3443 = vmatprep.subr.mxu0 0.0
          %3444 = vmatpush1.msra.mxu0 0.0
          %3445 = vmatprep.subr.mxu0 0.0
          %3446 = vmatpush1.msra.mxu0 0.0
          %3447 = vmatprep.subr.mxu0 0.0
          %3448 = vmatpush1.msra.mxu0 0.0
          %3449 = vmatprep.subr.mxu0 0.0
          %3450 = vmatpush1.msra.mxu0 0.0
          %3451 = vmatprep.subr.mxu0 0.0
          %3452 = vmatpush1.msra.mxu0 0.0
          %3453 = vmatprep.subr.mxu0 0.0
          %3454 = vmatpush1.msra.mxu0 0.0
          %3455 = vmatprep.subr.mxu0 0.0
          %3456 = vmatpush1.msra.mxu0 0.0
          %3457 = vmatprep.subr.mxu0 0.0
          %3458 = vmatpush1.msra.mxu0 0.0
          %3459 = vmatprep.subr.mxu0 0.0
          %3460 = vmatpush1.msra.mxu0 0.0
          %3461 = vmatprep.subr.mxu0 0.0
          %3462 = vmatpush1.msra.mxu0 0.0
          %3463 = vmatprep.subr.mxu0 0.0
          %3464 = vmatpush1.msra.mxu0 0.0
          %3465 = vmatprep.subr.mxu0 0.0
          %3466 = vmatpush1.msra.mxu0 0.0
          %3467 = vmatprep.subr.mxu0 0.0
          %3468 = vmatpush1.msra.mxu0 0.0
          %3469 = vmatprep.subr.mxu0 0.0
          %3470 = vmatpush1.msra.mxu0 0.0
          %3471 = vmatprep.mubr.f32.mxu0 0.0
          %3472 = vmatmul.mubr.f32.gmra.mrb[0].mxu0 %v3381
          %v3473 = vpop.f32.mrb[0].mxu0
          %v3474 = vadd.f32 0.0, %v3473
          %v3475 = vpop.f32.mrb[0].mxu0
          %3476 = vmatprep.mubr.f32.mxu0 0.0
          %3477 = vmatmul.mubr.f32.gmra.mrb[0].mxu0 %v3384
          %v3478 = vpop.f32.mrb[0].mxu0
          %v3479 = vadd.f32 0.0, %v3478
          %v3480 = vpop.f32.mrb[0].mxu0
          %3481 = vmatprep.mubr.f32.mxu0 0.0
          %3482 = vmatmul.mubr.f32.gmra.mrb[0].mxu0 %v3387
          %v3483 = vpop.f32.mrb[0].mxu0
          %v3484 = vadd.f32 0.0, %v3483
          %v3485 = vpop.f32.mrb[0].mxu0
          %3486 = vmatprep.mubr.f32.mxu0 0.0
          %3487 = vmatmul.mubr.f32.gmra.mrb[0].mxu0 %v3390
          %v3488 = vpop.f32.mrb[0].mxu0
          %v3489 = vadd.f32 0.0, %v3488
          %v3490 = vpop.f32.mrb[0].mxu0
          %3491 = vmatprep.mubr.f32.mxu0 0.0
          %3492 = vmatmul.mubr.f32.gmra.mrb[0].mxu0 %v3393
          %v3493 = vpop.f32.mrb[0].mxu0
          %v3494 = vadd.f32 0.0, %v3493
          %v3495 = vpop.f32.mrb[0].mxu0
          %3496 = vmatprep.mubr.f32.mxu0 0.0
          %3497 = vmatmul.mubr.f32.gmra.mrb[0].mxu0 %v3396
          %v3498 = vpop.f32.mrb[0].mxu0
          %v3499 = vadd.f32 0.0, %v3498
          %v3500 = vpop.f32.mrb[0].mxu0
          %3501 = vmatprep.mubr.f32.mxu0 0.0
          %3502 = vmatmul.mubr.f32.gmra.mrb[0].mxu0 %v3399
          %v3503 = vpop.f32.mrb[0].mxu0
          %v3504 = vadd.f32 0.0, %v3503
          %v3505 = vpop.f32.mrb[0].mxu0
          %3506 = vmatprep.mubr.f32.mxu0 0.0
          %3507 = vmatmul.mubr.f32.gmra.mrb[0].mxu0 %v3402
          %v3508 = vpop.f32.mrb[0].mxu0
          %v3509 = vadd.f32 0.0, %v3508
          %v3510 = vpop.f32.mrb[0].mxu0
          %3511 = vdwg.mxu0
          %v3512 = vadd.f32 %v3360, %v3474
          %v3513 = vadd.f32 %v3361, %v3479
          %v3514 = vadd.f32 %v3362, %v3484
          %v3515 = vadd.f32 %v3363, %v3489
          %v3516 = vadd.f32 %v3364, %v3494
          %v3517 = vadd.f32 %v3365, %v3499
          %v3518 = vadd.f32 %v3366, %v3504
          %v3519 = vadd.f32 %v3367, %v3509
          %s3520 = sadd.s32 %s191, 130
          %s3521 = scalar_lea.vmem %s178, %s3520
          %v3522 = vld [vmem:[%s3521] sm:$0xff]
          %v3523 = vld [vmem:[%s3521 + $0x8] sm:$0xff]
          %v3524 = vld [vmem:[%s3521 + $0x10] sm:$0xff]
          %v3525 = vld [vmem:[%s3521 + $0x18] sm:$0xff]
          %v3526 = vld [vmem:[%s3521 + $0x20] sm:$0xff]
          %v3527 = vld [vmem:[%s3521 + $0x28] sm:$0xff]
          %v3528 = vld [vmem:[%s3521 + $0x30] sm:$0xff]
          %v3529 = vld [vmem:[%s3521 + $0x38] sm:$0xf]
          %s3530 = scalar_lea.vmem %s1, 88
          %v3531 = vld [vmem:[%s3530] sm:$0x7]
          %v3533 = vsel %vm214, %v3522, 0
          %v3536 = vsel %vm214, %v3523, 0
          %v3539 = vsel %vm214, %v3524, 0
          %v3542 = vsel %vm214, %v3525, 0
          %v3545 = vsel %vm214, %v3526, 0
          %v3548 = vsel %vm214, %v3527, 0
          %v3551 = vsel %vm214, %v3528, 0
          %v3554 = vsel %vm214, %v3529, 0
          %v3557 = vsel %vm239, %v3531, 0
          %3559 = vmatprep.subr.mxu0 0.0
          %3560 = vmatpush1.msra.mxu0 %v3557
          %3561 = vmatprep.subr.mxu0 0.0
          %3562 = vmatpush1.msra.mxu0 0.0
          %3563 = vmatprep.subr.mxu0 0.0
          %3564 = vmatpush1.msra.mxu0 0.0
          %3565 = vmatprep.subr.mxu0 0.0
          %3566 = vmatpush1.msra.mxu0 0.0
          %3567 = vmatprep.subr.mxu0 0.0
          %3568 = vmatpush1.msra.mxu0 0.0
          %3569 = vmatprep.subr.mxu0 0.0
          %3570 = vmatpush1.msra.mxu0 0.0
          %3571 = vmatprep.subr.mxu0 0.0
          %3572 = vmatpush1.msra.mxu0 0.0
          %3573 = vmatprep.subr.mxu0 0.0
          %3574 = vmatpush1.msra.mxu0 0.0
          %3575 = vmatprep.subr.mxu0 0.0
          %3576 = vmatpush1.msra.mxu0 0.0
          %3577 = vmatprep.subr.mxu0 0.0
          %3578 = vmatpush1.msra.mxu0 0.0
          %3579 = vmatprep.subr.mxu0 0.0
          %3580 = vmatpush1.msra.mxu0 0.0
          %3581 = vmatprep.subr.mxu0 0.0
          %3582 = vmatpush1.msra.mxu0 0.0
          %3583 = vmatprep.subr.mxu0 0.0
          %3584 = vmatpush1.msra.mxu0 0.0
          %3585 = vmatprep.subr.mxu0 0.0
          %3586 = vmatpush1.msra.mxu0 0.0
          %3587 = vmatprep.subr.mxu0 0.0
          %3588 = vmatpush1.msra.mxu0 0.0
          %3589 = vmatprep.subr.mxu0 0.0
          %3590 = vmatpush1.msra.mxu0 0.0
          %3591 = vmatprep.subr.mxu0 0.0
          %3592 = vmatpush1.msra.mxu0 0.0
          %3593 = vmatprep.subr.mxu0 0.0
          %3594 = vmatpush1.msra.mxu0 0.0
          %3595 = vmatprep.subr.mxu0 0.0
          %3596 = vmatpush1.msra.mxu0 0.0
          %3597 = vmatprep.subr.mxu0 0.0
          %3598 = vmatpush1.msra.mxu0 0.0
          %3599 = vmatprep.subr.mxu0 0.0
          %3600 = vmatpush1.msra.mxu0 0.0
          %3601 = vmatprep.subr.mxu0 0.0
          %3602 = vmatpush1.msra.mxu0 0.0
          %3603 = vmatprep.subr.mxu0 0.0
          %3604 = vmatpush1.msra.mxu0 0.0
          %3605 = vmatprep.subr.mxu0 0.0
          %3606 = vmatpush1.msra.mxu0 0.0
          %3607 = vmatprep.subr.mxu0 0.0
          %3608 = vmatpush1.msra.mxu0 0.0
          %3609 = vmatprep.subr.mxu0 0.0
          %3610 = vmatpush1.msra.mxu0 0.0
          %3611 = vmatprep.subr.mxu0 0.0
          %3612 = vmatpush1.msra.mxu0 0.0
          %3613 = vmatprep.subr.mxu0 0.0
          %3614 = vmatpush1.msra.mxu0 0.0
          %3615 = vmatprep.subr.mxu0 0.0
          %3616 = vmatpush1.msra.mxu0 0.0
          %3617 = vmatprep.subr.mxu0 0.0
          %3618 = vmatpush1.msra.mxu0 0.0
          %3619 = vmatprep.subr.mxu0 0.0
          %3620 = vmatpush1.msra.mxu0 0.0
          %3621 = vmatprep.subr.mxu0 0.0
          %3622 = vmatpush1.msra.mxu0 0.0
          %3623 = vmatprep.mubr.f32.mxu0 0.0
          %3624 = vmatmul.mubr.f32.gmra.mrb[0].mxu0 %v3533
          %v3625 = vpop.f32.mrb[0].mxu0
          %v3626 = vadd.f32 0.0, %v3625
          %v3627 = vpop.f32.mrb[0].mxu0
          %3628 = vmatprep.mubr.f32.mxu0 0.0
          %3629 = vmatmul.mubr.f32.gmra.mrb[0].mxu0 %v3536
          %v3630 = vpop.f32.mrb[0].mxu0
          %v3631 = vadd.f32 0.0, %v3630
          %v3632 = vpop.f32.mrb[0].mxu0
          %3633 = vmatprep.mubr.f32.mxu0 0.0
          %3634 = vmatmul.mubr.f32.gmra.mrb[0].mxu0 %v3539
          %v3635 = vpop.f32.mrb[0].mxu0
          %v3636 = vadd.f32 0.0, %v3635
          %v3637 = vpop.f32.mrb[0].mxu0
          %3638 = vmatprep.mubr.f32.mxu0 0.0
          %3639 = vmatmul.mubr.f32.gmra.mrb[0].mxu0 %v3542
          %v3640 = vpop.f32.mrb[0].mxu0
          %v3641 = vadd.f32 0.0, %v3640
          %v3642 = vpop.f32.mrb[0].mxu0
          %3643 = vmatprep.mubr.f32.mxu0 0.0
          %3644 = vmatmul.mubr.f32.gmra.mrb[0].mxu0 %v3545
          %v3645 = vpop.f32.mrb[0].mxu0
          %v3646 = vadd.f32 0.0, %v3645
          %v3647 = vpop.f32.mrb[0].mxu0
          %3648 = vmatprep.mubr.f32.mxu0 0.0
          %3649 = vmatmul.mubr.f32.gmra.mrb[0].mxu0 %v3548
          %v3650 = vpop.f32.mrb[0].mxu0
          %v3651 = vadd.f32 0.0, %v3650
          %v3652 = vpop.f32.mrb[0].mxu0
          %3653 = vmatprep.mubr.f32.mxu0 0.0
          %3654 = vmatmul.mubr.f32.gmra.mrb[0].mxu0 %v3551
          %v3655 = vpop.f32.mrb[0].mxu0
          %v3656 = vadd.f32 0.0, %v3655
          %v3657 = vpop.f32.mrb[0].mxu0
          %3658 = vmatprep.mubr.f32.mxu0 0.0
          %3659 = vmatmul.mubr.f32.gmra.mrb[0].mxu0 %v3554
          %v3660 = vpop.f32.mrb[0].mxu0
          %v3661 = vadd.f32 0.0, %v3660
          %v3662 = vpop.f32.mrb[0].mxu0
          %3663 = vdwg.mxu0
          %v3664 = vadd.f32 %v3512, %v3626
          %v3665 = vadd.f32 %v3513, %v3631
          %v3666 = vadd.f32 %v3514, %v3636
          %v3667 = vadd.f32 %v3515, %v3641
          %v3668 = vadd.f32 %v3516, %v3646
          %v3669 = vadd.f32 %v3517, %v3651
          %v3670 = vadd.f32 %v3518, %v3656
          %v3671 = vadd.f32 %v3519, %v3661
          %s3672 = sadd.s32 %s191, 131
          %s3673 = scalar_lea.vmem %s178, %s3672
          %v3674 = vld [vmem:[%s3673] sm:$0xff]
          %v3675 = vld [vmem:[%s3673 + $0x8] sm:$0xff]
          %v3676 = vld [vmem:[%s3673 + $0x10] sm:$0xff]
          %v3677 = vld [vmem:[%s3673 + $0x18] sm:$0xff]
          %v3678 = vld [vmem:[%s3673 + $0x20] sm:$0xff]
          %v3679 = vld [vmem:[%s3673 + $0x28] sm:$0xff]
          %v3680 = vld [vmem:[%s3673 + $0x30] sm:$0xff]
          %v3681 = vld [vmem:[%s3673 + $0x38] sm:$0xf]
          %s3682 = scalar_lea.vmem %s1, 92
          %v3683 = vld [vmem:[%s3682] sm:$0x7]
          %v3685 = vsel %vm214, %v3674, 0
          %v3688 = vsel %vm214, %v3675, 0
          %v3691 = vsel %vm214, %v3676, 0
          %v3694 = vsel %vm214, %v3677, 0
          %v3697 = vsel %vm214, %v3678, 0
          %v3700 = vsel %vm214, %v3679, 0
          %v3703 = vsel %vm214, %v3680, 0
          %v3706 = vsel %vm214, %v3681, 0
          %v3709 = vsel %vm239, %v3683, 0
          %3711 = vmatprep.subr.mxu0 0.0
          %3712 = vmatpush1.msra.mxu0 %v3709
          %3713 = vmatprep.subr.mxu0 0.0
          %3714 = vmatpush1.msra.mxu0 0.0
          %3715 = vmatprep.subr.mxu0 0.0
          %3716 = vmatpush1.msra.mxu0 0.0
          %3717 = vmatprep.subr.mxu0 0.0
          %3718 = vmatpush1.msra.mxu0 0.0
          %3719 = vmatprep.subr.mxu0 0.0
          %3720 = vmatpush1.msra.mxu0 0.0
          %3721 = vmatprep.subr.mxu0 0.0
          %3722 = vmatpush1.msra.mxu0 0.0
          %3723 = vmatprep.subr.mxu0 0.0
          %3724 = vmatpush1.msra.mxu0 0.0
          %3725 = vmatprep.subr.mxu0 0.0
          %3726 = vmatpush1.msra.mxu0 0.0
          %3727 = vmatprep.subr.mxu0 0.0
          %3728 = vmatpush1.msra.mxu0 0.0
          %3729 = vmatprep.subr.mxu0 0.0
          %3730 = vmatpush1.msra.mxu0 0.0
          %3731 = vmatprep.subr.mxu0 0.0
          %3732 = vmatpush1.msra.mxu0 0.0
          %3733 = vmatprep.subr.mxu0 0.0
          %3734 = vmatpush1.msra.mxu0 0.0
          %3735 = vmatprep.subr.mxu0 0.0
          %3736 = vmatpush1.msra.mxu0 0.0
          %3737 = vmatprep.subr.mxu0 0.0
          %3738 = vmatpush1.msra.mxu0 0.0
          %3739 = vmatprep.subr.mxu0 0.0
          %3740 = vmatpush1.msra.mxu0 0.0
          %3741 = vmatprep.subr.mxu0 0.0
          %3742 = vmatpush1.msra.mxu0 0.0
          %3743 = vmatprep.subr.mxu0 0.0
          %3744 = vmatpush1.msra.mxu0 0.0
          %3745 = vmatprep.subr.mxu0 0.0
          %3746 = vmatpush1.msra.mxu0 0.0
          %3747 = vmatprep.subr.mxu0 0.0
          %3748 = vmatpush1.msra.mxu0 0.0
          %3749 = vmatprep.subr.mxu0 0.0
          %3750 = vmatpush1.msra.mxu0 0.0
          %3751 = vmatprep.subr.mxu0 0.0
          %3752 = vmatpush1.msra.mxu0 0.0
          %3753 = vmatprep.subr.mxu0 0.0
          %3754 = vmatpush1.msra.mxu0 0.0
          %3755 = vmatprep.subr.mxu0 0.0
          %3756 = vmatpush1.msra.mxu0 0.0
          %3757 = vmatprep.subr.mxu0 0.0
          %3758 = vmatpush1.msra.mxu0 0.0
          %3759 = vmatprep.subr.mxu0 0.0
          %3760 = vmatpush1.msra.mxu0 0.0
          %3761 = vmatprep.subr.mxu0 0.0
          %3762 = vmatpush1.msra.mxu0 0.0
          %3763 = vmatprep.subr.mxu0 0.0
          %3764 = vmatpush1.msra.mxu0 0.0
          %3765 = vmatprep.subr.mxu0 0.0
          %3766 = vmatpush1.msra.mxu0 0.0
          %3767 = vmatprep.subr.mxu0 0.0
          %3768 = vmatpush1.msra.mxu0 0.0
          %3769 = vmatprep.subr.mxu0 0.0
          %3770 = vmatpush1.msra.mxu0 0.0
          %3771 = vmatprep.subr.mxu0 0.0
          %3772 = vmatpush1.msra.mxu0 0.0
          %3773 = vmatprep.subr.mxu0 0.0
          %3774 = vmatpush1.msra.mxu0 0.0
          %3775 = vmatprep.mubr.f32.mxu0 0.0
          %3776 = vmatmul.mubr.f32.gmra.mrb[0].mxu0 %v3685
          %v3777 = vpop.f32.mrb[0].mxu0
          %v3778 = vadd.f32 0.0, %v3777
          %v3779 = vpop.f32.mrb[0].mxu0
          %3780 = vmatprep.mubr.f32.mxu0 0.0
          %3781 = vmatmul.mubr.f32.gmra.mrb[0].mxu0 %v3688
          %v3782 = vpop.f32.mrb[0].mxu0
          %v3783 = vadd.f32 0.0, %v3782
          %v3784 = vpop.f32.mrb[0].mxu0
          %3785 = vmatprep.mubr.f32.mxu0 0.0
          %3786 = vmatmul.mubr.f32.gmra.mrb[0].mxu0 %v3691
          %v3787 = vpop.f32.mrb[0].mxu0
          %v3788 = vadd.f32 0.0, %v3787
          %v3789 = vpop.f32.mrb[0].mxu0
          %3790 = vmatprep.mubr.f32.mxu0 0.0
          %3791 = vmatmul.mubr.f32.gmra.mrb[0].mxu0 %v3694
          %v3792 = vpop.f32.mrb[0].mxu0
          %v3793 = vadd.f32 0.0, %v3792
          %v3794 = vpop.f32.mrb[0].mxu0
          %3795 = vmatprep.mubr.f32.mxu0 0.0
          %3796 = vmatmul.mubr.f32.gmra.mrb[0].mxu0 %v3697
          %v3797 = vpop.f32.mrb[0].mxu0
          %v3798 = vadd.f32 0.0, %v3797
          %v3799 = vpop.f32.mrb[0].mxu0
          %3800 = vmatprep.mubr.f32.mxu0 0.0
          %3801 = vmatmul.mubr.f32.gmra.mrb[0].mxu0 %v3700
          %v3802 = vpop.f32.mrb[0].mxu0
          %v3803 = vadd.f32 0.0, %v3802
          %v3804 = vpop.f32.mrb[0].mxu0
          %3805 = vmatprep.mubr.f32.mxu0 0.0
          %3806 = vmatmul.mubr.f32.gmra.mrb[0].mxu0 %v3703
          %v3807 = vpop.f32.mrb[0].mxu0
          %v3808 = vadd.f32 0.0, %v3807
          %v3809 = vpop.f32.mrb[0].mxu0
          %3810 = vmatprep.mubr.f32.mxu0 0.0
          %3811 = vmatmul.mubr.f32.gmra.mrb[0].mxu0 %v3706
          %v3812 = vpop.f32.mrb[0].mxu0
          %v3813 = vadd.f32 0.0, %v3812
          %v3814 = vpop.f32.mrb[0].mxu0
          %3815 = vdwg.mxu0
          %v3816 = vadd.f32 %v3664, %v3778
          %v3817 = vadd.f32 %v3665, %v3783
          %v3818 = vadd.f32 %v3666, %v3788
          %v3819 = vadd.f32 %v3667, %v3793
          %v3820 = vadd.f32 %v3668, %v3798
          %v3821 = vadd.f32 %v3669, %v3803
          %v3822 = vadd.f32 %v3670, %v3808
          %v3823 = vadd.f32 %v3671, %v3813
          %s3824 = sadd.s32 %s191, 132
          %s3825 = scalar_lea.vmem %s178, %s3824
          %v3826 = vld [vmem:[%s3825] sm:$0xff]
          %v3827 = vld [vmem:[%s3825 + $0x8] sm:$0xff]
          %v3828 = vld [vmem:[%s3825 + $0x10] sm:$0xff]
          %v3829 = vld [vmem:[%s3825 + $0x18] sm:$0xff]
          %v3830 = vld [vmem:[%s3825 + $0x20] sm:$0xff]
          %v3831 = vld [vmem:[%s3825 + $0x28] sm:$0xff]
          %v3832 = vld [vmem:[%s3825 + $0x30] sm:$0xff]
          %v3833 = vld [vmem:[%s3825 + $0x38] sm:$0xf]
          %s3834 = scalar_lea.vmem %s1, 96
          %v3835 = vld [vmem:[%s3834] sm:$0x7]
          %v3837 = vsel %vm214, %v3826, 0
          %v3840 = vsel %vm214, %v3827, 0
          %v3843 = vsel %vm214, %v3828, 0
          %v3846 = vsel %vm214, %v3829, 0
          %v3849 = vsel %vm214, %v3830, 0
          %v3852 = vsel %vm214, %v3831, 0
          %v3855 = vsel %vm214, %v3832, 0
          %v3858 = vsel %vm214, %v3833, 0
          %v3861 = vsel %vm239, %v3835, 0
          %3863 = vmatprep.subr.mxu0 0.0
          %3864 = vmatpush1.msra.mxu0 %v3861
          %3865 = vmatprep.subr.mxu0 0.0
          %3866 = vmatpush1.msra.mxu0 0.0
          %3867 = vmatprep.subr.mxu0 0.0
          %3868 = vmatpush1.msra.mxu0 0.0
          %3869 = vmatprep.subr.mxu0 0.0
          %3870 = vmatpush1.msra.mxu0 0.0
          %3871 = vmatprep.subr.mxu0 0.0
          %3872 = vmatpush1.msra.mxu0 0.0
          %3873 = vmatprep.subr.mxu0 0.0
          %3874 = vmatpush1.msra.mxu0 0.0
          %3875 = vmatprep.subr.mxu0 0.0
          %3876 = vmatpush1.msra.mxu0 0.0
          %3877 = vmatprep.subr.mxu0 0.0
          %3878 = vmatpush1.msra.mxu0 0.0
          %3879 = vmatprep.subr.mxu0 0.0
          %3880 = vmatpush1.msra.mxu0 0.0
          %3881 = vmatprep.subr.mxu0 0.0
          %3882 = vmatpush1.msra.mxu0 0.0
          %3883 = vmatprep.subr.mxu0 0.0
          %3884 = vmatpush1.msra.mxu0 0.0
          %3885 = vmatprep.subr.mxu0 0.0
          %3886 = vmatpush1.msra.mxu0 0.0
          %3887 = vmatprep.subr.mxu0 0.0
          %3888 = vmatpush1.msra.mxu0 0.0
          %3889 = vmatprep.subr.mxu0 0.0
          %3890 = vmatpush1.msra.mxu0 0.0
          %3891 = vmatprep.subr.mxu0 0.0
          %3892 = vmatpush1.msra.mxu0 0.0
          %3893 = vmatprep.subr.mxu0 0.0
          %3894 = vmatpush1.msra.mxu0 0.0
          %3895 = vmatprep.subr.mxu0 0.0
          %3896 = vmatpush1.msra.mxu0 0.0
          %3897 = vmatprep.subr.mxu0 0.0
          %3898 = vmatpush1.msra.mxu0 0.0
          %3899 = vmatprep.subr.mxu0 0.0
          %3900 = vmatpush1.msra.mxu0 0.0
          %3901 = vmatprep.subr.mxu0 0.0
          %3902 = vmatpush1.msra.mxu0 0.0
          %3903 = vmatprep.subr.mxu0 0.0
          %3904 = vmatpush1.msra.mxu0 0.0
          %3905 = vmatprep.subr.mxu0 0.0
          %3906 = vmatpush1.msra.mxu0 0.0
          %3907 = vmatprep.subr.mxu0 0.0
          %3908 = vmatpush1.msra.mxu0 0.0
          %3909 = vmatprep.subr.mxu0 0.0
          %3910 = vmatpush1.msra.mxu0 0.0
          %3911 = vmatprep.subr.mxu0 0.0
          %3912 = vmatpush1.msra.mxu0 0.0
          %3913 = vmatprep.subr.mxu0 0.0
          %3914 = vmatpush1.msra.mxu0 0.0
          %3915 = vmatprep.subr.mxu0 0.0
          %3916 = vmatpush1.msra.mxu0 0.0
          %3917 = vmatprep.subr.mxu0 0.0
          %3918 = vmatpush1.msra.mxu0 0.0
          %3919 = vmatprep.subr.mxu0 0.0
          %3920 = vmatpush1.msra.mxu0 0.0
          %3921 = vmatprep.subr.mxu0 0.0
          %3922 = vmatpush1.msra.mxu0 0.0
          %3923 = vmatprep.subr.mxu0 0.0
          %3924 = vmatpush1.msra.mxu0 0.0
          %3925 = vmatprep.subr.mxu0 0.0
          %3926 = vmatpush1.msra.mxu0 0.0
          %3927 = vmatprep.mubr.f32.mxu0 0.0
          %3928 = vmatmul.mubr.f32.gmra.mrb[0].mxu0 %v3837
          %v3929 = vpop.f32.mrb[0].mxu0
          %v3930 = vadd.f32 0.0, %v3929
          %v3931 = vpop.f32.mrb[0].mxu0
          %3932 = vmatprep.mubr.f32.mxu0 0.0
          %3933 = vmatmul.mubr.f32.gmra.mrb[0].mxu0 %v3840
          %v3934 = vpop.f32.mrb[0].mxu0
          %v3935 = vadd.f32 0.0, %v3934
          %v3936 = vpop.f32.mrb[0].mxu0
          %3937 = vmatprep.mubr.f32.mxu0 0.0
          %3938 = vmatmul.mubr.f32.gmra.mrb[0].mxu0 %v3843
          %v3939 = vpop.f32.mrb[0].mxu0
          %v3940 = vadd.f32 0.0, %v3939
          %v3941 = vpop.f32.mrb[0].mxu0
          %3942 = vmatprep.mubr.f32.mxu0 0.0
          %3943 = vmatmul.mubr.f32.gmra.mrb[0].mxu0 %v3846
          %v3944 = vpop.f32.mrb[0].mxu0
          %v3945 = vadd.f32 0.0, %v3944
          %v3946 = vpop.f32.mrb[0].mxu0
          %3947 = vmatprep.mubr.f32.mxu0 0.0
          %3948 = vmatmul.mubr.f32.gmra.mrb[0].mxu0 %v3849
          %v3949 = vpop.f32.mrb[0].mxu0
          %v3950 = vadd.f32 0.0, %v3949
          %v3951 = vpop.f32.mrb[0].mxu0
          %3952 = vmatprep.mubr.f32.mxu0 0.0
          %3953 = vmatmul.mubr.f32.gmra.mrb[0].mxu0 %v3852
          %v3954 = vpop.f32.mrb[0].mxu0
          %v3955 = vadd.f32 0.0, %v3954
          %v3956 = vpop.f32.mrb[0].mxu0
          %3957 = vmatprep.mubr.f32.mxu0 0.0
          %3958 = vmatmul.mubr.f32.gmra.mrb[0].mxu0 %v3855
          %v3959 = vpop.f32.mrb[0].mxu0
          %v3960 = vadd.f32 0.0, %v3959
          %v3961 = vpop.f32.mrb[0].mxu0
          %3962 = vmatprep.mubr.f32.mxu0 0.0
          %3963 = vmatmul.mubr.f32.gmra.mrb[0].mxu0 %v3858
          %v3964 = vpop.f32.mrb[0].mxu0
          %v3965 = vadd.f32 0.0, %v3964
          %v3966 = vpop.f32.mrb[0].mxu0
          %3967 = vdwg.mxu0
          %v3968 = vadd.f32 %v3816, %v3930
          %v3969 = vadd.f32 %v3817, %v3935
          %v3970 = vadd.f32 %v3818, %v3940
          %v3971 = vadd.f32 %v3819, %v3945
          %v3972 = vadd.f32 %v3820, %v3950
          %v3973 = vadd.f32 %v3821, %v3955
          %v3974 = vadd.f32 %v3822, %v3960
          %v3975 = vadd.f32 %v3823, %v3965
          %3976 = vst [vmem:[#allocation2] sm:$0xff] %v3968
          %3977 = vst [vmem:[#allocation2 + $0x8] sm:$0xff] %v3969
          %3978 = vst [vmem:[#allocation2 + $0x10] sm:$0xff] %v3970
          %3979 = vst [vmem:[#allocation2 + $0x18] sm:$0xff] %v3971
          %3980 = vst [vmem:[#allocation2 + $0x20] sm:$0xff] %v3972
          %3981 = vst [vmem:[#allocation2 + $0x28] sm:$0xff] %v3973
          %3982 = vst [vmem:[#allocation2 + $0x30] sm:$0xff] %v3974
          %3983 = vst [vmem:[#allocation2 + $0x38] sm:$0xf] %v3975
          %v3984 = vld [vmem:[#allocation2] ss:$2 sm:$0xff]
          %s3985 = scalar_lea.vmem [#allocation2], 16
          %v3986 = vld [vmem:[%s3985] ss:$2 sm:$0x3f]
          %s3987 = scalar_lea.vmem [#allocation2], 1
          %v3988 = vld [vmem:[%s3987] ss:$2 sm:$0xff]
          %s3989 = scalar_lea.vmem [#allocation2], 17
          %v3990 = vld [vmem:[%s3989] ss:$2 sm:$0x3f]
          %v3991 = vmax.f32 %v3984, %v3988
          %v3992 = vmax.f32 %v3986, %v3990
          %s3993 = scalar_lea.vmem [#allocation2], 32
          %v3994 = vld [vmem:[%s3993] ss:$2 sm:$0xff]
          %s3995 = scalar_lea.vmem [#allocation2], 48
          %v3996 = vld [vmem:[%s3995] ss:$2 sm:$0x3f]
          %s3997 = scalar_lea.vmem [#allocation2], 33
          %v3998 = vld [vmem:[%s3997] ss:$2 sm:$0xff]
          %s3999 = scalar_lea.vmem [#allocation2], 49
          %v4000 = vld [vmem:[%s3999] ss:$2 sm:$0x3f]
          %v4001 = vmax.f32 %v3994, %v3998
          %v4002 = vmax.f32 %v3996, %v4000
          %v4003 = vmax.f32 %v3991, %v4001
          %v4004 = vmax.f32 %v3992, %v4002
          %v4006 = vlaneseq
          %v4007 = vshrl.u32 %v4006, 7
          %v4008 = vsub.s32 0, %v4007
          %v4009 = vrot.slane %v184, %v4008
          %v4011 = vadd.f32 %v4003, %v4009
          %v4012 = vadd.f32 %v4004, %v4009
          %v4013 = vtanh.pop %v4011
          %v4014 = vtanh.pop %v4012
          %s4015 = smul.u32 %s186, 16
          %s4016 = scalar_lea.vmem %s183, %s4015
          %4017 = vst [vmem:[%s4016] sm:$0xff] %v4013
          %4018 = vst [vmem:[%s4016 + $0x8] sm:$0x3f] %v4014
        $region41: #{cnn_net3_forward.3} parent=31 // loop_footer
          %s190 = sadd.s32 1, %s186
        $region42: #{cnn_net3_forward.3} parent=31 // loop_footer_branch
          %185 = sbr.rel target = $region38
        $region43: #{cnn_net3_forward.3} parent=31 // loop_exit
          _
        %p4019 = scmp.lt.s32.totalorder %s15, 1
        %s4020 = scalar_select %p4019, %s15, 1
        %s4021 = smul.addr %s4020, 28
        %s4022 = smul.addr %s4021, 8
        %s4023 = scalar_lea.vmem %s3, %s4022
        // Predicated region
        $region44: #{cnn_net3_forward.3} parent=31 // pred_check
          %p4024 = pneg %p101
        $region45: #{cnn_net3_forward.3} parent=31 // pred_check_branch
          %4026 = sbr.rel (%p4024) target = $region47
        $region46: #{cnn_net3_forward.3} parent=31 // pred_region
          _
        $region47: #{cnn_net3_forward.3} parent=31 // pred_fallthru
          _
      $region32: #{cnn_net3_forward.3} parent=5 // pred_fallthru
        _
      %p4027 = scmp.le.s32.totalorder 2, %s10
      // Predicated region
      $region48: #{cnn_net3_forward.3} parent=5 // pred_check
        %p4028 = pneg %p4027
      $region49: #{cnn_net3_forward.3} parent=5 // pred_check_branch
        %4030 = sbr.rel (%p4028) target = $region51
      $region50: #{cnn_net3_forward.3} parent=5 // pred_region
        %s4031 = ssub.s32 %s10, 2
        // Predicated region
        $region52: #{cnn_net3_forward.3} parent=50 // pred_check
          %p4032 = pneg %p107
        $region53: #{cnn_net3_forward.3} parent=50 // pred_check_branch
          %4034 = sbr.rel (%p4032) target = $region55
        $region54: #{cnn_net3_forward.3} parent=50 // pred_region
          %p4035 = scmp.lt.s32.totalorder %s16, 1
          %s4036 = scalar_select %p4035, %s16, 1
          %s4037 = smul.addr %s4036, 28
          %s4038 = smul.addr %s4037, 8
          %s4039 = scalar_lea.vmem %s3, %s4038
        $region55: #{cnn_net3_forward.3} parent=50 // pred_fallthru
          _
      $region51: #{cnn_net3_forward.3} parent=5 // pred_fallthru
        _
    $region6: #{cnn_net3_forward.3} parent=1 // loop_footer
      %s14 = sadd.s32 1, %s10
    $region7: #{cnn_net3_forward.3} parent=1 // loop_footer_branch
      %9 = sbr.rel target = $region3
    $region8: #{cnn_net3_forward.3} parent=1 // loop_exit
      _
    %4040 = vsyncpa [#allocation4], 1
    %s4041 = scalar_lea.sflag [#allocation4], 1
    %4042 = vsyncpa %s4041, 1

// kernel: cnn_net3_forward.5
$region0: #{cnn_net3_forward.5}
  #allocation0 [shape = 'u32[]', space=smem, size = 0x4, offset = 0x4, fixed_abs, tag = 'smem constant byte address 0x4 - core index']
  #allocation1 [shape = 'u32[144,128]{1,0:T(1,128)}', space=vmem, size = 0x12000, scoped, tag = 'internal scratch']
  %s0 = inlined_call_operand.vmem [shape: f32[2,4608], index: 0, kind: input, shape index: {}]
  %s1 = inlined_call_operand.vmem [shape: f32[4608,128], index: 1, kind: input, shape index: {}]
  %s2 = inlined_call_operand.vmem [shape: f32[1,128], index: 2, kind: input, shape index: {}]
  %s3 = inlined_call_operand.vmem [shape: f32[128,128], index: 3, kind: input, shape index: {}]
  %s4 = inlined_call_operand.vmem [shape: f32[1,128], index: 4, kind: input, shape index: {}]
  %s5 = inlined_call_operand.vmem [shape: f32[128,128], index: 5, kind: input, shape index: {}]
  %s6 = inlined_call_operand.vmem [shape: f32[1,128], index: 6, kind: input, shape index: {}]
  %s7 = inlined_call_operand.hbm [shape: f32[2,128], index: 7, kind: output, shape index: {}]
  %s8 = sld [smem:[#allocation0]]
  $region38: #{cnn_net3_forward.5} parent=0
    _
  %s10 = ssub.s32 1, %s8
  %s11 = scalar_select 0, %s10, %s8
  $region1: #{cnn_net3_forward.5} parent=0
    #allocation2 [shape = 'u8[1024]{0}', space=vmem, size = 0x400, scoped, tag = 'output window, operand 0, single buffered']
    #allocation3 [shape = 's32[1]{0}', space=sflag, size = 0x4, scoped, tag = 'scoped memory for cnn_net3_forward.5']
    %12 = vsyncpa [#allocation3], 0
    // Predicated region
    $region2: #{cnn_net3_forward.5} parent=1 // pred_check
      _
    $region3: #{cnn_net3_forward.5} parent=1 // pred_check_branch
      %14 = sbr.rel (0) target = $region5
    $region4: #{cnn_net3_forward.5} parent=1 // pred_region
      _
    $region5: #{cnn_net3_forward.5} parent=1 // pred_fallthru
      _
    // Predicated region
    $region6: #{cnn_net3_forward.5} parent=1 // pred_check
      _
    $region7: #{cnn_net3_forward.5} parent=1 // pred_check_branch
      %16 = sbr.rel (0) target = $region9
    $region8: #{cnn_net3_forward.5} parent=1 // pred_region
      _
    $region9: #{cnn_net3_forward.5} parent=1 // pred_fallthru
      _
    // Predicated region
    $region10: #{cnn_net3_forward.5} parent=1 // pred_check
      _
    $region11: #{cnn_net3_forward.5} parent=1 // pred_check_branch
      %18 = sbr.rel (0) target = $region13
    $region12: #{cnn_net3_forward.5} parent=1 // pred_region
      _
    $region13: #{cnn_net3_forward.5} parent=1 // pred_fallthru
      _
    // Predicated region
    $region14: #{cnn_net3_forward.5} parent=1 // pred_check
      _
    $region15: #{cnn_net3_forward.5} parent=1 // pred_check_branch
      %20 = sbr.rel (0) target = $region17
    $region16: #{cnn_net3_forward.5} parent=1 // pred_region
      _
    $region17: #{cnn_net3_forward.5} parent=1 // pred_fallthru
      _
    // Predicated region
    $region18: #{cnn_net3_forward.5} parent=1 // pred_check
      _
    $region19: #{cnn_net3_forward.5} parent=1 // pred_check_branch
      %22 = sbr.rel (0) target = $region21
    $region20: #{cnn_net3_forward.5} parent=1 // pred_region
      _
    $region21: #{cnn_net3_forward.5} parent=1 // pred_fallthru
      _
    // Predicated region
    $region22: #{cnn_net3_forward.5} parent=1 // pred_check
      _
    $region23: #{cnn_net3_forward.5} parent=1 // pred_check_branch
      %24 = sbr.rel (0) target = $region25
    $region24: #{cnn_net3_forward.5} parent=1 // pred_region
      _
    $region25: #{cnn_net3_forward.5} parent=1 // pred_fallthru
      _
    // Predicated region
    $region26: #{cnn_net3_forward.5} parent=1 // pred_check
      _
    $region27: #{cnn_net3_forward.5} parent=1 // pred_check_branch
      %26 = sbr.rel (0) target = $region29
    $region28: #{cnn_net3_forward.5} parent=1 // pred_region
      _
    $region29: #{cnn_net3_forward.5} parent=1 // pred_fallthru
      _
    %v27 = vld [vmem:[%s0] sm:$0xff]
    %v28 = vld [vmem:[%s0 + $0x8] sm:$0xff]
    %v29 = vld [vmem:[%s0 + $0x10] sm:$0xff]
    %v30 = vld [vmem:[%s0 + $0x18] sm:$0xff]
    %v31 = vld [vmem:[%s0 + $0x20] sm:$0xff]
    %v32 = vld [vmem:[%s0 + $0x28] sm:$0xff]
    %v33 = vld [vmem:[%s0 + $0x30] sm:$0xff]
    %v34 = vld [vmem:[%s0 + $0x38] sm:$0xff]
    %v35 = vld [vmem:[%s0 + $0x40] sm:$0xff]
    %v36 = vld [vmem:[%s1] sm:$0xff]
    %v37 = vld [vmem:[%s1 + $0x8] sm:$0xff]
    %v38 = vld [vmem:[%s1 + $0x10] sm:$0xff]
    %v39 = vld [vmem:[%s1 + $0x18] sm:$0xff]
    %v40 = vld [vmem:[%s1 + $0x20] sm:$0xff]
    %v41 = vld [vmem:[%s1 + $0x28] sm:$0xff]
    %v42 = vld [vmem:[%s1 + $0x30] sm:$0xff]
    %v43 = vld [vmem:[%s1 + $0x38] sm:$0xff]
    %v44 = vld [vmem:[%s1 + $0x40] sm:$0xff]
    %v45 = vld [vmem:[%s1 + $0x48] sm:$0xff]
    %v46 = vld [vmem:[%s1 + $0x50] sm:$0xff]
    %v47 = vld [vmem:[%s1 + $0x58] sm:$0xff]
    %v48 = vld [vmem:[%s1 + $0x60] sm:$0xff]
    %v49 = vld [vmem:[%s1 + $0x68] sm:$0xff]
    %v50 = vld [vmem:[%s1 + $0x70] sm:$0xff]
    %v51 = vld [vmem:[%s1 + $0x78] sm:$0xff]
    %v52 = vld [vmem:[%s1 + $0x80] sm:$0xff]
    %v53 = vld [vmem:[%s1 + $0x88] sm:$0xff]
    %v54 = vld [vmem:[%s1 + $0x90] sm:$0xff]
    %v55 = vld [vmem:[%s1 + $0x98] sm:$0xff]
    %v56 = vld [vmem:[%s1 + $0xa0] sm:$0xff]
    %v57 = vld [vmem:[%s1 + $0xa8] sm:$0xff]
    %v58 = vld [vmem:[%s1 + $0xb0] sm:$0xff]
    %v59 = vld [vmem:[%s1 + $0xb8] sm:$0xff]
    %v60 = vld [vmem:[%s1 + $0xc0] sm:$0xff]
    %v61 = vld [vmem:[%s1 + $0xc8] sm:$0xff]
    %v62 = vld [vmem:[%s1 + $0xd0] sm:$0xff]
    %v63 = vld [vmem:[%s1 + $0xd8] sm:$0xff]
    %v64 = vld [vmem:[%s1 + $0xe0] sm:$0xff]
    %v65 = vld [vmem:[%s1 + $0xe8] sm:$0xff]
    %v66 = vld [vmem:[%s1 + $0xf0] sm:$0xff]
    %v67 = vld [vmem:[%s1 + $0xf8] sm:$0xff]
    %v68 = vld [vmem:[%s1 + $0x100] sm:$0xff]
    %v69 = vld [vmem:[%s1 + $0x108] sm:$0xff]
    %v70 = vld [vmem:[%s1 + $0x110] sm:$0xff]
    %v71 = vld [vmem:[%s1 + $0x118] sm:$0xff]
    %v72 = vld [vmem:[%s1 + $0x120] sm:$0xff]
    %v73 = vld [vmem:[%s1 + $0x128] sm:$0xff]
    %v74 = vld [vmem:[%s1 + $0x130] sm:$0xff]
    %v75 = vld [vmem:[%s1 + $0x138] sm:$0xff]
    %v76 = vld [vmem:[%s1 + $0x140] sm:$0xff]
    %v77 = vld [vmem:[%s1 + $0x148] sm:$0xff]
    %v78 = vld [vmem:[%s1 + $0x150] sm:$0xff]
    %v79 = vld [vmem:[%s1 + $0x158] sm:$0xff]
    %v80 = vld [vmem:[%s1 + $0x160] sm:$0xff]
    %v81 = vld [vmem:[%s1 + $0x168] sm:$0xff]
    %v82 = vld [vmem:[%s1 + $0x170] sm:$0xff]
    %v83 = vld [vmem:[%s1 + $0x178] sm:$0xff]
    %v84 = vld [vmem:[%s1 + $0x180] sm:$0xff]
    %v85 = vld [vmem:[%s1 + $0x188] sm:$0xff]
    %v86 = vld [vmem:[%s1 + $0x190] sm:$0xff]
    %v87 = vld [vmem:[%s1 + $0x198] sm:$0xff]
    %v88 = vld [vmem:[%s1 + $0x1a0] sm:$0xff]
    %v89 = vld [vmem:[%s1 + $0x1a8] sm:$0xff]
    %v90 = vld [vmem:[%s1 + $0x1b0] sm:$0xff]
    %v91 = vld [vmem:[%s1 + $0x1b8] sm:$0xff]
    %v92 = vld [vmem:[%s1 + $0x1c0] sm:$0xff]
    %v93 = vld [vmem:[%s1 + $0x1c8] sm:$0xff]
    %v94 = vld [vmem:[%s1 + $0x1d0] sm:$0xff]
    %v95 = vld [vmem:[%s1 + $0x1d8] sm:$0xff]
    %v96 = vld [vmem:[%s1 + $0x1e0] sm:$0xff]
    %v97 = vld [vmem:[%s1 + $0x1e8] sm:$0xff]
    %v98 = vld [vmem:[%s1 + $0x1f0] sm:$0xff]
    %v99 = vld [vmem:[%s1 + $0x1f8] sm:$0xff]
    %v100 = vld [vmem:[%s1 + $0x200] sm:$0xff]
    %v101 = vld [vmem:[%s1 + $0x208] sm:$0xff]
    %v102 = vld [vmem:[%s1 + $0x210] sm:$0xff]
    %v103 = vld [vmem:[%s1 + $0x218] sm:$0xff]
    %v104 = vld [vmem:[%s1 + $0x220] sm:$0xff]
    %v105 = vld [vmem:[%s1 + $0x228] sm:$0xff]
    %v106 = vld [vmem:[%s1 + $0x230] sm:$0xff]
    %v107 = vld [vmem:[%s1 + $0x238] sm:$0xff]
    %v108 = vld [vmem:[%s1 + $0x240] sm:$0xff]
    %v109 = vld [vmem:[%s1 + $0x248] sm:$0xff]
    %v110 = vld [vmem:[%s1 + $0x250] sm:$0xff]
    %v111 = vld [vmem:[%s1 + $0x258] sm:$0xff]
    %v112 = vld [vmem:[%s1 + $0x260] sm:$0xff]
    %v113 = vld [vmem:[%s1 + $0x268] sm:$0xff]
    %v114 = vld [vmem:[%s1 + $0x270] sm:$0xff]
    %v115 = vld [vmem:[%s1 + $0x278] sm:$0xff]
    %v116 = vld [vmem:[%s1 + $0x280] sm:$0xff]
    %v117 = vld [vmem:[%s1 + $0x288] sm:$0xff]
    %v118 = vld [vmem:[%s1 + $0x290] sm:$0xff]
    %v119 = vld [vmem:[%s1 + $0x298] sm:$0xff]
    %v120 = vld [vmem:[%s1 + $0x2a0] sm:$0xff]
    %v121 = vld [vmem:[%s1 + $0x2a8] sm:$0xff]
    %v122 = vld [vmem:[%s1 + $0x2b0] sm:$0xff]
    %v123 = vld [vmem:[%s1 + $0x2b8] sm:$0xff]
    %v124 = vld [vmem:[%s1 + $0x2c0] sm:$0xff]
    %v125 = vld [vmem:[%s1 + $0x2c8] sm:$0xff]
    %v126 = vld [vmem:[%s1 + $0x2d0] sm:$0xff]
    %v127 = vld [vmem:[%s1 + $0x2d8] sm:$0xff]
    %v128 = vld [vmem:[%s1 + $0x2e0] sm:$0xff]
    %v129 = vld [vmem:[%s1 + $0x2e8] sm:$0xff]
    %v130 = vld [vmem:[%s1 + $0x2f0] sm:$0xff]
    %v131 = vld [vmem:[%s1 + $0x2f8] sm:$0xff]
    %v132 = vld [vmem:[%s1 + $0x300] sm:$0xff]
    %v133 = vld [vmem:[%s1 + $0x308] sm:$0xff]
    %v134 = vld [vmem:[%s1 + $0x310] sm:$0xff]
    %v135 = vld [vmem:[%s1 + $0x318] sm:$0xff]
    %v136 = vld [vmem:[%s1 + $0x320] sm:$0xff]
    %v137 = vld [vmem:[%s1 + $0x328] sm:$0xff]
    %v138 = vld [vmem:[%s1 + $0x330] sm:$0xff]
    %v139 = vld [vmem:[%s1 + $0x338] sm:$0xff]
    %v140 = vld [vmem:[%s1 + $0x340] sm:$0xff]
    %v141 = vld [vmem:[%s1 + $0x348] sm:$0xff]
    %v142 = vld [vmem:[%s1 + $0x350] sm:$0xff]
    %v143 = vld [vmem:[%s1 + $0x358] sm:$0xff]
    %v144 = vld [vmem:[%s1 + $0x360] sm:$0xff]
    %v145 = vld [vmem:[%s1 + $0x368] sm:$0xff]
    %v146 = vld [vmem:[%s1 + $0x370] sm:$0xff]
    %v147 = vld [vmem:[%s1 + $0x378] sm:$0xff]
    %v148 = vld [vmem:[%s1 + $0x380] sm:$0xff]
    %v149 = vld [vmem:[%s1 + $0x388] sm:$0xff]
    %v150 = vld [vmem:[%s1 + $0x390] sm:$0xff]
    %v151 = vld [vmem:[%s1 + $0x398] sm:$0xff]
    %v152 = vld [vmem:[%s1 + $0x3a0] sm:$0xff]
    %v153 = vld [vmem:[%s1 + $0x3a8] sm:$0xff]
    %v154 = vld [vmem:[%s1 + $0x3b0] sm:$0xff]
    %v155 = vld [vmem:[%s1 + $0x3b8] sm:$0xff]
    %v156 = vld [vmem:[%s1 + $0x3c0] sm:$0xff]
    %v157 = vld [vmem:[%s1 + $0x3c8] sm:$0xff]
    %v158 = vld [vmem:[%s1 + $0x3d0] sm:$0xff]
    %v159 = vld [vmem:[%s1 + $0x3d8] sm:$0xff]
    %v160 = vld [vmem:[%s1 + $0x3e0] sm:$0xff]
    %v161 = vld [vmem:[%s1 + $0x3e8] sm:$0xff]
    %v162 = vld [vmem:[%s1 + $0x3f0] sm:$0xff]
    %v163 = vld [vmem:[%s1 + $0x3f8] sm:$0xff]
    %v164 = vld [vmem:[%s1 + $0x400] sm:$0xff]
    %v165 = vld [vmem:[%s1 + $0x408] sm:$0xff]
    %v166 = vld [vmem:[%s1 + $0x410] sm:$0xff]
    %v167 = vld [vmem:[%s1 + $0x418] sm:$0xff]
    %v168 = vld [vmem:[%s1 + $0x420] sm:$0xff]
    %v169 = vld [vmem:[%s1 + $0x428] sm:$0xff]
    %v170 = vld [vmem:[%s1 + $0x430] sm:$0xff]
    %v171 = vld [vmem:[%s1 + $0x438] sm:$0xff]
    %v172 = vld [vmem:[%s1 + $0x440] sm:$0xff]
    %v173 = vld [vmem:[%s1 + $0x448] sm:$0xff]
    %v174 = vld [vmem:[%s1 + $0x450] sm:$0xff]
    %v175 = vld [vmem:[%s1 + $0x458] sm:$0xff]
    %v176 = vld [vmem:[%s1 + $0x460] sm:$0xff]
    %v177 = vld [vmem:[%s1 + $0x468] sm:$0xff]
    %v178 = vld [vmem:[%s1 + $0x470] sm:$0xff]
    %v179 = vld [vmem:[%s1 + $0x478] sm:$0xff]
    %v180 = vld [vmem:[%s1 + $0x480] sm:$0xff]
    %v181 = vld [vmem:[%s1 + $0x488] sm:$0xff]
    %v182 = vld [vmem:[%s1 + $0x490] sm:$0xff]
    %v183 = vld [vmem:[%s1 + $0x498] sm:$0xff]
    %v184 = vld [vmem:[%s1 + $0x4a0] sm:$0xff]
    %v185 = vld [vmem:[%s1 + $0x4a8] sm:$0xff]
    %v186 = vld [vmem:[%s1 + $0x4b0] sm:$0xff]
    %v187 = vld [vmem:[%s1 + $0x4b8] sm:$0xff]
    %v188 = vld [vmem:[%s1 + $0x4c0] sm:$0xff]
    %v189 = vld [vmem:[%s1 + $0x4c8] sm:$0xff]
    %v190 = vld [vmem:[%s1 + $0x4d0] sm:$0xff]
    %v191 = vld [vmem:[%s1 + $0x4d8] sm:$0xff]
    %v192 = vld [vmem:[%s1 + $0x4e0] sm:$0xff]
    %v193 = vld [vmem:[%s1 + $0x4e8] sm:$0xff]
    %v194 = vld [vmem:[%s1 + $0x4f0] sm:$0xff]
    %v195 = vld [vmem:[%s1 + $0x4f8] sm:$0xff]
    %v196 = vld [vmem:[%s1 + $0x500] sm:$0xff]
    %v197 = vld [vmem:[%s1 + $0x508] sm:$0xff]
    %v198 = vld [vmem:[%s1 + $0x510] sm:$0xff]
    %v199 = vld [vmem:[%s1 + $0x518] sm:$0xff]
    %v200 = vld [vmem:[%s1 + $0x520] sm:$0xff]
    %v201 = vld [vmem:[%s1 + $0x528] sm:$0xff]
    %v202 = vld [vmem:[%s1 + $0x530] sm:$0xff]
    %v203 = vld [vmem:[%s1 + $0x538] sm:$0xff]
    %v204 = vld [vmem:[%s1 + $0x540] sm:$0xff]
    %v205 = vld [vmem:[%s1 + $0x548] sm:$0xff]
    %v206 = vld [vmem:[%s1 + $0x550] sm:$0xff]
    %v207 = vld [vmem:[%s1 + $0x558] sm:$0xff]
    %v208 = vld [vmem:[%s1 + $0x560] sm:$0xff]
    %v209 = vld [vmem:[%s1 + $0x568] sm:$0xff]
    %v210 = vld [vmem:[%s1 + $0x570] sm:$0xff]
    %v211 = vld [vmem:[%s1 + $0x578] sm:$0xff]
    %v212 = vld [vmem:[%s1 + $0x580] sm:$0xff]
    %v213 = vld [vmem:[%s1 + $0x588] sm:$0xff]
    %v214 = vld [vmem:[%s1 + $0x590] sm:$0xff]
    %v215 = vld [vmem:[%s1 + $0x598] sm:$0xff]
    %v216 = vld [vmem:[%s1 + $0x5a0] sm:$0xff]
    %v217 = vld [vmem:[%s1 + $0x5a8] sm:$0xff]
    %v218 = vld [vmem:[%s1 + $0x5b0] sm:$0xff]
    %v219 = vld [vmem:[%s1 + $0x5b8] sm:$0xff]
    %v220 = vld [vmem:[%s1 + $0x5c0] sm:$0xff]
    %v221 = vld [vmem:[%s1 + $0x5c8] sm:$0xff]
    %v222 = vld [vmem:[%s1 + $0x5d0] sm:$0xff]
    %v223 = vld [vmem:[%s1 + $0x5d8] sm:$0xff]
    %v224 = vld [vmem:[%s1 + $0x5e0] sm:$0xff]
    %v225 = vld [vmem:[%s1 + $0x5e8] sm:$0xff]
    %v226 = vld [vmem:[%s1 + $0x5f0] sm:$0xff]
    %v227 = vld [vmem:[%s1 + $0x5f8] sm:$0xff]
    %v228 = vld [vmem:[%s1 + $0x600] sm:$0xff]
    %v229 = vld [vmem:[%s1 + $0x608] sm:$0xff]
    %v230 = vld [vmem:[%s1 + $0x610] sm:$0xff]
    %v231 = vld [vmem:[%s1 + $0x618] sm:$0xff]
    %v232 = vld [vmem:[%s1 + $0x620] sm:$0xff]
    %v233 = vld [vmem:[%s1 + $0x628] sm:$0xff]
    %v234 = vld [vmem:[%s1 + $0x630] sm:$0xff]
    %v235 = vld [vmem:[%s1 + $0x638] sm:$0xff]
    %v236 = vld [vmem:[%s1 + $0x640] sm:$0xff]
    %v237 = vld [vmem:[%s1 + $0x648] sm:$0xff]
    %v238 = vld [vmem:[%s1 + $0x650] sm:$0xff]
    %v239 = vld [vmem:[%s1 + $0x658] sm:$0xff]
    %v240 = vld [vmem:[%s1 + $0x660] sm:$0xff]
    %v241 = vld [vmem:[%s1 + $0x668] sm:$0xff]
    %v242 = vld [vmem:[%s1 + $0x670] sm:$0xff]
    %v243 = vld [vmem:[%s1 + $0x678] sm:$0xff]
    %v244 = vld [vmem:[%s1 + $0x680] sm:$0xff]
    %v245 = vld [vmem:[%s1 + $0x688] sm:$0xff]
    %v246 = vld [vmem:[%s1 + $0x690] sm:$0xff]
    %v247 = vld [vmem:[%s1 + $0x698] sm:$0xff]
    %v248 = vld [vmem:[%s1 + $0x6a0] sm:$0xff]
    %v249 = vld [vmem:[%s1 + $0x6a8] sm:$0xff]
    %v250 = vld [vmem:[%s1 + $0x6b0] sm:$0xff]
    %v251 = vld [vmem:[%s1 + $0x6b8] sm:$0xff]
    %v252 = vld [vmem:[%s1 + $0x6c0] sm:$0xff]
    %v253 = vld [vmem:[%s1 + $0x6c8] sm:$0xff]
    %v254 = vld [vmem:[%s1 + $0x6d0] sm:$0xff]
    %v255 = vld [vmem:[%s1 + $0x6d8] sm:$0xff]
    %v256 = vld [vmem:[%s1 + $0x6e0] sm:$0xff]
    %v257 = vld [vmem:[%s1 + $0x6e8] sm:$0xff]
    %v258 = vld [vmem:[%s1 + $0x6f0] sm:$0xff]
    %v259 = vld [vmem:[%s1 + $0x6f8] sm:$0xff]
    %v260 = vld [vmem:[%s1 + $0x700] sm:$0xff]
    %v261 = vld [vmem:[%s1 + $0x708] sm:$0xff]
    %v262 = vld [vmem:[%s1 + $0x710] sm:$0xff]
    %v263 = vld [vmem:[%s1 + $0x718] sm:$0xff]
    %v264 = vld [vmem:[%s1 + $0x720] sm:$0xff]
    %v265 = vld [vmem:[%s1 + $0x728] sm:$0xff]
    %v266 = vld [vmem:[%s1 + $0x730] sm:$0xff]
    %v267 = vld [vmem:[%s1 + $0x738] sm:$0xff]
    %v268 = vld [vmem:[%s1 + $0x740] sm:$0xff]
    %v269 = vld [vmem:[%s1 + $0x748] sm:$0xff]
    %v270 = vld [vmem:[%s1 + $0x750] sm:$0xff]
    %v271 = vld [vmem:[%s1 + $0x758] sm:$0xff]
    %v272 = vld [vmem:[%s1 + $0x760] sm:$0xff]
    %v273 = vld [vmem:[%s1 + $0x768] sm:$0xff]
    %v274 = vld [vmem:[%s1 + $0x770] sm:$0xff]
    %v275 = vld [vmem:[%s1 + $0x778] sm:$0xff]
    %v276 = vld [vmem:[%s1 + $0x780] sm:$0xff]
    %v277 = vld [vmem:[%s1 + $0x788] sm:$0xff]
    %v278 = vld [vmem:[%s1 + $0x790] sm:$0xff]
    %v279 = vld [vmem:[%s1 + $0x798] sm:$0xff]
    %v280 = vld [vmem:[%s1 + $0x7a0] sm:$0xff]
    %v281 = vld [vmem:[%s1 + $0x7a8] sm:$0xff]
    %v282 = vld [vmem:[%s1 + $0x7b0] sm:$0xff]
    %v283 = vld [vmem:[%s1 + $0x7b8] sm:$0xff]
    %v284 = vld [vmem:[%s1 + $0x7c0] sm:$0xff]
    %v285 = vld [vmem:[%s1 + $0x7c8] sm:$0xff]
    %v286 = vld [vmem:[%s1 + $0x7d0] sm:$0xff]
    %v287 = vld [vmem:[%s1 + $0x7d8] sm:$0xff]
    %v288 = vld [vmem:[%s1 + $0x7e0] sm:$0xff]
    %v289 = vld [vmem:[%s1 + $0x7e8] sm:$0xff]
    %v290 = vld [vmem:[%s1 + $0x7f0] sm:$0xff]
    %v291 = vld [vmem:[%s1 + $0x7f8] sm:$0xff]
    %v292 = vld [vmem:[%s1 + $0x800] sm:$0xff]
    %v293 = vld [vmem:[%s1 + $0x808] sm:$0xff]
    %v294 = vld [vmem:[%s1 + $0x810] sm:$0xff]
    %v295 = vld [vmem:[%s1 + $0x818] sm:$0xff]
    %v296 = vld [vmem:[%s1 + $0x820] sm:$0xff]
    %v297 = vld [vmem:[%s1 + $0x828] sm:$0xff]
    %v298 = vld [vmem:[%s1 + $0x830] sm:$0xff]
    %v299 = vld [vmem:[%s1 + $0x838] sm:$0xff]
    %v300 = vld [vmem:[%s1 + $0x840] sm:$0xff]
    %v301 = vld [vmem:[%s1 + $0x848] sm:$0xff]
    %v302 = vld [vmem:[%s1 + $0x850] sm:$0xff]
    %v303 = vld [vmem:[%s1 + $0x858] sm:$0xff]
    %v304 = vld [vmem:[%s1 + $0x860] sm:$0xff]
    %v305 = vld [vmem:[%s1 + $0x868] sm:$0xff]
    %v306 = vld [vmem:[%s1 + $0x870] sm:$0xff]
    %v307 = vld [vmem:[%s1 + $0x878] sm:$0xff]
    %v308 = vld [vmem:[%s1 + $0x880] sm:$0xff]
    %v309 = vld [vmem:[%s1 + $0x888] sm:$0xff]
    %v310 = vld [vmem:[%s1 + $0x890] sm:$0xff]
    %v311 = vld [vmem:[%s1 + $0x898] sm:$0xff]
    %v312 = vld [vmem:[%s1 + $0x8a0] sm:$0xff]
    %v313 = vld [vmem:[%s1 + $0x8a8] sm:$0xff]
    %v314 = vld [vmem:[%s1 + $0x8b0] sm:$0xff]
    %v315 = vld [vmem:[%s1 + $0x8b8] sm:$0xff]
    %v316 = vld [vmem:[%s1 + $0x8c0] sm:$0xff]
    %v317 = vld [vmem:[%s1 + $0x8c8] sm:$0xff]
    %v318 = vld [vmem:[%s1 + $0x8d0] sm:$0xff]
    %v319 = vld [vmem:[%s1 + $0x8d8] sm:$0xff]
    %v320 = vld [vmem:[%s1 + $0x8e0] sm:$0xff]
    %v321 = vld [vmem:[%s1 + $0x8e8] sm:$0xff]
    %v322 = vld [vmem:[%s1 + $0x8f0] sm:$0xff]
    %v323 = vld [vmem:[%s1 + $0x8f8] sm:$0xff]
    %v324 = vld [vmem:[%s1 + $0x900] sm:$0xff]
    %v325 = vld [vmem:[%s1 + $0x908] sm:$0xff]
    %v326 = vld [vmem:[%s1 + $0x910] sm:$0xff]
    %v327 = vld [vmem:[%s1 + $0x918] sm:$0xff]
    %v328 = vld [vmem:[%s1 + $0x920] sm:$0xff]
    %v329 = vld [vmem:[%s1 + $0x928] sm:$0xff]
    %v330 = vld [vmem:[%s1 + $0x930] sm:$0xff]
    %v331 = vld [vmem:[%s1 + $0x938] sm:$0xff]
    %v332 = vld [vmem:[%s1 + $0x940] sm:$0xff]
    %v333 = vld [vmem:[%s1 + $0x948] sm:$0xff]
    %v334 = vld [vmem:[%s1 + $0x950] sm:$0xff]
    %v335 = vld [vmem:[%s1 + $0x958] sm:$0xff]
    %v336 = vld [vmem:[%s1 + $0x960] sm:$0xff]
    %v337 = vld [vmem:[%s1 + $0x968] sm:$0xff]
    %v338 = vld [vmem:[%s1 + $0x970] sm:$0xff]
    %v339 = vld [vmem:[%s1 + $0x978] sm:$0xff]
    %v340 = vld [vmem:[%s1 + $0x980] sm:$0xff]
    %v341 = vld [vmem:[%s1 + $0x988] sm:$0xff]
    %v342 = vld [vmem:[%s1 + $0x990] sm:$0xff]
    %v343 = vld [vmem:[%s1 + $0x998] sm:$0xff]
    %v344 = vld [vmem:[%s1 + $0x9a0] sm:$0xff]
    %v345 = vld [vmem:[%s1 + $0x9a8] sm:$0xff]
    %v346 = vld [vmem:[%s1 + $0x9b0] sm:$0xff]
    %v347 = vld [vmem:[%s1 + $0x9b8] sm:$0xff]
    %v348 = vld [vmem:[%s1 + $0x9c0] sm:$0xff]
    %v349 = vld [vmem:[%s1 + $0x9c8] sm:$0xff]
    %v350 = vld [vmem:[%s1 + $0x9d0] sm:$0xff]
    %v351 = vld [vmem:[%s1 + $0x9d8] sm:$0xff]
    %v352 = vld [vmem:[%s1 + $0x9e0] sm:$0xff]
    %v353 = vld [vmem:[%s1 + $0x9e8] sm:$0xff]
    %v354 = vld [vmem:[%s1 + $0x9f0] sm:$0xff]
    %v355 = vld [vmem:[%s1 + $0x9f8] sm:$0xff]
    %v356 = vld [vmem:[%s1 + $0xa00] sm:$0xff]
    %v357 = vld [vmem:[%s1 + $0xa08] sm:$0xff]
    %v358 = vld [vmem:[%s1 + $0xa10] sm:$0xff]
    %v359 = vld [vmem:[%s1 + $0xa18] sm:$0xff]
    %v360 = vld [vmem:[%s1 + $0xa20] sm:$0xff]
    %v361 = vld [vmem:[%s1 + $0xa28] sm:$0xff]
    %v362 = vld [vmem:[%s1 + $0xa30] sm:$0xff]
    %v363 = vld [vmem:[%s1 + $0xa38] sm:$0xff]
    %v364 = vld [vmem:[%s1 + $0xa40] sm:$0xff]
    %v365 = vld [vmem:[%s1 + $0xa48] sm:$0xff]
    %v366 = vld [vmem:[%s1 + $0xa50] sm:$0xff]
    %v367 = vld [vmem:[%s1 + $0xa58] sm:$0xff]
    %v368 = vld [vmem:[%s1 + $0xa60] sm:$0xff]
    %v369 = vld [vmem:[%s1 + $0xa68] sm:$0xff]
    %v370 = vld [vmem:[%s1 + $0xa70] sm:$0xff]
    %v371 = vld [vmem:[%s1 + $0xa78] sm:$0xff]
    %v372 = vld [vmem:[%s1 + $0xa80] sm:$0xff]
    %v373 = vld [vmem:[%s1 + $0xa88] sm:$0xff]
    %v374 = vld [vmem:[%s1 + $0xa90] sm:$0xff]
    %v375 = vld [vmem:[%s1 + $0xa98] sm:$0xff]
    %v376 = vld [vmem:[%s1 + $0xaa0] sm:$0xff]
    %v377 = vld [vmem:[%s1 + $0xaa8] sm:$0xff]
    %v378 = vld [vmem:[%s1 + $0xab0] sm:$0xff]
    %v379 = vld [vmem:[%s1 + $0xab8] sm:$0xff]
    %v380 = vld [vmem:[%s1 + $0xac0] sm:$0xff]
    %v381 = vld [vmem:[%s1 + $0xac8] sm:$0xff]
    %v382 = vld [vmem:[%s1 + $0xad0] sm:$0xff]
    %v383 = vld [vmem:[%s1 + $0xad8] sm:$0xff]
    %v384 = vld [vmem:[%s1 + $0xae0] sm:$0xff]
    %v385 = vld [vmem:[%s1 + $0xae8] sm:$0xff]
    %v386 = vld [vmem:[%s1 + $0xaf0] sm:$0xff]
    %v387 = vld [vmem:[%s1 + $0xaf8] sm:$0xff]
    %v388 = vld [vmem:[%s1 + $0xb00] sm:$0xff]
    %v389 = vld [vmem:[%s1 + $0xb08] sm:$0xff]
    %v390 = vld [vmem:[%s1 + $0xb10] sm:$0xff]
    %v391 = vld [vmem:[%s1 + $0xb18] sm:$0xff]
    %v392 = vld [vmem:[%s1 + $0xb20] sm:$0xff]
    %v393 = vld [vmem:[%s1 + $0xb28] sm:$0xff]
    %v394 = vld [vmem:[%s1 + $0xb30] sm:$0xff]
    %v395 = vld [vmem:[%s1 + $0xb38] sm:$0xff]
    %v396 = vld [vmem:[%s1 + $0xb40] sm:$0xff]
    %v397 = vld [vmem:[%s1 + $0xb48] sm:$0xff]
    %v398 = vld [vmem:[%s1 + $0xb50] sm:$0xff]
    %v399 = vld [vmem:[%s1 + $0xb58] sm:$0xff]
    %v400 = vld [vmem:[%s1 + $0xb60] sm:$0xff]
    %v401 = vld [vmem:[%s1 + $0xb68] sm:$0xff]
    %v402 = vld [vmem:[%s1 + $0xb70] sm:$0xff]
    %v403 = vld [vmem:[%s1 + $0xb78] sm:$0xff]
    %v404 = vld [vmem:[%s1 + $0xb80] sm:$0xff]
    %v405 = vld [vmem:[%s1 + $0xb88] sm:$0xff]
    %v406 = vld [vmem:[%s1 + $0xb90] sm:$0xff]
    %v407 = vld [vmem:[%s1 + $0xb98] sm:$0xff]
    %v408 = vld [vmem:[%s1 + $0xba0] sm:$0xff]
    %v409 = vld [vmem:[%s1 + $0xba8] sm:$0xff]
    %v410 = vld [vmem:[%s1 + $0xbb0] sm:$0xff]
    %v411 = vld [vmem:[%s1 + $0xbb8] sm:$0xff]
    %v412 = vld [vmem:[%s1 + $0xbc0] sm:$0xff]
    %v413 = vld [vmem:[%s1 + $0xbc8] sm:$0xff]
    %v414 = vld [vmem:[%s1 + $0xbd0] sm:$0xff]
    %v415 = vld [vmem:[%s1 + $0xbd8] sm:$0xff]
    %v416 = vld [vmem:[%s1 + $0xbe0] sm:$0xff]
    %v417 = vld [vmem:[%s1 + $0xbe8] sm:$0xff]
    %v418 = vld [vmem:[%s1 + $0xbf0] sm:$0xff]
    %v419 = vld [vmem:[%s1 + $0xbf8] sm:$0xff]
    %v420 = vld [vmem:[%s1 + $0xc00] sm:$0xff]
    %v421 = vld [vmem:[%s1 + $0xc08] sm:$0xff]
    %v422 = vld [vmem:[%s1 + $0xc10] sm:$0xff]
    %v423 = vld [vmem:[%s1 + $0xc18] sm:$0xff]
    %v424 = vld [vmem:[%s1 + $0xc20] sm:$0xff]
    %v425 = vld [vmem:[%s1 + $0xc28] sm:$0xff]
    %v426 = vld [vmem:[%s1 + $0xc30] sm:$0xff]
    %v427 = vld [vmem:[%s1 + $0xc38] sm:$0xff]
    %v428 = vld [vmem:[%s1 + $0xc40] sm:$0xff]
    %v429 = vld [vmem:[%s1 + $0xc48] sm:$0xff]
    %v430 = vld [vmem:[%s1 + $0xc50] sm:$0xff]
    %v431 = vld [vmem:[%s1 + $0xc58] sm:$0xff]
    %v432 = vld [vmem:[%s1 + $0xc60] sm:$0xff]
    %v433 = vld [vmem:[%s1 + $0xc68] sm:$0xff]
    %v434 = vld [vmem:[%s1 + $0xc70] sm:$0xff]
    %v435 = vld [vmem:[%s1 + $0xc78] sm:$0xff]
    %v436 = vld [vmem:[%s1 + $0xc80] sm:$0xff]
    %v437 = vld [vmem:[%s1 + $0xc88] sm:$0xff]
    %v438 = vld [vmem:[%s1 + $0xc90] sm:$0xff]
    %v439 = vld [vmem:[%s1 + $0xc98] sm:$0xff]
    %v440 = vld [vmem:[%s1 + $0xca0] sm:$0xff]
    %v441 = vld [vmem:[%s1 + $0xca8] sm:$0xff]
    %v442 = vld [vmem:[%s1 + $0xcb0] sm:$0xff]
    %v443 = vld [vmem:[%s1 + $0xcb8] sm:$0xff]
    %v444 = vld [vmem:[%s1 + $0xcc0] sm:$0xff]
    %v445 = vld [vmem:[%s1 + $0xcc8] sm:$0xff]
    %v446 = vld [vmem:[%s1 + $0xcd0] sm:$0xff]
    %v447 = vld [vmem:[%s1 + $0xcd8] sm:$0xff]
    %v448 = vld [vmem:[%s1 + $0xce0] sm:$0xff]
    %v449 = vld [vmem:[%s1 + $0xce8] sm:$0xff]
    %v450 = vld [vmem:[%s1 + $0xcf0] sm:$0xff]
    %v451 = vld [vmem:[%s1 + $0xcf8] sm:$0xff]
    %v452 = vld [vmem:[%s1 + $0xd00] sm:$0xff]
    %v453 = vld [vmem:[%s1 + $0xd08] sm:$0xff]
    %v454 = vld [vmem:[%s1 + $0xd10] sm:$0xff]
    %v455 = vld [vmem:[%s1 + $0xd18] sm:$0xff]
    %v456 = vld [vmem:[%s1 + $0xd20] sm:$0xff]
    %v457 = vld [vmem:[%s1 + $0xd28] sm:$0xff]
    %v458 = vld [vmem:[%s1 + $0xd30] sm:$0xff]
    %v459 = vld [vmem:[%s1 + $0xd38] sm:$0xff]
    %v460 = vld [vmem:[%s1 + $0xd40] sm:$0xff]
    %v461 = vld [vmem:[%s1 + $0xd48] sm:$0xff]
    %v462 = vld [vmem:[%s1 + $0xd50] sm:$0xff]
    %v463 = vld [vmem:[%s1 + $0xd58] sm:$0xff]
    %v464 = vld [vmem:[%s1 + $0xd60] sm:$0xff]
    %v465 = vld [vmem:[%s1 + $0xd68] sm:$0xff]
    %v466 = vld [vmem:[%s1 + $0xd70] sm:$0xff]
    %v467 = vld [vmem:[%s1 + $0xd78] sm:$0xff]
    %v468 = vld [vmem:[%s1 + $0xd80] sm:$0xff]
    %v469 = vld [vmem:[%s1 + $0xd88] sm:$0xff]
    %v470 = vld [vmem:[%s1 + $0xd90] sm:$0xff]
    %v471 = vld [vmem:[%s1 + $0xd98] sm:$0xff]
    %v472 = vld [vmem:[%s1 + $0xda0] sm:$0xff]
    %v473 = vld [vmem:[%s1 + $0xda8] sm:$0xff]
    %v474 = vld [vmem:[%s1 + $0xdb0] sm:$0xff]
    %v475 = vld [vmem:[%s1 + $0xdb8] sm:$0xff]
    %v476 = vld [vmem:[%s1 + $0xdc0] sm:$0xff]
    %v477 = vld [vmem:[%s1 + $0xdc8] sm:$0xff]
    %v478 = vld [vmem:[%s1 + $0xdd0] sm:$0xff]
    %v479 = vld [vmem:[%s1 + $0xdd8] sm:$0xff]
    %v480 = vld [vmem:[%s1 + $0xde0] sm:$0xff]
    %v481 = vld [vmem:[%s1 + $0xde8] sm:$0xff]
    %v482 = vld [vmem:[%s1 + $0xdf0] sm:$0xff]
    %v483 = vld [vmem:[%s1 + $0xdf8] sm:$0xff]
    %v484 = vld [vmem:[%s1 + $0xe00] sm:$0xff]
    %v485 = vld [vmem:[%s1 + $0xe08] sm:$0xff]
    %v486 = vld [vmem:[%s1 + $0xe10] sm:$0xff]
    %v487 = vld [vmem:[%s1 + $0xe18] sm:$0xff]
    %v488 = vld [vmem:[%s1 + $0xe20] sm:$0xff]
    %v489 = vld [vmem:[%s1 + $0xe28] sm:$0xff]
    %v490 = vld [vmem:[%s1 + $0xe30] sm:$0xff]
    %v491 = vld [vmem:[%s1 + $0xe38] sm:$0xff]
    %v492 = vld [vmem:[%s1 + $0xe40] sm:$0xff]
    %v493 = vld [vmem:[%s1 + $0xe48] sm:$0xff]
    %v494 = vld [vmem:[%s1 + $0xe50] sm:$0xff]
    %v495 = vld [vmem:[%s1 + $0xe58] sm:$0xff]
    %v496 = vld [vmem:[%s1 + $0xe60] sm:$0xff]
    %v497 = vld [vmem:[%s1 + $0xe68] sm:$0xff]
    %v498 = vld [vmem:[%s1 + $0xe70] sm:$0xff]
    %v499 = vld [vmem:[%s1 + $0xe78] sm:$0xff]
    %v500 = vld [vmem:[%s1 + $0xe80] sm:$0xff]
    %v501 = vld [vmem:[%s1 + $0xe88] sm:$0xff]
    %v502 = vld [vmem:[%s1 + $0xe90] sm:$0xff]
    %v503 = vld [vmem:[%s1 + $0xe98] sm:$0xff]
    %v504 = vld [vmem:[%s1 + $0xea0] sm:$0xff]
    %v505 = vld [vmem:[%s1 + $0xea8] sm:$0xff]
    %v506 = vld [vmem:[%s1 + $0xeb0] sm:$0xff]
    %v507 = vld [vmem:[%s1 + $0xeb8] sm:$0xff]
    %v508 = vld [vmem:[%s1 + $0xec0] sm:$0xff]
    %v509 = vld [vmem:[%s1 + $0xec8] sm:$0xff]
    %v510 = vld [vmem:[%s1 + $0xed0] sm:$0xff]
    %v511 = vld [vmem:[%s1 + $0xed8] sm:$0xff]
    %v512 = vld [vmem:[%s1 + $0xee0] sm:$0xff]
    %v513 = vld [vmem:[%s1 + $0xee8] sm:$0xff]
    %v514 = vld [vmem:[%s1 + $0xef0] sm:$0xff]
    %v515 = vld [vmem:[%s1 + $0xef8] sm:$0xff]
    %v516 = vld [vmem:[%s1 + $0xf00] sm:$0xff]
    %v517 = vld [vmem:[%s1 + $0xf08] sm:$0xff]
    %v518 = vld [vmem:[%s1 + $0xf10] sm:$0xff]
    %v519 = vld [vmem:[%s1 + $0xf18] sm:$0xff]
    %v520 = vld [vmem:[%s1 + $0xf20] sm:$0xff]
    %v521 = vld [vmem:[%s1 + $0xf28] sm:$0xff]
    %v522 = vld [vmem:[%s1 + $0xf30] sm:$0xff]
    %v523 = vld [vmem:[%s1 + $0xf38] sm:$0xff]
    %v524 = vld [vmem:[%s1 + $0xf40] sm:$0xff]
    %v525 = vld [vmem:[%s1 + $0xf48] sm:$0xff]
    %v526 = vld [vmem:[%s1 + $0xf50] sm:$0xff]
    %v527 = vld [vmem:[%s1 + $0xf58] sm:$0xff]
    %v528 = vld [vmem:[%s1 + $0xf60] sm:$0xff]
    %v529 = vld [vmem:[%s1 + $0xf68] sm:$0xff]
    %v530 = vld [vmem:[%s1 + $0xf70] sm:$0xff]
    %v531 = vld [vmem:[%s1 + $0xf78] sm:$0xff]
    %v532 = vld [vmem:[%s1 + $0xf80] sm:$0xff]
    %v533 = vld [vmem:[%s1 + $0xf88] sm:$0xff]
    %v534 = vld [vmem:[%s1 + $0xf90] sm:$0xff]
    %v535 = vld [vmem:[%s1 + $0xf98] sm:$0xff]
    %v536 = vld [vmem:[%s1 + $0xfa0] sm:$0xff]
    %v537 = vld [vmem:[%s1 + $0xfa8] sm:$0xff]
    %v538 = vld [vmem:[%s1 + $0xfb0] sm:$0xff]
    %v539 = vld [vmem:[%s1 + $0xfb8] sm:$0xff]
    %v540 = vld [vmem:[%s1 + $0xfc0] sm:$0xff]
    %v541 = vld [vmem:[%s1 + $0xfc8] sm:$0xff]
    %v542 = vld [vmem:[%s1 + $0xfd0] sm:$0xff]
    %v543 = vld [vmem:[%s1 + $0xfd8] sm:$0xff]
    %v544 = vld [vmem:[%s1 + $0xfe0] sm:$0xff]
    %v545 = vld [vmem:[%s1 + $0xfe8] sm:$0xff]
    %v546 = vld [vmem:[%s1 + $0xff0] sm:$0xff]
    %v547 = vld [vmem:[%s1 + $0xff8] sm:$0xff]
    %v548 = vld [vmem:[%s1 + $0x1000] sm:$0xff]
    %v549 = vld [vmem:[%s1 + $0x1008] sm:$0xff]
    %v550 = vld [vmem:[%s1 + $0x1010] sm:$0xff]
    %v551 = vld [vmem:[%s1 + $0x1018] sm:$0xff]
    %v552 = vld [vmem:[%s1 + $0x1020] sm:$0xff]
    %v553 = vld [vmem:[%s1 + $0x1028] sm:$0xff]
    %v554 = vld [vmem:[%s1 + $0x1030] sm:$0xff]
    %v555 = vld [vmem:[%s1 + $0x1038] sm:$0xff]
    %v556 = vld [vmem:[%s1 + $0x1040] sm:$0xff]
    %v557 = vld [vmem:[%s1 + $0x1048] sm:$0xff]
    %v558 = vld [vmem:[%s1 + $0x1050] sm:$0xff]
    %v559 = vld [vmem:[%s1 + $0x1058] sm:$0xff]
    %v560 = vld [vmem:[%s1 + $0x1060] sm:$0xff]
    %v561 = vld [vmem:[%s1 + $0x1068] sm:$0xff]
    %v562 = vld [vmem:[%s1 + $0x1070] sm:$0xff]
    %v563 = vld [vmem:[%s1 + $0x1078] sm:$0xff]
    %v564 = vld [vmem:[%s1 + $0x1080] sm:$0xff]
    %v565 = vld [vmem:[%s1 + $0x1088] sm:$0xff]
    %v566 = vld [vmem:[%s1 + $0x1090] sm:$0xff]
    %v567 = vld [vmem:[%s1 + $0x1098] sm:$0xff]
    %v568 = vld [vmem:[%s1 + $0x10a0] sm:$0xff]
    %v569 = vld [vmem:[%s1 + $0x10a8] sm:$0xff]
    %v570 = vld [vmem:[%s1 + $0x10b0] sm:$0xff]
    %v571 = vld [vmem:[%s1 + $0x10b8] sm:$0xff]
    %v572 = vld [vmem:[%s1 + $0x10c0] sm:$0xff]
    %v573 = vld [vmem:[%s1 + $0x10c8] sm:$0xff]
    %v574 = vld [vmem:[%s1 + $0x10d0] sm:$0xff]
    %v575 = vld [vmem:[%s1 + $0x10d8] sm:$0xff]
    %v576 = vld [vmem:[%s1 + $0x10e0] sm:$0xff]
    %v577 = vld [vmem:[%s1 + $0x10e8] sm:$0xff]
    %v578 = vld [vmem:[%s1 + $0x10f0] sm:$0xff]
    %v579 = vld [vmem:[%s1 + $0x10f8] sm:$0xff]
    %v580 = vld [vmem:[%s1 + $0x1100] sm:$0xff]
    %v581 = vld [vmem:[%s1 + $0x1108] sm:$0xff]
    %v582 = vld [vmem:[%s1 + $0x1110] sm:$0xff]
    %v583 = vld [vmem:[%s1 + $0x1118] sm:$0xff]
    %v584 = vld [vmem:[%s1 + $0x1120] sm:$0xff]
    %v585 = vld [vmem:[%s1 + $0x1128] sm:$0xff]
    %v586 = vld [vmem:[%s1 + $0x1130] sm:$0xff]
    %v587 = vld [vmem:[%s1 + $0x1138] sm:$0xff]
    %v588 = vld [vmem:[%s1 + $0x1140] sm:$0xff]
    %v589 = vld [vmem:[%s1 + $0x1148] sm:$0xff]
    %v590 = vld [vmem:[%s1 + $0x1150] sm:$0xff]
    %v591 = vld [vmem:[%s1 + $0x1158] sm:$0xff]
    %v592 = vld [vmem:[%s1 + $0x1160] sm:$0xff]
    %v593 = vld [vmem:[%s1 + $0x1168] sm:$0xff]
    %v594 = vld [vmem:[%s1 + $0x1170] sm:$0xff]
    %v595 = vld [vmem:[%s1 + $0x1178] sm:$0xff]
    %v596 = vld [vmem:[%s1 + $0x1180] sm:$0xff]
    %v597 = vld [vmem:[%s1 + $0x1188] sm:$0xff]
    %v598 = vld [vmem:[%s1 + $0x1190] sm:$0xff]
    %v599 = vld [vmem:[%s1 + $0x1198] sm:$0xff]
    %v600 = vld [vmem:[%s1 + $0x11a0] sm:$0xff]
    %v601 = vld [vmem:[%s1 + $0x11a8] sm:$0xff]
    %v602 = vld [vmem:[%s1 + $0x11b0] sm:$0xff]
    %v603 = vld [vmem:[%s1 + $0x11b8] sm:$0xff]
    %v604 = vld [vmem:[%s1 + $0x11c0] sm:$0xff]
    %v605 = vld [vmem:[%s1 + $0x11c8] sm:$0xff]
    %v606 = vld [vmem:[%s1 + $0x11d0] sm:$0xff]
    %v607 = vld [vmem:[%s1 + $0x11d8] sm:$0xff]
    %v608 = vld [vmem:[%s1 + $0x11e0] sm:$0xff]
    %v609 = vld [vmem:[%s1 + $0x11e8] sm:$0xff]
    %v610 = vld [vmem:[%s1 + $0x11f0] sm:$0xff]
    %v611 = vld [vmem:[%s1 + $0x11f8] sm:$0xff]
    %v612 = vld [vmem:[%s2] sm:$0x1]
    %v614 = vlaneseq
    %v615 = vshrl.u32 %v614, 7
    %v616 = vsub.s32 0, %v615
    %v617 = vrot.slane %v612, %v616
    %v628 = vcombine.high %v27, %v27
    %v630 = vunpack.c.l.s4 1983009808
    %v631 = vunpack.c.0.s8 %v630
    %v632 = vlaneseq
    %v633 = vshrl.u32 %v632, 7
    %v634 = vsub.s32 %v631, %v633
    %v635 = vrot.slane %v27, %v634
    %v637 = vunpack.c.l.s4 1983009808
    %v638 = vunpack.c.0.s8 %v637
    %v639 = vlaneseq
    %v640 = vshrl.u32 %v639, 7
    %v641 = vsub.s32 %v638, %v640
    %v642 = vrot.slane %v628, %v641
    %v643 = vcombine.high %v635, %v635
    %v644 = vcombine.high %v642, %v642
    %v645 = vcombine.high %v28, %v28
    %v647 = vunpack.c.l.s4 1983009808
    %v648 = vunpack.c.0.s8 %v647
    %v649 = vlaneseq
    %v650 = vshrl.u32 %v649, 7
    %v651 = vsub.s32 %v648, %v650
    %v652 = vrot.slane %v28, %v651
    %v654 = vunpack.c.l.s4 1983009808
    %v655 = vunpack.c.0.s8 %v654
    %v656 = vlaneseq
    %v657 = vshrl.u32 %v656, 7
    %v658 = vsub.s32 %v655, %v657
    %v659 = vrot.slane %v645, %v658
    %v660 = vcombine.high %v652, %v652
    %v661 = vcombine.high %v659, %v659
    %v662 = vcombine.high %v29, %v29
    %v664 = vunpack.c.l.s4 1983009808
    %v665 = vunpack.c.0.s8 %v664
    %v666 = vlaneseq
    %v667 = vshrl.u32 %v666, 7
    %v668 = vsub.s32 %v665, %v667
    %v669 = vrot.slane %v29, %v668
    %v671 = vunpack.c.l.s4 1983009808
    %v672 = vunpack.c.0.s8 %v671
    %v673 = vlaneseq
    %v674 = vshrl.u32 %v673, 7
    %v675 = vsub.s32 %v672, %v674
    %v676 = vrot.slane %v662, %v675
    %v677 = vcombine.high %v669, %v669
    %v678 = vcombine.high %v676, %v676
    %v679 = vcombine.high %v30, %v30
    %v681 = vunpack.c.l.s4 1983009808
    %v682 = vunpack.c.0.s8 %v681
    %v683 = vlaneseq
    %v684 = vshrl.u32 %v683, 7
    %v685 = vsub.s32 %v682, %v684
    %v686 = vrot.slane %v30, %v685
    %v688 = vunpack.c.l.s4 1983009808
    %v689 = vunpack.c.0.s8 %v688
    %v690 = vlaneseq
    %v691 = vshrl.u32 %v690, 7
    %v692 = vsub.s32 %v689, %v691
    %v693 = vrot.slane %v679, %v692
    %v694 = vcombine.high %v686, %v686
    %v695 = vcombine.high %v693, %v693
    %v696 = vcombine.high %v31, %v31
    %v698 = vunpack.c.l.s4 1983009808
    %v699 = vunpack.c.0.s8 %v698
    %v700 = vlaneseq
    %v701 = vshrl.u32 %v700, 7
    %v702 = vsub.s32 %v699, %v701
    %v703 = vrot.slane %v31, %v702
    %v705 = vunpack.c.l.s4 1983009808
    %v706 = vunpack.c.0.s8 %v705
    %v707 = vlaneseq
    %v708 = vshrl.u32 %v707, 7
    %v709 = vsub.s32 %v706, %v708
    %v710 = vrot.slane %v696, %v709
    %v711 = vcombine.high %v703, %v703
    %v712 = vcombine.high %v710, %v710
    %v713 = vcombine.high %v32, %v32
    %v715 = vunpack.c.l.s4 1983009808
    %v716 = vunpack.c.0.s8 %v715
    %v717 = vlaneseq
    %v718 = vshrl.u32 %v717, 7
    %v719 = vsub.s32 %v716, %v718
    %v720 = vrot.slane %v32, %v719
    %v722 = vunpack.c.l.s4 1983009808
    %v723 = vunpack.c.0.s8 %v722
    %v724 = vlaneseq
    %v725 = vshrl.u32 %v724, 7
    %v726 = vsub.s32 %v723, %v725
    %v727 = vrot.slane %v713, %v726
    %v728 = vcombine.high %v720, %v720
    %v729 = vcombine.high %v727, %v727
    %v730 = vcombine.high %v33, %v33
    %v732 = vunpack.c.l.s4 1983009808
    %v733 = vunpack.c.0.s8 %v732
    %v734 = vlaneseq
    %v735 = vshrl.u32 %v734, 7
    %v736 = vsub.s32 %v733, %v735
    %v737 = vrot.slane %v33, %v736
    %v739 = vunpack.c.l.s4 1983009808
    %v740 = vunpack.c.0.s8 %v739
    %v741 = vlaneseq
    %v742 = vshrl.u32 %v741, 7
    %v743 = vsub.s32 %v740, %v742
    %v744 = vrot.slane %v730, %v743
    %v745 = vcombine.high %v737, %v737
    %v746 = vcombine.high %v744, %v744
    %v747 = vcombine.high %v34, %v34
    %v749 = vunpack.c.l.s4 1983009808
    %v750 = vunpack.c.0.s8 %v749
    %v751 = vlaneseq
    %v752 = vshrl.u32 %v751, 7
    %v753 = vsub.s32 %v750, %v752
    %v754 = vrot.slane %v34, %v753
    %v756 = vunpack.c.l.s4 1983009808
    %v757 = vunpack.c.0.s8 %v756
    %v758 = vlaneseq
    %v759 = vshrl.u32 %v758, 7
    %v760 = vsub.s32 %v757, %v759
    %v761 = vrot.slane %v747, %v760
    %v762 = vcombine.high %v754, %v754
    %v763 = vcombine.high %v761, %v761
    %v764 = vcombine.high %v35, %v35
    %v766 = vunpack.c.l.s4 1983009808
    %v767 = vunpack.c.0.s8 %v766
    %v768 = vlaneseq
    %v769 = vshrl.u32 %v768, 7
    %v770 = vsub.s32 %v767, %v769
    %v771 = vrot.slane %v35, %v770
    %v773 = vunpack.c.l.s4 1983009808
    %v774 = vunpack.c.0.s8 %v773
    %v775 = vlaneseq
    %v776 = vshrl.u32 %v775, 7
    %v777 = vsub.s32 %v774, %v776
    %v778 = vrot.slane %v764, %v777
    %v779 = vcombine.high %v771, %v771
    %v780 = vcombine.high %v778, %v778
    %817 = vmatprep.subr.mxu0 0.0
    %818 = vmatpush1.msra.mxu0 %v36
    %819 = vmatprep.subr.mxu0 0.0
    %820 = vmatpush1.msra.mxu0 %v37
    %821 = vmatprep.subr.mxu0 0.0
    %822 = vmatpush1.msra.mxu0 %v38
    %823 = vmatprep.subr.mxu0 0.0
    %824 = vmatpush1.msra.mxu0 %v39
    %825 = vmatprep.subr.mxu0 0.0
    %826 = vmatpush1.msra.mxu0 %v40
    %827 = vmatprep.subr.mxu0 0.0
    %828 = vmatpush1.msra.mxu0 %v41
    %829 = vmatprep.subr.mxu0 0.0
    %830 = vmatpush1.msra.mxu0 %v42
    %831 = vmatprep.subr.mxu0 0.0
    %832 = vmatpush1.msra.mxu0 %v43
    %833 = vmatprep.subr.mxu0 0.0
    %834 = vmatpush1.msra.mxu0 %v44
    %835 = vmatprep.subr.mxu0 0.0
    %836 = vmatpush1.msra.mxu0 %v45
    %837 = vmatprep.subr.mxu0 0.0
    %838 = vmatpush1.msra.mxu0 %v46
    %839 = vmatprep.subr.mxu0 0.0
    %840 = vmatpush1.msra.mxu0 %v47
    %841 = vmatprep.subr.mxu0 0.0
    %842 = vmatpush1.msra.mxu0 %v48
    %843 = vmatprep.subr.mxu0 0.0
    %844 = vmatpush1.msra.mxu0 %v49
    %845 = vmatprep.subr.mxu0 0.0
    %846 = vmatpush1.msra.mxu0 %v50
    %847 = vmatprep.subr.mxu0 0.0
    %848 = vmatpush1.msra.mxu0 %v51
    %849 = vmatprep.subr.mxu0 0.0
    %850 = vmatpush1.msra.mxu0 %v52
    %851 = vmatprep.subr.mxu0 0.0
    %852 = vmatpush1.msra.mxu0 %v53
    %853 = vmatprep.subr.mxu0 0.0
    %854 = vmatpush1.msra.mxu0 %v54
    %855 = vmatprep.subr.mxu0 0.0
    %856 = vmatpush1.msra.mxu0 %v55
    %857 = vmatprep.subr.mxu0 0.0
    %858 = vmatpush1.msra.mxu0 %v56
    %859 = vmatprep.subr.mxu0 0.0
    %860 = vmatpush1.msra.mxu0 %v57
    %861 = vmatprep.subr.mxu0 0.0
    %862 = vmatpush1.msra.mxu0 %v58
    %863 = vmatprep.subr.mxu0 0.0
    %864 = vmatpush1.msra.mxu0 %v59
    %865 = vmatprep.subr.mxu0 0.0
    %866 = vmatpush1.msra.mxu0 %v60
    %867 = vmatprep.subr.mxu0 0.0
    %868 = vmatpush1.msra.mxu0 %v61
    %869 = vmatprep.subr.mxu0 0.0
    %870 = vmatpush1.msra.mxu0 %v62
    %871 = vmatprep.subr.mxu0 0.0
    %872 = vmatpush1.msra.mxu0 %v63
    %873 = vmatprep.subr.mxu0 0.0
    %874 = vmatpush1.msra.mxu0 %v64
    %875 = vmatprep.subr.mxu0 0.0
    %876 = vmatpush1.msra.mxu0 %v65
    %877 = vmatprep.subr.mxu0 0.0
    %878 = vmatpush1.msra.mxu0 %v66
    %879 = vmatprep.subr.mxu0 0.0
    %880 = vmatpush1.msra.mxu0 %v67
    %881 = vmatprep.mubr.f32.mxu0 %v643
    %882 = vmatmul.mubr.f32.gmra.mrb[0].mxu0 %v635
    %v883 = vpop.f32.mrb[0].mxu0
    %v884 = vadd.f32 %v617, %v883
    %v885 = vpop.f32.mrb[0].mxu0
    %886 = vdwg.mxu0
    %887 = vmatprep.subr.mxu0 0.0
    %888 = vmatpush1.msra.mxu0 %v68
    %889 = vmatprep.subr.mxu0 0.0
    %890 = vmatpush1.msra.mxu0 %v69
    %891 = vmatprep.subr.mxu0 0.0
    %892 = vmatpush1.msra.mxu0 %v70
    %893 = vmatprep.subr.mxu0 0.0
    %894 = vmatpush1.msra.mxu0 %v71
    %895 = vmatprep.subr.mxu0 0.0
    %896 = vmatpush1.msra.mxu0 %v72
    %897 = vmatprep.subr.mxu0 0.0
    %898 = vmatpush1.msra.mxu0 %v73
    %899 = vmatprep.subr.mxu0 0.0
    %900 = vmatpush1.msra.mxu0 %v74
    %901 = vmatprep.subr.mxu0 0.0
    %902 = vmatpush1.msra.mxu0 %v75
    %903 = vmatprep.subr.mxu0 0.0
    %904 = vmatpush1.msra.mxu0 %v76
    %905 = vmatprep.subr.mxu0 0.0
    %906 = vmatpush1.msra.mxu0 %v77
    %907 = vmatprep.subr.mxu0 0.0
    %908 = vmatpush1.msra.mxu0 %v78
    %909 = vmatprep.subr.mxu0 0.0
    %910 = vmatpush1.msra.mxu0 %v79
    %911 = vmatprep.subr.mxu0 0.0
    %912 = vmatpush1.msra.mxu0 %v80
    %913 = vmatprep.subr.mxu0 0.0
    %914 = vmatpush1.msra.mxu0 %v81
    %915 = vmatprep.subr.mxu0 0.0
    %916 = vmatpush1.msra.mxu0 %v82
    %917 = vmatprep.subr.mxu0 0.0
    %918 = vmatpush1.msra.mxu0 %v83
    %919 = vmatprep.subr.mxu0 0.0
    %920 = vmatpush1.msra.mxu0 %v84
    %921 = vmatprep.subr.mxu0 0.0
    %922 = vmatpush1.msra.mxu0 %v85
    %923 = vmatprep.subr.mxu0 0.0
    %924 = vmatpush1.msra.mxu0 %v86
    %925 = vmatprep.subr.mxu0 0.0
    %926 = vmatpush1.msra.mxu0 %v87
    %927 = vmatprep.subr.mxu0 0.0
    %928 = vmatpush1.msra.mxu0 %v88
    %929 = vmatprep.subr.mxu0 0.0
    %930 = vmatpush1.msra.mxu0 %v89
    %931 = vmatprep.subr.mxu0 0.0
    %932 = vmatpush1.msra.mxu0 %v90
    %933 = vmatprep.subr.mxu0 0.0
    %934 = vmatpush1.msra.mxu0 %v91
    %935 = vmatprep.subr.mxu0 0.0
    %936 = vmatpush1.msra.mxu0 %v92
    %937 = vmatprep.subr.mxu0 0.0
    %938 = vmatpush1.msra.mxu0 %v93
    %939 = vmatprep.subr.mxu0 0.0
    %940 = vmatpush1.msra.mxu0 %v94
    %941 = vmatprep.subr.mxu0 0.0
    %942 = vmatpush1.msra.mxu0 %v95
    %943 = vmatprep.subr.mxu0 0.0
    %944 = vmatpush1.msra.mxu0 %v96
    %945 = vmatprep.subr.mxu0 0.0
    %946 = vmatpush1.msra.mxu0 %v97
    %947 = vmatprep.subr.mxu0 0.0
    %948 = vmatpush1.msra.mxu0 %v98
    %949 = vmatprep.subr.mxu0 0.0
    %950 = vmatpush1.msra.mxu0 %v99
    %951 = vmatprep.mubr.f32.mxu0 %v644
    %952 = vmatmul.mubr.f32.gmra.mrb[0].mxu0 %v642
    %v953 = vpop.f32.mrb[0].mxu0
    %v954 = vadd.f32 %v884, %v953
    %v955 = vpop.f32.mrb[0].mxu0
    %956 = vdwg.mxu0
    %957 = vmatprep.subr.mxu0 0.0
    %958 = vmatpush1.msra.mxu0 %v100
    %959 = vmatprep.subr.mxu0 0.0
    %960 = vmatpush1.msra.mxu0 %v101
    %961 = vmatprep.subr.mxu0 0.0
    %962 = vmatpush1.msra.mxu0 %v102
    %963 = vmatprep.subr.mxu0 0.0
    %964 = vmatpush1.msra.mxu0 %v103
    %965 = vmatprep.subr.mxu0 0.0
    %966 = vmatpush1.msra.mxu0 %v104
    %967 = vmatprep.subr.mxu0 0.0
    %968 = vmatpush1.msra.mxu0 %v105
    %969 = vmatprep.subr.mxu0 0.0
    %970 = vmatpush1.msra.mxu0 %v106
    %971 = vmatprep.subr.mxu0 0.0
    %972 = vmatpush1.msra.mxu0 %v107
    %973 = vmatprep.subr.mxu0 0.0
    %974 = vmatpush1.msra.mxu0 %v108
    %975 = vmatprep.subr.mxu0 0.0
    %976 = vmatpush1.msra.mxu0 %v109
    %977 = vmatprep.subr.mxu0 0.0
    %978 = vmatpush1.msra.mxu0 %v110
    %979 = vmatprep.subr.mxu0 0.0
    %980 = vmatpush1.msra.mxu0 %v111
    %981 = vmatprep.subr.mxu0 0.0
    %982 = vmatpush1.msra.mxu0 %v112
    %983 = vmatprep.subr.mxu0 0.0
    %984 = vmatpush1.msra.mxu0 %v113
    %985 = vmatprep.subr.mxu0 0.0
    %986 = vmatpush1.msra.mxu0 %v114
    %987 = vmatprep.subr.mxu0 0.0
    %988 = vmatpush1.msra.mxu0 %v115
    %989 = vmatprep.subr.mxu0 0.0
    %990 = vmatpush1.msra.mxu0 %v116
    %991 = vmatprep.subr.mxu0 0.0
    %992 = vmatpush1.msra.mxu0 %v117
    %993 = vmatprep.subr.mxu0 0.0
    %994 = vmatpush1.msra.mxu0 %v118
    %995 = vmatprep.subr.mxu0 0.0
    %996 = vmatpush1.msra.mxu0 %v119
    %997 = vmatprep.subr.mxu0 0.0
    %998 = vmatpush1.msra.mxu0 %v120
    %999 = vmatprep.subr.mxu0 0.0
    %1000 = vmatpush1.msra.mxu0 %v121
    %1001 = vmatprep.subr.mxu0 0.0
    %1002 = vmatpush1.msra.mxu0 %v122
    %1003 = vmatprep.subr.mxu0 0.0
    %1004 = vmatpush1.msra.mxu0 %v123
    %1005 = vmatprep.subr.mxu0 0.0
    %1006 = vmatpush1.msra.mxu0 %v124
    %1007 = vmatprep.subr.mxu0 0.0
    %1008 = vmatpush1.msra.mxu0 %v125
    %1009 = vmatprep.subr.mxu0 0.0
    %1010 = vmatpush1.msra.mxu0 %v126
    %1011 = vmatprep.subr.mxu0 0.0
    %1012 = vmatpush1.msra.mxu0 %v127
    %1013 = vmatprep.subr.mxu0 0.0
    %1014 = vmatpush1.msra.mxu0 %v128
    %1015 = vmatprep.subr.mxu0 0.0
    %1016 = vmatpush1.msra.mxu0 %v129
    %1017 = vmatprep.subr.mxu0 0.0
    %1018 = vmatpush1.msra.mxu0 %v130
    %1019 = vmatprep.subr.mxu0 0.0
    %1020 = vmatpush1.msra.mxu0 %v131
    %1021 = vmatprep.mubr.f32.mxu0 %v660
    %1022 = vmatmul.mubr.f32.gmra.mrb[0].mxu0 %v652
    %v1023 = vpop.f32.mrb[0].mxu0
    %v1024 = vadd.f32 %v954, %v1023
    %v1025 = vpop.f32.mrb[0].mxu0
    %1026 = vdwg.mxu0
    %1027 = vmatprep.subr.mxu0 0.0
    %1028 = vmatpush1.msra.mxu0 %v132
    %1029 = vmatprep.subr.mxu0 0.0
    %1030 = vmatpush1.msra.mxu0 %v133
    %1031 = vmatprep.subr.mxu0 0.0
    %1032 = vmatpush1.msra.mxu0 %v134
    %1033 = vmatprep.subr.mxu0 0.0
    %1034 = vmatpush1.msra.mxu0 %v135
    %1035 = vmatprep.subr.mxu0 0.0
    %1036 = vmatpush1.msra.mxu0 %v136
    %1037 = vmatprep.subr.mxu0 0.0
    %1038 = vmatpush1.msra.mxu0 %v137
    %1039 = vmatprep.subr.mxu0 0.0
    %1040 = vmatpush1.msra.mxu0 %v138
    %1041 = vmatprep.subr.mxu0 0.0
    %1042 = vmatpush1.msra.mxu0 %v139
    %1043 = vmatprep.subr.mxu0 0.0
    %1044 = vmatpush1.msra.mxu0 %v140
    %1045 = vmatprep.subr.mxu0 0.0
    %1046 = vmatpush1.msra.mxu0 %v141
    %1047 = vmatprep.subr.mxu0 0.0
    %1048 = vmatpush1.msra.mxu0 %v142
    %1049 = vmatprep.subr.mxu0 0.0
    %1050 = vmatpush1.msra.mxu0 %v143
    %1051 = vmatprep.subr.mxu0 0.0
    %1052 = vmatpush1.msra.mxu0 %v144
    %1053 = vmatprep.subr.mxu0 0.0
    %1054 = vmatpush1.msra.mxu0 %v145
    %1055 = vmatprep.subr.mxu0 0.0
    %1056 = vmatpush1.msra.mxu0 %v146
    %1057 = vmatprep.subr.mxu0 0.0
    %1058 = vmatpush1.msra.mxu0 %v147
    %1059 = vmatprep.subr.mxu0 0.0
    %1060 = vmatpush1.msra.mxu0 %v148
    %1061 = vmatprep.subr.mxu0 0.0
    %1062 = vmatpush1.msra.mxu0 %v149
    %1063 = vmatprep.subr.mxu0 0.0
    %1064 = vmatpush1.msra.mxu0 %v150
    %1065 = vmatprep.subr.mxu0 0.0
    %1066 = vmatpush1.msra.mxu0 %v151
    %1067 = vmatprep.subr.mxu0 0.0
    %1068 = vmatpush1.msra.mxu0 %v152
    %1069 = vmatprep.subr.mxu0 0.0
    %1070 = vmatpush1.msra.mxu0 %v153
    %1071 = vmatprep.subr.mxu0 0.0
    %1072 = vmatpush1.msra.mxu0 %v154
    %1073 = vmatprep.subr.mxu0 0.0
    %1074 = vmatpush1.msra.mxu0 %v155
    %1075 = vmatprep.subr.mxu0 0.0
    %1076 = vmatpush1.msra.mxu0 %v156
    %1077 = vmatprep.subr.mxu0 0.0
    %1078 = vmatpush1.msra.mxu0 %v157
    %1079 = vmatprep.subr.mxu0 0.0
    %1080 = vmatpush1.msra.mxu0 %v158
    %1081 = vmatprep.subr.mxu0 0.0
    %1082 = vmatpush1.msra.mxu0 %v159
    %1083 = vmatprep.subr.mxu0 0.0
    %1084 = vmatpush1.msra.mxu0 %v160
    %1085 = vmatprep.subr.mxu0 0.0
    %1086 = vmatpush1.msra.mxu0 %v161
    %1087 = vmatprep.subr.mxu0 0.0
    %1088 = vmatpush1.msra.mxu0 %v162
    %1089 = vmatprep.subr.mxu0 0.0
    %1090 = vmatpush1.msra.mxu0 %v163
    %1091 = vmatprep.mubr.f32.mxu0 %v661
    %1092 = vmatmul.mubr.f32.gmra.mrb[0].mxu0 %v659
    %v1093 = vpop.f32.mrb[0].mxu0
    %v1094 = vadd.f32 %v1024, %v1093
    %v1095 = vpop.f32.mrb[0].mxu0
    %1096 = vdwg.mxu0
    %1097 = vmatprep.subr.mxu0 0.0
    %1098 = vmatpush1.msra.mxu0 %v164
    %1099 = vmatprep.subr.mxu0 0.0
    %1100 = vmatpush1.msra.mxu0 %v165
    %1101 = vmatprep.subr.mxu0 0.0
    %1102 = vmatpush1.msra.mxu0 %v166
    %1103 = vmatprep.subr.mxu0 0.0
    %1104 = vmatpush1.msra.mxu0 %v167
    %1105 = vmatprep.subr.mxu0 0.0
    %1106 = vmatpush1.msra.mxu0 %v168
    %1107 = vmatprep.subr.mxu0 0.0
    %1108 = vmatpush1.msra.mxu0 %v169
    %1109 = vmatprep.subr.mxu0 0.0
    %1110 = vmatpush1.msra.mxu0 %v170
    %1111 = vmatprep.subr.mxu0 0.0
    %1112 = vmatpush1.msra.mxu0 %v171
    %1113 = vmatprep.subr.mxu0 0.0
    %1114 = vmatpush1.msra.mxu0 %v172
    %1115 = vmatprep.subr.mxu0 0.0
    %1116 = vmatpush1.msra.mxu0 %v173
    %1117 = vmatprep.subr.mxu0 0.0
    %1118 = vmatpush1.msra.mxu0 %v174
    %1119 = vmatprep.subr.mxu0 0.0
    %1120 = vmatpush1.msra.mxu0 %v175
    %1121 = vmatprep.subr.mxu0 0.0
    %1122 = vmatpush1.msra.mxu0 %v176
    %1123 = vmatprep.subr.mxu0 0.0
    %1124 = vmatpush1.msra.mxu0 %v177
    %1125 = vmatprep.subr.mxu0 0.0
    %1126 = vmatpush1.msra.mxu0 %v178
    %1127 = vmatprep.subr.mxu0 0.0
    %1128 = vmatpush1.msra.mxu0 %v179
    %1129 = vmatprep.subr.mxu0 0.0
    %1130 = vmatpush1.msra.mxu0 %v180
    %1131 = vmatprep.subr.mxu0 0.0
    %1132 = vmatpush1.msra.mxu0 %v181
    %1133 = vmatprep.subr.mxu0 0.0
    %1134 = vmatpush1.msra.mxu0 %v182
    %1135 = vmatprep.subr.mxu0 0.0
    %1136 = vmatpush1.msra.mxu0 %v183
    %1137 = vmatprep.subr.mxu0 0.0
    %1138 = vmatpush1.msra.mxu0 %v184
    %1139 = vmatprep.subr.mxu0 0.0
    %1140 = vmatpush1.msra.mxu0 %v185
    %1141 = vmatprep.subr.mxu0 0.0
    %1142 = vmatpush1.msra.mxu0 %v186
    %1143 = vmatprep.subr.mxu0 0.0
    %1144 = vmatpush1.msra.mxu0 %v187
    %1145 = vmatprep.subr.mxu0 0.0
    %1146 = vmatpush1.msra.mxu0 %v188
    %1147 = vmatprep.subr.mxu0 0.0
    %1148 = vmatpush1.msra.mxu0 %v189
    %1149 = vmatprep.subr.mxu0 0.0
    %1150 = vmatpush1.msra.mxu0 %v190
    %1151 = vmatprep.subr.mxu0 0.0
    %1152 = vmatpush1.msra.mxu0 %v191
    %1153 = vmatprep.subr.mxu0 0.0
    %1154 = vmatpush1.msra.mxu0 %v192
    %1155 = vmatprep.subr.mxu0 0.0
    %1156 = vmatpush1.msra.mxu0 %v193
    %1157 = vmatprep.subr.mxu0 0.0
    %1158 = vmatpush1.msra.mxu0 %v194
    %1159 = vmatprep.subr.mxu0 0.0
    %1160 = vmatpush1.msra.mxu0 %v195
    %1161 = vmatprep.mubr.f32.mxu0 %v677
    %1162 = vmatmul.mubr.f32.gmra.mrb[0].mxu0 %v669
    %v1163 = vpop.f32.mrb[0].mxu0
    %v1164 = vadd.f32 %v1094, %v1163
    %v1165 = vpop.f32.mrb[0].mxu0
    %1166 = vdwg.mxu0
    %1167 = vmatprep.subr.mxu0 0.0
    %1168 = vmatpush1.msra.mxu0 %v196
    %1169 = vmatprep.subr.mxu0 0.0
    %1170 = vmatpush1.msra.mxu0 %v197
    %1171 = vmatprep.subr.mxu0 0.0
    %1172 = vmatpush1.msra.mxu0 %v198
    %1173 = vmatprep.subr.mxu0 0.0
    %1174 = vmatpush1.msra.mxu0 %v199
    %1175 = vmatprep.subr.mxu0 0.0
    %1176 = vmatpush1.msra.mxu0 %v200
    %1177 = vmatprep.subr.mxu0 0.0
    %1178 = vmatpush1.msra.mxu0 %v201
    %1179 = vmatprep.subr.mxu0 0.0
    %1180 = vmatpush1.msra.mxu0 %v202
    %1181 = vmatprep.subr.mxu0 0.0
    %1182 = vmatpush1.msra.mxu0 %v203
    %1183 = vmatprep.subr.mxu0 0.0
    %1184 = vmatpush1.msra.mxu0 %v204
    %1185 = vmatprep.subr.mxu0 0.0
    %1186 = vmatpush1.msra.mxu0 %v205
    %1187 = vmatprep.subr.mxu0 0.0
    %1188 = vmatpush1.msra.mxu0 %v206
    %1189 = vmatprep.subr.mxu0 0.0
    %1190 = vmatpush1.msra.mxu0 %v207
    %1191 = vmatprep.subr.mxu0 0.0
    %1192 = vmatpush1.msra.mxu0 %v208
    %1193 = vmatprep.subr.mxu0 0.0
    %1194 = vmatpush1.msra.mxu0 %v209
    %1195 = vmatprep.subr.mxu0 0.0
    %1196 = vmatpush1.msra.mxu0 %v210
    %1197 = vmatprep.subr.mxu0 0.0
    %1198 = vmatpush1.msra.mxu0 %v211
    %1199 = vmatprep.subr.mxu0 0.0
    %1200 = vmatpush1.msra.mxu0 %v212
    %1201 = vmatprep.subr.mxu0 0.0
    %1202 = vmatpush1.msra.mxu0 %v213
    %1203 = vmatprep.subr.mxu0 0.0
    %1204 = vmatpush1.msra.mxu0 %v214
    %1205 = vmatprep.subr.mxu0 0.0
    %1206 = vmatpush1.msra.mxu0 %v215
    %1207 = vmatprep.subr.mxu0 0.0
    %1208 = vmatpush1.msra.mxu0 %v216
    %1209 = vmatprep.subr.mxu0 0.0
    %1210 = vmatpush1.msra.mxu0 %v217
    %1211 = vmatprep.subr.mxu0 0.0
    %1212 = vmatpush1.msra.mxu0 %v218
    %1213 = vmatprep.subr.mxu0 0.0
    %1214 = vmatpush1.msra.mxu0 %v219
    %1215 = vmatprep.subr.mxu0 0.0
    %1216 = vmatpush1.msra.mxu0 %v220
    %1217 = vmatprep.subr.mxu0 0.0
    %1218 = vmatpush1.msra.mxu0 %v221
    %1219 = vmatprep.subr.mxu0 0.0
    %1220 = vmatpush1.msra.mxu0 %v222
    %1221 = vmatprep.subr.mxu0 0.0
    %1222 = vmatpush1.msra.mxu0 %v223
    %1223 = vmatprep.subr.mxu0 0.0
    %1224 = vmatpush1.msra.mxu0 %v224
    %1225 = vmatprep.subr.mxu0 0.0
    %1226 = vmatpush1.msra.mxu0 %v225
    %1227 = vmatprep.subr.mxu0 0.0
    %1228 = vmatpush1.msra.mxu0 %v226
    %1229 = vmatprep.subr.mxu0 0.0
    %1230 = vmatpush1.msra.mxu0 %v227
    %1231 = vmatprep.mubr.f32.mxu0 %v678
    %1232 = vmatmul.mubr.f32.gmra.mrb[0].mxu0 %v676
    %v1233 = vpop.f32.mrb[0].mxu0
    %v1234 = vadd.f32 %v1164, %v1233
    %v1235 = vpop.f32.mrb[0].mxu0
    %1236 = vdwg.mxu0
    %1237 = vmatprep.subr.mxu0 0.0
    %1238 = vmatpush1.msra.mxu0 %v228
    %1239 = vmatprep.subr.mxu0 0.0
    %1240 = vmatpush1.msra.mxu0 %v229
    %1241 = vmatprep.subr.mxu0 0.0
    %1242 = vmatpush1.msra.mxu0 %v230
    %1243 = vmatprep.subr.mxu0 0.0
    %1244 = vmatpush1.msra.mxu0 %v231
    %1245 = vmatprep.subr.mxu0 0.0
    %1246 = vmatpush1.msra.mxu0 %v232
    %1247 = vmatprep.subr.mxu0 0.0
    %1248 = vmatpush1.msra.mxu0 %v233
    %1249 = vmatprep.subr.mxu0 0.0
    %1250 = vmatpush1.msra.mxu0 %v234
    %1251 = vmatprep.subr.mxu0 0.0
    %1252 = vmatpush1.msra.mxu0 %v235
    %1253 = vmatprep.subr.mxu0 0.0
    %1254 = vmatpush1.msra.mxu0 %v236
    %1255 = vmatprep.subr.mxu0 0.0
    %1256 = vmatpush1.msra.mxu0 %v237
    %1257 = vmatprep.subr.mxu0 0.0
    %1258 = vmatpush1.msra.mxu0 %v238
    %1259 = vmatprep.subr.mxu0 0.0
    %1260 = vmatpush1.msra.mxu0 %v239
    %1261 = vmatprep.subr.mxu0 0.0
    %1262 = vmatpush1.msra.mxu0 %v240
    %1263 = vmatprep.subr.mxu0 0.0
    %1264 = vmatpush1.msra.mxu0 %v241
    %1265 = vmatprep.subr.mxu0 0.0
    %1266 = vmatpush1.msra.mxu0 %v242
    %1267 = vmatprep.subr.mxu0 0.0
    %1268 = vmatpush1.msra.mxu0 %v243
    %1269 = vmatprep.subr.mxu0 0.0
    %1270 = vmatpush1.msra.mxu0 %v244
    %1271 = vmatprep.subr.mxu0 0.0
    %1272 = vmatpush1.msra.mxu0 %v245
    %1273 = vmatprep.subr.mxu0 0.0
    %1274 = vmatpush1.msra.mxu0 %v246
    %1275 = vmatprep.subr.mxu0 0.0
    %1276 = vmatpush1.msra.mxu0 %v247
    %1277 = vmatprep.subr.mxu0 0.0
    %1278 = vmatpush1.msra.mxu0 %v248
    %1279 = vmatprep.subr.mxu0 0.0
    %1280 = vmatpush1.msra.mxu0 %v249
    %1281 = vmatprep.subr.mxu0 0.0
    %1282 = vmatpush1.msra.mxu0 %v250
    %1283 = vmatprep.subr.mxu0 0.0
    %1284 = vmatpush1.msra.mxu0 %v251
    %1285 = vmatprep.subr.mxu0 0.0
    %1286 = vmatpush1.msra.mxu0 %v252
    %1287 = vmatprep.subr.mxu0 0.0
    %1288 = vmatpush1.msra.mxu0 %v253
    %1289 = vmatprep.subr.mxu0 0.0
    %1290 = vmatpush1.msra.mxu0 %v254
    %1291 = vmatprep.subr.mxu0 0.0
    %1292 = vmatpush1.msra.mxu0 %v255
    %1293 = vmatprep.subr.mxu0 0.0
    %1294 = vmatpush1.msra.mxu0 %v256
    %1295 = vmatprep.subr.mxu0 0.0
    %1296 = vmatpush1.msra.mxu0 %v257
    %1297 = vmatprep.subr.mxu0 0.0
    %1298 = vmatpush1.msra.mxu0 %v258
    %1299 = vmatprep.subr.mxu0 0.0
    %1300 = vmatpush1.msra.mxu0 %v259
    %1301 = vmatprep.mubr.f32.mxu0 %v694
    %1302 = vmatmul.mubr.f32.gmra.mrb[0].mxu0 %v686
    %v1303 = vpop.f32.mrb[0].mxu0
    %v1304 = vadd.f32 %v1234, %v1303
    %v1305 = vpop.f32.mrb[0].mxu0
    %1306 = vdwg.mxu0
    %1307 = vmatprep.subr.mxu0 0.0
    %1308 = vmatpush1.msra.mxu0 %v260
    %1309 = vmatprep.subr.mxu0 0.0
    %1310 = vmatpush1.msra.mxu0 %v261
    %1311 = vmatprep.subr.mxu0 0.0
    %1312 = vmatpush1.msra.mxu0 %v262
    %1313 = vmatprep.subr.mxu0 0.0
    %1314 = vmatpush1.msra.mxu0 %v263
    %1315 = vmatprep.subr.mxu0 0.0
    %1316 = vmatpush1.msra.mxu0 %v264
    %1317 = vmatprep.subr.mxu0 0.0
    %1318 = vmatpush1.msra.mxu0 %v265
    %1319 = vmatprep.subr.mxu0 0.0
    %1320 = vmatpush1.msra.mxu0 %v266
    %1321 = vmatprep.subr.mxu0 0.0
    %1322 = vmatpush1.msra.mxu0 %v267
    %1323 = vmatprep.subr.mxu0 0.0
    %1324 = vmatpush1.msra.mxu0 %v268
    %1325 = vmatprep.subr.mxu0 0.0
    %1326 = vmatpush1.msra.mxu0 %v269
    %1327 = vmatprep.subr.mxu0 0.0
    %1328 = vmatpush1.msra.mxu0 %v270
    %1329 = vmatprep.subr.mxu0 0.0
    %1330 = vmatpush1.msra.mxu0 %v271
    %1331 = vmatprep.subr.mxu0 0.0
    %1332 = vmatpush1.msra.mxu0 %v272
    %1333 = vmatprep.subr.mxu0 0.0
    %1334 = vmatpush1.msra.mxu0 %v273
    %1335 = vmatprep.subr.mxu0 0.0
    %1336 = vmatpush1.msra.mxu0 %v274
    %1337 = vmatprep.subr.mxu0 0.0
    %1338 = vmatpush1.msra.mxu0 %v275
    %1339 = vmatprep.subr.mxu0 0.0
    %1340 = vmatpush1.msra.mxu0 %v276
    %1341 = vmatprep.subr.mxu0 0.0
    %1342 = vmatpush1.msra.mxu0 %v277
    %1343 = vmatprep.subr.mxu0 0.0
    %1344 = vmatpush1.msra.mxu0 %v278
    %1345 = vmatprep.subr.mxu0 0.0
    %1346 = vmatpush1.msra.mxu0 %v279
    %1347 = vmatprep.subr.mxu0 0.0
    %1348 = vmatpush1.msra.mxu0 %v280
    %1349 = vmatprep.subr.mxu0 0.0
    %1350 = vmatpush1.msra.mxu0 %v281
    %1351 = vmatprep.subr.mxu0 0.0
    %1352 = vmatpush1.msra.mxu0 %v282
    %1353 = vmatprep.subr.mxu0 0.0
    %1354 = vmatpush1.msra.mxu0 %v283
    %1355 = vmatprep.subr.mxu0 0.0
    %1356 = vmatpush1.msra.mxu0 %v284
    %1357 = vmatprep.subr.mxu0 0.0
    %1358 = vmatpush1.msra.mxu0 %v285
    %1359 = vmatprep.subr.mxu0 0.0
    %1360 = vmatpush1.msra.mxu0 %v286
    %1361 = vmatprep.subr.mxu0 0.0
    %1362 = vmatpush1.msra.mxu0 %v287
    %1363 = vmatprep.subr.mxu0 0.0
    %1364 = vmatpush1.msra.mxu0 %v288
    %1365 = vmatprep.subr.mxu0 0.0
    %1366 = vmatpush1.msra.mxu0 %v289
    %1367 = vmatprep.subr.mxu0 0.0
    %1368 = vmatpush1.msra.mxu0 %v290
    %1369 = vmatprep.subr.mxu0 0.0
    %1370 = vmatpush1.msra.mxu0 %v291
    %1371 = vmatprep.mubr.f32.mxu0 %v695
    %1372 = vmatmul.mubr.f32.gmra.mrb[0].mxu0 %v693
    %v1373 = vpop.f32.mrb[0].mxu0
    %v1374 = vadd.f32 %v1304, %v1373
    %v1375 = vpop.f32.mrb[0].mxu0
    %1376 = vdwg.mxu0
    %1377 = vmatprep.subr.mxu0 0.0
    %1378 = vmatpush1.msra.mxu0 %v292
    %1379 = vmatprep.subr.mxu0 0.0
    %1380 = vmatpush1.msra.mxu0 %v293
    %1381 = vmatprep.subr.mxu0 0.0
    %1382 = vmatpush1.msra.mxu0 %v294
    %1383 = vmatprep.subr.mxu0 0.0
    %1384 = vmatpush1.msra.mxu0 %v295
    %1385 = vmatprep.subr.mxu0 0.0
    %1386 = vmatpush1.msra.mxu0 %v296
    %1387 = vmatprep.subr.mxu0 0.0
    %1388 = vmatpush1.msra.mxu0 %v297
    %1389 = vmatprep.subr.mxu0 0.0
    %1390 = vmatpush1.msra.mxu0 %v298
    %1391 = vmatprep.subr.mxu0 0.0
    %1392 = vmatpush1.msra.mxu0 %v299
    %1393 = vmatprep.subr.mxu0 0.0
    %1394 = vmatpush1.msra.mxu0 %v300
    %1395 = vmatprep.subr.mxu0 0.0
    %1396 = vmatpush1.msra.mxu0 %v301
    %1397 = vmatprep.subr.mxu0 0.0
    %1398 = vmatpush1.msra.mxu0 %v302
    %1399 = vmatprep.subr.mxu0 0.0
    %1400 = vmatpush1.msra.mxu0 %v303
    %1401 = vmatprep.subr.mxu0 0.0
    %1402 = vmatpush1.msra.mxu0 %v304
    %1403 = vmatprep.subr.mxu0 0.0
    %1404 = vmatpush1.msra.mxu0 %v305
    %1405 = vmatprep.subr.mxu0 0.0
    %1406 = vmatpush1.msra.mxu0 %v306
    %1407 = vmatprep.subr.mxu0 0.0
    %1408 = vmatpush1.msra.mxu0 %v307
    %1409 = vmatprep.subr.mxu0 0.0
    %1410 = vmatpush1.msra.mxu0 %v308
    %1411 = vmatprep.subr.mxu0 0.0
    %1412 = vmatpush1.msra.mxu0 %v309
    %1413 = vmatprep.subr.mxu0 0.0
    %1414 = vmatpush1.msra.mxu0 %v310
    %1415 = vmatprep.subr.mxu0 0.0
    %1416 = vmatpush1.msra.mxu0 %v311
    %1417 = vmatprep.subr.mxu0 0.0
    %1418 = vmatpush1.msra.mxu0 %v312
    %1419 = vmatprep.subr.mxu0 0.0
    %1420 = vmatpush1.msra.mxu0 %v313
    %1421 = vmatprep.subr.mxu0 0.0
    %1422 = vmatpush1.msra.mxu0 %v314
    %1423 = vmatprep.subr.mxu0 0.0
    %1424 = vmatpush1.msra.mxu0 %v315
    %1425 = vmatprep.subr.mxu0 0.0
    %1426 = vmatpush1.msra.mxu0 %v316
    %1427 = vmatprep.subr.mxu0 0.0
    %1428 = vmatpush1.msra.mxu0 %v317
    %1429 = vmatprep.subr.mxu0 0.0
    %1430 = vmatpush1.msra.mxu0 %v318
    %1431 = vmatprep.subr.mxu0 0.0
    %1432 = vmatpush1.msra.mxu0 %v319
    %1433 = vmatprep.subr.mxu0 0.0
    %1434 = vmatpush1.msra.mxu0 %v320
    %1435 = vmatprep.subr.mxu0 0.0
    %1436 = vmatpush1.msra.mxu0 %v321
    %1437 = vmatprep.subr.mxu0 0.0
    %1438 = vmatpush1.msra.mxu0 %v322
    %1439 = vmatprep.subr.mxu0 0.0
    %1440 = vmatpush1.msra.mxu0 %v323
    %1441 = vmatprep.mubr.f32.mxu0 %v711
    %1442 = vmatmul.mubr.f32.gmra.mrb[0].mxu0 %v703
    %v1443 = vpop.f32.mrb[0].mxu0
    %v1444 = vadd.f32 %v1374, %v1443
    %v1445 = vpop.f32.mrb[0].mxu0
    %1446 = vdwg.mxu0
    %1447 = vmatprep.subr.mxu0 0.0
    %1448 = vmatpush1.msra.mxu0 %v324
    %1449 = vmatprep.subr.mxu0 0.0
    %1450 = vmatpush1.msra.mxu0 %v325
    %1451 = vmatprep.subr.mxu0 0.0
    %1452 = vmatpush1.msra.mxu0 %v326
    %1453 = vmatprep.subr.mxu0 0.0
    %1454 = vmatpush1.msra.mxu0 %v327
    %1455 = vmatprep.subr.mxu0 0.0
    %1456 = vmatpush1.msra.mxu0 %v328
    %1457 = vmatprep.subr.mxu0 0.0
    %1458 = vmatpush1.msra.mxu0 %v329
    %1459 = vmatprep.subr.mxu0 0.0
    %1460 = vmatpush1.msra.mxu0 %v330
    %1461 = vmatprep.subr.mxu0 0.0
    %1462 = vmatpush1.msra.mxu0 %v331
    %1463 = vmatprep.subr.mxu0 0.0
    %1464 = vmatpush1.msra.mxu0 %v332
    %1465 = vmatprep.subr.mxu0 0.0
    %1466 = vmatpush1.msra.mxu0 %v333
    %1467 = vmatprep.subr.mxu0 0.0
    %1468 = vmatpush1.msra.mxu0 %v334
    %1469 = vmatprep.subr.mxu0 0.0
    %1470 = vmatpush1.msra.mxu0 %v335
    %1471 = vmatprep.subr.mxu0 0.0
    %1472 = vmatpush1.msra.mxu0 %v336
    %1473 = vmatprep.subr.mxu0 0.0
    %1474 = vmatpush1.msra.mxu0 %v337
    %1475 = vmatprep.subr.mxu0 0.0
    %1476 = vmatpush1.msra.mxu0 %v338
    %1477 = vmatprep.subr.mxu0 0.0
    %1478 = vmatpush1.msra.mxu0 %v339
    %1479 = vmatprep.subr.mxu0 0.0
    %1480 = vmatpush1.msra.mxu0 %v340
    %1481 = vmatprep.subr.mxu0 0.0
    %1482 = vmatpush1.msra.mxu0 %v341
    %1483 = vmatprep.subr.mxu0 0.0
    %1484 = vmatpush1.msra.mxu0 %v342
    %1485 = vmatprep.subr.mxu0 0.0
    %1486 = vmatpush1.msra.mxu0 %v343
    %1487 = vmatprep.subr.mxu0 0.0
    %1488 = vmatpush1.msra.mxu0 %v344
    %1489 = vmatprep.subr.mxu0 0.0
    %1490 = vmatpush1.msra.mxu0 %v345
    %1491 = vmatprep.subr.mxu0 0.0
    %1492 = vmatpush1.msra.mxu0 %v346
    %1493 = vmatprep.subr.mxu0 0.0
    %1494 = vmatpush1.msra.mxu0 %v347
    %1495 = vmatprep.subr.mxu0 0.0
    %1496 = vmatpush1.msra.mxu0 %v348
    %1497 = vmatprep.subr.mxu0 0.0
    %1498 = vmatpush1.msra.mxu0 %v349
    %1499 = vmatprep.subr.mxu0 0.0
    %1500 = vmatpush1.msra.mxu0 %v350
    %1501 = vmatprep.subr.mxu0 0.0
    %1502 = vmatpush1.msra.mxu0 %v351
    %1503 = vmatprep.subr.mxu0 0.0
    %1504 = vmatpush1.msra.mxu0 %v352
    %1505 = vmatprep.subr.mxu0 0.0
    %1506 = vmatpush1.msra.mxu0 %v353
    %1507 = vmatprep.subr.mxu0 0.0
    %1508 = vmatpush1.msra.mxu0 %v354
    %1509 = vmatprep.subr.mxu0 0.0
    %1510 = vmatpush1.msra.mxu0 %v355
    %1511 = vmatprep.mubr.f32.mxu0 %v712
    %1512 = vmatmul.mubr.f32.gmra.mrb[0].mxu0 %v710
    %v1513 = vpop.f32.mrb[0].mxu0
    %v1514 = vadd.f32 %v1444, %v1513
    %v1515 = vpop.f32.mrb[0].mxu0
    %1516 = vdwg.mxu0
    %1517 = vmatprep.subr.mxu0 0.0
    %1518 = vmatpush1.msra.mxu0 %v356
    %1519 = vmatprep.subr.mxu0 0.0
    %1520 = vmatpush1.msra.mxu0 %v357
    %1521 = vmatprep.subr.mxu0 0.0
    %1522 = vmatpush1.msra.mxu0 %v358
    %1523 = vmatprep.subr.mxu0 0.0
    %1524 = vmatpush1.msra.mxu0 %v359
    %1525 = vmatprep.subr.mxu0 0.0
    %1526 = vmatpush1.msra.mxu0 %v360
    %1527 = vmatprep.subr.mxu0 0.0
    %1528 = vmatpush1.msra.mxu0 %v361
    %1529 = vmatprep.subr.mxu0 0.0
    %1530 = vmatpush1.msra.mxu0 %v362
    %1531 = vmatprep.subr.mxu0 0.0
    %1532 = vmatpush1.msra.mxu0 %v363
    %1533 = vmatprep.subr.mxu0 0.0
    %1534 = vmatpush1.msra.mxu0 %v364
    %1535 = vmatprep.subr.mxu0 0.0
    %1536 = vmatpush1.msra.mxu0 %v365
    %1537 = vmatprep.subr.mxu0 0.0
    %1538 = vmatpush1.msra.mxu0 %v366
    %1539 = vmatprep.subr.mxu0 0.0
    %1540 = vmatpush1.msra.mxu0 %v367
    %1541 = vmatprep.subr.mxu0 0.0
    %1542 = vmatpush1.msra.mxu0 %v368
    %1543 = vmatprep.subr.mxu0 0.0
    %1544 = vmatpush1.msra.mxu0 %v369
    %1545 = vmatprep.subr.mxu0 0.0
    %1546 = vmatpush1.msra.mxu0 %v370
    %1547 = vmatprep.subr.mxu0 0.0
    %1548 = vmatpush1.msra.mxu0 %v371
    %1549 = vmatprep.subr.mxu0 0.0
    %1550 = vmatpush1.msra.mxu0 %v372
    %1551 = vmatprep.subr.mxu0 0.0
    %1552 = vmatpush1.msra.mxu0 %v373
    %1553 = vmatprep.subr.mxu0 0.0
    %1554 = vmatpush1.msra.mxu0 %v374
    %1555 = vmatprep.subr.mxu0 0.0
    %1556 = vmatpush1.msra.mxu0 %v375
    %1557 = vmatprep.subr.mxu0 0.0
    %1558 = vmatpush1.msra.mxu0 %v376
    %1559 = vmatprep.subr.mxu0 0.0
    %1560 = vmatpush1.msra.mxu0 %v377
    %1561 = vmatprep.subr.mxu0 0.0
    %1562 = vmatpush1.msra.mxu0 %v378
    %1563 = vmatprep.subr.mxu0 0.0
    %1564 = vmatpush1.msra.mxu0 %v379
    %1565 = vmatprep.subr.mxu0 0.0
    %1566 = vmatpush1.msra.mxu0 %v380
    %1567 = vmatprep.subr.mxu0 0.0
    %1568 = vmatpush1.msra.mxu0 %v381
    %1569 = vmatprep.subr.mxu0 0.0
    %1570 = vmatpush1.msra.mxu0 %v382
    %1571 = vmatprep.subr.mxu0 0.0
    %1572 = vmatpush1.msra.mxu0 %v383
    %1573 = vmatprep.subr.mxu0 0.0
    %1574 = vmatpush1.msra.mxu0 %v384
    %1575 = vmatprep.subr.mxu0 0.0
    %1576 = vmatpush1.msra.mxu0 %v385
    %1577 = vmatprep.subr.mxu0 0.0
    %1578 = vmatpush1.msra.mxu0 %v386
    %1579 = vmatprep.subr.mxu0 0.0
    %1580 = vmatpush1.msra.mxu0 %v387
    %1581 = vmatprep.mubr.f32.mxu0 %v728
    %1582 = vmatmul.mubr.f32.gmra.mrb[0].mxu0 %v720
    %v1583 = vpop.f32.mrb[0].mxu0
    %v1584 = vadd.f32 %v1514, %v1583
    %v1585 = vpop.f32.mrb[0].mxu0
    %1586 = vdwg.mxu0
    %1587 = vmatprep.subr.mxu0 0.0
    %1588 = vmatpush1.msra.mxu0 %v388
    %1589 = vmatprep.subr.mxu0 0.0
    %1590 = vmatpush1.msra.mxu0 %v389
    %1591 = vmatprep.subr.mxu0 0.0
    %1592 = vmatpush1.msra.mxu0 %v390
    %1593 = vmatprep.subr.mxu0 0.0
    %1594 = vmatpush1.msra.mxu0 %v391
    %1595 = vmatprep.subr.mxu0 0.0
    %1596 = vmatpush1.msra.mxu0 %v392
    %1597 = vmatprep.subr.mxu0 0.0
    %1598 = vmatpush1.msra.mxu0 %v393
    %1599 = vmatprep.subr.mxu0 0.0
    %1600 = vmatpush1.msra.mxu0 %v394
    %1601 = vmatprep.subr.mxu0 0.0
    %1602 = vmatpush1.msra.mxu0 %v395
    %1603 = vmatprep.subr.mxu0 0.0
    %1604 = vmatpush1.msra.mxu0 %v396
    %1605 = vmatprep.subr.mxu0 0.0
    %1606 = vmatpush1.msra.mxu0 %v397
    %1607 = vmatprep.subr.mxu0 0.0
    %1608 = vmatpush1.msra.mxu0 %v398
    %1609 = vmatprep.subr.mxu0 0.0
    %1610 = vmatpush1.msra.mxu0 %v399
    %1611 = vmatprep.subr.mxu0 0.0
    %1612 = vmatpush1.msra.mxu0 %v400
    %1613 = vmatprep.subr.mxu0 0.0
    %1614 = vmatpush1.msra.mxu0 %v401
    %1615 = vmatprep.subr.mxu0 0.0
    %1616 = vmatpush1.msra.mxu0 %v402
    %1617 = vmatprep.subr.mxu0 0.0
    %1618 = vmatpush1.msra.mxu0 %v403
    %1619 = vmatprep.subr.mxu0 0.0
    %1620 = vmatpush1.msra.mxu0 %v404
    %1621 = vmatprep.subr.mxu0 0.0
    %1622 = vmatpush1.msra.mxu0 %v405
    %1623 = vmatprep.subr.mxu0 0.0
    %1624 = vmatpush1.msra.mxu0 %v406
    %1625 = vmatprep.subr.mxu0 0.0
    %1626 = vmatpush1.msra.mxu0 %v407
    %1627 = vmatprep.subr.mxu0 0.0
    %1628 = vmatpush1.msra.mxu0 %v408
    %1629 = vmatprep.subr.mxu0 0.0
    %1630 = vmatpush1.msra.mxu0 %v409
    %1631 = vmatprep.subr.mxu0 0.0
    %1632 = vmatpush1.msra.mxu0 %v410
    %1633 = vmatprep.subr.mxu0 0.0
    %1634 = vmatpush1.msra.mxu0 %v411
    %1635 = vmatprep.subr.mxu0 0.0
    %1636 = vmatpush1.msra.mxu0 %v412
    %1637 = vmatprep.subr.mxu0 0.0
    %1638 = vmatpush1.msra.mxu0 %v413
    %1639 = vmatprep.subr.mxu0 0.0
    %1640 = vmatpush1.msra.mxu0 %v414
    %1641 = vmatprep.subr.mxu0 0.0
    %1642 = vmatpush1.msra.mxu0 %v415
    %1643 = vmatprep.subr.mxu0 0.0
    %1644 = vmatpush1.msra.mxu0 %v416
    %1645 = vmatprep.subr.mxu0 0.0
    %1646 = vmatpush1.msra.mxu0 %v417
    %1647 = vmatprep.subr.mxu0 0.0
    %1648 = vmatpush1.msra.mxu0 %v418
    %1649 = vmatprep.subr.mxu0 0.0
    %1650 = vmatpush1.msra.mxu0 %v419
    %1651 = vmatprep.mubr.f32.mxu0 %v729
    %1652 = vmatmul.mubr.f32.gmra.mrb[0].mxu0 %v727
    %v1653 = vpop.f32.mrb[0].mxu0
    %v1654 = vadd.f32 %v1584, %v1653
    %v1655 = vpop.f32.mrb[0].mxu0
    %1656 = vdwg.mxu0
    %1657 = vmatprep.subr.mxu0 0.0
    %1658 = vmatpush1.msra.mxu0 %v420
    %1659 = vmatprep.subr.mxu0 0.0
    %1660 = vmatpush1.msra.mxu0 %v421
    %1661 = vmatprep.subr.mxu0 0.0
    %1662 = vmatpush1.msra.mxu0 %v422
    %1663 = vmatprep.subr.mxu0 0.0
    %1664 = vmatpush1.msra.mxu0 %v423
    %1665 = vmatprep.subr.mxu0 0.0
    %1666 = vmatpush1.msra.mxu0 %v424
    %1667 = vmatprep.subr.mxu0 0.0
    %1668 = vmatpush1.msra.mxu0 %v425
    %1669 = vmatprep.subr.mxu0 0.0
    %1670 = vmatpush1.msra.mxu0 %v426
    %1671 = vmatprep.subr.mxu0 0.0
    %1672 = vmatpush1.msra.mxu0 %v427
    %1673 = vmatprep.subr.mxu0 0.0
    %1674 = vmatpush1.msra.mxu0 %v428
    %1675 = vmatprep.subr.mxu0 0.0
    %1676 = vmatpush1.msra.mxu0 %v429
    %1677 = vmatprep.subr.mxu0 0.0
    %1678 = vmatpush1.msra.mxu0 %v430
    %1679 = vmatprep.subr.mxu0 0.0
    %1680 = vmatpush1.msra.mxu0 %v431
    %1681 = vmatprep.subr.mxu0 0.0
    %1682 = vmatpush1.msra.mxu0 %v432
    %1683 = vmatprep.subr.mxu0 0.0
    %1684 = vmatpush1.msra.mxu0 %v433
    %1685 = vmatprep.subr.mxu0 0.0
    %1686 = vmatpush1.msra.mxu0 %v434
    %1687 = vmatprep.subr.mxu0 0.0
    %1688 = vmatpush1.msra.mxu0 %v435
    %1689 = vmatprep.subr.mxu0 0.0
    %1690 = vmatpush1.msra.mxu0 %v436
    %1691 = vmatprep.subr.mxu0 0.0
    %1692 = vmatpush1.msra.mxu0 %v437
    %1693 = vmatprep.subr.mxu0 0.0
    %1694 = vmatpush1.msra.mxu0 %v438
    %1695 = vmatprep.subr.mxu0 0.0
    %1696 = vmatpush1.msra.mxu0 %v439
    %1697 = vmatprep.subr.mxu0 0.0
    %1698 = vmatpush1.msra.mxu0 %v440
    %1699 = vmatprep.subr.mxu0 0.0
    %1700 = vmatpush1.msra.mxu0 %v441
    %1701 = vmatprep.subr.mxu0 0.0
    %1702 = vmatpush1.msra.mxu0 %v442
    %1703 = vmatprep.subr.mxu0 0.0
    %1704 = vmatpush1.msra.mxu0 %v443
    %1705 = vmatprep.subr.mxu0 0.0
    %1706 = vmatpush1.msra.mxu0 %v444
    %1707 = vmatprep.subr.mxu0 0.0
    %1708 = vmatpush1.msra.mxu0 %v445
    %1709 = vmatprep.subr.mxu0 0.0
    %1710 = vmatpush1.msra.mxu0 %v446
    %1711 = vmatprep.subr.mxu0 0.0
    %1712 = vmatpush1.msra.mxu0 %v447
    %1713 = vmatprep.subr.mxu0 0.0
    %1714 = vmatpush1.msra.mxu0 %v448
    %1715 = vmatprep.subr.mxu0 0.0
    %1716 = vmatpush1.msra.mxu0 %v449
    %1717 = vmatprep.subr.mxu0 0.0
    %1718 = vmatpush1.msra.mxu0 %v450
    %1719 = vmatprep.subr.mxu0 0.0
    %1720 = vmatpush1.msra.mxu0 %v451
    %1721 = vmatprep.mubr.f32.mxu0 %v745
    %1722 = vmatmul.mubr.f32.gmra.mrb[0].mxu0 %v737
    %v1723 = vpop.f32.mrb[0].mxu0
    %v1724 = vadd.f32 %v1654, %v1723
    %v1725 = vpop.f32.mrb[0].mxu0
    %1726 = vdwg.mxu0
    %1727 = vmatprep.subr.mxu0 0.0
    %1728 = vmatpush1.msra.mxu0 %v452
    %1729 = vmatprep.subr.mxu0 0.0
    %1730 = vmatpush1.msra.mxu0 %v453
    %1731 = vmatprep.subr.mxu0 0.0
    %1732 = vmatpush1.msra.mxu0 %v454
    %1733 = vmatprep.subr.mxu0 0.0
    %1734 = vmatpush1.msra.mxu0 %v455
    %1735 = vmatprep.subr.mxu0 0.0
    %1736 = vmatpush1.msra.mxu0 %v456
    %1737 = vmatprep.subr.mxu0 0.0
    %1738 = vmatpush1.msra.mxu0 %v457
    %1739 = vmatprep.subr.mxu0 0.0
    %1740 = vmatpush1.msra.mxu0 %v458
    %1741 = vmatprep.subr.mxu0 0.0
    %1742 = vmatpush1.msra.mxu0 %v459
    %1743 = vmatprep.subr.mxu0 0.0
    %1744 = vmatpush1.msra.mxu0 %v460
    %1745 = vmatprep.subr.mxu0 0.0
    %1746 = vmatpush1.msra.mxu0 %v461
    %1747 = vmatprep.subr.mxu0 0.0
    %1748 = vmatpush1.msra.mxu0 %v462
    %1749 = vmatprep.subr.mxu0 0.0
    %1750 = vmatpush1.msra.mxu0 %v463
    %1751 = vmatprep.subr.mxu0 0.0
    %1752 = vmatpush1.msra.mxu0 %v464
    %1753 = vmatprep.subr.mxu0 0.0
    %1754 = vmatpush1.msra.mxu0 %v465
    %1755 = vmatprep.subr.mxu0 0.0
    %1756 = vmatpush1.msra.mxu0 %v466
    %1757 = vmatprep.subr.mxu0 0.0
    %1758 = vmatpush1.msra.mxu0 %v467
    %1759 = vmatprep.subr.mxu0 0.0
    %1760 = vmatpush1.msra.mxu0 %v468
    %1761 = vmatprep.subr.mxu0 0.0
    %1762 = vmatpush1.msra.mxu0 %v469
    %1763 = vmatprep.subr.mxu0 0.0
    %1764 = vmatpush1.msra.mxu0 %v470
    %1765 = vmatprep.subr.mxu0 0.0
    %1766 = vmatpush1.msra.mxu0 %v471
    %1767 = vmatprep.subr.mxu0 0.0
    %1768 = vmatpush1.msra.mxu0 %v472
    %1769 = vmatprep.subr.mxu0 0.0
    %1770 = vmatpush1.msra.mxu0 %v473
    %1771 = vmatprep.subr.mxu0 0.0
    %1772 = vmatpush1.msra.mxu0 %v474
    %1773 = vmatprep.subr.mxu0 0.0
    %1774 = vmatpush1.msra.mxu0 %v475
    %1775 = vmatprep.subr.mxu0 0.0
    %1776 = vmatpush1.msra.mxu0 %v476
    %1777 = vmatprep.subr.mxu0 0.0
    %1778 = vmatpush1.msra.mxu0 %v477
    %1779 = vmatprep.subr.mxu0 0.0
    %1780 = vmatpush1.msra.mxu0 %v478
    %1781 = vmatprep.subr.mxu0 0.0
    %1782 = vmatpush1.msra.mxu0 %v479
    %1783 = vmatprep.subr.mxu0 0.0
    %1784 = vmatpush1.msra.mxu0 %v480
    %1785 = vmatprep.subr.mxu0 0.0
    %1786 = vmatpush1.msra.mxu0 %v481
    %1787 = vmatprep.subr.mxu0 0.0
    %1788 = vmatpush1.msra.mxu0 %v482
    %1789 = vmatprep.subr.mxu0 0.0
    %1790 = vmatpush1.msra.mxu0 %v483
    %1791 = vmatprep.mubr.f32.mxu0 %v746
    %1792 = vmatmul.mubr.f32.gmra.mrb[0].mxu0 %v744
    %v1793 = vpop.f32.mrb[0].mxu0
    %v1794 = vadd.f32 %v1724, %v1793
    %v1795 = vpop.f32.mrb[0].mxu0
    %1796 = vdwg.mxu0
    %1797 = vmatprep.subr.mxu0 0.0
    %1798 = vmatpush1.msra.mxu0 %v484
    %1799 = vmatprep.subr.mxu0 0.0
    %1800 = vmatpush1.msra.mxu0 %v485
    %1801 = vmatprep.subr.mxu0 0.0
    %1802 = vmatpush1.msra.mxu0 %v486
    %1803 = vmatprep.subr.mxu0 0.0
    %1804 = vmatpush1.msra.mxu0 %v487
    %1805 = vmatprep.subr.mxu0 0.0
    %1806 = vmatpush1.msra.mxu0 %v488
    %1807 = vmatprep.subr.mxu0 0.0
    %1808 = vmatpush1.msra.mxu0 %v489
    %1809 = vmatprep.subr.mxu0 0.0
    %1810 = vmatpush1.msra.mxu0 %v490
    %1811 = vmatprep.subr.mxu0 0.0
    %1812 = vmatpush1.msra.mxu0 %v491
    %1813 = vmatprep.subr.mxu0 0.0
    %1814 = vmatpush1.msra.mxu0 %v492
    %1815 = vmatprep.subr.mxu0 0.0
    %1816 = vmatpush1.msra.mxu0 %v493
    %1817 = vmatprep.subr.mxu0 0.0
    %1818 = vmatpush1.msra.mxu0 %v494
    %1819 = vmatprep.subr.mxu0 0.0
    %1820 = vmatpush1.msra.mxu0 %v495
    %1821 = vmatprep.subr.mxu0 0.0
    %1822 = vmatpush1.msra.mxu0 %v496
    %1823 = vmatprep.subr.mxu0 0.0
    %1824 = vmatpush1.msra.mxu0 %v497
    %1825 = vmatprep.subr.mxu0 0.0
    %1826 = vmatpush1.msra.mxu0 %v498
    %1827 = vmatprep.subr.mxu0 0.0
    %1828 = vmatpush1.msra.mxu0 %v499
    %1829 = vmatprep.subr.mxu0 0.0
    %1830 = vmatpush1.msra.mxu0 %v500
    %1831 = vmatprep.subr.mxu0 0.0
    %1832 = vmatpush1.msra.mxu0 %v501
    %1833 = vmatprep.subr.mxu0 0.0
    %1834 = vmatpush1.msra.mxu0 %v502
    %1835 = vmatprep.subr.mxu0 0.0
    %1836 = vmatpush1.msra.mxu0 %v503
    %1837 = vmatprep.subr.mxu0 0.0
    %1838 = vmatpush1.msra.mxu0 %v504
    %1839 = vmatprep.subr.mxu0 0.0
    %1840 = vmatpush1.msra.mxu0 %v505
    %1841 = vmatprep.subr.mxu0 0.0
    %1842 = vmatpush1.msra.mxu0 %v506
    %1843 = vmatprep.subr.mxu0 0.0
    %1844 = vmatpush1.msra.mxu0 %v507
    %1845 = vmatprep.subr.mxu0 0.0
    %1846 = vmatpush1.msra.mxu0 %v508
    %1847 = vmatprep.subr.mxu0 0.0
    %1848 = vmatpush1.msra.mxu0 %v509
    %1849 = vmatprep.subr.mxu0 0.0
    %1850 = vmatpush1.msra.mxu0 %v510
    %1851 = vmatprep.subr.mxu0 0.0
    %1852 = vmatpush1.msra.mxu0 %v511
    %1853 = vmatprep.subr.mxu0 0.0
    %1854 = vmatpush1.msra.mxu0 %v512
    %1855 = vmatprep.subr.mxu0 0.0
    %1856 = vmatpush1.msra.mxu0 %v513
    %1857 = vmatprep.subr.mxu0 0.0
    %1858 = vmatpush1.msra.mxu0 %v514
    %1859 = vmatprep.subr.mxu0 0.0
    %1860 = vmatpush1.msra.mxu0 %v515
    %1861 = vmatprep.mubr.f32.mxu0 %v762
    %1862 = vmatmul.mubr.f32.gmra.mrb[0].mxu0 %v754
    %v1863 = vpop.f32.mrb[0].mxu0
    %v1864 = vadd.f32 %v1794, %v1863
    %v1865 = vpop.f32.mrb[0].mxu0
    %1866 = vdwg.mxu0
    %1867 = vmatprep.subr.mxu0 0.0
    %1868 = vmatpush1.msra.mxu0 %v516
    %1869 = vmatprep.subr.mxu0 0.0
    %1870 = vmatpush1.msra.mxu0 %v517
    %1871 = vmatprep.subr.mxu0 0.0
    %1872 = vmatpush1.msra.mxu0 %v518
    %1873 = vmatprep.subr.mxu0 0.0
    %1874 = vmatpush1.msra.mxu0 %v519
    %1875 = vmatprep.subr.mxu0 0.0
    %1876 = vmatpush1.msra.mxu0 %v520
    %1877 = vmatprep.subr.mxu0 0.0
    %1878 = vmatpush1.msra.mxu0 %v521
    %1879 = vmatprep.subr.mxu0 0.0
    %1880 = vmatpush1.msra.mxu0 %v522
    %1881 = vmatprep.subr.mxu0 0.0
    %1882 = vmatpush1.msra.mxu0 %v523
    %1883 = vmatprep.subr.mxu0 0.0
    %1884 = vmatpush1.msra.mxu0 %v524
    %1885 = vmatprep.subr.mxu0 0.0
    %1886 = vmatpush1.msra.mxu0 %v525
    %1887 = vmatprep.subr.mxu0 0.0
    %1888 = vmatpush1.msra.mxu0 %v526
    %1889 = vmatprep.subr.mxu0 0.0
    %1890 = vmatpush1.msra.mxu0 %v527
    %1891 = vmatprep.subr.mxu0 0.0
    %1892 = vmatpush1.msra.mxu0 %v528
    %1893 = vmatprep.subr.mxu0 0.0
    %1894 = vmatpush1.msra.mxu0 %v529
    %1895 = vmatprep.subr.mxu0 0.0
    %1896 = vmatpush1.msra.mxu0 %v530
    %1897 = vmatprep.subr.mxu0 0.0
    %1898 = vmatpush1.msra.mxu0 %v531
    %1899 = vmatprep.subr.mxu0 0.0
    %1900 = vmatpush1.msra.mxu0 %v532
    %1901 = vmatprep.subr.mxu0 0.0
    %1902 = vmatpush1.msra.mxu0 %v533
    %1903 = vmatprep.subr.mxu0 0.0
    %1904 = vmatpush1.msra.mxu0 %v534
    %1905 = vmatprep.subr.mxu0 0.0
    %1906 = vmatpush1.msra.mxu0 %v535
    %1907 = vmatprep.subr.mxu0 0.0
    %1908 = vmatpush1.msra.mxu0 %v536
    %1909 = vmatprep.subr.mxu0 0.0
    %1910 = vmatpush1.msra.mxu0 %v537
    %1911 = vmatprep.subr.mxu0 0.0
    %1912 = vmatpush1.msra.mxu0 %v538
    %1913 = vmatprep.subr.mxu0 0.0
    %1914 = vmatpush1.msra.mxu0 %v539
    %1915 = vmatprep.subr.mxu0 0.0
    %1916 = vmatpush1.msra.mxu0 %v540
    %1917 = vmatprep.subr.mxu0 0.0
    %1918 = vmatpush1.msra.mxu0 %v541
    %1919 = vmatprep.subr.mxu0 0.0
    %1920 = vmatpush1.msra.mxu0 %v542
    %1921 = vmatprep.subr.mxu0 0.0
    %1922 = vmatpush1.msra.mxu0 %v543
    %1923 = vmatprep.subr.mxu0 0.0
    %1924 = vmatpush1.msra.mxu0 %v544
    %1925 = vmatprep.subr.mxu0 0.0
    %1926 = vmatpush1.msra.mxu0 %v545
    %1927 = vmatprep.subr.mxu0 0.0
    %1928 = vmatpush1.msra.mxu0 %v546
    %1929 = vmatprep.subr.mxu0 0.0
    %1930 = vmatpush1.msra.mxu0 %v547
    %1931 = vmatprep.mubr.f32.mxu0 %v763
    %1932 = vmatmul.mubr.f32.gmra.mrb[0].mxu0 %v761
    %v1933 = vpop.f32.mrb[0].mxu0
    %v1934 = vadd.f32 %v1864, %v1933
    %v1935 = vpop.f32.mrb[0].mxu0
    %1936 = vdwg.mxu0
    %1937 = vmatprep.subr.mxu0 0.0
    %1938 = vmatpush1.msra.mxu0 %v548
    %1939 = vmatprep.subr.mxu0 0.0
    %1940 = vmatpush1.msra.mxu0 %v549
    %1941 = vmatprep.subr.mxu0 0.0
    %1942 = vmatpush1.msra.mxu0 %v550
    %1943 = vmatprep.subr.mxu0 0.0
    %1944 = vmatpush1.msra.mxu0 %v551
    %1945 = vmatprep.subr.mxu0 0.0
    %1946 = vmatpush1.msra.mxu0 %v552
    %1947 = vmatprep.subr.mxu0 0.0
    %1948 = vmatpush1.msra.mxu0 %v553
    %1949 = vmatprep.subr.mxu0 0.0
    %1950 = vmatpush1.msra.mxu0 %v554
    %1951 = vmatprep.subr.mxu0 0.0
    %1952 = vmatpush1.msra.mxu0 %v555
    %1953 = vmatprep.subr.mxu0 0.0
    %1954 = vmatpush1.msra.mxu0 %v556
    %1955 = vmatprep.subr.mxu0 0.0
    %1956 = vmatpush1.msra.mxu0 %v557
    %1957 = vmatprep.subr.mxu0 0.0
    %1958 = vmatpush1.msra.mxu0 %v558
    %1959 = vmatprep.subr.mxu0 0.0
    %1960 = vmatpush1.msra.mxu0 %v559
    %1961 = vmatprep.subr.mxu0 0.0
    %1962 = vmatpush1.msra.mxu0 %v560
    %1963 = vmatprep.subr.mxu0 0.0
    %1964 = vmatpush1.msra.mxu0 %v561
    %1965 = vmatprep.subr.mxu0 0.0
    %1966 = vmatpush1.msra.mxu0 %v562
    %1967 = vmatprep.subr.mxu0 0.0
    %1968 = vmatpush1.msra.mxu0 %v563
    %1969 = vmatprep.subr.mxu0 0.0
    %1970 = vmatpush1.msra.mxu0 %v564
    %1971 = vmatprep.subr.mxu0 0.0
    %1972 = vmatpush1.msra.mxu0 %v565
    %1973 = vmatprep.subr.mxu0 0.0
    %1974 = vmatpush1.msra.mxu0 %v566
    %1975 = vmatprep.subr.mxu0 0.0
    %1976 = vmatpush1.msra.mxu0 %v567
    %1977 = vmatprep.subr.mxu0 0.0
    %1978 = vmatpush1.msra.mxu0 %v568
    %1979 = vmatprep.subr.mxu0 0.0
    %1980 = vmatpush1.msra.mxu0 %v569
    %1981 = vmatprep.subr.mxu0 0.0
    %1982 = vmatpush1.msra.mxu0 %v570
    %1983 = vmatprep.subr.mxu0 0.0
    %1984 = vmatpush1.msra.mxu0 %v571
    %1985 = vmatprep.subr.mxu0 0.0
    %1986 = vmatpush1.msra.mxu0 %v572
    %1987 = vmatprep.subr.mxu0 0.0
    %1988 = vmatpush1.msra.mxu0 %v573
    %1989 = vmatprep.subr.mxu0 0.0
    %1990 = vmatpush1.msra.mxu0 %v574
    %1991 = vmatprep.subr.mxu0 0.0
    %1992 = vmatpush1.msra.mxu0 %v575
    %1993 = vmatprep.subr.mxu0 0.0
    %1994 = vmatpush1.msra.mxu0 %v576
    %1995 = vmatprep.subr.mxu0 0.0
    %1996 = vmatpush1.msra.mxu0 %v577
    %1997 = vmatprep.subr.mxu0 0.0
    %1998 = vmatpush1.msra.mxu0 %v578
    %1999 = vmatprep.subr.mxu0 0.0
    %2000 = vmatpush1.msra.mxu0 %v579
    %2001 = vmatprep.mubr.f32.mxu0 %v779
    %2002 = vmatmul.mubr.f32.gmra.mrb[0].mxu0 %v771
    %v2003 = vpop.f32.mrb[0].mxu0
    %v2004 = vadd.f32 %v1934, %v2003
    %v2005 = vpop.f32.mrb[0].mxu0
    %2006 = vdwg.mxu0
    %2007 = vmatprep.subr.mxu0 0.0
    %2008 = vmatpush1.msra.mxu0 %v580
    %2009 = vmatprep.subr.mxu0 0.0
    %2010 = vmatpush1.msra.mxu0 %v581
    %2011 = vmatprep.subr.mxu0 0.0
    %2012 = vmatpush1.msra.mxu0 %v582
    %2013 = vmatprep.subr.mxu0 0.0
    %2014 = vmatpush1.msra.mxu0 %v583
    %2015 = vmatprep.subr.mxu0 0.0
    %2016 = vmatpush1.msra.mxu0 %v584
    %2017 = vmatprep.subr.mxu0 0.0
    %2018 = vmatpush1.msra.mxu0 %v585
    %2019 = vmatprep.subr.mxu0 0.0
    %2020 = vmatpush1.msra.mxu0 %v586
    %2021 = vmatprep.subr.mxu0 0.0
    %2022 = vmatpush1.msra.mxu0 %v587
    %2023 = vmatprep.subr.mxu0 0.0
    %2024 = vmatpush1.msra.mxu0 %v588
    %2025 = vmatprep.subr.mxu0 0.0
    %2026 = vmatpush1.msra.mxu0 %v589
    %2027 = vmatprep.subr.mxu0 0.0
    %2028 = vmatpush1.msra.mxu0 %v590
    %2029 = vmatprep.subr.mxu0 0.0
    %2030 = vmatpush1.msra.mxu0 %v591
    %2031 = vmatprep.subr.mxu0 0.0
    %2032 = vmatpush1.msra.mxu0 %v592
    %2033 = vmatprep.subr.mxu0 0.0
    %2034 = vmatpush1.msra.mxu0 %v593
    %2035 = vmatprep.subr.mxu0 0.0
    %2036 = vmatpush1.msra.mxu0 %v594
    %2037 = vmatprep.subr.mxu0 0.0
    %2038 = vmatpush1.msra.mxu0 %v595
    %2039 = vmatprep.subr.mxu0 0.0
    %2040 = vmatpush1.msra.mxu0 %v596
    %2041 = vmatprep.subr.mxu0 0.0
    %2042 = vmatpush1.msra.mxu0 %v597
    %2043 = vmatprep.subr.mxu0 0.0
    %2044 = vmatpush1.msra.mxu0 %v598
    %2045 = vmatprep.subr.mxu0 0.0
    %2046 = vmatpush1.msra.mxu0 %v599
    %2047 = vmatprep.subr.mxu0 0.0
    %2048 = vmatpush1.msra.mxu0 %v600
    %2049 = vmatprep.subr.mxu0 0.0
    %2050 = vmatpush1.msra.mxu0 %v601
    %2051 = vmatprep.subr.mxu0 0.0
    %2052 = vmatpush1.msra.mxu0 %v602
    %2053 = vmatprep.subr.mxu0 0.0
    %2054 = vmatpush1.msra.mxu0 %v603
    %2055 = vmatprep.subr.mxu0 0.0
    %2056 = vmatpush1.msra.mxu0 %v604
    %2057 = vmatprep.subr.mxu0 0.0
    %2058 = vmatpush1.msra.mxu0 %v605
    %2059 = vmatprep.subr.mxu0 0.0
    %2060 = vmatpush1.msra.mxu0 %v606
    %2061 = vmatprep.subr.mxu0 0.0
    %2062 = vmatpush1.msra.mxu0 %v607
    %2063 = vmatprep.subr.mxu0 0.0
    %2064 = vmatpush1.msra.mxu0 %v608
    %2065 = vmatprep.subr.mxu0 0.0
    %2066 = vmatpush1.msra.mxu0 %v609
    %2067 = vmatprep.subr.mxu0 0.0
    %2068 = vmatpush1.msra.mxu0 %v610
    %2069 = vmatprep.subr.mxu0 0.0
    %2070 = vmatpush1.msra.mxu0 %v611
    %2071 = vmatprep.mubr.f32.mxu0 %v780
    %2072 = vmatmul.mubr.f32.gmra.mrb[0].mxu0 %v778
    %v2073 = vpop.f32.mrb[0].mxu0
    %v2074 = vadd.f32 %v2004, %v2073
    %v2075 = vpop.f32.mrb[0].mxu0
    %2076 = vdwg.mxu0
    %v2077 = vtanh.pop %v2074
    %v2078 = vld [vmem:[%s3] sm:$0xff]
    %v2079 = vld [vmem:[%s3 + $0x8] sm:$0xff]
    %v2080 = vld [vmem:[%s3 + $0x10] sm:$0xff]
    %v2081 = vld [vmem:[%s3 + $0x18] sm:$0xff]
    %v2082 = vld [vmem:[%s3 + $0x20] sm:$0xff]
    %v2083 = vld [vmem:[%s3 + $0x28] sm:$0xff]
    %v2084 = vld [vmem:[%s3 + $0x30] sm:$0xff]
    %v2085 = vld [vmem:[%s3 + $0x38] sm:$0xff]
    %v2086 = vld [vmem:[%s3 + $0x40] sm:$0xff]
    %v2087 = vld [vmem:[%s3 + $0x48] sm:$0xff]
    %v2088 = vld [vmem:[%s3 + $0x50] sm:$0xff]
    %v2089 = vld [vmem:[%s3 + $0x58] sm:$0xff]
    %v2090 = vld [vmem:[%s3 + $0x60] sm:$0xff]
    %v2091 = vld [vmem:[%s3 + $0x68] sm:$0xff]
    %v2092 = vld [vmem:[%s3 + $0x70] sm:$0xff]
    %v2093 = vld [vmem:[%s3 + $0x78] sm:$0xff]
    %v2094 = vld [vmem:[%s4] sm:$0x1]
    %v2096 = vlaneseq
    %v2097 = vshrl.u32 %v2096, 7
    %v2098 = vsub.s32 0, %v2097
    %v2099 = vrot.slane %v2094, %v2098
    %2101 = vmatprep.subr.mxu0 0.0
    %2102 = vmatpush1.msra.mxu0 %v2078
    %2103 = vmatprep.subr.mxu0 0.0
    %2104 = vmatpush1.msra.mxu0 %v2079
    %2105 = vmatprep.subr.mxu0 0.0
    %2106 = vmatpush1.msra.mxu0 %v2080
    %2107 = vmatprep.subr.mxu0 0.0
    %2108 = vmatpush1.msra.mxu0 %v2081
    %2109 = vmatprep.subr.mxu0 0.0
    %2110 = vmatpush1.msra.mxu0 %v2082
    %2111 = vmatprep.subr.mxu0 0.0
    %2112 = vmatpush1.msra.mxu0 %v2083
    %2113 = vmatprep.subr.mxu0 0.0
    %2114 = vmatpush1.msra.mxu0 %v2084
    %2115 = vmatprep.subr.mxu0 0.0
    %2116 = vmatpush1.msra.mxu0 %v2085
    %2117 = vmatprep.subr.mxu0 0.0
    %2118 = vmatpush1.msra.mxu0 %v2086
    %2119 = vmatprep.subr.mxu0 0.0
    %2120 = vmatpush1.msra.mxu0 %v2087
    %2121 = vmatprep.subr.mxu0 0.0
    %2122 = vmatpush1.msra.mxu0 %v2088
    %2123 = vmatprep.subr.mxu0 0.0
    %2124 = vmatpush1.msra.mxu0 %v2089
    %2125 = vmatprep.subr.mxu0 0.0
    %2126 = vmatpush1.msra.mxu0 %v2090
    %2127 = vmatprep.subr.mxu0 0.0
    %2128 = vmatpush1.msra.mxu0 %v2091
    %2129 = vmatprep.subr.mxu0 0.0
    %2130 = vmatpush1.msra.mxu0 %v2092
    %2131 = vmatprep.subr.mxu0 0.0
    %2132 = vmatpush1.msra.mxu0 %v2093
    %2133 = vmatprep.subr.mxu0 0.0
    %2134 = vmatpush1.msra.mxu0 0.0
    %2135 = vmatprep.subr.mxu0 0.0
    %2136 = vmatpush1.msra.mxu0 0.0
    %2137 = vmatprep.subr.mxu0 0.0
    %2138 = vmatpush1.msra.mxu0 0.0
    %2139 = vmatprep.subr.mxu0 0.0
    %2140 = vmatpush1.msra.mxu0 0.0
    %2141 = vmatprep.subr.mxu0 0.0
    %2142 = vmatpush1.msra.mxu0 0.0
    %2143 = vmatprep.subr.mxu0 0.0
    %2144 = vmatpush1.msra.mxu0 0.0
    %2145 = vmatprep.subr.mxu0 0.0
    %2146 = vmatpush1.msra.mxu0 0.0
    %2147 = vmatprep.subr.mxu0 0.0
    %2148 = vmatpush1.msra.mxu0 0.0
    %2149 = vmatprep.subr.mxu0 0.0
    %2150 = vmatpush1.msra.mxu0 0.0
    %2151 = vmatprep.subr.mxu0 0.0
    %2152 = vmatpush1.msra.mxu0 0.0
    %2153 = vmatprep.subr.mxu0 0.0
    %2154 = vmatpush1.msra.mxu0 0.0
    %2155 = vmatprep.subr.mxu0 0.0
    %2156 = vmatpush1.msra.mxu0 0.0
    %2157 = vmatprep.subr.mxu0 0.0
    %2158 = vmatpush1.msra.mxu0 0.0
    %2159 = vmatprep.subr.mxu0 0.0
    %2160 = vmatpush1.msra.mxu0 0.0
    %2161 = vmatprep.subr.mxu0 0.0
    %2162 = vmatpush1.msra.mxu0 0.0
    %2163 = vmatprep.subr.mxu0 0.0
    %2164 = vmatpush1.msra.mxu0 0.0
    %2165 = vmatprep.mubr.f32.mxu0 0.0
    %2166 = vmatmul.mubr.f32.gmra.mrb[0].mxu0 %v2077
    %v2167 = vpop.f32.mrb[0].mxu0
    %v2168 = vadd.f32 %v2099, %v2167
    %v2169 = vpop.f32.mrb[0].mxu0
    %2170 = vdwg.mxu0
    %v2171 = vtanh.pop %v2168
    %v2172 = vld [vmem:[%s5] sm:$0xff]
    %v2173 = vld [vmem:[%s5 + $0x8] sm:$0xff]
    %v2174 = vld [vmem:[%s5 + $0x10] sm:$0xff]
    %v2175 = vld [vmem:[%s5 + $0x18] sm:$0xff]
    %v2176 = vld [vmem:[%s5 + $0x20] sm:$0xff]
    %v2177 = vld [vmem:[%s5 + $0x28] sm:$0xff]
    %v2178 = vld [vmem:[%s5 + $0x30] sm:$0xff]
    %v2179 = vld [vmem:[%s5 + $0x38] sm:$0xff]
    %v2180 = vld [vmem:[%s5 + $0x40] sm:$0xff]
    %v2181 = vld [vmem:[%s5 + $0x48] sm:$0xff]
    %v2182 = vld [vmem:[%s5 + $0x50] sm:$0xff]
    %v2183 = vld [vmem:[%s5 + $0x58] sm:$0xff]
    %v2184 = vld [vmem:[%s5 + $0x60] sm:$0xff]
    %v2185 = vld [vmem:[%s5 + $0x68] sm:$0xff]
    %v2186 = vld [vmem:[%s5 + $0x70] sm:$0xff]
    %v2187 = vld [vmem:[%s5 + $0x78] sm:$0xff]
    %v2188 = vld [vmem:[%s6] sm:$0x1]
    %v2190 = vlaneseq
    %v2191 = vshrl.u32 %v2190, 7
    %v2192 = vsub.s32 0, %v2191
    %v2193 = vrot.slane %v2188, %v2192
    %2195 = vmatprep.subr.mxu0 0.0
    %2196 = vmatpush1.msra.mxu0 %v2172
    %2197 = vmatprep.subr.mxu0 0.0
    %2198 = vmatpush1.msra.mxu0 %v2173
    %2199 = vmatprep.subr.mxu0 0.0
    %2200 = vmatpush1.msra.mxu0 %v2174
    %2201 = vmatprep.subr.mxu0 0.0
    %2202 = vmatpush1.msra.mxu0 %v2175
    %2203 = vmatprep.subr.mxu0 0.0
    %2204 = vmatpush1.msra.mxu0 %v2176
    %2205 = vmatprep.subr.mxu0 0.0
    %2206 = vmatpush1.msra.mxu0 %v2177
    %2207 = vmatprep.subr.mxu0 0.0
    %2208 = vmatpush1.msra.mxu0 %v2178
    %2209 = vmatprep.subr.mxu0 0.0
    %2210 = vmatpush1.msra.mxu0 %v2179
    %2211 = vmatprep.subr.mxu0 0.0
    %2212 = vmatpush1.msra.mxu0 %v2180
    %2213 = vmatprep.subr.mxu0 0.0
    %2214 = vmatpush1.msra.mxu0 %v2181
    %2215 = vmatprep.subr.mxu0 0.0
    %2216 = vmatpush1.msra.mxu0 %v2182
    %2217 = vmatprep.subr.mxu0 0.0
    %2218 = vmatpush1.msra.mxu0 %v2183
    %2219 = vmatprep.subr.mxu0 0.0
    %2220 = vmatpush1.msra.mxu0 %v2184
    %2221 = vmatprep.subr.mxu0 0.0
    %2222 = vmatpush1.msra.mxu0 %v2185
    %2223 = vmatprep.subr.mxu0 0.0
    %2224 = vmatpush1.msra.mxu0 %v2186
    %2225 = vmatprep.subr.mxu0 0.0
    %2226 = vmatpush1.msra.mxu0 %v2187
    %2227 = vmatprep.subr.mxu0 0.0
    %2228 = vmatpush1.msra.mxu0 0.0
    %2229 = vmatprep.subr.mxu0 0.0
    %2230 = vmatpush1.msra.mxu0 0.0
    %2231 = vmatprep.subr.mxu0 0.0
    %2232 = vmatpush1.msra.mxu0 0.0
    %2233 = vmatprep.subr.mxu0 0.0
    %2234 = vmatpush1.msra.mxu0 0.0
    %2235 = vmatprep.subr.mxu0 0.0
    %2236 = vmatpush1.msra.mxu0 0.0
    %2237 = vmatprep.subr.mxu0 0.0
    %2238 = vmatpush1.msra.mxu0 0.0
    %2239 = vmatprep.subr.mxu0 0.0
    %2240 = vmatpush1.msra.mxu0 0.0
    %2241 = vmatprep.subr.mxu0 0.0
    %2242 = vmatpush1.msra.mxu0 0.0
    %2243 = vmatprep.subr.mxu0 0.0
    %2244 = vmatpush1.msra.mxu0 0.0
    %2245 = vmatprep.subr.mxu0 0.0
    %2246 = vmatpush1.msra.mxu0 0.0
    %2247 = vmatprep.subr.mxu0 0.0
    %2248 = vmatpush1.msra.mxu0 0.0
    %2249 = vmatprep.subr.mxu0 0.0
    %2250 = vmatpush1.msra.mxu0 0.0
    %2251 = vmatprep.subr.mxu0 0.0
    %2252 = vmatpush1.msra.mxu0 0.0
    %2253 = vmatprep.subr.mxu0 0.0
    %2254 = vmatpush1.msra.mxu0 0.0
    %2255 = vmatprep.subr.mxu0 0.0
    %2256 = vmatpush1.msra.mxu0 0.0
    %2257 = vmatprep.subr.mxu0 0.0
    %2258 = vmatpush1.msra.mxu0 0.0
    %2259 = vmatprep.mubr.f32.mxu0 0.0
    %2260 = vmatmul.mubr.f32.gmra.mrb[0].mxu0 %v2171
    %v2261 = vpop.f32.mrb[0].mxu0
    %v2262 = vadd.f32 %v2193, %v2261
    %v2263 = vpop.f32.mrb[0].mxu0
    %2264 = vdwg.mxu0
    %2265 = vst [vmem:[#allocation2] sm:$0x3] %v2262
    // Predicated region
    $region30: #{cnn_net3_forward.5} parent=1 // pred_check
      _
    $region31: #{cnn_net3_forward.5} parent=1 // pred_check_branch
      %2267 = sbr.rel (0) target = $region33
    $region32: #{cnn_net3_forward.5} parent=1 // pred_region
      %s2269 = ssub.s32 32, 32
      %2270 = vsyncadd [#allocation3], %s2269
      %s2272 = sshll.u32 [#allocation2], 4
      %s2273 = int_to_ptr.vmem [resolvable:$true] %s2272
      %2275 = dma.vmem_to_hbm [thread:$0]  %s2273, 32, %s7, [#allocation3]
    $region33: #{cnn_net3_forward.5} parent=1 // pred_fallthru
      _
    // Predicated region
    $region34: #{cnn_net3_forward.5} parent=1 // pred_check
      _
    $region35: #{cnn_net3_forward.5} parent=1 // pred_check_branch
      %2277 = sbr.rel (0) target = $region37
    $region36: #{cnn_net3_forward.5} parent=1 // pred_region
      %2278 = dma.done [#allocation3], 32
    $region37: #{cnn_net3_forward.5} parent=1 // pred_fallthru
      _
    %2279 = vsyncpa [#allocation3], 1

</llo_original>
